<compile_context>
chip_gen: v5e
topology: v5e:2x2
jax: 0.10.0
libtpu: 0.0.40
codegen_flags: <defaults>
</compile_context>

<pallas_src>
import math

import jax
import jax.numpy as jnp
from jax.experimental import pallas as pl
from jax.experimental.pallas import tpu as pltpu


# ----------------------------------------------------------------------------
# Wrapper-side data movement (kept in XLA).
# ----------------------------------------------------------------------------
def maxpool_nchw(x, k):
    N, C, H, W = x.shape
    return x.reshape(N, C, H // k, k, W // k, k).max(axis=(3, 5))


def to_cnhw_flat(x_nchw):
    """NCHW -> (C, N, H*W): channels on sublanes, batch*spatial on the lane axis."""
    N, C, H, W = x_nchw.shape
    return jnp.transpose(x_nchw, (1, 0, 2, 3)).reshape(C, N, H * W)


def _upsample_matrix(Hs, Ws, u):
    """0/1 matrix U (Hs*Ws, Hs*u*Ws*u): (y @ U) = flat nearest-upsample per image."""
    Ho, Wo = Hs * u, Ws * u
    o = jnp.arange(Ho * Wo)
    oh, ow = o // Wo, o % Wo
    src = (oh // u) * Ws + (ow // u)
    return (jnp.arange(Hs * Ws)[:, None] == src[None, :]).astype(jnp.float32)


def _edge_masks(Hs, Ws, K, p):
    """(K, Hs*Ws) 0/1 masks: mask[dx, h*Ws+w] = 1 iff 0 <= w + dx - p < Ws.
    Zeroes the columns that wrap across a row boundary in the flat-padded layout."""
    w = jnp.arange(Hs * Ws) % Ws
    rows = [((w >= (p - dx)) & (w < (Ws + p - dx))).astype(jnp.float32)
            for dx in range(K)]
    return jnp.stack(rows, axis=0)


# ----------------------------------------------------------------------------
# Fused kernel: 3 convs -> (optional nearest upsample) -> sum -> BatchNorm.
# One gridless invocation handles the whole batch so BN batch statistics are
# computed inside the same kernel.
# ----------------------------------------------------------------------------
def _make_band_kernel(N, Ho, Wo, K, p, src_cfgs):
    """src_cfgs: tuple of (Hs, Ws, Cin, up) per source; the conv runs at (Hs, Ws)
    and its result is nearest-upsampled by `up` (1 = no upsample).  Source 0 must
    have up == 1 (it initialises the output accumulator)."""
    n_src = len(src_cfgs)
    n_up = sum(1 for c in src_cfgs if c[3] > 1)
    HWd = Ho * Wo

    def kernel(*refs):
        i = 0
        x_refs = refs[i:i + n_src]; i += n_src        # (Cin, N, Hs*Ws)
        w_refs = refs[i:i + n_src]; i += n_src        # (Cout, K*K*Cin) im2col weights
        u_refs = refs[i:i + n_up]; i += n_up          # (Hs*Ws, Ho*Wo)  only up > 1
        m_refs = refs[i:i + n_src]; i += n_src        # (K, Hs*Ws) edge masks
        g_ref, b_ref = refs[i], refs[i + 1]; i += 2   # (Cout, 1)
        o_ref = refs[i]; i += 1                       # (Cout, N*Ho*Wo) f32
        pad_refs = refs[i:i + n_src]; i += n_src      # VMEM (Cin, N, L)
        col_refs = refs[i:i + n_src]                  # VMEM (K*K*Cin, N*Hs*Ws)

        # Map upsample matrices to their sources.
        u_for_src, ui = [], 0
        for (_, _, _, up) in src_cfgs:
            if up > 1:
                u_for_src.append(u_refs[ui]); ui += 1
            else:
                u_for_src.append(None)

        for s, (Hs, Ws, Cin, up) in enumerate(src_cfgs):
            HW = Hs * Ws
            base = p * Ws + p                          # image start in flat padded axis
            L = (Hs + 2 * p) * Ws + 2 * p

            pad = pad_refs[s]
            col = col_refs[s]

            # In-VMEM zero padding: zero only the halo, then drop the whole batch
            # interior in with a single lane-dense store (no HBM round trip).
            pad[:, :, 0:base] = jnp.zeros((Cin, N, base), jnp.float32)
            pad[:, :, base + HW:L] = jnp.zeros((Cin, N, L - base - HW), jnp.float32)
            pad[:, :, base:base + HW] = x_refs[s][...]

            # im2col with the lane axis = batch*spatial.  In the flat "H-padded"
            # layout the (dy, dx) window of image n is the contiguous lane slice
            # pad[:, n, dy*Ws+dx : dy*Ws+dx + HW]; the edge mask (dx != p only)
            # zeroes the columns that wrapped across a row boundary.
            for dx in range(K):
                m = None if dx == p else m_refs[s][dx:dx + 1, :]   # (1, HW), hoisted
                for dy in range(K):
                    r0 = (dy * K + dx) * Cin
                    off = dy * Ws + dx
                    for n in range(N):
                        sl = pad[:, n, off:off + HW]               # (Cin, HW)
                        if m is not None:
                            sl = sl * m
                        col[r0:r0 + Cin, n * HW:(n + 1) * HW] = sl

            # One MXU matmul per source over the WHOLE batch (lane-dense result):
            # (Cout, K*K*Cin) @ (K*K*Cin, N*Hs*Ws) -> (Cout, N*Hs*Ws).
            y = jax.lax.dot_general(
                w_refs[s][...], col[...],
                dimension_numbers=(((1,), (0,)), ((), ())),
                preferred_element_type=jnp.float32)

            if up == 1:
                if s == 0:
                    o_ref[...] = y
                else:
                    o_ref[...] = o_ref[...] + y
            else:
                # Nearest upsample == matmul with a constant 0/1 selection matrix
                # (shared across images), accumulated per image into the output.
                # TODO(synk): at large resolutions replace this U-matmul with a
                # lane broadcast / strided accumulate (U grows as HWs*HWd).
                U = u_for_src[s][...]
                for n in range(N):
                    piece = jax.lax.dot_general(
                        y[:, n * HW:(n + 1) * HW], U,
                        dimension_numbers=(((1,), (0,)), ((), ())),
                        preferred_element_type=jnp.float32)
                    o_ref[:, n * HWd:(n + 1) * HWd] = (
                        o_ref[:, n * HWd:(n + 1) * HWd] + piece)

        # ---- fused BatchNorm2d (training-mode batch statistics), in place ----
        x = o_ref[...]                                 # (Cout, N*Ho*Wo)
        inv_cnt = 1.0 / float(N * HWd)
        mean = jnp.sum(x, axis=1, keepdims=True) * inv_cnt
        var = jnp.sum(x * x, axis=1, keepdims=True) * inv_cnt - mean * mean  # biased
        scale = g_ref[...] * jax.lax.rsqrt(var + 1e-5)
        bias = b_ref[...] - mean * scale
        o_ref[...] = x * scale + bias

    return kernel


def _fused_band(srcs, gamma, beta, out_hw, padding, ksize):
    """srcs: list of (x_src_nchw, w_im2col, up); x_src already at its source
    resolution.  Returns the band output in NCHW."""
    Ho, Wo = out_hw
    K, p = ksize, padding
    N = srcs[0][0].shape[0]
    Cout = srcs[0][1].shape[0]
    assert srcs[0][2] == 1, "source 0 must be at the destination resolution"

    xs, ws, u_mats, masks, cfgs = [], [], [], [], []
    for x_nchw, w, up in srcs:
        _, Cin, Hs, Ws = x_nchw.shape
        assert Hs * up == Ho and Ws * up == Wo
        xs.append(to_cnhw_flat(x_nchw))                # (Cin, N, Hs*Ws)
        ws.append(w)
        masks.append(_edge_masks(Hs, Ws, K, p))
        cfgs.append((Hs, Ws, Cin, up))
        if up > 1:
            u_mats.append(_upsample_matrix(Hs, Ws, up))

    scratch, scratch_bytes = [], 0
    for (Hs, Ws, Cin, up) in cfgs:
        L = (Hs + 2 * p) * Ws + 2 * p
        scratch.append(pltpu.VMEM((Cin, N, L), jnp.float32))
        scratch_bytes += 4 * Cin * N * L
    for (Hs, Ws, Cin, up) in cfgs:
        scratch.append(pltpu.VMEM((K * K * Cin, N * Hs * Ws), jnp.float32))
        scratch_bytes += 4 * K * K * Cin * N * Hs * Ws

    g2 = gamma.reshape(Cout, 1).astype(jnp.float32)
    b2 = beta.reshape(Cout, 1).astype(jnp.float32)
    args = (*xs, *ws, *u_mats, *masks, g2, b2)

    total_bytes = (sum(4 * math.prod(a.shape) for a in args)
                   + 4 * Cout * N * Ho * Wo + scratch_bytes)
    vmem_limit = int(min(max(2 * total_bytes, 16 * 1024 * 1024), 100 * 1024 * 1024))

    kernel = _make_band_kernel(N, Ho, Wo, K, p, tuple(cfgs))
    out = pl.pallas_call(
        kernel,
        out_shape=jax.ShapeDtypeStruct((Cout, N * Ho * Wo), jnp.float32),
        scratch_shapes=scratch,
        compiler_params=pltpu.CompilerParams(vmem_limit_bytes=vmem_limit),
    )(*args)
    # The kernel-side store is lane-dense (Cout, N*Ho*Wo); the reshape/transpose
    # back to NCHW is cheap XLA data movement.
    return jnp.transpose(out.reshape(Cout, N, Ho, Wo), (1, 0, 2, 3))


# ----------------------------------------------------------------------------
# Parameters (deterministic). Conv weights stored in im2col layout
# (Cout, K*K*Cin), row index (dy*K + dx)*Cin + cin  (derived from OIHW).
# ----------------------------------------------------------------------------
def make_params(key, in_channels, out_channels, ksize,
                a_l_in, a_m_in, a_h_in, a_l_out, a_m_out, a_h_out):
    c_in = {"l": int(a_l_in * in_channels),
            "m": int(a_m_in * in_channels),
            "h": int(a_h_in * in_channels)}
    c_out = {"l": int(a_l_out * out_channels),
             "m": int(a_m_out * out_channels),
             "h": int(a_h_out * out_channels)}
    params = {}
    names = [f"{s}2{d}" for s in ("l", "m", "h") for d in ("l", "m", "h")]
    keys = jax.random.split(key, len(names) + 6)
    for i, name in enumerate(names):
        src, dst = name[0], name[2]
        fan_in = c_in[src] * ksize * ksize
        w_oihw = jax.random.normal(
            keys[i], (c_out[dst], c_in[src], ksize, ksize), jnp.float32
        ) * (1.0 / jnp.sqrt(fan_in))
        params[f"w_{name}"] = jnp.transpose(w_oihw, (0, 2, 3, 1)).reshape(
            c_out[dst], ksize * ksize * c_in[src])
    for j, band in enumerate(("h", "m", "l")):
        params[f"gamma_{band}"] = 1.0 + 0.1 * jax.random.normal(
            keys[len(names) + 2 * j], (c_out[band],), jnp.float32)
        params[f"beta_{band}"] = 0.1 * jax.random.normal(
            keys[len(names) + 2 * j + 1], (c_out[band],), jnp.float32)
    return params


# ----------------------------------------------------------------------------
# Conv_BN2 forward (tuple input path). Inputs / outputs are NCHW.
# ----------------------------------------------------------------------------
def conv_bn2_forward(params, x_h, x_m, x_l, padding, ksize=3):
    # The band sums only line up (as in the PyTorch module) for "same" convs.
    assert padding == (ksize - 1) // 2
    N, _, H, W = x_h.shape

    # MaxPool downsampling is pure data movement; kept in XLA.
    x_h_d2 = maxpool_nchw(x_h, 2)
    x_h_d4 = maxpool_nchw(x_h, 4)
    x_m_d2 = maxpool_nchw(x_m, 2)

    # TODO(synk): (a) fuse the three band calls into a single kernel so x_m/x_l are
    # read from HBM once and their im2col is shared; (b) when N*H*W grows, tile
    # batch/spatial with a real grid + two-pass BatchNorm and mark the tile axis
    # "parallel" (dimension_semantics) for v7x dual-TensorCore; (c) cast matmul
    # operands to bf16 once shapes are MXU-bound (re-check validation tolerance).
    y_h = _fused_band([(x_h, params["w_h2h"], 1),
                       (x_m, params["w_m2h"], 2),
                       (x_l, params["w_l2h"], 4)],
                      params["gamma_h"], params["beta_h"], (H, W), padding, ksize)
    y_m = _fused_band([(x_h_d2, params["w_h2m"], 1),
                       (x_m,    params["w_m2m"], 1),
                       (x_l,    params["w_l2m"], 2)],
                      params["gamma_m"], params["beta_m"], (H // 2, W // 2), padding, ksize)
    y_l = _fused_band([(x_h_d4, params["w_h2l"], 1),
                       (x_m_d2, params["w_m2l"], 1),
                       (x_l,    params["w_l2l"], 1)],
                      params["gamma_l"], params["beta_l"], (H // 4, W // 4), padding, ksize)
    return y_h, y_m, y_l


# ----------------------------------------------------------------------------
# Pure-JAX reference of the same module (for validation only).
# ----------------------------------------------------------------------------
def _reference_forward(params, x_h, x_m, x_l, padding, ksize):
    def conv(x, w2):
        Cin, Cout = x.shape[1], w2.shape[0]
        w = jnp.transpose(w2.reshape(Cout, ksize, ksize, Cin), (0, 3, 1, 2))  # OIHW
        return jax.lax.conv_general_dilated(
            x, w, window_strides=(1, 1),
            padding=[(padding, padding), (padding, padding)],
            dimension_numbers=("NCHW", "OIHW", "NCHW"))

    def up(x, k):
        return jnp.repeat(jnp.repeat(x, k, axis=2), k, axis=3)

    def bn(x, g, b):
        mean = x.mean(axis=(0, 2, 3), keepdims=True)
        var = ((x - mean) ** 2).mean(axis=(0, 2, 3), keepdims=True)
        return ((x - mean) * jax.lax.rsqrt(var + 1e-5)
                * g.reshape(1, -1, 1, 1) + b.reshape(1, -1, 1, 1))

    y_h = bn(conv(x_h, params["w_h2h"]) + up(conv(x_m, params["w_m2h"]), 2)
             + up(conv(x_l, params["w_l2h"]), 4), params["gamma_h"], params["beta_h"])
    y_m = bn(conv(maxpool_nchw(x_h, 2), params["w_h2m"]) + conv(x_m, params["w_m2m"])
             + up(conv(x_l, params["w_l2m"]), 2), params["gamma_m"], params["beta_m"])
    y_l = bn(conv(maxpool_nchw(x_h, 4), params["w_h2l"])
             + conv(maxpool_nchw(x_m, 2), params["w_m2l"])
             + conv(x_l, params["w_l2l"]), params["gamma_l"], params["beta_l"])
    return y_h, y_m, y_l


if __name__ == "__main__":
    key = jax.random.PRNGKey(0)
    in_channels, out_channels = 8, 8
    ksize, padding = 3, 1
    a_l, a_m, a_h = 0.25, 0.25, 0.5        # alpha_{l,m,h}_in == alpha_{l,m,h}_out
    N, H, W = 2, 16, 16

    c_l_in = int(a_l * in_channels)        # 2
    c_m_in = int(a_m * in_channels)        # 2
    c_h_in = int(a_h * in_channels)        # 4

    kp, kh, km, kl = jax.random.split(key, 4)
    params = make_params(kp, in_channels, out_channels, ksize,
                         a_l, a_m, a_h, a_l, a_m, a_h)

    # NCHW inputs (PyTorch convention): high / mid / low resolution bands.
    x_h = jax.random.normal(kh, (N, c_h_in, H, W), jnp.float32)
    x_m = jax.random.normal(km, (N, c_m_in, H // 2, W // 2), jnp.float32)
    x_l = jax.random.normal(kl, (N, c_l_in, H // 4, W // 4), jnp.float32)

    fwd = jax.jit(lambda p, a, b, c: conv_bn2_forward(p, a, b, c, padding, ksize))
    y_h, y_m, y_l = fwd(params, x_h, x_m, x_l)
    jax.block_until_ready((y_h, y_m, y_l))

    assert y_h.shape == (N, int(a_h * out_channels), H, W)
    assert y_m.shape == (N, int(a_m * out_channels), H // 2, W // 2)
    assert y_l.shape == (N, int(a_l * out_channels), H // 4, W // 4)

    # Validate against a pure-JAX/XLA reference of the same module.
    r_h, r_m, r_l = _reference_forward(params, x_h, x_m, x_l, padding, ksize)
    for got, ref in ((y_h, r_h), (y_m, r_m), (y_l, r_l)):
        assert float(jnp.max(jnp.abs(got - ref))) < 2e-3

    print("KERNEL_OK")
</pallas_src>

<mosaic_0001>
module attributes {stable_mosaic.version = 11 : i64} {
  func.func @kernel(%arg0: memref<4x2x64xf32, #tpu.memory_space<vmem>>, %arg1: memref<2x2x64xf32, #tpu.memory_space<vmem>>, %arg2: memref<2x2x16xf32, #tpu.memory_space<vmem>>, %arg3: memref<2x36xf32, #tpu.memory_space<vmem>>, %arg4: memref<2x18xf32, #tpu.memory_space<vmem>>, %arg5: memref<2x18xf32, #tpu.memory_space<vmem>>, %arg6: memref<16x64xf32, #tpu.memory_space<vmem>>, %arg7: memref<3x64xf32, #tpu.memory_space<vmem>>, %arg8: memref<3x64xf32, #tpu.memory_space<vmem>>, %arg9: memref<3x16xf32, #tpu.memory_space<vmem>>, %arg10: memref<2x1xf32, #tpu.memory_space<vmem>>, %arg11: memref<2x1xf32, #tpu.memory_space<vmem>>, %arg12: memref<2x128xf32, #tpu.memory_space<vmem>>, %arg13: memref<4x2x82xf32, #tpu.memory_space<vmem>>, %arg14: memref<2x2x82xf32, #tpu.memory_space<vmem>>, %arg15: memref<2x2x26xf32, #tpu.memory_space<vmem>>, %arg16: memref<36x128xf32, #tpu.memory_space<vmem>>, %arg17: memref<18x128xf32, #tpu.memory_space<vmem>>, %arg18: memref<18x32xf32, #tpu.memory_space<vmem>>) attributes {dimension_semantics = [], scalar_prefetch = 0 : i64, scratch_operands = 6 : i64, tpu.core_type = #tpu.core_type<tc>} {
    %cst = arith.constant 0.000000e+00 : f32
    %0 = vector.broadcast %cst : f32 to vector<4x2x9xf32>
    %c0 = arith.constant 0 : index
    %c0_0 = arith.constant 0 : index
    %c0_1 = arith.constant 0 : index
    %1 = vector.load %arg13[%c0, %c0_0, %c0_1] : memref<4x2x82xf32, #tpu.memory_space<vmem>>, vector<4x2x9xf32>
    tpu.vector_store %arg13[%c0, %c0_0, %c0_1], %0 {strides = array<i32>} : memref<4x2x82xf32, #tpu.memory_space<vmem>>, vector<4x2x9xf32>,
    %cst_2 = arith.constant 0.000000e+00 : f32
    %2 = vector.broadcast %cst_2 : f32 to vector<4x2x9xf32>
    %c0_3 = arith.constant 0 : index
    %c0_4 = arith.constant 0 : index
    %c73 = arith.constant 73 : index
    %3 = vector.load %arg13[%c0_3, %c0_4, %c73] : memref<4x2x82xf32, #tpu.memory_space<vmem>>, vector<4x2x9xf32>
    tpu.vector_store %arg13[%c0_3, %c0_4, %c73], %2 {strides = array<i32>} : memref<4x2x82xf32, #tpu.memory_space<vmem>>, vector<4x2x9xf32>,
    %c0_5 = arith.constant 0 : index
    %c0_6 = arith.constant 0 : index
    %c0_7 = arith.constant 0 : index
    %4 = vector.load %arg0[%c0_5, %c0_6, %c0_7] : memref<4x2x64xf32, #tpu.memory_space<vmem>>, vector<4x2x64xf32>
    %c0_8 = arith.constant 0 : index
    %c0_9 = arith.constant 0 : index
    %c9 = arith.constant 9 : index
    %5 = vector.load %arg13[%c0_8, %c0_9, %c9] : memref<4x2x82xf32, #tpu.memory_space<vmem>>, vector<4x2x64xf32>
    tpu.vector_store %arg13[%c0_8, %c0_9, %c9], %4 {strides = array<i32>} : memref<4x2x82xf32, #tpu.memory_space<vmem>>, vector<4x2x64xf32>,
    %c0_10 = arith.constant 0 : index
    %c0_11 = arith.constant 0 : index
    %6 = vector.load %arg7[%c0_10, %c0_11] : memref<3x64xf32, #tpu.memory_space<vmem>>, vector<1x64xf32>
    %c0_12 = arith.constant 0 : index
    %c0_13 = arith.constant 0 : index
    %c0_14 = arith.constant 0 : index
    %7 = vector.load %arg13[%c0_12, %c0_13, %c0_14] : memref<4x2x82xf32, #tpu.memory_space<vmem>>, vector<4x1x64xf32>
    %8 = vector.shape_cast %7 : vector<4x1x64xf32> to vector<4x64xf32>
    %9 = vector.broadcast %6 : vector<1x64xf32> to vector<4x64xf32>
    %10 = arith.mulf %8, %9 : vector<4x64xf32>
    %c0_15 = arith.constant 0 : index
    %c0_16 = arith.constant 0 : index
    %11 = vector.load %arg16[%c0_15, %c0_16] : memref<36x128xf32, #tpu.memory_space<vmem>>, vector<4x64xf32>
    tpu.vector_store %arg16[%c0_15, %c0_16], %10 {strides = array<i32>} : memref<36x128xf32, #tpu.memory_space<vmem>>, vector<4x64xf32>,
    %c0_17 = arith.constant 0 : index
    %c1 = arith.constant 1 : index
    %c0_18 = arith.constant 0 : index
    %12 = vector.load %arg13[%c0_17, %c1, %c0_18] : memref<4x2x82xf32, #tpu.memory_space<vmem>>, vector<4x1x64xf32>
    %13 = vector.shape_cast %12 : vector<4x1x64xf32> to vector<4x64xf32>
    %14 = vector.broadcast %6 : vector<1x64xf32> to vector<4x64xf32>
    %15 = arith.mulf %13, %14 : vector<4x64xf32>
    %c0_19 = arith.constant 0 : index
    %c64 = arith.constant 64 : index
    %16 = vector.load %arg16[%c0_19, %c64] : memref<36x128xf32, #tpu.memory_space<vmem>>, vector<4x64xf32>
    tpu.vector_store %arg16[%c0_19, %c64], %15 {strides = array<i32>} : memref<36x128xf32, #tpu.memory_space<vmem>>, vector<4x64xf32>,
    %c0_20 = arith.constant 0 : index
    %c0_21 = arith.constant 0 : index
    %c8 = arith.constant 8 : index
    %17 = vector.load %arg13[%c0_20, %c0_21, %c8] : memref<4x2x82xf32, #tpu.memory_space<vmem>>, vector<4x1x64xf32>
    %18 = vector.shape_cast %17 : vector<4x1x64xf32> to vector<4x64xf32>
    %19 = vector.broadcast %6 : vector<1x64xf32> to vector<4x64xf32>
    %20 = arith.mulf %18, %19 : vector<4x64xf32>
    %c12 = arith.constant 12 : index
    %c0_22 = arith.constant 0 : index
    %21 = vector.load %arg16[%c12, %c0_22] : memref<36x128xf32, #tpu.memory_space<vmem>>, vector<4x64xf32>
    tpu.vector_store %arg16[%c12, %c0_22], %20 {strides = array<i32>} : memref<36x128xf32, #tpu.memory_space<vmem>>, vector<4x64xf32>,
    %c0_23 = arith.constant 0 : index
    %c1_24 = arith.constant 1 : index
    %c8_25 = arith.constant 8 : index
    %22 = vector.load %arg13[%c0_23, %c1_24, %c8_25] : memref<4x2x82xf32, #tpu.memory_space<vmem>>, vector<4x1x64xf32>
    %23 = vector.shape_cast %22 : vector<4x1x64xf32> to vector<4x64xf32>
    %24 = vector.broadcast %6 : vector<1x64xf32> to vector<4x64xf32>
    %25 = arith.mulf %23, %24 : vector<4x64xf32>
    %c12_26 = arith.constant 12 : index
    %c64_27 = arith.constant 64 : index
    %26 = vector.load %arg16[%c12_26, %c64_27] : memref<36x128xf32, #tpu.memory_space<vmem>>, vector<4x64xf32>
    tpu.vector_store %arg16[%c12_26, %c64_27], %25 {strides = array<i32>} : memref<36x128xf32, #tpu.memory_space<vmem>>, vector<4x64xf32>,
    %c0_28 = arith.constant 0 : index
    %c0_29 = arith.constant 0 : index
    %c16 = arith.constant 16 : index
    %27 = vector.load %arg13[%c0_28, %c0_29, %c16] : memref<4x2x82xf32, #tpu.memory_space<vmem>>, vector<4x1x64xf32>
    %28 = vector.shape_cast %27 : vector<4x1x64xf32> to vector<4x64xf32>
    %29 = vector.broadcast %6 : vector<1x64xf32> to vector<4x64xf32>
    %30 = arith.mulf %28, %29 : vector<4x64xf32>
    %c24 = arith.constant 24 : index
    %c0_30 = arith.constant 0 : index
    %31 = vector.load %arg16[%c24, %c0_30] : memref<36x128xf32, #tpu.memory_space<vmem>>, vector<4x64xf32>
    tpu.vector_store %arg16[%c24, %c0_30], %30 {strides = array<i32>} : memref<36x128xf32, #tpu.memory_space<vmem>>, vector<4x64xf32>,
    %c0_31 = arith.constant 0 : index
    %c1_32 = arith.constant 1 : index
    %c16_33 = arith.constant 16 : index
    %32 = vector.load %arg13[%c0_31, %c1_32, %c16_33] : memref<4x2x82xf32, #tpu.memory_space<vmem>>, vector<4x1x64xf32>
    %33 = vector.shape_cast %32 : vector<4x1x64xf32> to vector<4x64xf32>
    %34 = vector.broadcast %6 : vector<1x64xf32> to vector<4x64xf32>
    %35 = arith.mulf %33, %34 : vector<4x64xf32>
    %c24_34 = arith.constant 24 : index
    %c64_35 = arith.constant 64 : index
    %36 = vector.load %arg16[%c24_34, %c64_35] : memref<36x128xf32, #tpu.memory_space<vmem>>, vector<4x64xf32>
    tpu.vector_store %arg16[%c24_34, %c64_35], %35 {strides = array<i32>} : memref<36x128xf32, #tpu.memory_space<vmem>>, vector<4x64xf32>,
    %c0_36 = arith.constant 0 : index
    %c0_37 = arith.constant 0 : index
    %c1_38 = arith.constant 1 : index
    %37 = vector.load %arg13[%c0_36, %c0_37, %c1_38] : memref<4x2x82xf32, #tpu.memory_space<vmem>>, vector<4x1x64xf32>
    %38 = vector.shape_cast %37 : vector<4x1x64xf32> to vector<4x64xf32>
    %c4 = arith.constant 4 : index
    %c0_39 = arith.constant 0 : index
    %39 = vector.load %arg16[%c4, %c0_39] : memref<36x128xf32, #tpu.memory_space<vmem>>, vector<4x64xf32>
    tpu.vector_store %arg16[%c4, %c0_39], %38 {strides = array<i32>} : memref<36x128xf32, #tpu.memory_space<vmem>>, vector<4x64xf32>,
    %c0_40 = arith.constant 0 : index
    %c1_41 = arith.constant 1 : index
    %c1_42 = arith.constant 1 : index
    %40 = vector.load %arg13[%c0_40, %c1_41, %c1_42] : memref<4x2x82xf32, #tpu.memory_space<vmem>>, vector<4x1x64xf32>
    %41 = vector.shape_cast %40 : vector<4x1x64xf32> to vector<4x64xf32>
    %c4_43 = arith.constant 4 : index
    %c64_44 = arith.constant 64 : index
    %42 = vector.load %arg16[%c4_43, %c64_44] : memref<36x128xf32, #tpu.memory_space<vmem>>, vector<4x64xf32>
    tpu.vector_store %arg16[%c4_43, %c64_44], %41 {strides = array<i32>} : memref<36x128xf32, #tpu.memory_space<vmem>>, vector<4x64xf32>,
    %c0_45 = arith.constant 0 : index
    %c0_46 = arith.constant 0 : index
    %c9_47 = arith.constant 9 : index
    %43 = vector.load %arg13[%c0_45, %c0_46, %c9_47] : memref<4x2x82xf32, #tpu.memory_space<vmem>>, vector<4x1x64xf32>
    %44 = vector.shape_cast %43 : vector<4x1x64xf32> to vector<4x64xf32>
    %c16_48 = arith.constant 16 : index
    %c0_49 = arith.constant 0 : index
    %45 = vector.load %arg16[%c16_48, %c0_49] : memref<36x128xf32, #tpu.memory_space<vmem>>, vector<4x64xf32>
    tpu.vector_store %arg16[%c16_48, %c0_49], %44 {strides = array<i32>} : memref<36x128xf32, #tpu.memory_space<vmem>>, vector<4x64xf32>,
    %c0_50 = arith.constant 0 : index
    %c1_51 = arith.constant 1 : index
    %c9_52 = arith.constant 9 : index
    %46 = vector.load %arg13[%c0_50, %c1_51, %c9_52] : memref<4x2x82xf32, #tpu.memory_space<vmem>>, vector<4x1x64xf32>
    %47 = vector.shape_cast %46 : vector<4x1x64xf32> to vector<4x64xf32>
    %c16_53 = arith.constant 16 : index
    %c64_54 = arith.constant 64 : index
    %48 = vector.load %arg16[%c16_53, %c64_54] : memref<36x128xf32, #tpu.memory_space<vmem>>, vector<4x64xf32>
    tpu.vector_store %arg16[%c16_53, %c64_54], %47 {strides = array<i32>} : memref<36x128xf32, #tpu.memory_space<vmem>>, vector<4x64xf32>,
    %c0_55 = arith.constant 0 : index
    %c0_56 = arith.constant 0 : index
    %c17 = arith.constant 17 : index
    %49 = vector.load %arg13[%c0_55, %c0_56, %c17] : memref<4x2x82xf32, #tpu.memory_space<vmem>>, vector<4x1x64xf32>
    %50 = vector.shape_cast %49 : vector<4x1x64xf32> to vector<4x64xf32>
    %c28 = arith.constant 28 : index
    %c0_57 = arith.constant 0 : index
    %51 = vector.load %arg16[%c28, %c0_57] : memref<36x128xf32, #tpu.memory_space<vmem>>, vector<4x64xf32>
    tpu.vector_store %arg16[%c28, %c0_57], %50 {strides = array<i32>} : memref<36x128xf32, #tpu.memory_space<vmem>>, vector<4x64xf32>,
    %c0_58 = arith.constant 0 : index
    %c1_59 = arith.constant 1 : index
    %c17_60 = arith.constant 17 : index
    %52 = vector.load %arg13[%c0_58, %c1_59, %c17_60] : memref<4x2x82xf32, #tpu.memory_space<vmem>>, vector<4x1x64xf32>
    %53 = vector.shape_cast %52 : vector<4x1x64xf32> to vector<4x64xf32>
    %c28_61 = arith.constant 28 : index
    %c64_62 = arith.constant 64 : index
    %54 = vector.load %arg16[%c28_61, %c64_62] : memref<36x128xf32, #tpu.memory_space<vmem>>, vector<4x64xf32>
    tpu.vector_store %arg16[%c28_61, %c64_62], %53 {strides = array<i32>} : memref<36x128xf32, #tpu.memory_space<vmem>>, vector<4x64xf32>,
    %c2 = arith.constant 2 : index
    %c0_63 = arith.constant 0 : index
    %55 = vector.load %arg7[%c2, %c0_63] : memref<3x64xf32, #tpu.memory_space<vmem>>, vector<1x64xf32>
    %c0_64 = arith.constant 0 : index
    %c0_65 = arith.constant 0 : index
    %c2_66 = arith.constant 2 : index
    %56 = vector.load %arg13[%c0_64, %c0_65, %c2_66] : memref<4x2x82xf32, #tpu.memory_space<vmem>>, vector<4x1x64xf32>
    %57 = vector.shape_cast %56 : vector<4x1x64xf32> to vector<4x64xf32>
    %58 = vector.broadcast %55 : vector<1x64xf32> to vector<4x64xf32>
    %59 = arith.mulf %57, %58 : vector<4x64xf32>
    %c8_67 = arith.constant 8 : index
    %c0_68 = arith.constant 0 : index
    %60 = vector.load %arg16[%c8_67, %c0_68] : memref<36x128xf32, #tpu.memory_space<vmem>>, vector<4x64xf32>
    tpu.vector_store %arg16[%c8_67, %c0_68], %59 {strides = array<i32>} : memref<36x128xf32, #tpu.memory_space<vmem>>, vector<4x64xf32>,
    %c0_69 = arith.constant 0 : index
    %c1_70 = arith.constant 1 : index
    %c2_71 = arith.constant 2 : index
    %61 = vector.load %arg13[%c0_69, %c1_70, %c2_71] : memref<4x2x82xf32, #tpu.memory_space<vmem>>, vector<4x1x64xf32>
    %62 = vector.shape_cast %61 : vector<4x1x64xf32> to vector<4x64xf32>
    %63 = vector.broadcast %55 : vector<1x64xf32> to vector<4x64xf32>
    %64 = arith.mulf %62, %63 : vector<4x64xf32>
    %c8_72 = arith.constant 8 : index
    %c64_73 = arith.constant 64 : index
    %65 = vector.load %arg16[%c8_72, %c64_73] : memref<36x128xf32, #tpu.memory_space<vmem>>, vector<4x64xf32>
    tpu.vector_store %arg16[%c8_72, %c64_73], %64 {strides = array<i32>} : memref<36x128xf32, #tpu.memory_space<vmem>>, vector<4x64xf32>,
    %c0_74 = arith.constant 0 : index
    %c0_75 = arith.constant 0 : index
    %c10 = arith.constant 10 : index
    %66 = vector.load %arg13[%c0_74, %c0_75, %c10] : memref<4x2x82xf32, #tpu.memory_space<vmem>>, vector<4x1x64xf32>
    %67 = vector.shape_cast %66 : vector<4x1x64xf32> to vector<4x64xf32>
    %68 = vector.broadcast %55 : vector<1x64xf32> to vector<4x64xf32>
    %69 = arith.mulf %67, %68 : vector<4x64xf32>
    %c20 = arith.constant 20 : index
    %c0_76 = arith.constant 0 : index
    %70 = vector.load %arg16[%c20, %c0_76] : memref<36x128xf32, #tpu.memory_space<vmem>>, vector<4x64xf32>
    tpu.vector_store %arg16[%c20, %c0_76], %69 {strides = array<i32>} : memref<36x128xf32, #tpu.memory_space<vmem>>, vector<4x64xf32>,
    %c0_77 = arith.constant 0 : index
    %c1_78 = arith.constant 1 : index
    %c10_79 = arith.constant 10 : index
    %71 = vector.load %arg13[%c0_77, %c1_78, %c10_79] : memref<4x2x82xf32, #tpu.memory_space<vmem>>, vector<4x1x64xf32>
    %72 = vector.shape_cast %71 : vector<4x1x64xf32> to vector<4x64xf32>
    %73 = vector.broadcast %55 : vector<1x64xf32> to vector<4x64xf32>
    %74 = arith.mulf %72, %73 : vector<4x64xf32>
    %c20_80 = arith.constant 20 : index
    %c64_81 = arith.constant 64 : index
    %75 = vector.load %arg16[%c20_80, %c64_81] : memref<36x128xf32, #tpu.memory_space<vmem>>, vector<4x64xf32>
    tpu.vector_store %arg16[%c20_80, %c64_81], %74 {strides = array<i32>} : memref<36x128xf32, #tpu.memory_space<vmem>>, vector<4x64xf32>,
    %c0_82 = arith.constant 0 : index
    %c0_83 = arith.constant 0 : index
    %c18 = arith.constant 18 : index
    %76 = vector.load %arg13[%c0_82, %c0_83, %c18] : memref<4x2x82xf32, #tpu.memory_space<vmem>>, vector<4x1x64xf32>
    %77 = vector.shape_cast %76 : vector<4x1x64xf32> to vector<4x64xf32>
    %78 = vector.broadcast %55 : vector<1x64xf32> to vector<4x64xf32>
    %79 = arith.mulf %77, %78 : vector<4x64xf32>
    %c32 = arith.constant 32 : index
    %c0_84 = arith.constant 0 : index
    %80 = vector.load %arg16[%c32, %c0_84] : memref<36x128xf32, #tpu.memory_space<vmem>>, vector<4x64xf32>
    tpu.vector_store %arg16[%c32, %c0_84], %79 {strides = array<i32>} : memref<36x128xf32, #tpu.memory_space<vmem>>, vector<4x64xf32>,
    %c0_85 = arith.constant 0 : index
    %c1_86 = arith.constant 1 : index
    %c18_87 = arith.constant 18 : index
    %81 = vector.load %arg13[%c0_85, %c1_86, %c18_87] : memref<4x2x82xf32, #tpu.memory_space<vmem>>, vector<4x1x64xf32>
    %82 = vector.shape_cast %81 : vector<4x1x64xf32> to vector<4x64xf32>
    %83 = vector.broadcast %55 : vector<1x64xf32> to vector<4x64xf32>
    %84 = arith.mulf %82, %83 : vector<4x64xf32>
    %c32_88 = arith.constant 32 : index
    %c64_89 = arith.constant 64 : index
    %85 = vector.load %arg16[%c32_88, %c64_89] : memref<36x128xf32, #tpu.memory_space<vmem>>, vector<4x64xf32>
    tpu.vector_store %arg16[%c32_88, %c64_89], %84 {strides = array<i32>} : memref<36x128xf32, #tpu.memory_space<vmem>>, vector<4x64xf32>,
    %c0_90 = arith.constant 0 : index
    %c0_91 = arith.constant 0 : index
    %86 = vector.load %arg3[%c0_90, %c0_91] : memref<2x36xf32, #tpu.memory_space<vmem>>, vector<2x36xf32>
    %c0_92 = arith.constant 0 : index
    %c0_93 = arith.constant 0 : index
    %87 = vector.load %arg16[%c0_92, %c0_93] : memref<36x128xf32, #tpu.memory_space<vmem>>, vector<36x128xf32>
    %cst_94 = arith.constant dense<0.000000e+00> : vector<2x128xf32>
    %88 = tpu.matmul %86, %87, %cst_94 {dimension_numbers = #tpu.dot_dimension_numbers<[1], [0], [0], [1], [0, 0, 1, 1], [], []>} : vector<2x36xf32>, vector<36x128xf32>, vector<2x128xf32> -> vector<2x128xf32>
    %c0_95 = arith.constant 0 : index
    %c0_96 = arith.constant 0 : index
    %89 = vector.load %arg12[%c0_95, %c0_96] : memref<2x128xf32, #tpu.memory_space<vmem>>, vector<2x128xf32>
    tpu.vector_store %arg12[%c0_95, %c0_96], %88 {strides = array<i32>} : memref<2x128xf32, #tpu.memory_space<vmem>>, vector<2x128xf32>,
    %cst_97 = arith.constant 0.000000e+00 : f32
    %90 = vector.broadcast %cst_97 : f32 to vector<2x2x9xf32>
    %c0_98 = arith.constant 0 : index
    %c0_99 = arith.constant 0 : index
    %c0_100 = arith.constant 0 : index
    %91 = vector.load %arg14[%c0_98, %c0_99, %c0_100] : memref<2x2x82xf32, #tpu.memory_space<vmem>>, vector<2x2x9xf32>
    tpu.vector_store %arg14[%c0_98, %c0_99, %c0_100], %90 {strides = array<i32>} : memref<2x2x82xf32, #tpu.memory_space<vmem>>, vector<2x2x9xf32>,
    %cst_101 = arith.constant 0.000000e+00 : f32
    %92 = vector.broadcast %cst_101 : f32 to vector<2x2x9xf32>
    %c0_102 = arith.constant 0 : index
    %c0_103 = arith.constant 0 : index
    %c73_104 = arith.constant 73 : index
    %93 = vector.load %arg14[%c0_102, %c0_103, %c73_104] : memref<2x2x82xf32, #tpu.memory_space<vmem>>, vector<2x2x9xf32>
    tpu.vector_store %arg14[%c0_102, %c0_103, %c73_104], %92 {strides = array<i32>} : memref<2x2x82xf32, #tpu.memory_space<vmem>>, vector<2x2x9xf32>,
    %c0_105 = arith.constant 0 : index
    %c0_106 = arith.constant 0 : index
    %c0_107 = arith.constant 0 : index
    %94 = vector.load %arg1[%c0_105, %c0_106, %c0_107] : memref<2x2x64xf32, #tpu.memory_space<vmem>>, vector<2x2x64xf32>
    %c0_108 = arith.constant 0 : index
    %c0_109 = arith.constant 0 : index
    %c9_110 = arith.constant 9 : index
    %95 = vector.load %arg14[%c0_108, %c0_109, %c9_110] : memref<2x2x82xf32, #tpu.memory_space<vmem>>, vector<2x2x64xf32>
    tpu.vector_store %arg14[%c0_108, %c0_109, %c9_110], %94 {strides = array<i32>} : memref<2x2x82xf32, #tpu.memory_space<vmem>>, vector<2x2x64xf32>,
    %c0_111 = arith.constant 0 : index
    %c0_112 = arith.constant 0 : index
    %96 = vector.load %arg8[%c0_111, %c0_112] : memref<3x64xf32, #tpu.memory_space<vmem>>, vector<1x64xf32>
    %c0_113 = arith.constant 0 : index
    %c0_114 = arith.constant 0 : index
    %c0_115 = arith.constant 0 : index
    %97 = vector.load %arg14[%c0_113, %c0_114, %c0_115] : memref<2x2x82xf32, #tpu.memory_space<vmem>>, vector<2x1x64xf32>
    %98 = vector.shape_cast %97 : vector<2x1x64xf32> to vector<2x64xf32>
    %99 = vector.broadcast %96 : vector<1x64xf32> to vector<2x64xf32>
    %100 = arith.mulf %98, %99 : vector<2x64xf32>
    %c0_116 = arith.constant 0 : index
    %c0_117 = arith.constant 0 : index
    %101 = vector.load %arg17[%c0_116, %c0_117] : memref<18x128xf32, #tpu.memory_space<vmem>>, vector<2x64xf32>
    tpu.vector_store %arg17[%c0_116, %c0_117], %100 {strides = array<i32>} : memref<18x128xf32, #tpu.memory_space<vmem>>, vector<2x64xf32>,
    %c0_118 = arith.constant 0 : index
    %c1_119 = arith.constant 1 : index
    %c0_120 = arith.constant 0 : index
    %102 = vector.load %arg14[%c0_118, %c1_119, %c0_120] : memref<2x2x82xf32, #tpu.memory_space<vmem>>, vector<2x1x64xf32>
    %103 = vector.shape_cast %102 : vector<2x1x64xf32> to vector<2x64xf32>
    %104 = vector.broadcast %96 : vector<1x64xf32> to vector<2x64xf32>
    %105 = arith.mulf %103, %104 : vector<2x64xf32>
    %c0_121 = arith.constant 0 : index
    %c64_122 = arith.constant 64 : index
    %106 = vector.load %arg17[%c0_121, %c64_122] : memref<18x128xf32, #tpu.memory_space<vmem>>, vector<2x64xf32>
    tpu.vector_store %arg17[%c0_121, %c64_122], %105 {strides = array<i32>} : memref<18x128xf32, #tpu.memory_space<vmem>>, vector<2x64xf32>,
    %c0_123 = arith.constant 0 : index
    %c0_124 = arith.constant 0 : index
    %c8_125 = arith.constant 8 : index
    %107 = vector.load %arg14[%c0_123, %c0_124, %c8_125] : memref<2x2x82xf32, #tpu.memory_space<vmem>>, vector<2x1x64xf32>
    %108 = vector.shape_cast %107 : vector<2x1x64xf32> to vector<2x64xf32>
    %109 = vector.broadcast %96 : vector<1x64xf32> to vector<2x64xf32>
    %110 = arith.mulf %108, %109 : vector<2x64xf32>
    %c6 = arith.constant 6 : index
    %c0_126 = arith.constant 0 : index
    %111 = vector.load %arg17[%c6, %c0_126] : memref<18x128xf32, #tpu.memory_space<vmem>>, vector<2x64xf32>
    tpu.vector_store %arg17[%c6, %c0_126], %110 {strides = array<i32>} : memref<18x128xf32, #tpu.memory_space<vmem>>, vector<2x64xf32>,
    %c0_127 = arith.constant 0 : index
    %c1_128 = arith.constant 1 : index
    %c8_129 = arith.constant 8 : index
    %112 = vector.load %arg14[%c0_127, %c1_128, %c8_129] : memref<2x2x82xf32, #tpu.memory_space<vmem>>, vector<2x1x64xf32>
    %113 = vector.shape_cast %112 : vector<2x1x64xf32> to vector<2x64xf32>
    %114 = vector.broadcast %96 : vector<1x64xf32> to vector<2x64xf32>
    %115 = arith.mulf %113, %114 : vector<2x64xf32>
    %c6_130 = arith.constant 6 : index
    %c64_131 = arith.constant 64 : index
    %116 = vector.load %arg17[%c6_130, %c64_131] : memref<18x128xf32, #tpu.memory_space<vmem>>, vector<2x64xf32>
    tpu.vector_store %arg17[%c6_130, %c64_131], %115 {strides = array<i32>} : memref<18x128xf32, #tpu.memory_space<vmem>>, vector<2x64xf32>,
    %c0_132 = arith.constant 0 : index
    %c0_133 = arith.constant 0 : index
    %c16_134 = arith.constant 16 : index
    %117 = vector.load %arg14[%c0_132, %c0_133, %c16_134] : memref<2x2x82xf32, #tpu.memory_space<vmem>>, vector<2x1x64xf32>
    %118 = vector.shape_cast %117 : vector<2x1x64xf32> to vector<2x64xf32>
    %119 = vector.broadcast %96 : vector<1x64xf32> to vector<2x64xf32>
    %120 = arith.mulf %118, %119 : vector<2x64xf32>
    %c12_135 = arith.constant 12 : index
    %c0_136 = arith.constant 0 : index
    %121 = vector.load %arg17[%c12_135, %c0_136] : memref<18x128xf32, #tpu.memory_space<vmem>>, vector<2x64xf32>
    tpu.vector_store %arg17[%c12_135, %c0_136], %120 {strides = array<i32>} : memref<18x128xf32, #tpu.memory_space<vmem>>, vector<2x64xf32>,
    %c0_137 = arith.constant 0 : index
    %c1_138 = arith.constant 1 : index
    %c16_139 = arith.constant 16 : index
    %122 = vector.load %arg14[%c0_137, %c1_138, %c16_139] : memref<2x2x82xf32, #tpu.memory_space<vmem>>, vector<2x1x64xf32>
    %123 = vector.shape_cast %122 : vector<2x1x64xf32> to vector<2x64xf32>
    %124 = vector.broadcast %96 : vector<1x64xf32> to vector<2x64xf32>
    %125 = arith.mulf %123, %124 : vector<2x64xf32>
    %c12_140 = arith.constant 12 : index
    %c64_141 = arith.constant 64 : index
    %126 = vector.load %arg17[%c12_140, %c64_141] : memref<18x128xf32, #tpu.memory_space<vmem>>, vector<2x64xf32>
    tpu.vector_store %arg17[%c12_140, %c64_141], %125 {strides = array<i32>} : memref<18x128xf32, #tpu.memory_space<vmem>>, vector<2x64xf32>,
    %c0_142 = arith.constant 0 : index
    %c0_143 = arith.constant 0 : index
    %c1_144 = arith.constant 1 : index
    %127 = vector.load %arg14[%c0_142, %c0_143, %c1_144] : memref<2x2x82xf32, #tpu.memory_space<vmem>>, vector<2x1x64xf32>
    %128 = vector.shape_cast %127 : vector<2x1x64xf32> to vector<2x64xf32>
    %c2_145 = arith.constant 2 : index
    %c0_146 = arith.constant 0 : index
    %129 = vector.load %arg17[%c2_145, %c0_146] : memref<18x128xf32, #tpu.memory_space<vmem>>, vector<2x64xf32>
    tpu.vector_store %arg17[%c2_145, %c0_146], %128 {strides = array<i32>} : memref<18x128xf32, #tpu.memory_space<vmem>>, vector<2x64xf32>,
    %c0_147 = arith.constant 0 : index
    %c1_148 = arith.constant 1 : index
    %c1_149 = arith.constant 1 : index
    %130 = vector.load %arg14[%c0_147, %c1_148, %c1_149] : memref<2x2x82xf32, #tpu.memory_space<vmem>>, vector<2x1x64xf32>
    %131 = vector.shape_cast %130 : vector<2x1x64xf32> to vector<2x64xf32>
    %c2_150 = arith.constant 2 : index
    %c64_151 = arith.constant 64 : index
    %132 = vector.load %arg17[%c2_150, %c64_151] : memref<18x128xf32, #tpu.memory_space<vmem>>, vector<2x64xf32>
    tpu.vector_store %arg17[%c2_150, %c64_151], %131 {strides = array<i32>} : memref<18x128xf32, #tpu.memory_space<vmem>>, vector<2x64xf32>,
    %c0_152 = arith.constant 0 : index
    %c0_153 = arith.constant 0 : index
    %c9_154 = arith.constant 9 : index
    %133 = vector.load %arg14[%c0_152, %c0_153, %c9_154] : memref<2x2x82xf32, #tpu.memory_space<vmem>>, vector<2x1x64xf32>
    %134 = vector.shape_cast %133 : vector<2x1x64xf32> to vector<2x64xf32>
    %c8_155 = arith.constant 8 : index
    %c0_156 = arith.constant 0 : index
    %135 = vector.load %arg17[%c8_155, %c0_156] : memref<18x128xf32, #tpu.memory_space<vmem>>, vector<2x64xf32>
    tpu.vector_store %arg17[%c8_155, %c0_156], %134 {strides = array<i32>} : memref<18x128xf32, #tpu.memory_space<vmem>>, vector<2x64xf32>,
    %c0_157 = arith.constant 0 : index
    %c1_158 = arith.constant 1 : index
    %c9_159 = arith.constant 9 : index
    %136 = vector.load %arg14[%c0_157, %c1_158, %c9_159] : memref<2x2x82xf32, #tpu.memory_space<vmem>>, vector<2x1x64xf32>
    %137 = vector.shape_cast %136 : vector<2x1x64xf32> to vector<2x64xf32>
    %c8_160 = arith.constant 8 : index
    %c64_161 = arith.constant 64 : index
    %138 = vector.load %arg17[%c8_160, %c64_161] : memref<18x128xf32, #tpu.memory_space<vmem>>, vector<2x64xf32>
    tpu.vector_store %arg17[%c8_160, %c64_161], %137 {strides = array<i32>} : memref<18x128xf32, #tpu.memory_space<vmem>>, vector<2x64xf32>,
    %c0_162 = arith.constant 0 : index
    %c0_163 = arith.constant 0 : index
    %c17_164 = arith.constant 17 : index
    %139 = vector.load %arg14[%c0_162, %c0_163, %c17_164] : memref<2x2x82xf32, #tpu.memory_space<vmem>>, vector<2x1x64xf32>
    %140 = vector.shape_cast %139 : vector<2x1x64xf32> to vector<2x64xf32>
    %c14 = arith.constant 14 : index
    %c0_165 = arith.constant 0 : index
    %141 = vector.load %arg17[%c14, %c0_165] : memref<18x128xf32, #tpu.memory_space<vmem>>, vector<2x64xf32>
    tpu.vector_store %arg17[%c14, %c0_165], %140 {strides = array<i32>} : memref<18x128xf32, #tpu.memory_space<vmem>>, vector<2x64xf32>,
    %c0_166 = arith.constant 0 : index
    %c1_167 = arith.constant 1 : index
    %c17_168 = arith.constant 17 : index
    %142 = vector.load %arg14[%c0_166, %c1_167, %c17_168] : memref<2x2x82xf32, #tpu.memory_space<vmem>>, vector<2x1x64xf32>
    %143 = vector.shape_cast %142 : vector<2x1x64xf32> to vector<2x64xf32>
    %c14_169 = arith.constant 14 : index
    %c64_170 = arith.constant 64 : index
    %144 = vector.load %arg17[%c14_169, %c64_170] : memref<18x128xf32, #tpu.memory_space<vmem>>, vector<2x64xf32>
    tpu.vector_store %arg17[%c14_169, %c64_170], %143 {strides = array<i32>} : memref<18x128xf32, #tpu.memory_space<vmem>>, vector<2x64xf32>,
    %c2_171 = arith.constant 2 : index
    %c0_172 = arith.constant 0 : index
    %145 = vector.load %arg8[%c2_171, %c0_172] : memref<3x64xf32, #tpu.memory_space<vmem>>, vector<1x64xf32>
    %c0_173 = arith.constant 0 : index
    %c0_174 = arith.constant 0 : index
    %c2_175 = arith.constant 2 : index
    %146 = vector.load %arg14[%c0_173, %c0_174, %c2_175] : memref<2x2x82xf32, #tpu.memory_space<vmem>>, vector<2x1x64xf32>
    %147 = vector.shape_cast %146 : vector<2x1x64xf32> to vector<2x64xf32>
    %148 = vector.broadcast %145 : vector<1x64xf32> to vector<2x64xf32>
    %149 = arith.mulf %147, %148 : vector<2x64xf32>
    %c4_176 = arith.constant 4 : index
    %c0_177 = arith.constant 0 : index
    %150 = vector.load %arg17[%c4_176, %c0_177] : memref<18x128xf32, #tpu.memory_space<vmem>>, vector<2x64xf32>
    tpu.vector_store %arg17[%c4_176, %c0_177], %149 {strides = array<i32>} : memref<18x128xf32, #tpu.memory_space<vmem>>, vector<2x64xf32>,
    %c0_178 = arith.constant 0 : index
    %c1_179 = arith.constant 1 : index
    %c2_180 = arith.constant 2 : index
    %151 = vector.load %arg14[%c0_178, %c1_179, %c2_180] : memref<2x2x82xf32, #tpu.memory_space<vmem>>, vector<2x1x64xf32>
    %152 = vector.shape_cast %151 : vector<2x1x64xf32> to vector<2x64xf32>
    %153 = vector.broadcast %145 : vector<1x64xf32> to vector<2x64xf32>
    %154 = arith.mulf %152, %153 : vector<2x64xf32>
    %c4_181 = arith.constant 4 : index
    %c64_182 = arith.constant 64 : index
    %155 = vector.load %arg17[%c4_181, %c64_182] : memref<18x128xf32, #tpu.memory_space<vmem>>, vector<2x64xf32>
    tpu.vector_store %arg17[%c4_181, %c64_182], %154 {strides = array<i32>} : memref<18x128xf32, #tpu.memory_space<vmem>>, vector<2x64xf32>,
    %c0_183 = arith.constant 0 : index
    %c0_184 = arith.constant 0 : index
    %c10_185 = arith.constant 10 : index
    %156 = vector.load %arg14[%c0_183, %c0_184, %c10_185] : memref<2x2x82xf32, #tpu.memory_space<vmem>>, vector<2x1x64xf32>
    %157 = vector.shape_cast %156 : vector<2x1x64xf32> to vector<2x64xf32>
    %158 = vector.broadcast %145 : vector<1x64xf32> to vector<2x64xf32>
    %159 = arith.mulf %157, %158 : vector<2x64xf32>
    %c10_186 = arith.constant 10 : index
    %c0_187 = arith.constant 0 : index
    %160 = vector.load %arg17[%c10_186, %c0_187] : memref<18x128xf32, #tpu.memory_space<vmem>>, vector<2x64xf32>
    tpu.vector_store %arg17[%c10_186, %c0_187], %159 {strides = array<i32>} : memref<18x128xf32, #tpu.memory_space<vmem>>, vector<2x64xf32>,
    %c0_188 = arith.constant 0 : index
    %c1_189 = arith.constant 1 : index
    %c10_190 = arith.constant 10 : index
    %161 = vector.load %arg14[%c0_188, %c1_189, %c10_190] : memref<2x2x82xf32, #tpu.memory_space<vmem>>, vector<2x1x64xf32>
    %162 = vector.shape_cast %161 : vector<2x1x64xf32> to vector<2x64xf32>
    %163 = vector.broadcast %145 : vector<1x64xf32> to vector<2x64xf32>
    %164 = arith.mulf %162, %163 : vector<2x64xf32>
    %c10_191 = arith.constant 10 : index
    %c64_192 = arith.constant 64 : index
    %165 = vector.load %arg17[%c10_191, %c64_192] : memref<18x128xf32, #tpu.memory_space<vmem>>, vector<2x64xf32>
    tpu.vector_store %arg17[%c10_191, %c64_192], %164 {strides = array<i32>} : memref<18x128xf32, #tpu.memory_space<vmem>>, vector<2x64xf32>,
    %c0_193 = arith.constant 0 : index
    %c0_194 = arith.constant 0 : index
    %c18_195 = arith.constant 18 : index
    %166 = vector.load %arg14[%c0_193, %c0_194, %c18_195] : memref<2x2x82xf32, #tpu.memory_space<vmem>>, vector<2x1x64xf32>
    %167 = vector.shape_cast %166 : vector<2x1x64xf32> to vector<2x64xf32>
    %168 = vector.broadcast %145 : vector<1x64xf32> to vector<2x64xf32>
    %169 = arith.mulf %167, %168 : vector<2x64xf32>
    %c16_196 = arith.constant 16 : index
    %c0_197 = arith.constant 0 : index
    %170 = vector.load %arg17[%c16_196, %c0_197] : memref<18x128xf32, #tpu.memory_space<vmem>>, vector<2x64xf32>
    tpu.vector_store %arg17[%c16_196, %c0_197], %169 {strides = array<i32>} : memref<18x128xf32, #tpu.memory_space<vmem>>, vector<2x64xf32>,
    %c0_198 = arith.constant 0 : index
    %c1_199 = arith.constant 1 : index
    %c18_200 = arith.constant 18 : index
    %171 = vector.load %arg14[%c0_198, %c1_199, %c18_200] : memref<2x2x82xf32, #tpu.memory_space<vmem>>, vector<2x1x64xf32>
    %172 = vector.shape_cast %171 : vector<2x1x64xf32> to vector<2x64xf32>
    %173 = vector.broadcast %145 : vector<1x64xf32> to vector<2x64xf32>
    %174 = arith.mulf %172, %173 : vector<2x64xf32>
    %c16_201 = arith.constant 16 : index
    %c64_202 = arith.constant 64 : index
    %175 = vector.load %arg17[%c16_201, %c64_202] : memref<18x128xf32, #tpu.memory_space<vmem>>, vector<2x64xf32>
    tpu.vector_store %arg17[%c16_201, %c64_202], %174 {strides = array<i32>} : memref<18x128xf32, #tpu.memory_space<vmem>>, vector<2x64xf32>,
    %c0_203 = arith.constant 0 : index
    %c0_204 = arith.constant 0 : index
    %176 = vector.load %arg4[%c0_203, %c0_204] : memref<2x18xf32, #tpu.memory_space<vmem>>, vector<2x18xf32>
    %c0_205 = arith.constant 0 : index
    %c0_206 = arith.constant 0 : index
    %177 = vector.load %arg17[%c0_205, %c0_206] : memref<18x128xf32, #tpu.memory_space<vmem>>, vector<18x128xf32>
    %cst_207 = arith.constant dense<0.000000e+00> : vector<2x128xf32>
    %178 = tpu.matmul %176, %177, %cst_207 {dimension_numbers = #tpu.dot_dimension_numbers<[1], [0], [0], [1], [0, 0, 1, 1], [], []>} : vector<2x18xf32>, vector<18x128xf32>, vector<2x128xf32> -> vector<2x128xf32>
    %c0_208 = arith.constant 0 : index
    %c0_209 = arith.constant 0 : index
    %179 = vector.load %arg12[%c0_208, %c0_209] : memref<2x128xf32, #tpu.memory_space<vmem>>, vector<2x128xf32>
    %180 = arith.addf %179, %178 : vector<2x128xf32>
    %c0_210 = arith.constant 0 : index
    %c0_211 = arith.constant 0 : index
    %181 = vector.load %arg12[%c0_210, %c0_211] : memref<2x128xf32, #tpu.memory_space<vmem>>, vector<2x128xf32>
    tpu.vector_store %arg12[%c0_210, %c0_211], %180 {strides = array<i32>} : memref<2x128xf32, #tpu.memory_space<vmem>>, vector<2x128xf32>,
    %cst_212 = arith.constant 0.000000e+00 : f32
    %182 = vector.broadcast %cst_212 : f32 to vector<2x2x5xf32>
    %c0_213 = arith.constant 0 : index
    %c0_214 = arith.constant 0 : index
    %c0_215 = arith.constant 0 : index
    %183 = vector.load %arg15[%c0_213, %c0_214, %c0_215] : memref<2x2x26xf32, #tpu.memory_space<vmem>>, vector<2x2x5xf32>
    tpu.vector_store %arg15[%c0_213, %c0_214, %c0_215], %182 {strides = array<i32>} : memref<2x2x26xf32, #tpu.memory_space<vmem>>, vector<2x2x5xf32>,
    %cst_216 = arith.constant 0.000000e+00 : f32
    %184 = vector.broadcast %cst_216 : f32 to vector<2x2x5xf32>
    %c0_217 = arith.constant 0 : index
    %c0_218 = arith.constant 0 : index
    %c21 = arith.constant 21 : index
    %185 = vector.load %arg15[%c0_217, %c0_218, %c21] : memref<2x2x26xf32, #tpu.memory_space<vmem>>, vector<2x2x5xf32>
    tpu.vector_store %arg15[%c0_217, %c0_218, %c21], %184 {strides = array<i32>} : memref<2x2x26xf32, #tpu.memory_space<vmem>>, vector<2x2x5xf32>,
    %c0_219 = arith.constant 0 : index
    %c0_220 = arith.constant 0 : index
    %c0_221 = arith.constant 0 : index
    %186 = vector.load %arg2[%c0_219, %c0_220, %c0_221] : memref<2x2x16xf32, #tpu.memory_space<vmem>>, vector<2x2x16xf32>
    %c0_222 = arith.constant 0 : index
    %c0_223 = arith.constant 0 : index
    %c5 = arith.constant 5 : index
    %187 = vector.load %arg15[%c0_222, %c0_223, %c5] : memref<2x2x26xf32, #tpu.memory_space<vmem>>, vector<2x2x16xf32>
    tpu.vector_store %arg15[%c0_222, %c0_223, %c5], %186 {strides = array<i32>} : memref<2x2x26xf32, #tpu.memory_space<vmem>>, vector<2x2x16xf32>,
    %c0_224 = arith.constant 0 : index
    %c0_225 = arith.constant 0 : index
    %188 = vector.load %arg9[%c0_224, %c0_225] : memref<3x16xf32, #tpu.memory_space<vmem>>, vector<1x16xf32>
    %c0_226 = arith.constant 0 : index
    %c0_227 = arith.constant 0 : index
    %c0_228 = arith.constant 0 : index
    %189 = vector.load %arg15[%c0_226, %c0_227, %c0_228] : memref<2x2x26xf32, #tpu.memory_space<vmem>>, vector<2x1x16xf32>
    %190 = vector.shape_cast %189 : vector<2x1x16xf32> to vector<2x16xf32>
    %191 = vector.broadcast %188 : vector<1x16xf32> to vector<2x16xf32>
    %192 = arith.mulf %190, %191 : vector<2x16xf32>
    %c0_229 = arith.constant 0 : index
    %c0_230 = arith.constant 0 : index
    %193 = vector.load %arg18[%c0_229, %c0_230] : memref<18x32xf32, #tpu.memory_space<vmem>>, vector<2x16xf32>
    tpu.vector_store %arg18[%c0_229, %c0_230], %192 {strides = array<i32>} : memref<18x32xf32, #tpu.memory_space<vmem>>, vector<2x16xf32>,
    %c0_231 = arith.constant 0 : index
    %c1_232 = arith.constant 1 : index
    %c0_233 = arith.constant 0 : index
    %194 = vector.load %arg15[%c0_231, %c1_232, %c0_233] : memref<2x2x26xf32, #tpu.memory_space<vmem>>, vector<2x1x16xf32>
    %195 = vector.shape_cast %194 : vector<2x1x16xf32> to vector<2x16xf32>
    %196 = vector.broadcast %188 : vector<1x16xf32> to vector<2x16xf32>
    %197 = arith.mulf %195, %196 : vector<2x16xf32>
    %c0_234 = arith.constant 0 : index
    %c16_235 = arith.constant 16 : index
    %198 = vector.load %arg18[%c0_234, %c16_235] : memref<18x32xf32, #tpu.memory_space<vmem>>, vector<2x16xf32>
    tpu.vector_store %arg18[%c0_234, %c16_235], %197 {strides = array<i32>} : memref<18x32xf32, #tpu.memory_space<vmem>>, vector<2x16xf32>,
    %c0_236 = arith.constant 0 : index
    %c0_237 = arith.constant 0 : index
    %c4_238 = arith.constant 4 : index
    %199 = vector.load %arg15[%c0_236, %c0_237, %c4_238] : memref<2x2x26xf32, #tpu.memory_space<vmem>>, vector<2x1x16xf32>
    %200 = vector.shape_cast %199 : vector<2x1x16xf32> to vector<2x16xf32>
    %201 = vector.broadcast %188 : vector<1x16xf32> to vector<2x16xf32>
    %202 = arith.mulf %200, %201 : vector<2x16xf32>
    %c6_239 = arith.constant 6 : index
    %c0_240 = arith.constant 0 : index
    %203 = vector.load %arg18[%c6_239, %c0_240] : memref<18x32xf32, #tpu.memory_space<vmem>>, vector<2x16xf32>
    tpu.vector_store %arg18[%c6_239, %c0_240], %202 {strides = array<i32>} : memref<18x32xf32, #tpu.memory_space<vmem>>, vector<2x16xf32>,
    %c0_241 = arith.constant 0 : index
    %c1_242 = arith.constant 1 : index
    %c4_243 = arith.constant 4 : index
    %204 = vector.load %arg15[%c0_241, %c1_242, %c4_243] : memref<2x2x26xf32, #tpu.memory_space<vmem>>, vector<2x1x16xf32>
    %205 = vector.shape_cast %204 : vector<2x1x16xf32> to vector<2x16xf32>
    %206 = vector.broadcast %188 : vector<1x16xf32> to vector<2x16xf32>
    %207 = arith.mulf %205, %206 : vector<2x16xf32>
    %c6_244 = arith.constant 6 : index
    %c16_245 = arith.constant 16 : index
    %208 = vector.load %arg18[%c6_244, %c16_245] : memref<18x32xf32, #tpu.memory_space<vmem>>, vector<2x16xf32>
    tpu.vector_store %arg18[%c6_244, %c16_245], %207 {strides = array<i32>} : memref<18x32xf32, #tpu.memory_space<vmem>>, vector<2x16xf32>,
    %c0_246 = arith.constant 0 : index
    %c0_247 = arith.constant 0 : index
    %c8_248 = arith.constant 8 : index
    %209 = vector.load %arg15[%c0_246, %c0_247, %c8_248] : memref<2x2x26xf32, #tpu.memory_space<vmem>>, vector<2x1x16xf32>
    %210 = vector.shape_cast %209 : vector<2x1x16xf32> to vector<2x16xf32>
    %211 = vector.broadcast %188 : vector<1x16xf32> to vector<2x16xf32>
    %212 = arith.mulf %210, %211 : vector<2x16xf32>
    %c12_249 = arith.constant 12 : index
    %c0_250 = arith.constant 0 : index
    %213 = vector.load %arg18[%c12_249, %c0_250] : memref<18x32xf32, #tpu.memory_space<vmem>>, vector<2x16xf32>
    tpu.vector_store %arg18[%c12_249, %c0_250], %212 {strides = array<i32>} : memref<18x32xf32, #tpu.memory_space<vmem>>, vector<2x16xf32>,
    %c0_251 = arith.constant 0 : index
    %c1_252 = arith.constant 1 : index
    %c8_253 = arith.constant 8 : index
    %214 = vector.load %arg15[%c0_251, %c1_252, %c8_253] : memref<2x2x26xf32, #tpu.memory_space<vmem>>, vector<2x1x16xf32>
    %215 = vector.shape_cast %214 : vector<2x1x16xf32> to vector<2x16xf32>
    %216 = vector.broadcast %188 : vector<1x16xf32> to vector<2x16xf32>
    %217 = arith.mulf %215, %216 : vector<2x16xf32>
    %c12_254 = arith.constant 12 : index
    %c16_255 = arith.constant 16 : index
    %218 = vector.load %arg18[%c12_254, %c16_255] : memref<18x32xf32, #tpu.memory_space<vmem>>, vector<2x16xf32>
    tpu.vector_store %arg18[%c12_254, %c16_255], %217 {strides = array<i32>} : memref<18x32xf32, #tpu.memory_space<vmem>>, vector<2x16xf32>,
    %c0_256 = arith.constant 0 : index
    %c0_257 = arith.constant 0 : index
    %c1_258 = arith.constant 1 : index
    %219 = vector.load %arg15[%c0_256, %c0_257, %c1_258] : memref<2x2x26xf32, #tpu.memory_space<vmem>>, vector<2x1x16xf32>
    %220 = vector.shape_cast %219 : vector<2x1x16xf32> to vector<2x16xf32>
    %c2_259 = arith.constant 2 : index
    %c0_260 = arith.constant 0 : index
    %221 = vector.load %arg18[%c2_259, %c0_260] : memref<18x32xf32, #tpu.memory_space<vmem>>, vector<2x16xf32>
    tpu.vector_store %arg18[%c2_259, %c0_260], %220 {strides = array<i32>} : memref<18x32xf32, #tpu.memory_space<vmem>>, vector<2x16xf32>,
    %c0_261 = arith.constant 0 : index
    %c1_262 = arith.constant 1 : index
    %c1_263 = arith.constant 1 : index
    %222 = vector.load %arg15[%c0_261, %c1_262, %c1_263] : memref<2x2x26xf32, #tpu.memory_space<vmem>>, vector<2x1x16xf32>
    %223 = vector.shape_cast %222 : vector<2x1x16xf32> to vector<2x16xf32>
    %c2_264 = arith.constant 2 : index
    %c16_265 = arith.constant 16 : index
    %224 = vector.load %arg18[%c2_264, %c16_265] : memref<18x32xf32, #tpu.memory_space<vmem>>, vector<2x16xf32>
    tpu.vector_store %arg18[%c2_264, %c16_265], %223 {strides = array<i32>} : memref<18x32xf32, #tpu.memory_space<vmem>>, vector<2x16xf32>,
    %c0_266 = arith.constant 0 : index
    %c0_267 = arith.constant 0 : index
    %c5_268 = arith.constant 5 : index
    %225 = vector.load %arg15[%c0_266, %c0_267, %c5_268] : memref<2x2x26xf32, #tpu.memory_space<vmem>>, vector<2x1x16xf32>
    %226 = vector.shape_cast %225 : vector<2x1x16xf32> to vector<2x16xf32>
    %c8_269 = arith.constant 8 : index
    %c0_270 = arith.constant 0 : index
    %227 = vector.load %arg18[%c8_269, %c0_270] : memref<18x32xf32, #tpu.memory_space<vmem>>, vector<2x16xf32>
    tpu.vector_store %arg18[%c8_269, %c0_270], %226 {strides = array<i32>} : memref<18x32xf32, #tpu.memory_space<vmem>>, vector<2x16xf32>,
    %c0_271 = arith.constant 0 : index
    %c1_272 = arith.constant 1 : index
    %c5_273 = arith.constant 5 : index
    %228 = vector.load %arg15[%c0_271, %c1_272, %c5_273] : memref<2x2x26xf32, #tpu.memory_space<vmem>>, vector<2x1x16xf32>
    %229 = vector.shape_cast %228 : vector<2x1x16xf32> to vector<2x16xf32>
    %c8_274 = arith.constant 8 : index
    %c16_275 = arith.constant 16 : index
    %230 = vector.load %arg18[%c8_274, %c16_275] : memref<18x32xf32, #tpu.memory_space<vmem>>, vector<2x16xf32>
    tpu.vector_store %arg18[%c8_274, %c16_275], %229 {strides = array<i32>} : memref<18x32xf32, #tpu.memory_space<vmem>>, vector<2x16xf32>,
    %c0_276 = arith.constant 0 : index
    %c0_277 = arith.constant 0 : index
    %c9_278 = arith.constant 9 : index
    %231 = vector.load %arg15[%c0_276, %c0_277, %c9_278] : memref<2x2x26xf32, #tpu.memory_space<vmem>>, vector<2x1x16xf32>
    %232 = vector.shape_cast %231 : vector<2x1x16xf32> to vector<2x16xf32>
    %c14_279 = arith.constant 14 : index
    %c0_280 = arith.constant 0 : index
    %233 = vector.load %arg18[%c14_279, %c0_280] : memref<18x32xf32, #tpu.memory_space<vmem>>, vector<2x16xf32>
    tpu.vector_store %arg18[%c14_279, %c0_280], %232 {strides = array<i32>} : memref<18x32xf32, #tpu.memory_space<vmem>>, vector<2x16xf32>,
    %c0_281 = arith.constant 0 : index
    %c1_282 = arith.constant 1 : index
    %c9_283 = arith.constant 9 : index
    %234 = vector.load %arg15[%c0_281, %c1_282, %c9_283] : memref<2x2x26xf32, #tpu.memory_space<vmem>>, vector<2x1x16xf32>
    %235 = vector.shape_cast %234 : vector<2x1x16xf32> to vector<2x16xf32>
    %c14_284 = arith.constant 14 : index
    %c16_285 = arith.constant 16 : index
    %236 = vector.load %arg18[%c14_284, %c16_285] : memref<18x32xf32, #tpu.memory_space<vmem>>, vector<2x16xf32>
    tpu.vector_store %arg18[%c14_284, %c16_285], %235 {strides = array<i32>} : memref<18x32xf32, #tpu.memory_space<vmem>>, vector<2x16xf32>,
    %c2_286 = arith.constant 2 : index
    %c0_287 = arith.constant 0 : index
    %237 = vector.load %arg9[%c2_286, %c0_287] : memref<3x16xf32, #tpu.memory_space<vmem>>, vector<1x16xf32>
    %c0_288 = arith.constant 0 : index
    %c0_289 = arith.constant 0 : index
    %c2_290 = arith.constant 2 : index
    %238 = vector.load %arg15[%c0_288, %c0_289, %c2_290] : memref<2x2x26xf32, #tpu.memory_space<vmem>>, vector<2x1x16xf32>
    %239 = vector.shape_cast %238 : vector<2x1x16xf32> to vector<2x16xf32>
    %240 = vector.broadcast %237 : vector<1x16xf32> to vector<2x16xf32>
    %241 = arith.mulf %239, %240 : vector<2x16xf32>
    %c4_291 = arith.constant 4 : index
    %c0_292 = arith.constant 0 : index
    %242 = vector.load %arg18[%c4_291, %c0_292] : memref<18x32xf32, #tpu.memory_space<vmem>>, vector<2x16xf32>
    tpu.vector_store %arg18[%c4_291, %c0_292], %241 {strides = array<i32>} : memref<18x32xf32, #tpu.memory_space<vmem>>, vector<2x16xf32>,
    %c0_293 = arith.constant 0 : index
    %c1_294 = arith.constant 1 : index
    %c2_295 = arith.constant 2 : index
    %243 = vector.load %arg15[%c0_293, %c1_294, %c2_295] : memref<2x2x26xf32, #tpu.memory_space<vmem>>, vector<2x1x16xf32>
    %244 = vector.shape_cast %243 : vector<2x1x16xf32> to vector<2x16xf32>
    %245 = vector.broadcast %237 : vector<1x16xf32> to vector<2x16xf32>
    %246 = arith.mulf %244, %245 : vector<2x16xf32>
    %c4_296 = arith.constant 4 : index
    %c16_297 = arith.constant 16 : index
    %247 = vector.load %arg18[%c4_296, %c16_297] : memref<18x32xf32, #tpu.memory_space<vmem>>, vector<2x16xf32>
    tpu.vector_store %arg18[%c4_296, %c16_297], %246 {strides = array<i32>} : memref<18x32xf32, #tpu.memory_space<vmem>>, vector<2x16xf32>,
    %c0_298 = arith.constant 0 : index
    %c0_299 = arith.constant 0 : index
    %c6_300 = arith.constant 6 : index
    %248 = vector.load %arg15[%c0_298, %c0_299, %c6_300] : memref<2x2x26xf32, #tpu.memory_space<vmem>>, vector<2x1x16xf32>
    %249 = vector.shape_cast %248 : vector<2x1x16xf32> to vector<2x16xf32>
    %250 = vector.broadcast %237 : vector<1x16xf32> to vector<2x16xf32>
    %251 = arith.mulf %249, %250 : vector<2x16xf32>
    %c10_301 = arith.constant 10 : index
    %c0_302 = arith.constant 0 : index
    %252 = vector.load %arg18[%c10_301, %c0_302] : memref<18x32xf32, #tpu.memory_space<vmem>>, vector<2x16xf32>
    tpu.vector_store %arg18[%c10_301, %c0_302], %251 {strides = array<i32>} : memref<18x32xf32, #tpu.memory_space<vmem>>, vector<2x16xf32>,
    %c0_303 = arith.constant 0 : index
    %c1_304 = arith.constant 1 : index
    %c6_305 = arith.constant 6 : index
    %253 = vector.load %arg15[%c0_303, %c1_304, %c6_305] : memref<2x2x26xf32, #tpu.memory_space<vmem>>, vector<2x1x16xf32>
    %254 = vector.shape_cast %253 : vector<2x1x16xf32> to vector<2x16xf32>
    %255 = vector.broadcast %237 : vector<1x16xf32> to vector<2x16xf32>
    %256 = arith.mulf %254, %255 : vector<2x16xf32>
    %c10_306 = arith.constant 10 : index
    %c16_307 = arith.constant 16 : index
    %257 = vector.load %arg18[%c10_306, %c16_307] : memref<18x32xf32, #tpu.memory_space<vmem>>, vector<2x16xf32>
    tpu.vector_store %arg18[%c10_306, %c16_307], %256 {strides = array<i32>} : memref<18x32xf32, #tpu.memory_space<vmem>>, vector<2x16xf32>,
    %c0_308 = arith.constant 0 : index
    %c0_309 = arith.constant 0 : index
    %c10_310 = arith.constant 10 : index
    %258 = vector.load %arg15[%c0_308, %c0_309, %c10_310] : memref<2x2x26xf32, #tpu.memory_space<vmem>>, vector<2x1x16xf32>
    %259 = vector.shape_cast %258 : vector<2x1x16xf32> to vector<2x16xf32>
    %260 = vector.broadcast %237 : vector<1x16xf32> to vector<2x16xf32>
    %261 = arith.mulf %259, %260 : vector<2x16xf32>
    %c16_311 = arith.constant 16 : index
    %c0_312 = arith.constant 0 : index
    %262 = vector.load %arg18[%c16_311, %c0_312] : memref<18x32xf32, #tpu.memory_space<vmem>>, vector<2x16xf32>
    tpu.vector_store %arg18[%c16_311, %c0_312], %261 {strides = array<i32>} : memref<18x32xf32, #tpu.memory_space<vmem>>, vector<2x16xf32>,
    %c0_313 = arith.constant 0 : index
    %c1_314 = arith.constant 1 : index
    %c10_315 = arith.constant 10 : index
    %263 = vector.load %arg15[%c0_313, %c1_314, %c10_315] : memref<2x2x26xf32, #tpu.memory_space<vmem>>, vector<2x1x16xf32>
    %264 = vector.shape_cast %263 : vector<2x1x16xf32> to vector<2x16xf32>
    %265 = vector.broadcast %237 : vector<1x16xf32> to vector<2x16xf32>
    %266 = arith.mulf %264, %265 : vector<2x16xf32>
    %c16_316 = arith.constant 16 : index
    %c16_317 = arith.constant 16 : index
    %267 = vector.load %arg18[%c16_316, %c16_317] : memref<18x32xf32, #tpu.memory_space<vmem>>, vector<2x16xf32>
    tpu.vector_store %arg18[%c16_316, %c16_317], %266 {strides = array<i32>} : memref<18x32xf32, #tpu.memory_space<vmem>>, vector<2x16xf32>,
    %c0_318 = arith.constant 0 : index
    %c0_319 = arith.constant 0 : index
    %268 = vector.load %arg5[%c0_318, %c0_319] : memref<2x18xf32, #tpu.memory_space<vmem>>, vector<2x18xf32>
    %c0_320 = arith.constant 0 : index
    %c0_321 = arith.constant 0 : index
    %269 = vector.load %arg18[%c0_320, %c0_321] : memref<18x32xf32, #tpu.memory_space<vmem>>, vector<18x32xf32>
    %cst_322 = arith.constant dense<0.000000e+00> : vector<2x32xf32>
    %270 = tpu.matmul %268, %269, %cst_322 {dimension_numbers = #tpu.dot_dimension_numbers<[1], [0], [0], [1], [0, 0, 1, 1], [], []>} : vector<2x18xf32>, vector<18x32xf32>, vector<2x32xf32> -> vector<2x32xf32>
    %c0_323 = arith.constant 0 : index
    %c0_324 = arith.constant 0 : index
    %271 = vector.load %arg6[%c0_323, %c0_324] : memref<16x64xf32, #tpu.memory_space<vmem>>, vector<16x64xf32>
    %272 = vector.extract_strided_slice %270 {offsets = [0, 0], sizes = [2, 16], strides = [1, 1]} : vector<2x32xf32> to vector<2x16xf32>
    %cst_325 = arith.constant dense<0.000000e+00> : vector<2x64xf32>
    %273 = tpu.matmul %272, %271, %cst_325 {dimension_numbers = #tpu.dot_dimension_numbers<[1], [0], [0], [1], [0, 0, 1, 1], [], []>} : vector<2x16xf32>, vector<16x64xf32>, vector<2x64xf32> -> vector<2x64xf32>
    %c0_326 = arith.constant 0 : index
    %c0_327 = arith.constant 0 : index
    %274 = vector.load %arg12[%c0_326, %c0_327] : memref<2x128xf32, #tpu.memory_space<vmem>>, vector<2x64xf32>
    %275 = arith.addf %274, %273 : vector<2x64xf32>
    %c0_328 = arith.constant 0 : index
    %c0_329 = arith.constant 0 : index
    %276 = vector.load %arg12[%c0_328, %c0_329] : memref<2x128xf32, #tpu.memory_space<vmem>>, vector<2x64xf32>
    tpu.vector_store %arg12[%c0_328, %c0_329], %275 {strides = array<i32>} : memref<2x128xf32, #tpu.memory_space<vmem>>, vector<2x64xf32>,
    %277 = vector.extract_strided_slice %270 {offsets = [0, 16], sizes = [2, 16], strides = [1, 1]} : vector<2x32xf32> to vector<2x16xf32>
    %cst_330 = arith.constant dense<0.000000e+00> : vector<2x64xf32>
    %278 = tpu.matmul %277, %271, %cst_330 {dimension_numbers = #tpu.dot_dimension_numbers<[1], [0], [0], [1], [0, 0, 1, 1], [], []>} : vector<2x16xf32>, vector<16x64xf32>, vector<2x64xf32> -> vector<2x64xf32>
    %c0_331 = arith.constant 0 : index
    %c64_332 = arith.constant 64 : index
    %279 = vector.load %arg12[%c0_331, %c64_332] : memref<2x128xf32, #tpu.memory_space<vmem>>, vector<2x64xf32>
    %280 = arith.addf %279, %278 : vector<2x64xf32>
    %c0_333 = arith.constant 0 : index
    %c64_334 = arith.constant 64 : index
    %281 = vector.load %arg12[%c0_333, %c64_334] : memref<2x128xf32, #tpu.memory_space<vmem>>, vector<2x64xf32>
    tpu.vector_store %arg12[%c0_333, %c64_334], %280 {strides = array<i32>} : memref<2x128xf32, #tpu.memory_space<vmem>>, vector<2x64xf32>,
    %c0_335 = arith.constant 0 : index
    %c0_336 = arith.constant 0 : index
    %282 = vector.load %arg12[%c0_335, %c0_336] : memref<2x128xf32, #tpu.memory_space<vmem>>, vector<2x128xf32>
    %cst_337 = arith.constant dense<0.000000e+00> : vector<2xf32>
    %283 = vector.multi_reduction <add>, %282, %cst_337 [1] : vector<2x128xf32> to vector<2xf32>
    %284 = vector.shape_cast %283 : vector<2xf32> to vector<2x1xf32>
    %cst_338 = arith.constant 7.812500e-03 : f32
    %285 = vector.broadcast %cst_338 : f32 to vector<2x1xf32>
    %286 = arith.mulf %284, %285 : vector<2x1xf32>
    %287 = arith.mulf %282, %282 : vector<2x128xf32>
    %cst_339 = arith.constant dense<0.000000e+00> : vector<2xf32>
    %288 = vector.multi_reduction <add>, %287, %cst_339 [1] : vector<2x128xf32> to vector<2xf32>
    %289 = vector.shape_cast %288 : vector<2xf32> to vector<2x1xf32>
    %cst_340 = arith.constant 7.812500e-03 : f32
    %290 = vector.broadcast %cst_340 : f32 to vector<2x1xf32>
    %291 = arith.mulf %289, %290 : vector<2x1xf32>
    %292 = arith.mulf %286, %286 : vector<2x1xf32>
    %293 = arith.subf %291, %292 : vector<2x1xf32>
    %c0_341 = arith.constant 0 : index
    %c0_342 = arith.constant 0 : index
    %294 = vector.load %arg10[%c0_341, %c0_342] : memref<2x1xf32, #tpu.memory_space<vmem>>, vector<2x1xf32>
    %cst_343 = arith.constant 9.99999974E-6 : f32
    %295 = vector.broadcast %cst_343 : f32 to vector<2x1xf32>
    %296 = arith.addf %293, %295 : vector<2x1xf32>
    %297 = math.rsqrt %296 : vector<2x1xf32>
    %298 = arith.mulf %294, %297 : vector<2x1xf32>
    %c0_344 = arith.constant 0 : index
    %c0_345 = arith.constant 0 : index
    %299 = vector.load %arg11[%c0_344, %c0_345] : memref<2x1xf32, #tpu.memory_space<vmem>>, vector<2x1xf32>
    %300 = arith.mulf %286, %298 : vector<2x1xf32>
    %301 = arith.subf %299, %300 : vector<2x1xf32>
    %302 = vector.broadcast %298 : vector<2x1xf32> to vector<2x128xf32>
    %303 = arith.mulf %282, %302 : vector<2x128xf32>
    %304 = vector.broadcast %301 : vector<2x1xf32> to vector<2x128xf32>
    %305 = arith.addf %303, %304 : vector<2x128xf32>
    %c0_346 = arith.constant 0 : index
    %c0_347 = arith.constant 0 : index
    %306 = vector.load %arg12[%c0_346, %c0_347] : memref<2x128xf32, #tpu.memory_space<vmem>>, vector<2x128xf32>
    tpu.vector_store %arg12[%c0_346, %c0_347], %305 {strides = array<i32>} : memref<2x128xf32, #tpu.memory_space<vmem>>, vector<2x128xf32>,
    return
  }
}

module attributes {stable_mosaic.version = 11 : i64} {
  func.func @kernel(%arg0: memref<4x2x256xf32, #tpu.memory_space<vmem>>, %arg1: memref<2x2x64xf32, #tpu.memory_space<vmem>>, %arg2: memref<2x2x16xf32, #tpu.memory_space<vmem>>, %arg3: memref<4x36xf32, #tpu.memory_space<vmem>>, %arg4: memref<4x18xf32, #tpu.memory_space<vmem>>, %arg5: memref<4x18xf32, #tpu.memory_space<vmem>>, %arg6: memref<64x256xf32, #tpu.memory_space<vmem>>, %arg7: memref<16x256xf32, #tpu.memory_space<vmem>>, %arg8: memref<3x256xf32, #tpu.memory_space<vmem>>, %arg9: memref<3x64xf32, #tpu.memory_space<vmem>>, %arg10: memref<3x16xf32, #tpu.memory_space<vmem>>, %arg11: memref<4x1xf32, #tpu.memory_space<vmem>>, %arg12: memref<4x1xf32, #tpu.memory_space<vmem>>, %arg13: memref<4x512xf32, #tpu.memory_space<vmem>>, %arg14: memref<4x2x290xf32, #tpu.memory_space<vmem>>, %arg15: memref<2x2x82xf32, #tpu.memory_space<vmem>>, %arg16: memref<2x2x26xf32, #tpu.memory_space<vmem>>, %arg17: memref<36x512xf32, #tpu.memory_space<vmem>>, %arg18: memref<18x128xf32, #tpu.memory_space<vmem>>, %arg19: memref<18x32xf32, #tpu.memory_space<vmem>>) attributes {dimension_semantics = [], scalar_prefetch = 0 : i64, scratch_operands = 6 : i64, tpu.core_type = #tpu.core_type<tc>} {
    %cst = arith.constant 0.000000e+00 : f32
    %0 = vector.broadcast %cst : f32 to vector<4x2x17xf32>
    %c0 = arith.constant 0 : index
    %c0_0 = arith.constant 0 : index
    %c0_1 = arith.constant 0 : index
    %1 = vector.load %arg14[%c0, %c0_0, %c0_1] : memref<4x2x290xf32, #tpu.memory_space<vmem>>, vector<4x2x17xf32>
    tpu.vector_store %arg14[%c0, %c0_0, %c0_1], %0 {strides = array<i32>} : memref<4x2x290xf32, #tpu.memory_space<vmem>>, vector<4x2x17xf32>,
    %cst_2 = arith.constant 0.000000e+00 : f32
    %2 = vector.broadcast %cst_2 : f32 to vector<4x2x17xf32>
    %c0_3 = arith.constant 0 : index
    %c0_4 = arith.constant 0 : index
    %c273 = arith.constant 273 : index
    %3 = vector.load %arg14[%c0_3, %c0_4, %c273] : memref<4x2x290xf32, #tpu.memory_space<vmem>>, vector<4x2x17xf32>
    tpu.vector_store %arg14[%c0_3, %c0_4, %c273], %2 {strides = array<i32>} : memref<4x2x290xf32, #tpu.memory_space<vmem>>, vector<4x2x17xf32>,
    %c0_5 = arith.constant 0 : index
    %c0_6 = arith.constant 0 : index
    %c0_7 = arith.constant 0 : index
    %4 = vector.load %arg0[%c0_5, %c0_6, %c0_7] : memref<4x2x256xf32, #tpu.memory_space<vmem>>, vector<4x2x256xf32>
    %c0_8 = arith.constant 0 : index
    %c0_9 = arith.constant 0 : index
    %c17 = arith.constant 17 : index
    %5 = vector.load %arg14[%c0_8, %c0_9, %c17] : memref<4x2x290xf32, #tpu.memory_space<vmem>>, vector<4x2x256xf32>
    tpu.vector_store %arg14[%c0_8, %c0_9, %c17], %4 {strides = array<i32>} : memref<4x2x290xf32, #tpu.memory_space<vmem>>, vector<4x2x256xf32>,
    %c0_10 = arith.constant 0 : index
    %c0_11 = arith.constant 0 : index
    %6 = vector.load %arg8[%c0_10, %c0_11] : memref<3x256xf32, #tpu.memory_space<vmem>>, vector<1x256xf32>
    %c0_12 = arith.constant 0 : index
    %c0_13 = arith.constant 0 : index
    %c0_14 = arith.constant 0 : index
    %7 = vector.load %arg14[%c0_12, %c0_13, %c0_14] : memref<4x2x290xf32, #tpu.memory_space<vmem>>, vector<4x1x256xf32>
    %8 = vector.shape_cast %7 : vector<4x1x256xf32> to vector<4x256xf32>
    %9 = vector.broadcast %6 : vector<1x256xf32> to vector<4x256xf32>
    %10 = arith.mulf %8, %9 : vector<4x256xf32>
    %c0_15 = arith.constant 0 : index
    %c0_16 = arith.constant 0 : index
    %11 = vector.load %arg17[%c0_15, %c0_16] : memref<36x512xf32, #tpu.memory_space<vmem>>, vector<4x256xf32>
    tpu.vector_store %arg17[%c0_15, %c0_16], %10 {strides = array<i32>} : memref<36x512xf32, #tpu.memory_space<vmem>>, vector<4x256xf32>,
    %c0_17 = arith.constant 0 : index
    %c1 = arith.constant 1 : index
    %c0_18 = arith.constant 0 : index
    %12 = vector.load %arg14[%c0_17, %c1, %c0_18] : memref<4x2x290xf32, #tpu.memory_space<vmem>>, vector<4x1x256xf32>
    %13 = vector.shape_cast %12 : vector<4x1x256xf32> to vector<4x256xf32>
    %14 = vector.broadcast %6 : vector<1x256xf32> to vector<4x256xf32>
    %15 = arith.mulf %13, %14 : vector<4x256xf32>
    %c0_19 = arith.constant 0 : index
    %c256 = arith.constant 256 : index
    %16 = vector.load %arg17[%c0_19, %c256] : memref<36x512xf32, #tpu.memory_space<vmem>>, vector<4x256xf32>
    tpu.vector_store %arg17[%c0_19, %c256], %15 {strides = array<i32>} : memref<36x512xf32, #tpu.memory_space<vmem>>, vector<4x256xf32>,
    %c0_20 = arith.constant 0 : index
    %c0_21 = arith.constant 0 : index
    %c16 = arith.constant 16 : index
    %17 = vector.load %arg14[%c0_20, %c0_21, %c16] : memref<4x2x290xf32, #tpu.memory_space<vmem>>, vector<4x1x256xf32>
    %18 = vector.shape_cast %17 : vector<4x1x256xf32> to vector<4x256xf32>
    %19 = vector.broadcast %6 : vector<1x256xf32> to vector<4x256xf32>
    %20 = arith.mulf %18, %19 : vector<4x256xf32>
    %c12 = arith.constant 12 : index
    %c0_22 = arith.constant 0 : index
    %21 = vector.load %arg17[%c12, %c0_22] : memref<36x512xf32, #tpu.memory_space<vmem>>, vector<4x256xf32>
    tpu.vector_store %arg17[%c12, %c0_22], %20 {strides = array<i32>} : memref<36x512xf32, #tpu.memory_space<vmem>>, vector<4x256xf32>,
    %c0_23 = arith.constant 0 : index
    %c1_24 = arith.constant 1 : index
    %c16_25 = arith.constant 16 : index
    %22 = vector.load %arg14[%c0_23, %c1_24, %c16_25] : memref<4x2x290xf32, #tpu.memory_space<vmem>>, vector<4x1x256xf32>
    %23 = vector.shape_cast %22 : vector<4x1x256xf32> to vector<4x256xf32>
    %24 = vector.broadcast %6 : vector<1x256xf32> to vector<4x256xf32>
    %25 = arith.mulf %23, %24 : vector<4x256xf32>
    %c12_26 = arith.constant 12 : index
    %c256_27 = arith.constant 256 : index
    %26 = vector.load %arg17[%c12_26, %c256_27] : memref<36x512xf32, #tpu.memory_space<vmem>>, vector<4x256xf32>
    tpu.vector_store %arg17[%c12_26, %c256_27], %25 {strides = array<i32>} : memref<36x512xf32, #tpu.memory_space<vmem>>, vector<4x256xf32>,
    %c0_28 = arith.constant 0 : index
    %c0_29 = arith.constant 0 : index
    %c32 = arith.constant 32 : index
    %27 = vector.load %arg14[%c0_28, %c0_29, %c32] : memref<4x2x290xf32, #tpu.memory_space<vmem>>, vector<4x1x256xf32>
    %28 = vector.shape_cast %27 : vector<4x1x256xf32> to vector<4x256xf32>
    %29 = vector.broadcast %6 : vector<1x256xf32> to vector<4x256xf32>
    %30 = arith.mulf %28, %29 : vector<4x256xf32>
    %c24 = arith.constant 24 : index
    %c0_30 = arith.constant 0 : index
    %31 = vector.load %arg17[%c24, %c0_30] : memref<36x512xf32, #tpu.memory_space<vmem>>, vector<4x256xf32>
    tpu.vector_store %arg17[%c24, %c0_30], %30 {strides = array<i32>} : memref<36x512xf32, #tpu.memory_space<vmem>>, vector<4x256xf32>,
    %c0_31 = arith.constant 0 : index
    %c1_32 = arith.constant 1 : index
    %c32_33 = arith.constant 32 : index
    %32 = vector.load %arg14[%c0_31, %c1_32, %c32_33] : memref<4x2x290xf32, #tpu.memory_space<vmem>>, vector<4x1x256xf32>
    %33 = vector.shape_cast %32 : vector<4x1x256xf32> to vector<4x256xf32>
    %34 = vector.broadcast %6 : vector<1x256xf32> to vector<4x256xf32>
    %35 = arith.mulf %33, %34 : vector<4x256xf32>
    %c24_34 = arith.constant 24 : index
    %c256_35 = arith.constant 256 : index
    %36 = vector.load %arg17[%c24_34, %c256_35] : memref<36x512xf32, #tpu.memory_space<vmem>>, vector<4x256xf32>
    tpu.vector_store %arg17[%c24_34, %c256_35], %35 {strides = array<i32>} : memref<36x512xf32, #tpu.memory_space<vmem>>, vector<4x256xf32>,
    %c0_36 = arith.constant 0 : index
    %c0_37 = arith.constant 0 : index
    %c1_38 = arith.constant 1 : index
    %37 = vector.load %arg14[%c0_36, %c0_37, %c1_38] : memref<4x2x290xf32, #tpu.memory_space<vmem>>, vector<4x1x256xf32>
    %38 = vector.shape_cast %37 : vector<4x1x256xf32> to vector<4x256xf32>
    %c4 = arith.constant 4 : index
    %c0_39 = arith.constant 0 : index
    %39 = vector.load %arg17[%c4, %c0_39] : memref<36x512xf32, #tpu.memory_space<vmem>>, vector<4x256xf32>
    tpu.vector_store %arg17[%c4, %c0_39], %38 {strides = array<i32>} : memref<36x512xf32, #tpu.memory_space<vmem>>, vector<4x256xf32>,
    %c0_40 = arith.constant 0 : index
    %c1_41 = arith.constant 1 : index
    %c1_42 = arith.constant 1 : index
    %40 = vector.load %arg14[%c0_40, %c1_41, %c1_42] : memref<4x2x290xf32, #tpu.memory_space<vmem>>, vector<4x1x256xf32>
    %41 = vector.shape_cast %40 : vector<4x1x256xf32> to vector<4x256xf32>
    %c4_43 = arith.constant 4 : index
    %c256_44 = arith.constant 256 : index
    %42 = vector.load %arg17[%c4_43, %c256_44] : memref<36x512xf32, #tpu.memory_space<vmem>>, vector<4x256xf32>
    tpu.vector_store %arg17[%c4_43, %c256_44], %41 {strides = array<i32>} : memref<36x512xf32, #tpu.memory_space<vmem>>, vector<4x256xf32>,
    %c0_45 = arith.constant 0 : index
    %c0_46 = arith.constant 0 : index
    %c17_47 = arith.constant 17 : index
    %43 = vector.load %arg14[%c0_45, %c0_46, %c17_47] : memref<4x2x290xf32, #tpu.memory_space<vmem>>, vector<4x1x256xf32>
    %44 = vector.shape_cast %43 : vector<4x1x256xf32> to vector<4x256xf32>
    %c16_48 = arith.constant 16 : index
    %c0_49 = arith.constant 0 : index
    %45 = vector.load %arg17[%c16_48, %c0_49] : memref<36x512xf32, #tpu.memory_space<vmem>>, vector<4x256xf32>
    tpu.vector_store %arg17[%c16_48, %c0_49], %44 {strides = array<i32>} : memref<36x512xf32, #tpu.memory_space<vmem>>, vector<4x256xf32>,
    %c0_50 = arith.constant 0 : index
    %c1_51 = arith.constant 1 : index
    %c17_52 = arith.constant 17 : index
    %46 = vector.load %arg14[%c0_50, %c1_51, %c17_52] : memref<4x2x290xf32, #tpu.memory_space<vmem>>, vector<4x1x256xf32>
    %47 = vector.shape_cast %46 : vector<4x1x256xf32> to vector<4x256xf32>
    %c16_53 = arith.constant 16 : index
    %c256_54 = arith.constant 256 : index
    %48 = vector.load %arg17[%c16_53, %c256_54] : memref<36x512xf32, #tpu.memory_space<vmem>>, vector<4x256xf32>
    tpu.vector_store %arg17[%c16_53, %c256_54], %47 {strides = array<i32>} : memref<36x512xf32, #tpu.memory_space<vmem>>, vector<4x256xf32>,
    %c0_55 = arith.constant 0 : index
    %c0_56 = arith.constant 0 : index
    %c33 = arith.constant 33 : index
    %49 = vector.load %arg14[%c0_55, %c0_56, %c33] : memref<4x2x290xf32, #tpu.memory_space<vmem>>, vector<4x1x256xf32>
    %50 = vector.shape_cast %49 : vector<4x1x256xf32> to vector<4x256xf32>
    %c28 = arith.constant 28 : index
    %c0_57 = arith.constant 0 : index
    %51 = vector.load %arg17[%c28, %c0_57] : memref<36x512xf32, #tpu.memory_space<vmem>>, vector<4x256xf32>
    tpu.vector_store %arg17[%c28, %c0_57], %50 {strides = array<i32>} : memref<36x512xf32, #tpu.memory_space<vmem>>, vector<4x256xf32>,
    %c0_58 = arith.constant 0 : index
    %c1_59 = arith.constant 1 : index
    %c33_60 = arith.constant 33 : index
    %52 = vector.load %arg14[%c0_58, %c1_59, %c33_60] : memref<4x2x290xf32, #tpu.memory_space<vmem>>, vector<4x1x256xf32>
    %53 = vector.shape_cast %52 : vector<4x1x256xf32> to vector<4x256xf32>
    %c28_61 = arith.constant 28 : index
    %c256_62 = arith.constant 256 : index
    %54 = vector.load %arg17[%c28_61, %c256_62] : memref<36x512xf32, #tpu.memory_space<vmem>>, vector<4x256xf32>
    tpu.vector_store %arg17[%c28_61, %c256_62], %53 {strides = array<i32>} : memref<36x512xf32, #tpu.memory_space<vmem>>, vector<4x256xf32>,
    %c2 = arith.constant 2 : index
    %c0_63 = arith.constant 0 : index
    %55 = vector.load %arg8[%c2, %c0_63] : memref<3x256xf32, #tpu.memory_space<vmem>>, vector<1x256xf32>
    %c0_64 = arith.constant 0 : index
    %c0_65 = arith.constant 0 : index
    %c2_66 = arith.constant 2 : index
    %56 = vector.load %arg14[%c0_64, %c0_65, %c2_66] : memref<4x2x290xf32, #tpu.memory_space<vmem>>, vector<4x1x256xf32>
    %57 = vector.shape_cast %56 : vector<4x1x256xf32> to vector<4x256xf32>
    %58 = vector.broadcast %55 : vector<1x256xf32> to vector<4x256xf32>
    %59 = arith.mulf %57, %58 : vector<4x256xf32>
    %c8 = arith.constant 8 : index
    %c0_67 = arith.constant 0 : index
    %60 = vector.load %arg17[%c8, %c0_67] : memref<36x512xf32, #tpu.memory_space<vmem>>, vector<4x256xf32>
    tpu.vector_store %arg17[%c8, %c0_67], %59 {strides = array<i32>} : memref<36x512xf32, #tpu.memory_space<vmem>>, vector<4x256xf32>,
    %c0_68 = arith.constant 0 : index
    %c1_69 = arith.constant 1 : index
    %c2_70 = arith.constant 2 : index
    %61 = vector.load %arg14[%c0_68, %c1_69, %c2_70] : memref<4x2x290xf32, #tpu.memory_space<vmem>>, vector<4x1x256xf32>
    %62 = vector.shape_cast %61 : vector<4x1x256xf32> to vector<4x256xf32>
    %63 = vector.broadcast %55 : vector<1x256xf32> to vector<4x256xf32>
    %64 = arith.mulf %62, %63 : vector<4x256xf32>
    %c8_71 = arith.constant 8 : index
    %c256_72 = arith.constant 256 : index
    %65 = vector.load %arg17[%c8_71, %c256_72] : memref<36x512xf32, #tpu.memory_space<vmem>>, vector<4x256xf32>
    tpu.vector_store %arg17[%c8_71, %c256_72], %64 {strides = array<i32>} : memref<36x512xf32, #tpu.memory_space<vmem>>, vector<4x256xf32>,
    %c0_73 = arith.constant 0 : index
    %c0_74 = arith.constant 0 : index
    %c18 = arith.constant 18 : index
    %66 = vector.load %arg14[%c0_73, %c0_74, %c18] : memref<4x2x290xf32, #tpu.memory_space<vmem>>, vector<4x1x256xf32>
    %67 = vector.shape_cast %66 : vector<4x1x256xf32> to vector<4x256xf32>
    %68 = vector.broadcast %55 : vector<1x256xf32> to vector<4x256xf32>
    %69 = arith.mulf %67, %68 : vector<4x256xf32>
    %c20 = arith.constant 20 : index
    %c0_75 = arith.constant 0 : index
    %70 = vector.load %arg17[%c20, %c0_75] : memref<36x512xf32, #tpu.memory_space<vmem>>, vector<4x256xf32>
    tpu.vector_store %arg17[%c20, %c0_75], %69 {strides = array<i32>} : memref<36x512xf32, #tpu.memory_space<vmem>>, vector<4x256xf32>,
    %c0_76 = arith.constant 0 : index
    %c1_77 = arith.constant 1 : index
    %c18_78 = arith.constant 18 : index
    %71 = vector.load %arg14[%c0_76, %c1_77, %c18_78] : memref<4x2x290xf32, #tpu.memory_space<vmem>>, vector<4x1x256xf32>
    %72 = vector.shape_cast %71 : vector<4x1x256xf32> to vector<4x256xf32>
    %73 = vector.broadcast %55 : vector<1x256xf32> to vector<4x256xf32>
    %74 = arith.mulf %72, %73 : vector<4x256xf32>
    %c20_79 = arith.constant 20 : index
    %c256_80 = arith.constant 256 : index
    %75 = vector.load %arg17[%c20_79, %c256_80] : memref<36x512xf32, #tpu.memory_space<vmem>>, vector<4x256xf32>
    tpu.vector_store %arg17[%c20_79, %c256_80], %74 {strides = array<i32>} : memref<36x512xf32, #tpu.memory_space<vmem>>, vector<4x256xf32>,
    %c0_81 = arith.constant 0 : index
    %c0_82 = arith.constant 0 : index
    %c34 = arith.constant 34 : index
    %76 = vector.load %arg14[%c0_81, %c0_82, %c34] : memref<4x2x290xf32, #tpu.memory_space<vmem>>, vector<4x1x256xf32>
    %77 = vector.shape_cast %76 : vector<4x1x256xf32> to vector<4x256xf32>
    %78 = vector.broadcast %55 : vector<1x256xf32> to vector<4x256xf32>
    %79 = arith.mulf %77, %78 : vector<4x256xf32>
    %c32_83 = arith.constant 32 : index
    %c0_84 = arith.constant 0 : index
    %80 = vector.load %arg17[%c32_83, %c0_84] : memref<36x512xf32, #tpu.memory_space<vmem>>, vector<4x256xf32>
    tpu.vector_store %arg17[%c32_83, %c0_84], %79 {strides = array<i32>} : memref<36x512xf32, #tpu.memory_space<vmem>>, vector<4x256xf32>,
    %c0_85 = arith.constant 0 : index
    %c1_86 = arith.constant 1 : index
    %c34_87 = arith.constant 34 : index
    %81 = vector.load %arg14[%c0_85, %c1_86, %c34_87] : memref<4x2x290xf32, #tpu.memory_space<vmem>>, vector<4x1x256xf32>
    %82 = vector.shape_cast %81 : vector<4x1x256xf32> to vector<4x256xf32>
    %83 = vector.broadcast %55 : vector<1x256xf32> to vector<4x256xf32>
    %84 = arith.mulf %82, %83 : vector<4x256xf32>
    %c32_88 = arith.constant 32 : index
    %c256_89 = arith.constant 256 : index
    %85 = vector.load %arg17[%c32_88, %c256_89] : memref<36x512xf32, #tpu.memory_space<vmem>>, vector<4x256xf32>
    tpu.vector_store %arg17[%c32_88, %c256_89], %84 {strides = array<i32>} : memref<36x512xf32, #tpu.memory_space<vmem>>, vector<4x256xf32>,
    %c0_90 = arith.constant 0 : index
    %c0_91 = arith.constant 0 : index
    %86 = vector.load %arg3[%c0_90, %c0_91] : memref<4x36xf32, #tpu.memory_space<vmem>>, vector<4x36xf32>
    %c0_92 = arith.constant 0 : index
    %c0_93 = arith.constant 0 : index
    %87 = vector.load %arg17[%c0_92, %c0_93] : memref<36x512xf32, #tpu.memory_space<vmem>>, vector<36x512xf32>
    %cst_94 = arith.constant dense<0.000000e+00> : vector<4x512xf32>
    %88 = tpu.matmul %86, %87, %cst_94 {dimension_numbers = #tpu.dot_dimension_numbers<[1], [0], [0], [1], [0, 0, 1, 1], [], []>} : vector<4x36xf32>, vector<36x512xf32>, vector<4x512xf32> -> vector<4x512xf32>
    %c0_95 = arith.constant 0 : index
    %c0_96 = arith.constant 0 : index
    %89 = vector.load %arg13[%c0_95, %c0_96] : memref<4x512xf32, #tpu.memory_space<vmem>>, vector<4x512xf32>
    tpu.vector_store %arg13[%c0_95, %c0_96], %88 {strides = array<i32>} : memref<4x512xf32, #tpu.memory_space<vmem>>, vector<4x512xf32>,
    %cst_97 = arith.constant 0.000000e+00 : f32
    %90 = vector.broadcast %cst_97 : f32 to vector<2x2x9xf32>
    %c0_98 = arith.constant 0 : index
    %c0_99 = arith.constant 0 : index
    %c0_100 = arith.constant 0 : index
    %91 = vector.load %arg15[%c0_98, %c0_99, %c0_100] : memref<2x2x82xf32, #tpu.memory_space<vmem>>, vector<2x2x9xf32>
    tpu.vector_store %arg15[%c0_98, %c0_99, %c0_100], %90 {strides = array<i32>} : memref<2x2x82xf32, #tpu.memory_space<vmem>>, vector<2x2x9xf32>,
    %cst_101 = arith.constant 0.000000e+00 : f32
    %92 = vector.broadcast %cst_101 : f32 to vector<2x2x9xf32>
    %c0_102 = arith.constant 0 : index
    %c0_103 = arith.constant 0 : index
    %c73 = arith.constant 73 : index
    %93 = vector.load %arg15[%c0_102, %c0_103, %c73] : memref<2x2x82xf32, #tpu.memory_space<vmem>>, vector<2x2x9xf32>
    tpu.vector_store %arg15[%c0_102, %c0_103, %c73], %92 {strides = array<i32>} : memref<2x2x82xf32, #tpu.memory_space<vmem>>, vector<2x2x9xf32>,
    %c0_104 = arith.constant 0 : index
    %c0_105 = arith.constant 0 : index
    %c0_106 = arith.constant 0 : index
    %94 = vector.load %arg1[%c0_104, %c0_105, %c0_106] : memref<2x2x64xf32, #tpu.memory_space<vmem>>, vector<2x2x64xf32>
    %c0_107 = arith.constant 0 : index
    %c0_108 = arith.constant 0 : index
    %c9 = arith.constant 9 : index
    %95 = vector.load %arg15[%c0_107, %c0_108, %c9] : memref<2x2x82xf32, #tpu.memory_space<vmem>>, vector<2x2x64xf32>
    tpu.vector_store %arg15[%c0_107, %c0_108, %c9], %94 {strides = array<i32>} : memref<2x2x82xf32, #tpu.memory_space<vmem>>, vector<2x2x64xf32>,
    %c0_109 = arith.constant 0 : index
    %c0_110 = arith.constant 0 : index
    %96 = vector.load %arg9[%c0_109, %c0_110] : memref<3x64xf32, #tpu.memory_space<vmem>>, vector<1x64xf32>
    %c0_111 = arith.constant 0 : index
    %c0_112 = arith.constant 0 : index
    %c0_113 = arith.constant 0 : index
    %97 = vector.load %arg15[%c0_111, %c0_112, %c0_113] : memref<2x2x82xf32, #tpu.memory_space<vmem>>, vector<2x1x64xf32>
    %98 = vector.shape_cast %97 : vector<2x1x64xf32> to vector<2x64xf32>
    %99 = vector.broadcast %96 : vector<1x64xf32> to vector<2x64xf32>
    %100 = arith.mulf %98, %99 : vector<2x64xf32>
    %c0_114 = arith.constant 0 : index
    %c0_115 = arith.constant 0 : index
    %101 = vector.load %arg18[%c0_114, %c0_115] : memref<18x128xf32, #tpu.memory_space<vmem>>, vector<2x64xf32>
    tpu.vector_store %arg18[%c0_114, %c0_115], %100 {strides = array<i32>} : memref<18x128xf32, #tpu.memory_space<vmem>>, vector<2x64xf32>,
    %c0_116 = arith.constant 0 : index
    %c1_117 = arith.constant 1 : index
    %c0_118 = arith.constant 0 : index
    %102 = vector.load %arg15[%c0_116, %c1_117, %c0_118] : memref<2x2x82xf32, #tpu.memory_space<vmem>>, vector<2x1x64xf32>
    %103 = vector.shape_cast %102 : vector<2x1x64xf32> to vector<2x64xf32>
    %104 = vector.broadcast %96 : vector<1x64xf32> to vector<2x64xf32>
    %105 = arith.mulf %103, %104 : vector<2x64xf32>
    %c0_119 = arith.constant 0 : index
    %c64 = arith.constant 64 : index
    %106 = vector.load %arg18[%c0_119, %c64] : memref<18x128xf32, #tpu.memory_space<vmem>>, vector<2x64xf32>
    tpu.vector_store %arg18[%c0_119, %c64], %105 {strides = array<i32>} : memref<18x128xf32, #tpu.memory_space<vmem>>, vector<2x64xf32>,
    %c0_120 = arith.constant 0 : index
    %c0_121 = arith.constant 0 : index
    %c8_122 = arith.constant 8 : index
    %107 = vector.load %arg15[%c0_120, %c0_121, %c8_122] : memref<2x2x82xf32, #tpu.memory_space<vmem>>, vector<2x1x64xf32>
    %108 = vector.shape_cast %107 : vector<2x1x64xf32> to vector<2x64xf32>
    %109 = vector.broadcast %96 : vector<1x64xf32> to vector<2x64xf32>
    %110 = arith.mulf %108, %109 : vector<2x64xf32>
    %c6 = arith.constant 6 : index
    %c0_123 = arith.constant 0 : index
    %111 = vector.load %arg18[%c6, %c0_123] : memref<18x128xf32, #tpu.memory_space<vmem>>, vector<2x64xf32>
    tpu.vector_store %arg18[%c6, %c0_123], %110 {strides = array<i32>} : memref<18x128xf32, #tpu.memory_space<vmem>>, vector<2x64xf32>,
    %c0_124 = arith.constant 0 : index
    %c1_125 = arith.constant 1 : index
    %c8_126 = arith.constant 8 : index
    %112 = vector.load %arg15[%c0_124, %c1_125, %c8_126] : memref<2x2x82xf32, #tpu.memory_space<vmem>>, vector<2x1x64xf32>
    %113 = vector.shape_cast %112 : vector<2x1x64xf32> to vector<2x64xf32>
    %114 = vector.broadcast %96 : vector<1x64xf32> to vector<2x64xf32>
    %115 = arith.mulf %113, %114 : vector<2x64xf32>
    %c6_127 = arith.constant 6 : index
    %c64_128 = arith.constant 64 : index
    %116 = vector.load %arg18[%c6_127, %c64_128] : memref<18x128xf32, #tpu.memory_space<vmem>>, vector<2x64xf32>
    tpu.vector_store %arg18[%c6_127, %c64_128], %115 {strides = array<i32>} : memref<18x128xf32, #tpu.memory_space<vmem>>, vector<2x64xf32>,
    %c0_129 = arith.constant 0 : index
    %c0_130 = arith.constant 0 : index
    %c16_131 = arith.constant 16 : index
    %117 = vector.load %arg15[%c0_129, %c0_130, %c16_131] : memref<2x2x82xf32, #tpu.memory_space<vmem>>, vector<2x1x64xf32>
    %118 = vector.shape_cast %117 : vector<2x1x64xf32> to vector<2x64xf32>
    %119 = vector.broadcast %96 : vector<1x64xf32> to vector<2x64xf32>
    %120 = arith.mulf %118, %119 : vector<2x64xf32>
    %c12_132 = arith.constant 12 : index
    %c0_133 = arith.constant 0 : index
    %121 = vector.load %arg18[%c12_132, %c0_133] : memref<18x128xf32, #tpu.memory_space<vmem>>, vector<2x64xf32>
    tpu.vector_store %arg18[%c12_132, %c0_133], %120 {strides = array<i32>} : memref<18x128xf32, #tpu.memory_space<vmem>>, vector<2x64xf32>,
    %c0_134 = arith.constant 0 : index
    %c1_135 = arith.constant 1 : index
    %c16_136 = arith.constant 16 : index
    %122 = vector.load %arg15[%c0_134, %c1_135, %c16_136] : memref<2x2x82xf32, #tpu.memory_space<vmem>>, vector<2x1x64xf32>
    %123 = vector.shape_cast %122 : vector<2x1x64xf32> to vector<2x64xf32>
    %124 = vector.broadcast %96 : vector<1x64xf32> to vector<2x64xf32>
    %125 = arith.mulf %123, %124 : vector<2x64xf32>
    %c12_137 = arith.constant 12 : index
    %c64_138 = arith.constant 64 : index
    %126 = vector.load %arg18[%c12_137, %c64_138] : memref<18x128xf32, #tpu.memory_space<vmem>>, vector<2x64xf32>
    tpu.vector_store %arg18[%c12_137, %c64_138], %125 {strides = array<i32>} : memref<18x128xf32, #tpu.memory_space<vmem>>, vector<2x64xf32>,
    %c0_139 = arith.constant 0 : index
    %c0_140 = arith.constant 0 : index
    %c1_141 = arith.constant 1 : index
    %127 = vector.load %arg15[%c0_139, %c0_140, %c1_141] : memref<2x2x82xf32, #tpu.memory_space<vmem>>, vector<2x1x64xf32>
    %128 = vector.shape_cast %127 : vector<2x1x64xf32> to vector<2x64xf32>
    %c2_142 = arith.constant 2 : index
    %c0_143 = arith.constant 0 : index
    %129 = vector.load %arg18[%c2_142, %c0_143] : memref<18x128xf32, #tpu.memory_space<vmem>>, vector<2x64xf32>
    tpu.vector_store %arg18[%c2_142, %c0_143], %128 {strides = array<i32>} : memref<18x128xf32, #tpu.memory_space<vmem>>, vector<2x64xf32>,
    %c0_144 = arith.constant 0 : index
    %c1_145 = arith.constant 1 : index
    %c1_146 = arith.constant 1 : index
    %130 = vector.load %arg15[%c0_144, %c1_145, %c1_146] : memref<2x2x82xf32, #tpu.memory_space<vmem>>, vector<2x1x64xf32>
    %131 = vector.shape_cast %130 : vector<2x1x64xf32> to vector<2x64xf32>
    %c2_147 = arith.constant 2 : index
    %c64_148 = arith.constant 64 : index
    %132 = vector.load %arg18[%c2_147, %c64_148] : memref<18x128xf32, #tpu.memory_space<vmem>>, vector<2x64xf32>
    tpu.vector_store %arg18[%c2_147, %c64_148], %131 {strides = array<i32>} : memref<18x128xf32, #tpu.memory_space<vmem>>, vector<2x64xf32>,
    %c0_149 = arith.constant 0 : index
    %c0_150 = arith.constant 0 : index
    %c9_151 = arith.constant 9 : index
    %133 = vector.load %arg15[%c0_149, %c0_150, %c9_151] : memref<2x2x82xf32, #tpu.memory_space<vmem>>, vector<2x1x64xf32>
    %134 = vector.shape_cast %133 : vector<2x1x64xf32> to vector<2x64xf32>
    %c8_152 = arith.constant 8 : index
    %c0_153 = arith.constant 0 : index
    %135 = vector.load %arg18[%c8_152, %c0_153] : memref<18x128xf32, #tpu.memory_space<vmem>>, vector<2x64xf32>
    tpu.vector_store %arg18[%c8_152, %c0_153], %134 {strides = array<i32>} : memref<18x128xf32, #tpu.memory_space<vmem>>, vector<2x64xf32>,
    %c0_154 = arith.constant 0 : index
    %c1_155 = arith.constant 1 : index
    %c9_156 = arith.constant 9 : index
    %136 = vector.load %arg15[%c0_154, %c1_155, %c9_156] : memref<2x2x82xf32, #tpu.memory_space<vmem>>, vector<2x1x64xf32>
    %137 = vector.shape_cast %136 : vector<2x1x64xf32> to vector<2x64xf32>
    %c8_157 = arith.constant 8 : index
    %c64_158 = arith.constant 64 : index
    %138 = vector.load %arg18[%c8_157, %c64_158] : memref<18x128xf32, #tpu.memory_space<vmem>>, vector<2x64xf32>
    tpu.vector_store %arg18[%c8_157, %c64_158], %137 {strides = array<i32>} : memref<18x128xf32, #tpu.memory_space<vmem>>, vector<2x64xf32>,
    %c0_159 = arith.constant 0 : index
    %c0_160 = arith.constant 0 : index
    %c17_161 = arith.constant 17 : index
    %139 = vector.load %arg15[%c0_159, %c0_160, %c17_161] : memref<2x2x82xf32, #tpu.memory_space<vmem>>, vector<2x1x64xf32>
    %140 = vector.shape_cast %139 : vector<2x1x64xf32> to vector<2x64xf32>
    %c14 = arith.constant 14 : index
    %c0_162 = arith.constant 0 : index
    %141 = vector.load %arg18[%c14, %c0_162] : memref<18x128xf32, #tpu.memory_space<vmem>>, vector<2x64xf32>
    tpu.vector_store %arg18[%c14, %c0_162], %140 {strides = array<i32>} : memref<18x128xf32, #tpu.memory_space<vmem>>, vector<2x64xf32>,
    %c0_163 = arith.constant 0 : index
    %c1_164 = arith.constant 1 : index
    %c17_165 = arith.constant 17 : index
    %142 = vector.load %arg15[%c0_163, %c1_164, %c17_165] : memref<2x2x82xf32, #tpu.memory_space<vmem>>, vector<2x1x64xf32>
    %143 = vector.shape_cast %142 : vector<2x1x64xf32> to vector<2x64xf32>
    %c14_166 = arith.constant 14 : index
    %c64_167 = arith.constant 64 : index
    %144 = vector.load %arg18[%c14_166, %c64_167] : memref<18x128xf32, #tpu.memory_space<vmem>>, vector<2x64xf32>
    tpu.vector_store %arg18[%c14_166, %c64_167], %143 {strides = array<i32>} : memref<18x128xf32, #tpu.memory_space<vmem>>, vector<2x64xf32>,
    %c2_168 = arith.constant 2 : index
    %c0_169 = arith.constant 0 : index
    %145 = vector.load %arg9[%c2_168, %c0_169] : memref<3x64xf32, #tpu.memory_space<vmem>>, vector<1x64xf32>
    %c0_170 = arith.constant 0 : index
    %c0_171 = arith.constant 0 : index
    %c2_172 = arith.constant 2 : index
    %146 = vector.load %arg15[%c0_170, %c0_171, %c2_172] : memref<2x2x82xf32, #tpu.memory_space<vmem>>, vector<2x1x64xf32>
    %147 = vector.shape_cast %146 : vector<2x1x64xf32> to vector<2x64xf32>
    %148 = vector.broadcast %145 : vector<1x64xf32> to vector<2x64xf32>
    %149 = arith.mulf %147, %148 : vector<2x64xf32>
    %c4_173 = arith.constant 4 : index
    %c0_174 = arith.constant 0 : index
    %150 = vector.load %arg18[%c4_173, %c0_174] : memref<18x128xf32, #tpu.memory_space<vmem>>, vector<2x64xf32>
    tpu.vector_store %arg18[%c4_173, %c0_174], %149 {strides = array<i32>} : memref<18x128xf32, #tpu.memory_space<vmem>>, vector<2x64xf32>,
    %c0_175 = arith.constant 0 : index
    %c1_176 = arith.constant 1 : index
    %c2_177 = arith.constant 2 : index
    %151 = vector.load %arg15[%c0_175, %c1_176, %c2_177] : memref<2x2x82xf32, #tpu.memory_space<vmem>>, vector<2x1x64xf32>
    %152 = vector.shape_cast %151 : vector<2x1x64xf32> to vector<2x64xf32>
    %153 = vector.broadcast %145 : vector<1x64xf32> to vector<2x64xf32>
    %154 = arith.mulf %152, %153 : vector<2x64xf32>
    %c4_178 = arith.constant 4 : index
    %c64_179 = arith.constant 64 : index
    %155 = vector.load %arg18[%c4_178, %c64_179] : memref<18x128xf32, #tpu.memory_space<vmem>>, vector<2x64xf32>
    tpu.vector_store %arg18[%c4_178, %c64_179], %154 {strides = array<i32>} : memref<18x128xf32, #tpu.memory_space<vmem>>, vector<2x64xf32>,
    %c0_180 = arith.constant 0 : index
    %c0_181 = arith.constant 0 : index
    %c10 = arith.constant 10 : index
    %156 = vector.load %arg15[%c0_180, %c0_181, %c10] : memref<2x2x82xf32, #tpu.memory_space<vmem>>, vector<2x1x64xf32>
    %157 = vector.shape_cast %156 : vector<2x1x64xf32> to vector<2x64xf32>
    %158 = vector.broadcast %145 : vector<1x64xf32> to vector<2x64xf32>
    %159 = arith.mulf %157, %158 : vector<2x64xf32>
    %c10_182 = arith.constant 10 : index
    %c0_183 = arith.constant 0 : index
    %160 = vector.load %arg18[%c10_182, %c0_183] : memref<18x128xf32, #tpu.memory_space<vmem>>, vector<2x64xf32>
    tpu.vector_store %arg18[%c10_182, %c0_183], %159 {strides = array<i32>} : memref<18x128xf32, #tpu.memory_space<vmem>>, vector<2x64xf32>,
    %c0_184 = arith.constant 0 : index
    %c1_185 = arith.constant 1 : index
    %c10_186 = arith.constant 10 : index
    %161 = vector.load %arg15[%c0_184, %c1_185, %c10_186] : memref<2x2x82xf32, #tpu.memory_space<vmem>>, vector<2x1x64xf32>
    %162 = vector.shape_cast %161 : vector<2x1x64xf32> to vector<2x64xf32>
    %163 = vector.broadcast %145 : vector<1x64xf32> to vector<2x64xf32>
    %164 = arith.mulf %162, %163 : vector<2x64xf32>
    %c10_187 = arith.constant 10 : index
    %c64_188 = arith.constant 64 : index
    %165 = vector.load %arg18[%c10_187, %c64_188] : memref<18x128xf32, #tpu.memory_space<vmem>>, vector<2x64xf32>
    tpu.vector_store %arg18[%c10_187, %c64_188], %164 {strides = array<i32>} : memref<18x128xf32, #tpu.memory_space<vmem>>, vector<2x64xf32>,
    %c0_189 = arith.constant 0 : index
    %c0_190 = arith.constant 0 : index
    %c18_191 = arith.constant 18 : index
    %166 = vector.load %arg15[%c0_189, %c0_190, %c18_191] : memref<2x2x82xf32, #tpu.memory_space<vmem>>, vector<2x1x64xf32>
    %167 = vector.shape_cast %166 : vector<2x1x64xf32> to vector<2x64xf32>
    %168 = vector.broadcast %145 : vector<1x64xf32> to vector<2x64xf32>
    %169 = arith.mulf %167, %168 : vector<2x64xf32>
    %c16_192 = arith.constant 16 : index
    %c0_193 = arith.constant 0 : index
    %170 = vector.load %arg18[%c16_192, %c0_193] : memref<18x128xf32, #tpu.memory_space<vmem>>, vector<2x64xf32>
    tpu.vector_store %arg18[%c16_192, %c0_193], %169 {strides = array<i32>} : memref<18x128xf32, #tpu.memory_space<vmem>>, vector<2x64xf32>,
    %c0_194 = arith.constant 0 : index
    %c1_195 = arith.constant 1 : index
    %c18_196 = arith.constant 18 : index
    %171 = vector.load %arg15[%c0_194, %c1_195, %c18_196] : memref<2x2x82xf32, #tpu.memory_space<vmem>>, vector<2x1x64xf32>
    %172 = vector.shape_cast %171 : vector<2x1x64xf32> to vector<2x64xf32>
    %173 = vector.broadcast %145 : vector<1x64xf32> to vector<2x64xf32>
    %174 = arith.mulf %172, %173 : vector<2x64xf32>
    %c16_197 = arith.constant 16 : index
    %c64_198 = arith.constant 64 : index
    %175 = vector.load %arg18[%c16_197, %c64_198] : memref<18x128xf32, #tpu.memory_space<vmem>>, vector<2x64xf32>
    tpu.vector_store %arg18[%c16_197, %c64_198], %174 {strides = array<i32>} : memref<18x128xf32, #tpu.memory_space<vmem>>, vector<2x64xf32>,
    %c0_199 = arith.constant 0 : index
    %c0_200 = arith.constant 0 : index
    %176 = vector.load %arg4[%c0_199, %c0_200] : memref<4x18xf32, #tpu.memory_space<vmem>>, vector<4x18xf32>
    %c0_201 = arith.constant 0 : index
    %c0_202 = arith.constant 0 : index
    %177 = vector.load %arg18[%c0_201, %c0_202] : memref<18x128xf32, #tpu.memory_space<vmem>>, vector<18x128xf32>
    %cst_203 = arith.constant dense<0.000000e+00> : vector<4x128xf32>
    %178 = tpu.matmul %176, %177, %cst_203 {dimension_numbers = #tpu.dot_dimension_numbers<[1], [0], [0], [1], [0, 0, 1, 1], [], []>} : vector<4x18xf32>, vector<18x128xf32>, vector<4x128xf32> -> vector<4x128xf32>
    %c0_204 = arith.constant 0 : index
    %c0_205 = arith.constant 0 : index
    %179 = vector.load %arg6[%c0_204, %c0_205] : memref<64x256xf32, #tpu.memory_space<vmem>>, vector<64x256xf32>
    %180 = vector.extract_strided_slice %178 {offsets = [0, 0], sizes = [4, 64], strides = [1, 1]} : vector<4x128xf32> to vector<4x64xf32>
    %cst_206 = arith.constant dense<0.000000e+00> : vector<4x256xf32>
    %181 = tpu.matmul %180, %179, %cst_206 {dimension_numbers = #tpu.dot_dimension_numbers<[1], [0], [0], [1], [0, 0, 1, 1], [], []>} : vector<4x64xf32>, vector<64x256xf32>, vector<4x256xf32> -> vector<4x256xf32>
    %c0_207 = arith.constant 0 : index
    %c0_208 = arith.constant 0 : index
    %182 = vector.load %arg13[%c0_207, %c0_208] : memref<4x512xf32, #tpu.memory_space<vmem>>, vector<4x256xf32>
    %183 = arith.addf %182, %181 : vector<4x256xf32>
    %c0_209 = arith.constant 0 : index
    %c0_210 = arith.constant 0 : index
    %184 = vector.load %arg13[%c0_209, %c0_210] : memref<4x512xf32, #tpu.memory_space<vmem>>, vector<4x256xf32>
    tpu.vector_store %arg13[%c0_209, %c0_210], %183 {strides = array<i32>} : memref<4x512xf32, #tpu.memory_space<vmem>>, vector<4x256xf32>,
    %185 = vector.extract_strided_slice %178 {offsets = [0, 64], sizes = [4, 64], strides = [1, 1]} : vector<4x128xf32> to vector<4x64xf32>
    %cst_211 = arith.constant dense<0.000000e+00> : vector<4x256xf32>
    %186 = tpu.matmul %185, %179, %cst_211 {dimension_numbers = #tpu.dot_dimension_numbers<[1], [0], [0], [1], [0, 0, 1, 1], [], []>} : vector<4x64xf32>, vector<64x256xf32>, vector<4x256xf32> -> vector<4x256xf32>
    %c0_212 = arith.constant 0 : index
    %c256_213 = arith.constant 256 : index
    %187 = vector.load %arg13[%c0_212, %c256_213] : memref<4x512xf32, #tpu.memory_space<vmem>>, vector<4x256xf32>
    %188 = arith.addf %187, %186 : vector<4x256xf32>
    %c0_214 = arith.constant 0 : index
    %c256_215 = arith.constant 256 : index
    %189 = vector.load %arg13[%c0_214, %c256_215] : memref<4x512xf32, #tpu.memory_space<vmem>>, vector<4x256xf32>
    tpu.vector_store %arg13[%c0_214, %c256_215], %188 {strides = array<i32>} : memref<4x512xf32, #tpu.memory_space<vmem>>, vector<4x256xf32>,
    %cst_216 = arith.constant 0.000000e+00 : f32
    %190 = vector.broadcast %cst_216 : f32 to vector<2x2x5xf32>
    %c0_217 = arith.constant 0 : index
    %c0_218 = arith.constant 0 : index
    %c0_219 = arith.constant 0 : index
    %191 = vector.load %arg16[%c0_217, %c0_218, %c0_219] : memref<2x2x26xf32, #tpu.memory_space<vmem>>, vector<2x2x5xf32>
    tpu.vector_store %arg16[%c0_217, %c0_218, %c0_219], %190 {strides = array<i32>} : memref<2x2x26xf32, #tpu.memory_space<vmem>>, vector<2x2x5xf32>,
    %cst_220 = arith.constant 0.000000e+00 : f32
    %192 = vector.broadcast %cst_220 : f32 to vector<2x2x5xf32>
    %c0_221 = arith.constant 0 : index
    %c0_222 = arith.constant 0 : index
    %c21 = arith.constant 21 : index
    %193 = vector.load %arg16[%c0_221, %c0_222, %c21] : memref<2x2x26xf32, #tpu.memory_space<vmem>>, vector<2x2x5xf32>
    tpu.vector_store %arg16[%c0_221, %c0_222, %c21], %192 {strides = array<i32>} : memref<2x2x26xf32, #tpu.memory_space<vmem>>, vector<2x2x5xf32>,
    %c0_223 = arith.constant 0 : index
    %c0_224 = arith.constant 0 : index
    %c0_225 = arith.constant 0 : index
    %194 = vector.load %arg2[%c0_223, %c0_224, %c0_225] : memref<2x2x16xf32, #tpu.memory_space<vmem>>, vector<2x2x16xf32>
    %c0_226 = arith.constant 0 : index
    %c0_227 = arith.constant 0 : index
    %c5 = arith.constant 5 : index
    %195 = vector.load %arg16[%c0_226, %c0_227, %c5] : memref<2x2x26xf32, #tpu.memory_space<vmem>>, vector<2x2x16xf32>
    tpu.vector_store %arg16[%c0_226, %c0_227, %c5], %194 {strides = array<i32>} : memref<2x2x26xf32, #tpu.memory_space<vmem>>, vector<2x2x16xf32>,
    %c0_228 = arith.constant 0 : index
    %c0_229 = arith.constant 0 : index
    %196 = vector.load %arg10[%c0_228, %c0_229] : memref<3x16xf32, #tpu.memory_space<vmem>>, vector<1x16xf32>
    %c0_230 = arith.constant 0 : index
    %c0_231 = arith.constant 0 : index
    %c0_232 = arith.constant 0 : index
    %197 = vector.load %arg16[%c0_230, %c0_231, %c0_232] : memref<2x2x26xf32, #tpu.memory_space<vmem>>, vector<2x1x16xf32>
    %198 = vector.shape_cast %197 : vector<2x1x16xf32> to vector<2x16xf32>
    %199 = vector.broadcast %196 : vector<1x16xf32> to vector<2x16xf32>
    %200 = arith.mulf %198, %199 : vector<2x16xf32>
    %c0_233 = arith.constant 0 : index
    %c0_234 = arith.constant 0 : index
    %201 = vector.load %arg19[%c0_233, %c0_234] : memref<18x32xf32, #tpu.memory_space<vmem>>, vector<2x16xf32>
    tpu.vector_store %arg19[%c0_233, %c0_234], %200 {strides = array<i32>} : memref<18x32xf32, #tpu.memory_space<vmem>>, vector<2x16xf32>,
    %c0_235 = arith.constant 0 : index
    %c1_236 = arith.constant 1 : index
    %c0_237 = arith.constant 0 : index
    %202 = vector.load %arg16[%c0_235, %c1_236, %c0_237] : memref<2x2x26xf32, #tpu.memory_space<vmem>>, vector<2x1x16xf32>
    %203 = vector.shape_cast %202 : vector<2x1x16xf32> to vector<2x16xf32>
    %204 = vector.broadcast %196 : vector<1x16xf32> to vector<2x16xf32>
    %205 = arith.mulf %203, %204 : vector<2x16xf32>
    %c0_238 = arith.constant 0 : index
    %c16_239 = arith.constant 16 : index
    %206 = vector.load %arg19[%c0_238, %c16_239] : memref<18x32xf32, #tpu.memory_space<vmem>>, vector<2x16xf32>
    tpu.vector_store %arg19[%c0_238, %c16_239], %205 {strides = array<i32>} : memref<18x32xf32, #tpu.memory_space<vmem>>, vector<2x16xf32>,
    %c0_240 = arith.constant 0 : index
    %c0_241 = arith.constant 0 : index
    %c4_242 = arith.constant 4 : index
    %207 = vector.load %arg16[%c0_240, %c0_241, %c4_242] : memref<2x2x26xf32, #tpu.memory_space<vmem>>, vector<2x1x16xf32>
    %208 = vector.shape_cast %207 : vector<2x1x16xf32> to vector<2x16xf32>
    %209 = vector.broadcast %196 : vector<1x16xf32> to vector<2x16xf32>
    %210 = arith.mulf %208, %209 : vector<2x16xf32>
    %c6_243 = arith.constant 6 : index
    %c0_244 = arith.constant 0 : index
    %211 = vector.load %arg19[%c6_243, %c0_244] : memref<18x32xf32, #tpu.memory_space<vmem>>, vector<2x16xf32>
    tpu.vector_store %arg19[%c6_243, %c0_244], %210 {strides = array<i32>} : memref<18x32xf32, #tpu.memory_space<vmem>>, vector<2x16xf32>,
    %c0_245 = arith.constant 0 : index
    %c1_246 = arith.constant 1 : index
    %c4_247 = arith.constant 4 : index
    %212 = vector.load %arg16[%c0_245, %c1_246, %c4_247] : memref<2x2x26xf32, #tpu.memory_space<vmem>>, vector<2x1x16xf32>
    %213 = vector.shape_cast %212 : vector<2x1x16xf32> to vector<2x16xf32>
    %214 = vector.broadcast %196 : vector<1x16xf32> to vector<2x16xf32>
    %215 = arith.mulf %213, %214 : vector<2x16xf32>
    %c6_248 = arith.constant 6 : index
    %c16_249 = arith.constant 16 : index
    %216 = vector.load %arg19[%c6_248, %c16_249] : memref<18x32xf32, #tpu.memory_space<vmem>>, vector<2x16xf32>
    tpu.vector_store %arg19[%c6_248, %c16_249], %215 {strides = array<i32>} : memref<18x32xf32, #tpu.memory_space<vmem>>, vector<2x16xf32>,
    %c0_250 = arith.constant 0 : index
    %c0_251 = arith.constant 0 : index
    %c8_252 = arith.constant 8 : index
    %217 = vector.load %arg16[%c0_250, %c0_251, %c8_252] : memref<2x2x26xf32, #tpu.memory_space<vmem>>, vector<2x1x16xf32>
    %218 = vector.shape_cast %217 : vector<2x1x16xf32> to vector<2x16xf32>
    %219 = vector.broadcast %196 : vector<1x16xf32> to vector<2x16xf32>
    %220 = arith.mulf %218, %219 : vector<2x16xf32>
    %c12_253 = arith.constant 12 : index
    %c0_254 = arith.constant 0 : index
    %221 = vector.load %arg19[%c12_253, %c0_254] : memref<18x32xf32, #tpu.memory_space<vmem>>, vector<2x16xf32>
    tpu.vector_store %arg19[%c12_253, %c0_254], %220 {strides = array<i32>} : memref<18x32xf32, #tpu.memory_space<vmem>>, vector<2x16xf32>,
    %c0_255 = arith.constant 0 : index
    %c1_256 = arith.constant 1 : index
    %c8_257 = arith.constant 8 : index
    %222 = vector.load %arg16[%c0_255, %c1_256, %c8_257] : memref<2x2x26xf32, #tpu.memory_space<vmem>>, vector<2x1x16xf32>
    %223 = vector.shape_cast %222 : vector<2x1x16xf32> to vector<2x16xf32>
    %224 = vector.broadcast %196 : vector<1x16xf32> to vector<2x16xf32>
    %225 = arith.mulf %223, %224 : vector<2x16xf32>
    %c12_258 = arith.constant 12 : index
    %c16_259 = arith.constant 16 : index
    %226 = vector.load %arg19[%c12_258, %c16_259] : memref<18x32xf32, #tpu.memory_space<vmem>>, vector<2x16xf32>
    tpu.vector_store %arg19[%c12_258, %c16_259], %225 {strides = array<i32>} : memref<18x32xf32, #tpu.memory_space<vmem>>, vector<2x16xf32>,
    %c0_260 = arith.constant 0 : index
    %c0_261 = arith.constant 0 : index
    %c1_262 = arith.constant 1 : index
    %227 = vector.load %arg16[%c0_260, %c0_261, %c1_262] : memref<2x2x26xf32, #tpu.memory_space<vmem>>, vector<2x1x16xf32>
    %228 = vector.shape_cast %227 : vector<2x1x16xf32> to vector<2x16xf32>
    %c2_263 = arith.constant 2 : index
    %c0_264 = arith.constant 0 : index
    %229 = vector.load %arg19[%c2_263, %c0_264] : memref<18x32xf32, #tpu.memory_space<vmem>>, vector<2x16xf32>
    tpu.vector_store %arg19[%c2_263, %c0_264], %228 {strides = array<i32>} : memref<18x32xf32, #tpu.memory_space<vmem>>, vector<2x16xf32>,
    %c0_265 = arith.constant 0 : index
    %c1_266 = arith.constant 1 : index
    %c1_267 = arith.constant 1 : index
    %230 = vector.load %arg16[%c0_265, %c1_266, %c1_267] : memref<2x2x26xf32, #tpu.memory_space<vmem>>, vector<2x1x16xf32>
    %231 = vector.shape_cast %230 : vector<2x1x16xf32> to vector<2x16xf32>
    %c2_268 = arith.constant 2 : index
    %c16_269 = arith.constant 16 : index
    %232 = vector.load %arg19[%c2_268, %c16_269] : memref<18x32xf32, #tpu.memory_space<vmem>>, vector<2x16xf32>
    tpu.vector_store %arg19[%c2_268, %c16_269], %231 {strides = array<i32>} : memref<18x32xf32, #tpu.memory_space<vmem>>, vector<2x16xf32>,
    %c0_270 = arith.constant 0 : index
    %c0_271 = arith.constant 0 : index
    %c5_272 = arith.constant 5 : index
    %233 = vector.load %arg16[%c0_270, %c0_271, %c5_272] : memref<2x2x26xf32, #tpu.memory_space<vmem>>, vector<2x1x16xf32>
    %234 = vector.shape_cast %233 : vector<2x1x16xf32> to vector<2x16xf32>
    %c8_273 = arith.constant 8 : index
    %c0_274 = arith.constant 0 : index
    %235 = vector.load %arg19[%c8_273, %c0_274] : memref<18x32xf32, #tpu.memory_space<vmem>>, vector<2x16xf32>
    tpu.vector_store %arg19[%c8_273, %c0_274], %234 {strides = array<i32>} : memref<18x32xf32, #tpu.memory_space<vmem>>, vector<2x16xf32>,
    %c0_275 = arith.constant 0 : index
    %c1_276 = arith.constant 1 : index
    %c5_277 = arith.constant 5 : index
    %236 = vector.load %arg16[%c0_275, %c1_276, %c5_277] : memref<2x2x26xf32, #tpu.memory_space<vmem>>, vector<2x1x16xf32>
    %237 = vector.shape_cast %236 : vector<2x1x16xf32> to vector<2x16xf32>
    %c8_278 = arith.constant 8 : index
    %c16_279 = arith.constant 16 : index
    %238 = vector.load %arg19[%c8_278, %c16_279] : memref<18x32xf32, #tpu.memory_space<vmem>>, vector<2x16xf32>
    tpu.vector_store %arg19[%c8_278, %c16_279], %237 {strides = array<i32>} : memref<18x32xf32, #tpu.memory_space<vmem>>, vector<2x16xf32>,
    %c0_280 = arith.constant 0 : index
    %c0_281 = arith.constant 0 : index
    %c9_282 = arith.constant 9 : index
    %239 = vector.load %arg16[%c0_280, %c0_281, %c9_282] : memref<2x2x26xf32, #tpu.memory_space<vmem>>, vector<2x1x16xf32>
    %240 = vector.shape_cast %239 : vector<2x1x16xf32> to vector<2x16xf32>
    %c14_283 = arith.constant 14 : index
    %c0_284 = arith.constant 0 : index
    %241 = vector.load %arg19[%c14_283, %c0_284] : memref<18x32xf32, #tpu.memory_space<vmem>>, vector<2x16xf32>
    tpu.vector_store %arg19[%c14_283, %c0_284], %240 {strides = array<i32>} : memref<18x32xf32, #tpu.memory_space<vmem>>, vector<2x16xf32>,
    %c0_285 = arith.constant 0 : index
    %c1_286 = arith.constant 1 : index
    %c9_287 = arith.constant 9 : index
    %242 = vector.load %arg16[%c0_285, %c1_286, %c9_287] : memref<2x2x26xf32, #tpu.memory_space<vmem>>, vector<2x1x16xf32>
    %243 = vector.shape_cast %242 : vector<2x1x16xf32> to vector<2x16xf32>
    %c14_288 = arith.constant 14 : index
    %c16_289 = arith.constant 16 : index
    %244 = vector.load %arg19[%c14_288, %c16_289] : memref<18x32xf32, #tpu.memory_space<vmem>>, vector<2x16xf32>
    tpu.vector_store %arg19[%c14_288, %c16_289], %243 {strides = array<i32>} : memref<18x32xf32, #tpu.memory_space<vmem>>, vector<2x16xf32>,
    %c2_290 = arith.constant 2 : index
    %c0_291 = arith.constant 0 : index
    %245 = vector.load %arg10[%c2_290, %c0_291] : memref<3x16xf32, #tpu.memory_space<vmem>>, vector<1x16xf32>
    %c0_292 = arith.constant 0 : index
    %c0_293 = arith.constant 0 : index
    %c2_294 = arith.constant 2 : index
    %246 = vector.load %arg16[%c0_292, %c0_293, %c2_294] : memref<2x2x26xf32, #tpu.memory_space<vmem>>, vector<2x1x16xf32>
    %247 = vector.shape_cast %246 : vector<2x1x16xf32> to vector<2x16xf32>
    %248 = vector.broadcast %245 : vector<1x16xf32> to vector<2x16xf32>
    %249 = arith.mulf %247, %248 : vector<2x16xf32>
    %c4_295 = arith.constant 4 : index
    %c0_296 = arith.constant 0 : index
    %250 = vector.load %arg19[%c4_295, %c0_296] : memref<18x32xf32, #tpu.memory_space<vmem>>, vector<2x16xf32>
    tpu.vector_store %arg19[%c4_295, %c0_296], %249 {strides = array<i32>} : memref<18x32xf32, #tpu.memory_space<vmem>>, vector<2x16xf32>,
    %c0_297 = arith.constant 0 : index
    %c1_298 = arith.constant 1 : index
    %c2_299 = arith.constant 2 : index
    %251 = vector.load %arg16[%c0_297, %c1_298, %c2_299] : memref<2x2x26xf32, #tpu.memory_space<vmem>>, vector<2x1x16xf32>
    %252 = vector.shape_cast %251 : vector<2x1x16xf32> to vector<2x16xf32>
    %253 = vector.broadcast %245 : vector<1x16xf32> to vector<2x16xf32>
    %254 = arith.mulf %252, %253 : vector<2x16xf32>
    %c4_300 = arith.constant 4 : index
    %c16_301 = arith.constant 16 : index
    %255 = vector.load %arg19[%c4_300, %c16_301] : memref<18x32xf32, #tpu.memory_space<vmem>>, vector<2x16xf32>
    tpu.vector_store %arg19[%c4_300, %c16_301], %254 {strides = array<i32>} : memref<18x32xf32, #tpu.memory_space<vmem>>, vector<2x16xf32>,
    %c0_302 = arith.constant 0 : index
    %c0_303 = arith.constant 0 : index
    %c6_304 = arith.constant 6 : index
    %256 = vector.load %arg16[%c0_302, %c0_303, %c6_304] : memref<2x2x26xf32, #tpu.memory_space<vmem>>, vector<2x1x16xf32>
    %257 = vector.shape_cast %256 : vector<2x1x16xf32> to vector<2x16xf32>
    %258 = vector.broadcast %245 : vector<1x16xf32> to vector<2x16xf32>
    %259 = arith.mulf %257, %258 : vector<2x16xf32>
    %c10_305 = arith.constant 10 : index
    %c0_306 = arith.constant 0 : index
    %260 = vector.load %arg19[%c10_305, %c0_306] : memref<18x32xf32, #tpu.memory_space<vmem>>, vector<2x16xf32>
    tpu.vector_store %arg19[%c10_305, %c0_306], %259 {strides = array<i32>} : memref<18x32xf32, #tpu.memory_space<vmem>>, vector<2x16xf32>,
    %c0_307 = arith.constant 0 : index
    %c1_308 = arith.constant 1 : index
    %c6_309 = arith.constant 6 : index
    %261 = vector.load %arg16[%c0_307, %c1_308, %c6_309] : memref<2x2x26xf32, #tpu.memory_space<vmem>>, vector<2x1x16xf32>
    %262 = vector.shape_cast %261 : vector<2x1x16xf32> to vector<2x16xf32>
    %263 = vector.broadcast %245 : vector<1x16xf32> to vector<2x16xf32>
    %264 = arith.mulf %262, %263 : vector<2x16xf32>
    %c10_310 = arith.constant 10 : index
    %c16_311 = arith.constant 16 : index
    %265 = vector.load %arg19[%c10_310, %c16_311] : memref<18x32xf32, #tpu.memory_space<vmem>>, vector<2x16xf32>
    tpu.vector_store %arg19[%c10_310, %c16_311], %264 {strides = array<i32>} : memref<18x32xf32, #tpu.memory_space<vmem>>, vector<2x16xf32>,
    %c0_312 = arith.constant 0 : index
    %c0_313 = arith.constant 0 : index
    %c10_314 = arith.constant 10 : index
    %266 = vector.load %arg16[%c0_312, %c0_313, %c10_314] : memref<2x2x26xf32, #tpu.memory_space<vmem>>, vector<2x1x16xf32>
    %267 = vector.shape_cast %266 : vector<2x1x16xf32> to vector<2x16xf32>
    %268 = vector.broadcast %245 : vector<1x16xf32> to vector<2x16xf32>
    %269 = arith.mulf %267, %268 : vector<2x16xf32>
    %c16_315 = arith.constant 16 : index
    %c0_316 = arith.constant 0 : index
    %270 = vector.load %arg19[%c16_315, %c0_316] : memref<18x32xf32, #tpu.memory_space<vmem>>, vector<2x16xf32>
    tpu.vector_store %arg19[%c16_315, %c0_316], %269 {strides = array<i32>} : memref<18x32xf32, #tpu.memory_space<vmem>>, vector<2x16xf32>,
    %c0_317 = arith.constant 0 : index
    %c1_318 = arith.constant 1 : index
    %c10_319 = arith.constant 10 : index
    %271 = vector.load %arg16[%c0_317, %c1_318, %c10_319] : memref<2x2x26xf32, #tpu.memory_space<vmem>>, vector<2x1x16xf32>
    %272 = vector.shape_cast %271 : vector<2x1x16xf32> to vector<2x16xf32>
    %273 = vector.broadcast %245 : vector<1x16xf32> to vector<2x16xf32>
    %274 = arith.mulf %272, %273 : vector<2x16xf32>
    %c16_320 = arith.constant 16 : index
    %c16_321 = arith.constant 16 : index
    %275 = vector.load %arg19[%c16_320, %c16_321] : memref<18x32xf32, #tpu.memory_space<vmem>>, vector<2x16xf32>
    tpu.vector_store %arg19[%c16_320, %c16_321], %274 {strides = array<i32>} : memref<18x32xf32, #tpu.memory_space<vmem>>, vector<2x16xf32>,
    %c0_322 = arith.constant 0 : index
    %c0_323 = arith.constant 0 : index
    %276 = vector.load %arg5[%c0_322, %c0_323] : memref<4x18xf32, #tpu.memory_space<vmem>>, vector<4x18xf32>
    %c0_324 = arith.constant 0 : index
    %c0_325 = arith.constant 0 : index
    %277 = vector.load %arg19[%c0_324, %c0_325] : memref<18x32xf32, #tpu.memory_space<vmem>>, vector<18x32xf32>
    %cst_326 = arith.constant dense<0.000000e+00> : vector<4x32xf32>
    %278 = tpu.matmul %276, %277, %cst_326 {dimension_numbers = #tpu.dot_dimension_numbers<[1], [0], [0], [1], [0, 0, 1, 1], [], []>} : vector<4x18xf32>, vector<18x32xf32>, vector<4x32xf32> -> vector<4x32xf32>
    %c0_327 = arith.constant 0 : index
    %c0_328 = arith.constant 0 : index
    %279 = vector.load %arg7[%c0_327, %c0_328] : memref<16x256xf32, #tpu.memory_space<vmem>>, vector<16x256xf32>
    %280 = vector.extract_strided_slice %278 {offsets = [0, 0], sizes = [4, 16], strides = [1, 1]} : vector<4x32xf32> to vector<4x16xf32>
    %cst_329 = arith.constant dense<0.000000e+00> : vector<4x256xf32>
    %281 = tpu.matmul %280, %279, %cst_329 {dimension_numbers = #tpu.dot_dimension_numbers<[1], [0], [0], [1], [0, 0, 1, 1], [], []>} : vector<4x16xf32>, vector<16x256xf32>, vector<4x256xf32> -> vector<4x256xf32>
    %c0_330 = arith.constant 0 : index
    %c0_331 = arith.constant 0 : index
    %282 = vector.load %arg13[%c0_330, %c0_331] : memref<4x512xf32, #tpu.memory_space<vmem>>, vector<4x256xf32>
    %283 = arith.addf %282, %281 : vector<4x256xf32>
    %c0_332 = arith.constant 0 : index
    %c0_333 = arith.constant 0 : index
    %284 = vector.load %arg13[%c0_332, %c0_333] : memref<4x512xf32, #tpu.memory_space<vmem>>, vector<4x256xf32>
    tpu.vector_store %arg13[%c0_332, %c0_333], %283 {strides = array<i32>} : memref<4x512xf32, #tpu.memory_space<vmem>>, vector<4x256xf32>,
    %285 = vector.extract_strided_slice %278 {offsets = [0, 16], sizes = [4, 16], strides = [1, 1]} : vector<4x32xf32> to vector<4x16xf32>
    %cst_334 = arith.constant dense<0.000000e+00> : vector<4x256xf32>
    %286 = tpu.matmul %285, %279, %cst_334 {dimension_numbers = #tpu.dot_dimension_numbers<[1], [0], [0], [1], [0, 0, 1, 1], [], []>} : vector<4x16xf32>, vector<16x256xf32>, vector<4x256xf32> -> vector<4x256xf32>
    %c0_335 = arith.constant 0 : index
    %c256_336 = arith.constant 256 : index
    %287 = vector.load %arg13[%c0_335, %c256_336] : memref<4x512xf32, #tpu.memory_space<vmem>>, vector<4x256xf32>
    %288 = arith.addf %287, %286 : vector<4x256xf32>
    %c0_337 = arith.constant 0 : index
    %c256_338 = arith.constant 256 : index
    %289 = vector.load %arg13[%c0_337, %c256_338] : memref<4x512xf32, #tpu.memory_space<vmem>>, vector<4x256xf32>
    tpu.vector_store %arg13[%c0_337, %c256_338], %288 {strides = array<i32>} : memref<4x512xf32, #tpu.memory_space<vmem>>, vector<4x256xf32>,
    %c0_339 = arith.constant 0 : index
    %c0_340 = arith.constant 0 : index
    %290 = vector.load %arg13[%c0_339, %c0_340] : memref<4x512xf32, #tpu.memory_space<vmem>>, vector<4x512xf32>
    %cst_341 = arith.constant dense<0.000000e+00> : vector<4xf32>
    %291 = vector.multi_reduction <add>, %290, %cst_341 [1] : vector<4x512xf32> to vector<4xf32>
    %292 = vector.shape_cast %291 : vector<4xf32> to vector<4x1xf32>
    %cst_342 = arith.constant 0.001953125 : f32
    %293 = vector.broadcast %cst_342 : f32 to vector<4x1xf32>
    %294 = arith.mulf %292, %293 : vector<4x1xf32>
    %295 = arith.mulf %290, %290 : vector<4x512xf32>
    %cst_343 = arith.constant dense<0.000000e+00> : vector<4xf32>
    %296 = vector.multi_reduction <add>, %295, %cst_343 [1] : vector<4x512xf32> to vector<4xf32>
    %297 = vector.shape_cast %296 : vector<4xf32> to vector<4x1xf32>
    %cst_344 = arith.constant 0.001953125 : f32
    %298 = vector.broadcast %cst_344 : f32 to vector<4x1xf32>
    %299 = arith.mulf %297, %298 : vector<4x1xf32>
    %300 = arith.mulf %294, %294 : vector<4x1xf32>
    %301 = arith.subf %299, %300 : vector<4x1xf32>
    %c0_345 = arith.constant 0 : index
    %c0_346 = arith.constant 0 : index
    %302 = vector.load %arg11[%c0_345, %c0_346] : memref<4x1xf32, #tpu.memory_space<vmem>>, vector<4x1xf32>
    %cst_347 = arith.constant 9.99999974E-6 : f32
    %303 = vector.broadcast %cst_347 : f32 to vector<4x1xf32>
    %304 = arith.addf %301, %303 : vector<4x1xf32>
    %305 = math.rsqrt %304 : vector<4x1xf32>
    %306 = arith.mulf %302, %305 : vector<4x1xf32>
    %c0_348 = arith.constant 0 : index
    %c0_349 = arith.constant 0 : index
    %307 = vector.load %arg12[%c0_348, %c0_349] : memref<4x1xf32, #tpu.memory_space<vmem>>, vector<4x1xf32>
    %308 = arith.mulf %294, %306 : vector<4x1xf32>
    %309 = arith.subf %307, %308 : vector<4x1xf32>
    %310 = vector.broadcast %306 : vector<4x1xf32> to vector<4x512xf32>
    %311 = arith.mulf %290, %310 : vector<4x512xf32>
    %312 = vector.broadcast %309 : vector<4x1xf32> to vector<4x512xf32>
    %313 = arith.addf %311, %312 : vector<4x512xf32>
    %c0_350 = arith.constant 0 : index
    %c0_351 = arith.constant 0 : index
    %314 = vector.load %arg13[%c0_350, %c0_351] : memref<4x512xf32, #tpu.memory_space<vmem>>, vector<4x512xf32>
    tpu.vector_store %arg13[%c0_350, %c0_351], %313 {strides = array<i32>} : memref<4x512xf32, #tpu.memory_space<vmem>>, vector<4x512xf32>,
    return
  }
}

module attributes {stable_mosaic.version = 11 : i64} {
  func.func @kernel(%arg0: memref<4x2x16xf32, #tpu.memory_space<vmem>>, %arg1: memref<2x2x16xf32, #tpu.memory_space<vmem>>, %arg2: memref<2x2x16xf32, #tpu.memory_space<vmem>>, %arg3: memref<2x36xf32, #tpu.memory_space<vmem>>, %arg4: memref<2x18xf32, #tpu.memory_space<vmem>>, %arg5: memref<2x18xf32, #tpu.memory_space<vmem>>, %arg6: memref<3x16xf32, #tpu.memory_space<vmem>>, %arg7: memref<3x16xf32, #tpu.memory_space<vmem>>, %arg8: memref<3x16xf32, #tpu.memory_space<vmem>>, %arg9: memref<2x1xf32, #tpu.memory_space<vmem>>, %arg10: memref<2x1xf32, #tpu.memory_space<vmem>>, %arg11: memref<2x32xf32, #tpu.memory_space<vmem>>, %arg12: memref<4x2x26xf32, #tpu.memory_space<vmem>>, %arg13: memref<2x2x26xf32, #tpu.memory_space<vmem>>, %arg14: memref<2x2x26xf32, #tpu.memory_space<vmem>>, %arg15: memref<36x32xf32, #tpu.memory_space<vmem>>, %arg16: memref<18x32xf32, #tpu.memory_space<vmem>>, %arg17: memref<18x32xf32, #tpu.memory_space<vmem>>) attributes {dimension_semantics = [], scalar_prefetch = 0 : i64, scratch_operands = 6 : i64, tpu.core_type = #tpu.core_type<tc>} {
    %cst = arith.constant 0.000000e+00 : f32
    %0 = vector.broadcast %cst : f32 to vector<4x2x5xf32>
    %c0 = arith.constant 0 : index
    %c0_0 = arith.constant 0 : index
    %c0_1 = arith.constant 0 : index
    %1 = vector.load %arg12[%c0, %c0_0, %c0_1] : memref<4x2x26xf32, #tpu.memory_space<vmem>>, vector<4x2x5xf32>
    tpu.vector_store %arg12[%c0, %c0_0, %c0_1], %0 {strides = array<i32>} : memref<4x2x26xf32, #tpu.memory_space<vmem>>, vector<4x2x5xf32>,
    %cst_2 = arith.constant 0.000000e+00 : f32
    %2 = vector.broadcast %cst_2 : f32 to vector<4x2x5xf32>
    %c0_3 = arith.constant 0 : index
    %c0_4 = arith.constant 0 : index
    %c21 = arith.constant 21 : index
    %3 = vector.load %arg12[%c0_3, %c0_4, %c21] : memref<4x2x26xf32, #tpu.memory_space<vmem>>, vector<4x2x5xf32>
    tpu.vector_store %arg12[%c0_3, %c0_4, %c21], %2 {strides = array<i32>} : memref<4x2x26xf32, #tpu.memory_space<vmem>>, vector<4x2x5xf32>,
    %c0_5 = arith.constant 0 : index
    %c0_6 = arith.constant 0 : index
    %c0_7 = arith.constant 0 : index
    %4 = vector.load %arg0[%c0_5, %c0_6, %c0_7] : memref<4x2x16xf32, #tpu.memory_space<vmem>>, vector<4x2x16xf32>
    %c0_8 = arith.constant 0 : index
    %c0_9 = arith.constant 0 : index
    %c5 = arith.constant 5 : index
    %5 = vector.load %arg12[%c0_8, %c0_9, %c5] : memref<4x2x26xf32, #tpu.memory_space<vmem>>, vector<4x2x16xf32>
    tpu.vector_store %arg12[%c0_8, %c0_9, %c5], %4 {strides = array<i32>} : memref<4x2x26xf32, #tpu.memory_space<vmem>>, vector<4x2x16xf32>,
    %c0_10 = arith.constant 0 : index
    %c0_11 = arith.constant 0 : index
    %6 = vector.load %arg6[%c0_10, %c0_11] : memref<3x16xf32, #tpu.memory_space<vmem>>, vector<1x16xf32>
    %c0_12 = arith.constant 0 : index
    %c0_13 = arith.constant 0 : index
    %c0_14 = arith.constant 0 : index
    %7 = vector.load %arg12[%c0_12, %c0_13, %c0_14] : memref<4x2x26xf32, #tpu.memory_space<vmem>>, vector<4x1x16xf32>
    %8 = vector.shape_cast %7 : vector<4x1x16xf32> to vector<4x16xf32>
    %9 = vector.broadcast %6 : vector<1x16xf32> to vector<4x16xf32>
    %10 = arith.mulf %8, %9 : vector<4x16xf32>
    %c0_15 = arith.constant 0 : index
    %c0_16 = arith.constant 0 : index
    %11 = vector.load %arg15[%c0_15, %c0_16] : memref<36x32xf32, #tpu.memory_space<vmem>>, vector<4x16xf32>
    tpu.vector_store %arg15[%c0_15, %c0_16], %10 {strides = array<i32>} : memref<36x32xf32, #tpu.memory_space<vmem>>, vector<4x16xf32>,
    %c0_17 = arith.constant 0 : index
    %c1 = arith.constant 1 : index
    %c0_18 = arith.constant 0 : index
    %12 = vector.load %arg12[%c0_17, %c1, %c0_18] : memref<4x2x26xf32, #tpu.memory_space<vmem>>, vector<4x1x16xf32>
    %13 = vector.shape_cast %12 : vector<4x1x16xf32> to vector<4x16xf32>
    %14 = vector.broadcast %6 : vector<1x16xf32> to vector<4x16xf32>
    %15 = arith.mulf %13, %14 : vector<4x16xf32>
    %c0_19 = arith.constant 0 : index
    %c16 = arith.constant 16 : index
    %16 = vector.load %arg15[%c0_19, %c16] : memref<36x32xf32, #tpu.memory_space<vmem>>, vector<4x16xf32>
    tpu.vector_store %arg15[%c0_19, %c16], %15 {strides = array<i32>} : memref<36x32xf32, #tpu.memory_space<vmem>>, vector<4x16xf32>,
    %c0_20 = arith.constant 0 : index
    %c0_21 = arith.constant 0 : index
    %c4 = arith.constant 4 : index
    %17 = vector.load %arg12[%c0_20, %c0_21, %c4] : memref<4x2x26xf32, #tpu.memory_space<vmem>>, vector<4x1x16xf32>
    %18 = vector.shape_cast %17 : vector<4x1x16xf32> to vector<4x16xf32>
    %19 = vector.broadcast %6 : vector<1x16xf32> to vector<4x16xf32>
    %20 = arith.mulf %18, %19 : vector<4x16xf32>
    %c12 = arith.constant 12 : index
    %c0_22 = arith.constant 0 : index
    %21 = vector.load %arg15[%c12, %c0_22] : memref<36x32xf32, #tpu.memory_space<vmem>>, vector<4x16xf32>
    tpu.vector_store %arg15[%c12, %c0_22], %20 {strides = array<i32>} : memref<36x32xf32, #tpu.memory_space<vmem>>, vector<4x16xf32>,
    %c0_23 = arith.constant 0 : index
    %c1_24 = arith.constant 1 : index
    %c4_25 = arith.constant 4 : index
    %22 = vector.load %arg12[%c0_23, %c1_24, %c4_25] : memref<4x2x26xf32, #tpu.memory_space<vmem>>, vector<4x1x16xf32>
    %23 = vector.shape_cast %22 : vector<4x1x16xf32> to vector<4x16xf32>
    %24 = vector.broadcast %6 : vector<1x16xf32> to vector<4x16xf32>
    %25 = arith.mulf %23, %24 : vector<4x16xf32>
    %c12_26 = arith.constant 12 : index
    %c16_27 = arith.constant 16 : index
    %26 = vector.load %arg15[%c12_26, %c16_27] : memref<36x32xf32, #tpu.memory_space<vmem>>, vector<4x16xf32>
    tpu.vector_store %arg15[%c12_26, %c16_27], %25 {strides = array<i32>} : memref<36x32xf32, #tpu.memory_space<vmem>>, vector<4x16xf32>,
    %c0_28 = arith.constant 0 : index
    %c0_29 = arith.constant 0 : index
    %c8 = arith.constant 8 : index
    %27 = vector.load %arg12[%c0_28, %c0_29, %c8] : memref<4x2x26xf32, #tpu.memory_space<vmem>>, vector<4x1x16xf32>
    %28 = vector.shape_cast %27 : vector<4x1x16xf32> to vector<4x16xf32>
    %29 = vector.broadcast %6 : vector<1x16xf32> to vector<4x16xf32>
    %30 = arith.mulf %28, %29 : vector<4x16xf32>
    %c24 = arith.constant 24 : index
    %c0_30 = arith.constant 0 : index
    %31 = vector.load %arg15[%c24, %c0_30] : memref<36x32xf32, #tpu.memory_space<vmem>>, vector<4x16xf32>
    tpu.vector_store %arg15[%c24, %c0_30], %30 {strides = array<i32>} : memref<36x32xf32, #tpu.memory_space<vmem>>, vector<4x16xf32>,
    %c0_31 = arith.constant 0 : index
    %c1_32 = arith.constant 1 : index
    %c8_33 = arith.constant 8 : index
    %32 = vector.load %arg12[%c0_31, %c1_32, %c8_33] : memref<4x2x26xf32, #tpu.memory_space<vmem>>, vector<4x1x16xf32>
    %33 = vector.shape_cast %32 : vector<4x1x16xf32> to vector<4x16xf32>
    %34 = vector.broadcast %6 : vector<1x16xf32> to vector<4x16xf32>
    %35 = arith.mulf %33, %34 : vector<4x16xf32>
    %c24_34 = arith.constant 24 : index
    %c16_35 = arith.constant 16 : index
    %36 = vector.load %arg15[%c24_34, %c16_35] : memref<36x32xf32, #tpu.memory_space<vmem>>, vector<4x16xf32>
    tpu.vector_store %arg15[%c24_34, %c16_35], %35 {strides = array<i32>} : memref<36x32xf32, #tpu.memory_space<vmem>>, vector<4x16xf32>,
    %c0_36 = arith.constant 0 : index
    %c0_37 = arith.constant 0 : index
    %c1_38 = arith.constant 1 : index
    %37 = vector.load %arg12[%c0_36, %c0_37, %c1_38] : memref<4x2x26xf32, #tpu.memory_space<vmem>>, vector<4x1x16xf32>
    %38 = vector.shape_cast %37 : vector<4x1x16xf32> to vector<4x16xf32>
    %c4_39 = arith.constant 4 : index
    %c0_40 = arith.constant 0 : index
    %39 = vector.load %arg15[%c4_39, %c0_40] : memref<36x32xf32, #tpu.memory_space<vmem>>, vector<4x16xf32>
    tpu.vector_store %arg15[%c4_39, %c0_40], %38 {strides = array<i32>} : memref<36x32xf32, #tpu.memory_space<vmem>>, vector<4x16xf32>,
    %c0_41 = arith.constant 0 : index
    %c1_42 = arith.constant 1 : index
    %c1_43 = arith.constant 1 : index
    %40 = vector.load %arg12[%c0_41, %c1_42, %c1_43] : memref<4x2x26xf32, #tpu.memory_space<vmem>>, vector<4x1x16xf32>
    %41 = vector.shape_cast %40 : vector<4x1x16xf32> to vector<4x16xf32>
    %c4_44 = arith.constant 4 : index
    %c16_45 = arith.constant 16 : index
    %42 = vector.load %arg15[%c4_44, %c16_45] : memref<36x32xf32, #tpu.memory_space<vmem>>, vector<4x16xf32>
    tpu.vector_store %arg15[%c4_44, %c16_45], %41 {strides = array<i32>} : memref<36x32xf32, #tpu.memory_space<vmem>>, vector<4x16xf32>,
    %c0_46 = arith.constant 0 : index
    %c0_47 = arith.constant 0 : index
    %c5_48 = arith.constant 5 : index
    %43 = vector.load %arg12[%c0_46, %c0_47, %c5_48] : memref<4x2x26xf32, #tpu.memory_space<vmem>>, vector<4x1x16xf32>
    %44 = vector.shape_cast %43 : vector<4x1x16xf32> to vector<4x16xf32>
    %c16_49 = arith.constant 16 : index
    %c0_50 = arith.constant 0 : index
    %45 = vector.load %arg15[%c16_49, %c0_50] : memref<36x32xf32, #tpu.memory_space<vmem>>, vector<4x16xf32>
    tpu.vector_store %arg15[%c16_49, %c0_50], %44 {strides = array<i32>} : memref<36x32xf32, #tpu.memory_space<vmem>>, vector<4x16xf32>,
    %c0_51 = arith.constant 0 : index
    %c1_52 = arith.constant 1 : index
    %c5_53 = arith.constant 5 : index
    %46 = vector.load %arg12[%c0_51, %c1_52, %c5_53] : memref<4x2x26xf32, #tpu.memory_space<vmem>>, vector<4x1x16xf32>
    %47 = vector.shape_cast %46 : vector<4x1x16xf32> to vector<4x16xf32>
    %c16_54 = arith.constant 16 : index
    %c16_55 = arith.constant 16 : index
    %48 = vector.load %arg15[%c16_54, %c16_55] : memref<36x32xf32, #tpu.memory_space<vmem>>, vector<4x16xf32>
    tpu.vector_store %arg15[%c16_54, %c16_55], %47 {strides = array<i32>} : memref<36x32xf32, #tpu.memory_space<vmem>>, vector<4x16xf32>,
    %c0_56 = arith.constant 0 : index
    %c0_57 = arith.constant 0 : index
    %c9 = arith.constant 9 : index
    %49 = vector.load %arg12[%c0_56, %c0_57, %c9] : memref<4x2x26xf32, #tpu.memory_space<vmem>>, vector<4x1x16xf32>
    %50 = vector.shape_cast %49 : vector<4x1x16xf32> to vector<4x16xf32>
    %c28 = arith.constant 28 : index
    %c0_58 = arith.constant 0 : index
    %51 = vector.load %arg15[%c28, %c0_58] : memref<36x32xf32, #tpu.memory_space<vmem>>, vector<4x16xf32>
    tpu.vector_store %arg15[%c28, %c0_58], %50 {strides = array<i32>} : memref<36x32xf32, #tpu.memory_space<vmem>>, vector<4x16xf32>,
    %c0_59 = arith.constant 0 : index
    %c1_60 = arith.constant 1 : index
    %c9_61 = arith.constant 9 : index
    %52 = vector.load %arg12[%c0_59, %c1_60, %c9_61] : memref<4x2x26xf32, #tpu.memory_space<vmem>>, vector<4x1x16xf32>
    %53 = vector.shape_cast %52 : vector<4x1x16xf32> to vector<4x16xf32>
    %c28_62 = arith.constant 28 : index
    %c16_63 = arith.constant 16 : index
    %54 = vector.load %arg15[%c28_62, %c16_63] : memref<36x32xf32, #tpu.memory_space<vmem>>, vector<4x16xf32>
    tpu.vector_store %arg15[%c28_62, %c16_63], %53 {strides = array<i32>} : memref<36x32xf32, #tpu.memory_space<vmem>>, vector<4x16xf32>,
    %c2 = arith.constant 2 : index
    %c0_64 = arith.constant 0 : index
    %55 = vector.load %arg6[%c2, %c0_64] : memref<3x16xf32, #tpu.memory_space<vmem>>, vector<1x16xf32>
    %c0_65 = arith.constant 0 : index
    %c0_66 = arith.constant 0 : index
    %c2_67 = arith.constant 2 : index
    %56 = vector.load %arg12[%c0_65, %c0_66, %c2_67] : memref<4x2x26xf32, #tpu.memory_space<vmem>>, vector<4x1x16xf32>
    %57 = vector.shape_cast %56 : vector<4x1x16xf32> to vector<4x16xf32>
    %58 = vector.broadcast %55 : vector<1x16xf32> to vector<4x16xf32>
    %59 = arith.mulf %57, %58 : vector<4x16xf32>
    %c8_68 = arith.constant 8 : index
    %c0_69 = arith.constant 0 : index
    %60 = vector.load %arg15[%c8_68, %c0_69] : memref<36x32xf32, #tpu.memory_space<vmem>>, vector<4x16xf32>
    tpu.vector_store %arg15[%c8_68, %c0_69], %59 {strides = array<i32>} : memref<36x32xf32, #tpu.memory_space<vmem>>, vector<4x16xf32>,
    %c0_70 = arith.constant 0 : index
    %c1_71 = arith.constant 1 : index
    %c2_72 = arith.constant 2 : index
    %61 = vector.load %arg12[%c0_70, %c1_71, %c2_72] : memref<4x2x26xf32, #tpu.memory_space<vmem>>, vector<4x1x16xf32>
    %62 = vector.shape_cast %61 : vector<4x1x16xf32> to vector<4x16xf32>
    %63 = vector.broadcast %55 : vector<1x16xf32> to vector<4x16xf32>
    %64 = arith.mulf %62, %63 : vector<4x16xf32>
    %c8_73 = arith.constant 8 : index
    %c16_74 = arith.constant 16 : index
    %65 = vector.load %arg15[%c8_73, %c16_74] : memref<36x32xf32, #tpu.memory_space<vmem>>, vector<4x16xf32>
    tpu.vector_store %arg15[%c8_73, %c16_74], %64 {strides = array<i32>} : memref<36x32xf32, #tpu.memory_space<vmem>>, vector<4x16xf32>,
    %c0_75 = arith.constant 0 : index
    %c0_76 = arith.constant 0 : index
    %c6 = arith.constant 6 : index
    %66 = vector.load %arg12[%c0_75, %c0_76, %c6] : memref<4x2x26xf32, #tpu.memory_space<vmem>>, vector<4x1x16xf32>
    %67 = vector.shape_cast %66 : vector<4x1x16xf32> to vector<4x16xf32>
    %68 = vector.broadcast %55 : vector<1x16xf32> to vector<4x16xf32>
    %69 = arith.mulf %67, %68 : vector<4x16xf32>
    %c20 = arith.constant 20 : index
    %c0_77 = arith.constant 0 : index
    %70 = vector.load %arg15[%c20, %c0_77] : memref<36x32xf32, #tpu.memory_space<vmem>>, vector<4x16xf32>
    tpu.vector_store %arg15[%c20, %c0_77], %69 {strides = array<i32>} : memref<36x32xf32, #tpu.memory_space<vmem>>, vector<4x16xf32>,
    %c0_78 = arith.constant 0 : index
    %c1_79 = arith.constant 1 : index
    %c6_80 = arith.constant 6 : index
    %71 = vector.load %arg12[%c0_78, %c1_79, %c6_80] : memref<4x2x26xf32, #tpu.memory_space<vmem>>, vector<4x1x16xf32>
    %72 = vector.shape_cast %71 : vector<4x1x16xf32> to vector<4x16xf32>
    %73 = vector.broadcast %55 : vector<1x16xf32> to vector<4x16xf32>
    %74 = arith.mulf %72, %73 : vector<4x16xf32>
    %c20_81 = arith.constant 20 : index
    %c16_82 = arith.constant 16 : index
    %75 = vector.load %arg15[%c20_81, %c16_82] : memref<36x32xf32, #tpu.memory_space<vmem>>, vector<4x16xf32>
    tpu.vector_store %arg15[%c20_81, %c16_82], %74 {strides = array<i32>} : memref<36x32xf32, #tpu.memory_space<vmem>>, vector<4x16xf32>,
    %c0_83 = arith.constant 0 : index
    %c0_84 = arith.constant 0 : index
    %c10 = arith.constant 10 : index
    %76 = vector.load %arg12[%c0_83, %c0_84, %c10] : memref<4x2x26xf32, #tpu.memory_space<vmem>>, vector<4x1x16xf32>
    %77 = vector.shape_cast %76 : vector<4x1x16xf32> to vector<4x16xf32>
    %78 = vector.broadcast %55 : vector<1x16xf32> to vector<4x16xf32>
    %79 = arith.mulf %77, %78 : vector<4x16xf32>
    %c32 = arith.constant 32 : index
    %c0_85 = arith.constant 0 : index
    %80 = vector.load %arg15[%c32, %c0_85] : memref<36x32xf32, #tpu.memory_space<vmem>>, vector<4x16xf32>
    tpu.vector_store %arg15[%c32, %c0_85], %79 {strides = array<i32>} : memref<36x32xf32, #tpu.memory_space<vmem>>, vector<4x16xf32>,
    %c0_86 = arith.constant 0 : index
    %c1_87 = arith.constant 1 : index
    %c10_88 = arith.constant 10 : index
    %81 = vector.load %arg12[%c0_86, %c1_87, %c10_88] : memref<4x2x26xf32, #tpu.memory_space<vmem>>, vector<4x1x16xf32>
    %82 = vector.shape_cast %81 : vector<4x1x16xf32> to vector<4x16xf32>
    %83 = vector.broadcast %55 : vector<1x16xf32> to vector<4x16xf32>
    %84 = arith.mulf %82, %83 : vector<4x16xf32>
    %c32_89 = arith.constant 32 : index
    %c16_90 = arith.constant 16 : index
    %85 = vector.load %arg15[%c32_89, %c16_90] : memref<36x32xf32, #tpu.memory_space<vmem>>, vector<4x16xf32>
    tpu.vector_store %arg15[%c32_89, %c16_90], %84 {strides = array<i32>} : memref<36x32xf32, #tpu.memory_space<vmem>>, vector<4x16xf32>,
    %c0_91 = arith.constant 0 : index
    %c0_92 = arith.constant 0 : index
    %86 = vector.load %arg3[%c0_91, %c0_92] : memref<2x36xf32, #tpu.memory_space<vmem>>, vector<2x36xf32>
    %c0_93 = arith.constant 0 : index
    %c0_94 = arith.constant 0 : index
    %87 = vector.load %arg15[%c0_93, %c0_94] : memref<36x32xf32, #tpu.memory_space<vmem>>, vector<36x32xf32>
    %cst_95 = arith.constant dense<0.000000e+00> : vector<2x32xf32>
    %88 = tpu.matmul %86, %87, %cst_95 {dimension_numbers = #tpu.dot_dimension_numbers<[1], [0], [0], [1], [0, 0, 1, 1], [], []>} : vector<2x36xf32>, vector<36x32xf32>, vector<2x32xf32> -> vector<2x32xf32>
    %c0_96 = arith.constant 0 : index
    %c0_97 = arith.constant 0 : index
    %89 = vector.load %arg11[%c0_96, %c0_97] : memref<2x32xf32, #tpu.memory_space<vmem>>, vector<2x32xf32>
    tpu.vector_store %arg11[%c0_96, %c0_97], %88 {strides = array<i32>} : memref<2x32xf32, #tpu.memory_space<vmem>>, vector<2x32xf32>,
    %cst_98 = arith.constant 0.000000e+00 : f32
    %90 = vector.broadcast %cst_98 : f32 to vector<2x2x5xf32>
    %c0_99 = arith.constant 0 : index
    %c0_100 = arith.constant 0 : index
    %c0_101 = arith.constant 0 : index
    %91 = vector.load %arg13[%c0_99, %c0_100, %c0_101] : memref<2x2x26xf32, #tpu.memory_space<vmem>>, vector<2x2x5xf32>
    tpu.vector_store %arg13[%c0_99, %c0_100, %c0_101], %90 {strides = array<i32>} : memref<2x2x26xf32, #tpu.memory_space<vmem>>, vector<2x2x5xf32>,
    %cst_102 = arith.constant 0.000000e+00 : f32
    %92 = vector.broadcast %cst_102 : f32 to vector<2x2x5xf32>
    %c0_103 = arith.constant 0 : index
    %c0_104 = arith.constant 0 : index
    %c21_105 = arith.constant 21 : index
    %93 = vector.load %arg13[%c0_103, %c0_104, %c21_105] : memref<2x2x26xf32, #tpu.memory_space<vmem>>, vector<2x2x5xf32>
    tpu.vector_store %arg13[%c0_103, %c0_104, %c21_105], %92 {strides = array<i32>} : memref<2x2x26xf32, #tpu.memory_space<vmem>>, vector<2x2x5xf32>,
    %c0_106 = arith.constant 0 : index
    %c0_107 = arith.constant 0 : index
    %c0_108 = arith.constant 0 : index
    %94 = vector.load %arg1[%c0_106, %c0_107, %c0_108] : memref<2x2x16xf32, #tpu.memory_space<vmem>>, vector<2x2x16xf32>
    %c0_109 = arith.constant 0 : index
    %c0_110 = arith.constant 0 : index
    %c5_111 = arith.constant 5 : index
    %95 = vector.load %arg13[%c0_109, %c0_110, %c5_111] : memref<2x2x26xf32, #tpu.memory_space<vmem>>, vector<2x2x16xf32>
    tpu.vector_store %arg13[%c0_109, %c0_110, %c5_111], %94 {strides = array<i32>} : memref<2x2x26xf32, #tpu.memory_space<vmem>>, vector<2x2x16xf32>,
    %c0_112 = arith.constant 0 : index
    %c0_113 = arith.constant 0 : index
    %96 = vector.load %arg7[%c0_112, %c0_113] : memref<3x16xf32, #tpu.memory_space<vmem>>, vector<1x16xf32>
    %c0_114 = arith.constant 0 : index
    %c0_115 = arith.constant 0 : index
    %c0_116 = arith.constant 0 : index
    %97 = vector.load %arg13[%c0_114, %c0_115, %c0_116] : memref<2x2x26xf32, #tpu.memory_space<vmem>>, vector<2x1x16xf32>
    %98 = vector.shape_cast %97 : vector<2x1x16xf32> to vector<2x16xf32>
    %99 = vector.broadcast %96 : vector<1x16xf32> to vector<2x16xf32>
    %100 = arith.mulf %98, %99 : vector<2x16xf32>
    %c0_117 = arith.constant 0 : index
    %c0_118 = arith.constant 0 : index
    %101 = vector.load %arg16[%c0_117, %c0_118] : memref<18x32xf32, #tpu.memory_space<vmem>>, vector<2x16xf32>
    tpu.vector_store %arg16[%c0_117, %c0_118], %100 {strides = array<i32>} : memref<18x32xf32, #tpu.memory_space<vmem>>, vector<2x16xf32>,
    %c0_119 = arith.constant 0 : index
    %c1_120 = arith.constant 1 : index
    %c0_121 = arith.constant 0 : index
    %102 = vector.load %arg13[%c0_119, %c1_120, %c0_121] : memref<2x2x26xf32, #tpu.memory_space<vmem>>, vector<2x1x16xf32>
    %103 = vector.shape_cast %102 : vector<2x1x16xf32> to vector<2x16xf32>
    %104 = vector.broadcast %96 : vector<1x16xf32> to vector<2x16xf32>
    %105 = arith.mulf %103, %104 : vector<2x16xf32>
    %c0_122 = arith.constant 0 : index
    %c16_123 = arith.constant 16 : index
    %106 = vector.load %arg16[%c0_122, %c16_123] : memref<18x32xf32, #tpu.memory_space<vmem>>, vector<2x16xf32>
    tpu.vector_store %arg16[%c0_122, %c16_123], %105 {strides = array<i32>} : memref<18x32xf32, #tpu.memory_space<vmem>>, vector<2x16xf32>,
    %c0_124 = arith.constant 0 : index
    %c0_125 = arith.constant 0 : index
    %c4_126 = arith.constant 4 : index
    %107 = vector.load %arg13[%c0_124, %c0_125, %c4_126] : memref<2x2x26xf32, #tpu.memory_space<vmem>>, vector<2x1x16xf32>
    %108 = vector.shape_cast %107 : vector<2x1x16xf32> to vector<2x16xf32>
    %109 = vector.broadcast %96 : vector<1x16xf32> to vector<2x16xf32>
    %110 = arith.mulf %108, %109 : vector<2x16xf32>
    %c6_127 = arith.constant 6 : index
    %c0_128 = arith.constant 0 : index
    %111 = vector.load %arg16[%c6_127, %c0_128] : memref<18x32xf32, #tpu.memory_space<vmem>>, vector<2x16xf32>
    tpu.vector_store %arg16[%c6_127, %c0_128], %110 {strides = array<i32>} : memref<18x32xf32, #tpu.memory_space<vmem>>, vector<2x16xf32>,
    %c0_129 = arith.constant 0 : index
    %c1_130 = arith.constant 1 : index
    %c4_131 = arith.constant 4 : index
    %112 = vector.load %arg13[%c0_129, %c1_130, %c4_131] : memref<2x2x26xf32, #tpu.memory_space<vmem>>, vector<2x1x16xf32>
    %113 = vector.shape_cast %112 : vector<2x1x16xf32> to vector<2x16xf32>
    %114 = vector.broadcast %96 : vector<1x16xf32> to vector<2x16xf32>
    %115 = arith.mulf %113, %114 : vector<2x16xf32>
    %c6_132 = arith.constant 6 : index
    %c16_133 = arith.constant 16 : index
    %116 = vector.load %arg16[%c6_132, %c16_133] : memref<18x32xf32, #tpu.memory_space<vmem>>, vector<2x16xf32>
    tpu.vector_store %arg16[%c6_132, %c16_133], %115 {strides = array<i32>} : memref<18x32xf32, #tpu.memory_space<vmem>>, vector<2x16xf32>,
    %c0_134 = arith.constant 0 : index
    %c0_135 = arith.constant 0 : index
    %c8_136 = arith.constant 8 : index
    %117 = vector.load %arg13[%c0_134, %c0_135, %c8_136] : memref<2x2x26xf32, #tpu.memory_space<vmem>>, vector<2x1x16xf32>
    %118 = vector.shape_cast %117 : vector<2x1x16xf32> to vector<2x16xf32>
    %119 = vector.broadcast %96 : vector<1x16xf32> to vector<2x16xf32>
    %120 = arith.mulf %118, %119 : vector<2x16xf32>
    %c12_137 = arith.constant 12 : index
    %c0_138 = arith.constant 0 : index
    %121 = vector.load %arg16[%c12_137, %c0_138] : memref<18x32xf32, #tpu.memory_space<vmem>>, vector<2x16xf32>
    tpu.vector_store %arg16[%c12_137, %c0_138], %120 {strides = array<i32>} : memref<18x32xf32, #tpu.memory_space<vmem>>, vector<2x16xf32>,
    %c0_139 = arith.constant 0 : index
    %c1_140 = arith.constant 1 : index
    %c8_141 = arith.constant 8 : index
    %122 = vector.load %arg13[%c0_139, %c1_140, %c8_141] : memref<2x2x26xf32, #tpu.memory_space<vmem>>, vector<2x1x16xf32>
    %123 = vector.shape_cast %122 : vector<2x1x16xf32> to vector<2x16xf32>
    %124 = vector.broadcast %96 : vector<1x16xf32> to vector<2x16xf32>
    %125 = arith.mulf %123, %124 : vector<2x16xf32>
    %c12_142 = arith.constant 12 : index
    %c16_143 = arith.constant 16 : index
    %126 = vector.load %arg16[%c12_142, %c16_143] : memref<18x32xf32, #tpu.memory_space<vmem>>, vector<2x16xf32>
    tpu.vector_store %arg16[%c12_142, %c16_143], %125 {strides = array<i32>} : memref<18x32xf32, #tpu.memory_space<vmem>>, vector<2x16xf32>,
    %c0_144 = arith.constant 0 : index
    %c0_145 = arith.constant 0 : index
    %c1_146 = arith.constant 1 : index
    %127 = vector.load %arg13[%c0_144, %c0_145, %c1_146] : memref<2x2x26xf32, #tpu.memory_space<vmem>>, vector<2x1x16xf32>
    %128 = vector.shape_cast %127 : vector<2x1x16xf32> to vector<2x16xf32>
    %c2_147 = arith.constant 2 : index
    %c0_148 = arith.constant 0 : index
    %129 = vector.load %arg16[%c2_147, %c0_148] : memref<18x32xf32, #tpu.memory_space<vmem>>, vector<2x16xf32>
    tpu.vector_store %arg16[%c2_147, %c0_148], %128 {strides = array<i32>} : memref<18x32xf32, #tpu.memory_space<vmem>>, vector<2x16xf32>,
    %c0_149 = arith.constant 0 : index
    %c1_150 = arith.constant 1 : index
    %c1_151 = arith.constant 1 : index
    %130 = vector.load %arg13[%c0_149, %c1_150, %c1_151] : memref<2x2x26xf32, #tpu.memory_space<vmem>>, vector<2x1x16xf32>
    %131 = vector.shape_cast %130 : vector<2x1x16xf32> to vector<2x16xf32>
    %c2_152 = arith.constant 2 : index
    %c16_153 = arith.constant 16 : index
    %132 = vector.load %arg16[%c2_152, %c16_153] : memref<18x32xf32, #tpu.memory_space<vmem>>, vector<2x16xf32>
    tpu.vector_store %arg16[%c2_152, %c16_153], %131 {strides = array<i32>} : memref<18x32xf32, #tpu.memory_space<vmem>>, vector<2x16xf32>,
    %c0_154 = arith.constant 0 : index
    %c0_155 = arith.constant 0 : index
    %c5_156 = arith.constant 5 : index
    %133 = vector.load %arg13[%c0_154, %c0_155, %c5_156] : memref<2x2x26xf32, #tpu.memory_space<vmem>>, vector<2x1x16xf32>
    %134 = vector.shape_cast %133 : vector<2x1x16xf32> to vector<2x16xf32>
    %c8_157 = arith.constant 8 : index
    %c0_158 = arith.constant 0 : index
    %135 = vector.load %arg16[%c8_157, %c0_158] : memref<18x32xf32, #tpu.memory_space<vmem>>, vector<2x16xf32>
    tpu.vector_store %arg16[%c8_157, %c0_158], %134 {strides = array<i32>} : memref<18x32xf32, #tpu.memory_space<vmem>>, vector<2x16xf32>,
    %c0_159 = arith.constant 0 : index
    %c1_160 = arith.constant 1 : index
    %c5_161 = arith.constant 5 : index
    %136 = vector.load %arg13[%c0_159, %c1_160, %c5_161] : memref<2x2x26xf32, #tpu.memory_space<vmem>>, vector<2x1x16xf32>
    %137 = vector.shape_cast %136 : vector<2x1x16xf32> to vector<2x16xf32>
    %c8_162 = arith.constant 8 : index
    %c16_163 = arith.constant 16 : index
    %138 = vector.load %arg16[%c8_162, %c16_163] : memref<18x32xf32, #tpu.memory_space<vmem>>, vector<2x16xf32>
    tpu.vector_store %arg16[%c8_162, %c16_163], %137 {strides = array<i32>} : memref<18x32xf32, #tpu.memory_space<vmem>>, vector<2x16xf32>,
    %c0_164 = arith.constant 0 : index
    %c0_165 = arith.constant 0 : index
    %c9_166 = arith.constant 9 : index
    %139 = vector.load %arg13[%c0_164, %c0_165, %c9_166] : memref<2x2x26xf32, #tpu.memory_space<vmem>>, vector<2x1x16xf32>
    %140 = vector.shape_cast %139 : vector<2x1x16xf32> to vector<2x16xf32>
    %c14 = arith.constant 14 : index
    %c0_167 = arith.constant 0 : index
    %141 = vector.load %arg16[%c14, %c0_167] : memref<18x32xf32, #tpu.memory_space<vmem>>, vector<2x16xf32>
    tpu.vector_store %arg16[%c14, %c0_167], %140 {strides = array<i32>} : memref<18x32xf32, #tpu.memory_space<vmem>>, vector<2x16xf32>,
    %c0_168 = arith.constant 0 : index
    %c1_169 = arith.constant 1 : index
    %c9_170 = arith.constant 9 : index
    %142 = vector.load %arg13[%c0_168, %c1_169, %c9_170] : memref<2x2x26xf32, #tpu.memory_space<vmem>>, vector<2x1x16xf32>
    %143 = vector.shape_cast %142 : vector<2x1x16xf32> to vector<2x16xf32>
    %c14_171 = arith.constant 14 : index
    %c16_172 = arith.constant 16 : index
    %144 = vector.load %arg16[%c14_171, %c16_172] : memref<18x32xf32, #tpu.memory_space<vmem>>, vector<2x16xf32>
    tpu.vector_store %arg16[%c14_171, %c16_172], %143 {strides = array<i32>} : memref<18x32xf32, #tpu.memory_space<vmem>>, vector<2x16xf32>,
    %c2_173 = arith.constant 2 : index
    %c0_174 = arith.constant 0 : index
    %145 = vector.load %arg7[%c2_173, %c0_174] : memref<3x16xf32, #tpu.memory_space<vmem>>, vector<1x16xf32>
    %c0_175 = arith.constant 0 : index
    %c0_176 = arith.constant 0 : index
    %c2_177 = arith.constant 2 : index
    %146 = vector.load %arg13[%c0_175, %c0_176, %c2_177] : memref<2x2x26xf32, #tpu.memory_space<vmem>>, vector<2x1x16xf32>
    %147 = vector.shape_cast %146 : vector<2x1x16xf32> to vector<2x16xf32>
    %148 = vector.broadcast %145 : vector<1x16xf32> to vector<2x16xf32>
    %149 = arith.mulf %147, %148 : vector<2x16xf32>
    %c4_178 = arith.constant 4 : index
    %c0_179 = arith.constant 0 : index
    %150 = vector.load %arg16[%c4_178, %c0_179] : memref<18x32xf32, #tpu.memory_space<vmem>>, vector<2x16xf32>
    tpu.vector_store %arg16[%c4_178, %c0_179], %149 {strides = array<i32>} : memref<18x32xf32, #tpu.memory_space<vmem>>, vector<2x16xf32>,
    %c0_180 = arith.constant 0 : index
    %c1_181 = arith.constant 1 : index
    %c2_182 = arith.constant 2 : index
    %151 = vector.load %arg13[%c0_180, %c1_181, %c2_182] : memref<2x2x26xf32, #tpu.memory_space<vmem>>, vector<2x1x16xf32>
    %152 = vector.shape_cast %151 : vector<2x1x16xf32> to vector<2x16xf32>
    %153 = vector.broadcast %145 : vector<1x16xf32> to vector<2x16xf32>
    %154 = arith.mulf %152, %153 : vector<2x16xf32>
    %c4_183 = arith.constant 4 : index
    %c16_184 = arith.constant 16 : index
    %155 = vector.load %arg16[%c4_183, %c16_184] : memref<18x32xf32, #tpu.memory_space<vmem>>, vector<2x16xf32>
    tpu.vector_store %arg16[%c4_183, %c16_184], %154 {strides = array<i32>} : memref<18x32xf32, #tpu.memory_space<vmem>>, vector<2x16xf32>,
    %c0_185 = arith.constant 0 : index
    %c0_186 = arith.constant 0 : index
    %c6_187 = arith.constant 6 : index
    %156 = vector.load %arg13[%c0_185, %c0_186, %c6_187] : memref<2x2x26xf32, #tpu.memory_space<vmem>>, vector<2x1x16xf32>
    %157 = vector.shape_cast %156 : vector<2x1x16xf32> to vector<2x16xf32>
    %158 = vector.broadcast %145 : vector<1x16xf32> to vector<2x16xf32>
    %159 = arith.mulf %157, %158 : vector<2x16xf32>
    %c10_188 = arith.constant 10 : index
    %c0_189 = arith.constant 0 : index
    %160 = vector.load %arg16[%c10_188, %c0_189] : memref<18x32xf32, #tpu.memory_space<vmem>>, vector<2x16xf32>
    tpu.vector_store %arg16[%c10_188, %c0_189], %159 {strides = array<i32>} : memref<18x32xf32, #tpu.memory_space<vmem>>, vector<2x16xf32>,
    %c0_190 = arith.constant 0 : index
    %c1_191 = arith.constant 1 : index
    %c6_192 = arith.constant 6 : index
    %161 = vector.load %arg13[%c0_190, %c1_191, %c6_192] : memref<2x2x26xf32, #tpu.memory_space<vmem>>, vector<2x1x16xf32>
    %162 = vector.shape_cast %161 : vector<2x1x16xf32> to vector<2x16xf32>
    %163 = vector.broadcast %145 : vector<1x16xf32> to vector<2x16xf32>
    %164 = arith.mulf %162, %163 : vector<2x16xf32>
    %c10_193 = arith.constant 10 : index
    %c16_194 = arith.constant 16 : index
    %165 = vector.load %arg16[%c10_193, %c16_194] : memref<18x32xf32, #tpu.memory_space<vmem>>, vector<2x16xf32>
    tpu.vector_store %arg16[%c10_193, %c16_194], %164 {strides = array<i32>} : memref<18x32xf32, #tpu.memory_space<vmem>>, vector<2x16xf32>,
    %c0_195 = arith.constant 0 : index
    %c0_196 = arith.constant 0 : index
    %c10_197 = arith.constant 10 : index
    %166 = vector.load %arg13[%c0_195, %c0_196, %c10_197] : memref<2x2x26xf32, #tpu.memory_space<vmem>>, vector<2x1x16xf32>
    %167 = vector.shape_cast %166 : vector<2x1x16xf32> to vector<2x16xf32>
    %168 = vector.broadcast %145 : vector<1x16xf32> to vector<2x16xf32>
    %169 = arith.mulf %167, %168 : vector<2x16xf32>
    %c16_198 = arith.constant 16 : index
    %c0_199 = arith.constant 0 : index
    %170 = vector.load %arg16[%c16_198, %c0_199] : memref<18x32xf32, #tpu.memory_space<vmem>>, vector<2x16xf32>
    tpu.vector_store %arg16[%c16_198, %c0_199], %169 {strides = array<i32>} : memref<18x32xf32, #tpu.memory_space<vmem>>, vector<2x16xf32>,
    %c0_200 = arith.constant 0 : index
    %c1_201 = arith.constant 1 : index
    %c10_202 = arith.constant 10 : index
    %171 = vector.load %arg13[%c0_200, %c1_201, %c10_202] : memref<2x2x26xf32, #tpu.memory_space<vmem>>, vector<2x1x16xf32>
    %172 = vector.shape_cast %171 : vector<2x1x16xf32> to vector<2x16xf32>
    %173 = vector.broadcast %145 : vector<1x16xf32> to vector<2x16xf32>
    %174 = arith.mulf %172, %173 : vector<2x16xf32>
    %c16_203 = arith.constant 16 : index
    %c16_204 = arith.constant 16 : index
    %175 = vector.load %arg16[%c16_203, %c16_204] : memref<18x32xf32, #tpu.memory_space<vmem>>, vector<2x16xf32>
    tpu.vector_store %arg16[%c16_203, %c16_204], %174 {strides = array<i32>} : memref<18x32xf32, #tpu.memory_space<vmem>>, vector<2x16xf32>,
    %c0_205 = arith.constant 0 : index
    %c0_206 = arith.constant 0 : index
    %176 = vector.load %arg4[%c0_205, %c0_206] : memref<2x18xf32, #tpu.memory_space<vmem>>, vector<2x18xf32>
    %c0_207 = arith.constant 0 : index
    %c0_208 = arith.constant 0 : index
    %177 = vector.load %arg16[%c0_207, %c0_208] : memref<18x32xf32, #tpu.memory_space<vmem>>, vector<18x32xf32>
    %cst_209 = arith.constant dense<0.000000e+00> : vector<2x32xf32>
    %178 = tpu.matmul %176, %177, %cst_209 {dimension_numbers = #tpu.dot_dimension_numbers<[1], [0], [0], [1], [0, 0, 1, 1], [], []>} : vector<2x18xf32>, vector<18x32xf32>, vector<2x32xf32> -> vector<2x32xf32>
    %c0_210 = arith.constant 0 : index
    %c0_211 = arith.constant 0 : index
    %179 = vector.load %arg11[%c0_210, %c0_211] : memref<2x32xf32, #tpu.memory_space<vmem>>, vector<2x32xf32>
    %180 = arith.addf %179, %178 : vector<2x32xf32>
    %c0_212 = arith.constant 0 : index
    %c0_213 = arith.constant 0 : index
    %181 = vector.load %arg11[%c0_212, %c0_213] : memref<2x32xf32, #tpu.memory_space<vmem>>, vector<2x32xf32>
    tpu.vector_store %arg11[%c0_212, %c0_213], %180 {strides = array<i32>} : memref<2x32xf32, #tpu.memory_space<vmem>>, vector<2x32xf32>,
    %cst_214 = arith.constant 0.000000e+00 : f32
    %182 = vector.broadcast %cst_214 : f32 to vector<2x2x5xf32>
    %c0_215 = arith.constant 0 : index
    %c0_216 = arith.constant 0 : index
    %c0_217 = arith.constant 0 : index
    %183 = vector.load %arg14[%c0_215, %c0_216, %c0_217] : memref<2x2x26xf32, #tpu.memory_space<vmem>>, vector<2x2x5xf32>
    tpu.vector_store %arg14[%c0_215, %c0_216, %c0_217], %182 {strides = array<i32>} : memref<2x2x26xf32, #tpu.memory_space<vmem>>, vector<2x2x5xf32>,
    %cst_218 = arith.constant 0.000000e+00 : f32
    %184 = vector.broadcast %cst_218 : f32 to vector<2x2x5xf32>
    %c0_219 = arith.constant 0 : index
    %c0_220 = arith.constant 0 : index
    %c21_221 = arith.constant 21 : index
    %185 = vector.load %arg14[%c0_219, %c0_220, %c21_221] : memref<2x2x26xf32, #tpu.memory_space<vmem>>, vector<2x2x5xf32>
    tpu.vector_store %arg14[%c0_219, %c0_220, %c21_221], %184 {strides = array<i32>} : memref<2x2x26xf32, #tpu.memory_space<vmem>>, vector<2x2x5xf32>,
    %c0_222 = arith.constant 0 : index
    %c0_223 = arith.constant 0 : index
    %c0_224 = arith.constant 0 : index
    %186 = vector.load %arg2[%c0_222, %c0_223, %c0_224] : memref<2x2x16xf32, #tpu.memory_space<vmem>>, vector<2x2x16xf32>
    %c0_225 = arith.constant 0 : index
    %c0_226 = arith.constant 0 : index
    %c5_227 = arith.constant 5 : index
    %187 = vector.load %arg14[%c0_225, %c0_226, %c5_227] : memref<2x2x26xf32, #tpu.memory_space<vmem>>, vector<2x2x16xf32>
    tpu.vector_store %arg14[%c0_225, %c0_226, %c5_227], %186 {strides = array<i32>} : memref<2x2x26xf32, #tpu.memory_space<vmem>>, vector<2x2x16xf32>,
    %c0_228 = arith.constant 0 : index
    %c0_229 = arith.constant 0 : index
    %188 = vector.load %arg8[%c0_228, %c0_229] : memref<3x16xf32, #tpu.memory_space<vmem>>, vector<1x16xf32>
    %c0_230 = arith.constant 0 : index
    %c0_231 = arith.constant 0 : index
    %c0_232 = arith.constant 0 : index
    %189 = vector.load %arg14[%c0_230, %c0_231, %c0_232] : memref<2x2x26xf32, #tpu.memory_space<vmem>>, vector<2x1x16xf32>
    %190 = vector.shape_cast %189 : vector<2x1x16xf32> to vector<2x16xf32>
    %191 = vector.broadcast %188 : vector<1x16xf32> to vector<2x16xf32>
    %192 = arith.mulf %190, %191 : vector<2x16xf32>
    %c0_233 = arith.constant 0 : index
    %c0_234 = arith.constant 0 : index
    %193 = vector.load %arg17[%c0_233, %c0_234] : memref<18x32xf32, #tpu.memory_space<vmem>>, vector<2x16xf32>
    tpu.vector_store %arg17[%c0_233, %c0_234], %192 {strides = array<i32>} : memref<18x32xf32, #tpu.memory_space<vmem>>, vector<2x16xf32>,
    %c0_235 = arith.constant 0 : index
    %c1_236 = arith.constant 1 : index
    %c0_237 = arith.constant 0 : index
    %194 = vector.load %arg14[%c0_235, %c1_236, %c0_237] : memref<2x2x26xf32, #tpu.memory_space<vmem>>, vector<2x1x16xf32>
    %195 = vector.shape_cast %194 : vector<2x1x16xf32> to vector<2x16xf32>
    %196 = vector.broadcast %188 : vector<1x16xf32> to vector<2x16xf32>
    %197 = arith.mulf %195, %196 : vector<2x16xf32>
    %c0_238 = arith.constant 0 : index
    %c16_239 = arith.constant 16 : index
    %198 = vector.load %arg17[%c0_238, %c16_239] : memref<18x32xf32, #tpu.memory_space<vmem>>, vector<2x16xf32>
    tpu.vector_store %arg17[%c0_238, %c16_239], %197 {strides = array<i32>} : memref<18x32xf32, #tpu.memory_space<vmem>>, vector<2x16xf32>,
    %c0_240 = arith.constant 0 : index
    %c0_241 = arith.constant 0 : index
    %c4_242 = arith.constant 4 : index
    %199 = vector.load %arg14[%c0_240, %c0_241, %c4_242] : memref<2x2x26xf32, #tpu.memory_space<vmem>>, vector<2x1x16xf32>
    %200 = vector.shape_cast %199 : vector<2x1x16xf32> to vector<2x16xf32>
    %201 = vector.broadcast %188 : vector<1x16xf32> to vector<2x16xf32>
    %202 = arith.mulf %200, %201 : vector<2x16xf32>
    %c6_243 = arith.constant 6 : index
    %c0_244 = arith.constant 0 : index
    %203 = vector.load %arg17[%c6_243, %c0_244] : memref<18x32xf32, #tpu.memory_space<vmem>>, vector<2x16xf32>
    tpu.vector_store %arg17[%c6_243, %c0_244], %202 {strides = array<i32>} : memref<18x32xf32, #tpu.memory_space<vmem>>, vector<2x16xf32>,
    %c0_245 = arith.constant 0 : index
    %c1_246 = arith.constant 1 : index
    %c4_247 = arith.constant 4 : index
    %204 = vector.load %arg14[%c0_245, %c1_246, %c4_247] : memref<2x2x26xf32, #tpu.memory_space<vmem>>, vector<2x1x16xf32>
    %205 = vector.shape_cast %204 : vector<2x1x16xf32> to vector<2x16xf32>
    %206 = vector.broadcast %188 : vector<1x16xf32> to vector<2x16xf32>
    %207 = arith.mulf %205, %206 : vector<2x16xf32>
    %c6_248 = arith.constant 6 : index
    %c16_249 = arith.constant 16 : index
    %208 = vector.load %arg17[%c6_248, %c16_249] : memref<18x32xf32, #tpu.memory_space<vmem>>, vector<2x16xf32>
    tpu.vector_store %arg17[%c6_248, %c16_249], %207 {strides = array<i32>} : memref<18x32xf32, #tpu.memory_space<vmem>>, vector<2x16xf32>,
    %c0_250 = arith.constant 0 : index
    %c0_251 = arith.constant 0 : index
    %c8_252 = arith.constant 8 : index
    %209 = vector.load %arg14[%c0_250, %c0_251, %c8_252] : memref<2x2x26xf32, #tpu.memory_space<vmem>>, vector<2x1x16xf32>
    %210 = vector.shape_cast %209 : vector<2x1x16xf32> to vector<2x16xf32>
    %211 = vector.broadcast %188 : vector<1x16xf32> to vector<2x16xf32>
    %212 = arith.mulf %210, %211 : vector<2x16xf32>
    %c12_253 = arith.constant 12 : index
    %c0_254 = arith.constant 0 : index
    %213 = vector.load %arg17[%c12_253, %c0_254] : memref<18x32xf32, #tpu.memory_space<vmem>>, vector<2x16xf32>
    tpu.vector_store %arg17[%c12_253, %c0_254], %212 {strides = array<i32>} : memref<18x32xf32, #tpu.memory_space<vmem>>, vector<2x16xf32>,
    %c0_255 = arith.constant 0 : index
    %c1_256 = arith.constant 1 : index
    %c8_257 = arith.constant 8 : index
    %214 = vector.load %arg14[%c0_255, %c1_256, %c8_257] : memref<2x2x26xf32, #tpu.memory_space<vmem>>, vector<2x1x16xf32>
    %215 = vector.shape_cast %214 : vector<2x1x16xf32> to vector<2x16xf32>
    %216 = vector.broadcast %188 : vector<1x16xf32> to vector<2x16xf32>
    %217 = arith.mulf %215, %216 : vector<2x16xf32>
    %c12_258 = arith.constant 12 : index
    %c16_259 = arith.constant 16 : index
    %218 = vector.load %arg17[%c12_258, %c16_259] : memref<18x32xf32, #tpu.memory_space<vmem>>, vector<2x16xf32>
    tpu.vector_store %arg17[%c12_258, %c16_259], %217 {strides = array<i32>} : memref<18x32xf32, #tpu.memory_space<vmem>>, vector<2x16xf32>,
    %c0_260 = arith.constant 0 : index
    %c0_261 = arith.constant 0 : index
    %c1_262 = arith.constant 1 : index
    %219 = vector.load %arg14[%c0_260, %c0_261, %c1_262] : memref<2x2x26xf32, #tpu.memory_space<vmem>>, vector<2x1x16xf32>
    %220 = vector.shape_cast %219 : vector<2x1x16xf32> to vector<2x16xf32>
    %c2_263 = arith.constant 2 : index
    %c0_264 = arith.constant 0 : index
    %221 = vector.load %arg17[%c2_263, %c0_264] : memref<18x32xf32, #tpu.memory_space<vmem>>, vector<2x16xf32>
    tpu.vector_store %arg17[%c2_263, %c0_264], %220 {strides = array<i32>} : memref<18x32xf32, #tpu.memory_space<vmem>>, vector<2x16xf32>,
    %c0_265 = arith.constant 0 : index
    %c1_266 = arith.constant 1 : index
    %c1_267 = arith.constant 1 : index
    %222 = vector.load %arg14[%c0_265, %c1_266, %c1_267] : memref<2x2x26xf32, #tpu.memory_space<vmem>>, vector<2x1x16xf32>
    %223 = vector.shape_cast %222 : vector<2x1x16xf32> to vector<2x16xf32>
    %c2_268 = arith.constant 2 : index
    %c16_269 = arith.constant 16 : index
    %224 = vector.load %arg17[%c2_268, %c16_269] : memref<18x32xf32, #tpu.memory_space<vmem>>, vector<2x16xf32>
    tpu.vector_store %arg17[%c2_268, %c16_269], %223 {strides = array<i32>} : memref<18x32xf32, #tpu.memory_space<vmem>>, vector<2x16xf32>,
    %c0_270 = arith.constant 0 : index
    %c0_271 = arith.constant 0 : index
    %c5_272 = arith.constant 5 : index
    %225 = vector.load %arg14[%c0_270, %c0_271, %c5_272] : memref<2x2x26xf32, #tpu.memory_space<vmem>>, vector<2x1x16xf32>
    %226 = vector.shape_cast %225 : vector<2x1x16xf32> to vector<2x16xf32>
    %c8_273 = arith.constant 8 : index
    %c0_274 = arith.constant 0 : index
    %227 = vector.load %arg17[%c8_273, %c0_274] : memref<18x32xf32, #tpu.memory_space<vmem>>, vector<2x16xf32>
    tpu.vector_store %arg17[%c8_273, %c0_274], %226 {strides = array<i32>} : memref<18x32xf32, #tpu.memory_space<vmem>>, vector<2x16xf32>,
    %c0_275 = arith.constant 0 : index
    %c1_276 = arith.constant 1 : index
    %c5_277 = arith.constant 5 : index
    %228 = vector.load %arg14[%c0_275, %c1_276, %c5_277] : memref<2x2x26xf32, #tpu.memory_space<vmem>>, vector<2x1x16xf32>
    %229 = vector.shape_cast %228 : vector<2x1x16xf32> to vector<2x16xf32>
    %c8_278 = arith.constant 8 : index
    %c16_279 = arith.constant 16 : index
    %230 = vector.load %arg17[%c8_278, %c16_279] : memref<18x32xf32, #tpu.memory_space<vmem>>, vector<2x16xf32>
    tpu.vector_store %arg17[%c8_278, %c16_279], %229 {strides = array<i32>} : memref<18x32xf32, #tpu.memory_space<vmem>>, vector<2x16xf32>,
    %c0_280 = arith.constant 0 : index
    %c0_281 = arith.constant 0 : index
    %c9_282 = arith.constant 9 : index
    %231 = vector.load %arg14[%c0_280, %c0_281, %c9_282] : memref<2x2x26xf32, #tpu.memory_space<vmem>>, vector<2x1x16xf32>
    %232 = vector.shape_cast %231 : vector<2x1x16xf32> to vector<2x16xf32>
    %c14_283 = arith.constant 14 : index
    %c0_284 = arith.constant 0 : index
    %233 = vector.load %arg17[%c14_283, %c0_284] : memref<18x32xf32, #tpu.memory_space<vmem>>, vector<2x16xf32>
    tpu.vector_store %arg17[%c14_283, %c0_284], %232 {strides = array<i32>} : memref<18x32xf32, #tpu.memory_space<vmem>>, vector<2x16xf32>,
    %c0_285 = arith.constant 0 : index
    %c1_286 = arith.constant 1 : index
    %c9_287 = arith.constant 9 : index
    %234 = vector.load %arg14[%c0_285, %c1_286, %c9_287] : memref<2x2x26xf32, #tpu.memory_space<vmem>>, vector<2x1x16xf32>
    %235 = vector.shape_cast %234 : vector<2x1x16xf32> to vector<2x16xf32>
    %c14_288 = arith.constant 14 : index
    %c16_289 = arith.constant 16 : index
    %236 = vector.load %arg17[%c14_288, %c16_289] : memref<18x32xf32, #tpu.memory_space<vmem>>, vector<2x16xf32>
    tpu.vector_store %arg17[%c14_288, %c16_289], %235 {strides = array<i32>} : memref<18x32xf32, #tpu.memory_space<vmem>>, vector<2x16xf32>,
    %c2_290 = arith.constant 2 : index
    %c0_291 = arith.constant 0 : index
    %237 = vector.load %arg8[%c2_290, %c0_291] : memref<3x16xf32, #tpu.memory_space<vmem>>, vector<1x16xf32>
    %c0_292 = arith.constant 0 : index
    %c0_293 = arith.constant 0 : index
    %c2_294 = arith.constant 2 : index
    %238 = vector.load %arg14[%c0_292, %c0_293, %c2_294] : memref<2x2x26xf32, #tpu.memory_space<vmem>>, vector<2x1x16xf32>
    %239 = vector.shape_cast %238 : vector<2x1x16xf32> to vector<2x16xf32>
    %240 = vector.broadcast %237 : vector<1x16xf32> to vector<2x16xf32>
    %241 = arith.mulf %239, %240 : vector<2x16xf32>
    %c4_295 = arith.constant 4 : index
    %c0_296 = arith.constant 0 : index
    %242 = vector.load %arg17[%c4_295, %c0_296] : memref<18x32xf32, #tpu.memory_space<vmem>>, vector<2x16xf32>
    tpu.vector_store %arg17[%c4_295, %c0_296], %241 {strides = array<i32>} : memref<18x32xf32, #tpu.memory_space<vmem>>, vector<2x16xf32>,
    %c0_297 = arith.constant 0 : index
    %c1_298 = arith.constant 1 : index
    %c2_299 = arith.constant 2 : index
    %243 = vector.load %arg14[%c0_297, %c1_298, %c2_299] : memref<2x2x26xf32, #tpu.memory_space<vmem>>, vector<2x1x16xf32>
    %244 = vector.shape_cast %243 : vector<2x1x16xf32> to vector<2x16xf32>
    %245 = vector.broadcast %237 : vector<1x16xf32> to vector<2x16xf32>
    %246 = arith.mulf %244, %245 : vector<2x16xf32>
    %c4_300 = arith.constant 4 : index
    %c16_301 = arith.constant 16 : index
    %247 = vector.load %arg17[%c4_300, %c16_301] : memref<18x32xf32, #tpu.memory_space<vmem>>, vector<2x16xf32>
    tpu.vector_store %arg17[%c4_300, %c16_301], %246 {strides = array<i32>} : memref<18x32xf32, #tpu.memory_space<vmem>>, vector<2x16xf32>,
    %c0_302 = arith.constant 0 : index
    %c0_303 = arith.constant 0 : index
    %c6_304 = arith.constant 6 : index
    %248 = vector.load %arg14[%c0_302, %c0_303, %c6_304] : memref<2x2x26xf32, #tpu.memory_space<vmem>>, vector<2x1x16xf32>
    %249 = vector.shape_cast %248 : vector<2x1x16xf32> to vector<2x16xf32>
    %250 = vector.broadcast %237 : vector<1x16xf32> to vector<2x16xf32>
    %251 = arith.mulf %249, %250 : vector<2x16xf32>
    %c10_305 = arith.constant 10 : index
    %c0_306 = arith.constant 0 : index
    %252 = vector.load %arg17[%c10_305, %c0_306] : memref<18x32xf32, #tpu.memory_space<vmem>>, vector<2x16xf32>
    tpu.vector_store %arg17[%c10_305, %c0_306], %251 {strides = array<i32>} : memref<18x32xf32, #tpu.memory_space<vmem>>, vector<2x16xf32>,
    %c0_307 = arith.constant 0 : index
    %c1_308 = arith.constant 1 : index
    %c6_309 = arith.constant 6 : index
    %253 = vector.load %arg14[%c0_307, %c1_308, %c6_309] : memref<2x2x26xf32, #tpu.memory_space<vmem>>, vector<2x1x16xf32>
    %254 = vector.shape_cast %253 : vector<2x1x16xf32> to vector<2x16xf32>
    %255 = vector.broadcast %237 : vector<1x16xf32> to vector<2x16xf32>
    %256 = arith.mulf %254, %255 : vector<2x16xf32>
    %c10_310 = arith.constant 10 : index
    %c16_311 = arith.constant 16 : index
    %257 = vector.load %arg17[%c10_310, %c16_311] : memref<18x32xf32, #tpu.memory_space<vmem>>, vector<2x16xf32>
    tpu.vector_store %arg17[%c10_310, %c16_311], %256 {strides = array<i32>} : memref<18x32xf32, #tpu.memory_space<vmem>>, vector<2x16xf32>,
    %c0_312 = arith.constant 0 : index
    %c0_313 = arith.constant 0 : index
    %c10_314 = arith.constant 10 : index
    %258 = vector.load %arg14[%c0_312, %c0_313, %c10_314] : memref<2x2x26xf32, #tpu.memory_space<vmem>>, vector<2x1x16xf32>
    %259 = vector.shape_cast %258 : vector<2x1x16xf32> to vector<2x16xf32>
    %260 = vector.broadcast %237 : vector<1x16xf32> to vector<2x16xf32>
    %261 = arith.mulf %259, %260 : vector<2x16xf32>
    %c16_315 = arith.constant 16 : index
    %c0_316 = arith.constant 0 : index
    %262 = vector.load %arg17[%c16_315, %c0_316] : memref<18x32xf32, #tpu.memory_space<vmem>>, vector<2x16xf32>
    tpu.vector_store %arg17[%c16_315, %c0_316], %261 {strides = array<i32>} : memref<18x32xf32, #tpu.memory_space<vmem>>, vector<2x16xf32>,
    %c0_317 = arith.constant 0 : index
    %c1_318 = arith.constant 1 : index
    %c10_319 = arith.constant 10 : index
    %263 = vector.load %arg14[%c0_317, %c1_318, %c10_319] : memref<2x2x26xf32, #tpu.memory_space<vmem>>, vector<2x1x16xf32>
    %264 = vector.shape_cast %263 : vector<2x1x16xf32> to vector<2x16xf32>
    %265 = vector.broadcast %237 : vector<1x16xf32> to vector<2x16xf32>
    %266 = arith.mulf %264, %265 : vector<2x16xf32>
    %c16_320 = arith.constant 16 : index
    %c16_321 = arith.constant 16 : index
    %267 = vector.load %arg17[%c16_320, %c16_321] : memref<18x32xf32, #tpu.memory_space<vmem>>, vector<2x16xf32>
    tpu.vector_store %arg17[%c16_320, %c16_321], %266 {strides = array<i32>} : memref<18x32xf32, #tpu.memory_space<vmem>>, vector<2x16xf32>,
    %c0_322 = arith.constant 0 : index
    %c0_323 = arith.constant 0 : index
    %268 = vector.load %arg5[%c0_322, %c0_323] : memref<2x18xf32, #tpu.memory_space<vmem>>, vector<2x18xf32>
    %c0_324 = arith.constant 0 : index
    %c0_325 = arith.constant 0 : index
    %269 = vector.load %arg17[%c0_324, %c0_325] : memref<18x32xf32, #tpu.memory_space<vmem>>, vector<18x32xf32>
    %cst_326 = arith.constant dense<0.000000e+00> : vector<2x32xf32>
    %270 = tpu.matmul %268, %269, %cst_326 {dimension_numbers = #tpu.dot_dimension_numbers<[1], [0], [0], [1], [0, 0, 1, 1], [], []>} : vector<2x18xf32>, vector<18x32xf32>, vector<2x32xf32> -> vector<2x32xf32>
    %c0_327 = arith.constant 0 : index
    %c0_328 = arith.constant 0 : index
    %271 = vector.load %arg11[%c0_327, %c0_328] : memref<2x32xf32, #tpu.memory_space<vmem>>, vector<2x32xf32>
    %272 = arith.addf %271, %270 : vector<2x32xf32>
    %c0_329 = arith.constant 0 : index
    %c0_330 = arith.constant 0 : index
    %273 = vector.load %arg11[%c0_329, %c0_330] : memref<2x32xf32, #tpu.memory_space<vmem>>, vector<2x32xf32>
    tpu.vector_store %arg11[%c0_329, %c0_330], %272 {strides = array<i32>} : memref<2x32xf32, #tpu.memory_space<vmem>>, vector<2x32xf32>,
    %c0_331 = arith.constant 0 : index
    %c0_332 = arith.constant 0 : index
    %274 = vector.load %arg11[%c0_331, %c0_332] : memref<2x32xf32, #tpu.memory_space<vmem>>, vector<2x32xf32>
    %cst_333 = arith.constant dense<0.000000e+00> : vector<2xf32>
    %275 = vector.multi_reduction <add>, %274, %cst_333 [1] : vector<2x32xf32> to vector<2xf32>
    %276 = vector.shape_cast %275 : vector<2xf32> to vector<2x1xf32>
    %cst_334 = arith.constant 3.125000e-02 : f32
    %277 = vector.broadcast %cst_334 : f32 to vector<2x1xf32>
    %278 = arith.mulf %276, %277 : vector<2x1xf32>
    %279 = arith.mulf %274, %274 : vector<2x32xf32>
    %cst_335 = arith.constant dense<0.000000e+00> : vector<2xf32>
    %280 = vector.multi_reduction <add>, %279, %cst_335 [1] : vector<2x32xf32> to vector<2xf32>
    %281 = vector.shape_cast %280 : vector<2xf32> to vector<2x1xf32>
    %cst_336 = arith.constant 3.125000e-02 : f32
    %282 = vector.broadcast %cst_336 : f32 to vector<2x1xf32>
    %283 = arith.mulf %281, %282 : vector<2x1xf32>
    %284 = arith.mulf %278, %278 : vector<2x1xf32>
    %285 = arith.subf %283, %284 : vector<2x1xf32>
    %c0_337 = arith.constant 0 : index
    %c0_338 = arith.constant 0 : index
    %286 = vector.load %arg9[%c0_337, %c0_338] : memref<2x1xf32, #tpu.memory_space<vmem>>, vector<2x1xf32>
    %cst_339 = arith.constant 9.99999974E-6 : f32
    %287 = vector.broadcast %cst_339 : f32 to vector<2x1xf32>
    %288 = arith.addf %285, %287 : vector<2x1xf32>
    %289 = math.rsqrt %288 : vector<2x1xf32>
    %290 = arith.mulf %286, %289 : vector<2x1xf32>
    %c0_340 = arith.constant 0 : index
    %c0_341 = arith.constant 0 : index
    %291 = vector.load %arg10[%c0_340, %c0_341] : memref<2x1xf32, #tpu.memory_space<vmem>>, vector<2x1xf32>
    %292 = arith.mulf %278, %290 : vector<2x1xf32>
    %293 = arith.subf %291, %292 : vector<2x1xf32>
    %294 = vector.broadcast %290 : vector<2x1xf32> to vector<2x32xf32>
    %295 = arith.mulf %274, %294 : vector<2x32xf32>
    %296 = vector.broadcast %293 : vector<2x1xf32> to vector<2x32xf32>
    %297 = arith.addf %295, %296 : vector<2x32xf32>
    %c0_342 = arith.constant 0 : index
    %c0_343 = arith.constant 0 : index
    %298 = vector.load %arg11[%c0_342, %c0_343] : memref<2x32xf32, #tpu.memory_space<vmem>>, vector<2x32xf32>
    tpu.vector_store %arg11[%c0_342, %c0_343], %297 {strides = array<i32>} : memref<2x32xf32, #tpu.memory_space<vmem>>, vector<2x32xf32>,
    return
  }
}

</mosaic_0001>

<llo_original>
// kernel: _lambda_.4
$region0: #{_lambda_.4}
  #allocation0 [shape = 'u32[]', space=smem, size = 0x4, offset = 0x4, fixed_abs, tag = 'smem constant byte address 0x4 - core index']
  #allocation1 [shape = 'u32[72,128]{1,0:T(1,128)}', space=vmem, size = 0x9000, scoped, tag = 'internal scratch']
  #allocation2 [shape = 'f32[4,2,82]{2,1,0:T(2,128)}', space=vmem, size = 0x1000, scoped, tag = 'scratch operand']
  #allocation3 [shape = 'f32[2,2,82]{2,1,0:T(2,128)}', space=vmem, size = 0x800, scoped, tag = 'scratch operand']
  #allocation4 [shape = 'f32[2,2,26]{2,1,0:T(2,128)}', space=vmem, size = 0x800, scoped, tag = 'scratch operand']
  #allocation5 [shape = 'f32[36,128]{1,0:T(8,128)}', space=vmem, size = 0x5000, scoped, tag = 'scratch operand']
  #allocation6 [shape = 'f32[18,128]{1,0:T(8,128)}', space=vmem, size = 0x3000, scoped, tag = 'scratch operand']
  #allocation7 [shape = 'f32[18,32]{1,0:T(8,128)}', space=vmem, size = 0x3000, scoped, tag = 'scratch operand']
  %s0 = inlined_call_operand.vmem [shape: f32[4,2,64], index: 0, kind: input, shape index: {}]
  %s1 = inlined_call_operand.vmem [shape: f32[2,2,64], index: 1, kind: input, shape index: {}]
  %s2 = inlined_call_operand.vmem [shape: f32[2,2,16], index: 2, kind: input, shape index: {}]
  %s3 = inlined_call_operand.vmem [shape: f32[2,36], index: 3, kind: input, shape index: {}]
  %s4 = inlined_call_operand.vmem [shape: f32[2,18], index: 4, kind: input, shape index: {}]
  %s5 = inlined_call_operand.vmem [shape: f32[2,18], index: 5, kind: input, shape index: {}]
  %s6 = inlined_call_operand.vmem [shape: f32[16,64], index: 6, kind: input, shape index: {}]
  %s7 = inlined_call_operand.vmem [shape: f32[3,64], index: 7, kind: input, shape index: {}, may-alias: {7,8}]
  %s8 = inlined_call_operand.vmem [shape: f32[3,64], index: 8, kind: input, shape index: {}, may-alias: {7,8}]
  %s9 = inlined_call_operand.vmem [shape: f32[3,16], index: 9, kind: input, shape index: {}]
  %s10 = inlined_call_operand.vmem [shape: f32[2,1], index: 10, kind: input, shape index: {}]
  %s11 = inlined_call_operand.vmem [shape: f32[2,1], index: 11, kind: input, shape index: {}]
  %s12 = inlined_call_operand.vmem [shape: f32[2,128], index: 12, kind: output, shape index: {}]
  %s13 = sld [smem:[#allocation0]]
  $region58: #{_lambda_.4} parent=0
    _
  %s15 = ssub.s32 1, %s13
  %s16 = scalar_select 0, %s15, %s13
  // Predicated region
  $region2: #{_lambda_.4} parent=0 // pred_check
    _
  $region3: #{_lambda_.4} parent=0 // pred_check_branch
    %18 = sbr.rel (0) target = $region5
  $region4: #{_lambda_.4} parent=0 // pred_region
    _
  $region5: #{_lambda_.4} parent=0 // pred_fallthru
    _
  // Predicated region
  $region6: #{_lambda_.4} parent=0 // pred_check
    _
  $region7: #{_lambda_.4} parent=0 // pred_check_branch
    %20 = sbr.rel (0) target = $region9
  $region8: #{_lambda_.4} parent=0 // pred_region
    _
  $region9: #{_lambda_.4} parent=0 // pred_fallthru
    _
  // Predicated region
  $region10: #{_lambda_.4} parent=0 // pred_check
    _
  $region11: #{_lambda_.4} parent=0 // pred_check_branch
    %22 = sbr.rel (0) target = $region13
  $region12: #{_lambda_.4} parent=0 // pred_region
    _
  $region13: #{_lambda_.4} parent=0 // pred_fallthru
    _
  // Predicated region
  $region14: #{_lambda_.4} parent=0 // pred_check
    _
  $region15: #{_lambda_.4} parent=0 // pred_check_branch
    %24 = sbr.rel (0) target = $region17
  $region16: #{_lambda_.4} parent=0 // pred_region
    _
  $region17: #{_lambda_.4} parent=0 // pred_fallthru
    _
  // Predicated region
  $region18: #{_lambda_.4} parent=0 // pred_check
    _
  $region19: #{_lambda_.4} parent=0 // pred_check_branch
    %26 = sbr.rel (0) target = $region21
  $region20: #{_lambda_.4} parent=0 // pred_region
    _
  $region21: #{_lambda_.4} parent=0 // pred_fallthru
    _
  // Predicated region
  $region22: #{_lambda_.4} parent=0 // pred_check
    _
  $region23: #{_lambda_.4} parent=0 // pred_check_branch
    %28 = sbr.rel (0) target = $region25
  $region24: #{_lambda_.4} parent=0 // pred_region
    _
  $region25: #{_lambda_.4} parent=0 // pred_fallthru
    _
  // Predicated region
  $region26: #{_lambda_.4} parent=0 // pred_check
    _
  $region27: #{_lambda_.4} parent=0 // pred_check_branch
    %30 = sbr.rel (0) target = $region29
  $region28: #{_lambda_.4} parent=0 // pred_region
    _
  $region29: #{_lambda_.4} parent=0 // pred_fallthru
    _
  // Predicated region
  $region30: #{_lambda_.4} parent=0 // pred_check
    _
  $region31: #{_lambda_.4} parent=0 // pred_check_branch
    %32 = sbr.rel (0) target = $region33
  $region32: #{_lambda_.4} parent=0 // pred_region
    _
  $region33: #{_lambda_.4} parent=0 // pred_fallthru
    _
  // Predicated region
  $region34: #{_lambda_.4} parent=0 // pred_check
    _
  $region35: #{_lambda_.4} parent=0 // pred_check_branch
    %34 = sbr.rel (0) target = $region37
  $region36: #{_lambda_.4} parent=0 // pred_region
    _
  $region37: #{_lambda_.4} parent=0 // pred_fallthru
    _
  // Predicated region
  $region38: #{_lambda_.4} parent=0 // pred_check
    _
  $region39: #{_lambda_.4} parent=0 // pred_check_branch
    %36 = sbr.rel (0) target = $region41
  $region40: #{_lambda_.4} parent=0 // pred_region
    _
  $region41: #{_lambda_.4} parent=0 // pred_fallthru
    _
  // Predicated region
  $region42: #{_lambda_.4} parent=0 // pred_check
    _
  $region43: #{_lambda_.4} parent=0 // pred_check_branch
    %38 = sbr.rel (0) target = $region45
  $region44: #{_lambda_.4} parent=0 // pred_region
    _
  $region45: #{_lambda_.4} parent=0 // pred_fallthru
    _
  // Predicated region
  $region46: #{_lambda_.4} parent=0 // pred_check
    _
  $region47: #{_lambda_.4} parent=0 // pred_check_branch
    %40 = sbr.rel (0) target = $region49
  $region48: #{_lambda_.4} parent=0 // pred_region
    _
  $region49: #{_lambda_.4} parent=0 // pred_fallthru
    _
  %vm41 = vcmask 66560
  %42 = vst.msk [vmem:[#allocation2] sm:$0x3] %vm41, 0.0
  %43 = vst.msk [vmem:[#allocation2 + $0x2] sm:$0x3] %vm41, 0.0
  %44 = vst.msk [vmem:[#allocation2 + $0x4] sm:$0x3] %vm41, 0.0
  %45 = vst.msk [vmem:[#allocation2 + $0x6] sm:$0x3] %vm41, 0.0
  %vm46 = vcmask 665160
  %47 = vst.msk [vmem:[#allocation2] sm:$0x3] %vm46, 0.0
  %48 = vst.msk [vmem:[#allocation2 + $0x2] sm:$0x3] %vm46, 0.0
  %49 = vst.msk [vmem:[#allocation2 + $0x4] sm:$0x3] %vm46, 0.0
  %50 = vst.msk [vmem:[#allocation2 + $0x6] sm:$0x3] %vm46, 0.0
  %v51 = vld [vmem:[%s0] sm:$0x3]
  %v52 = vld [vmem:[%s0 + $0x2] sm:$0x3]
  %v53 = vld [vmem:[%s0 + $0x4] sm:$0x3]
  %v54 = vld [vmem:[%s0 + $0x6] sm:$0x3]
  %59 = vrot.lane.b32.xlu0 %v51, 9
  %v60 = vpop.permute.xlu0 %59
  %61 = vrot.lane.b32.xlu0 %v52, 9
  %v62 = vpop.permute.xlu0 %61
  %63 = vrot.lane.b32.xlu0 %v53, 9
  %v64 = vpop.permute.xlu0 %63
  %65 = vrot.lane.b32.xlu0 %v54, 9
  %v66 = vpop.permute.xlu0 %65
  %vm71 = vcmask 590920
  %72 = vst.msk [vmem:[#allocation2] sm:$0x3] %vm71, %v60
  %73 = vst.msk [vmem:[#allocation2 + $0x2] sm:$0x3] %vm71, %v62
  %74 = vst.msk [vmem:[#allocation2 + $0x4] sm:$0x3] %vm71, %v64
  %75 = vst.msk [vmem:[#allocation2 + $0x6] sm:$0x3] %vm71, %v66
  %v76 = vld [vmem:[%s7] sm:$0x1]
  %v77 = vld [vmem:[#allocation2] sm:$0x1]
  %v78 = vld [vmem:[#allocation2 + $0x2] sm:$0x1]
  %v79 = vld [vmem:[#allocation2 + $0x4] sm:$0x1]
  %v80 = vld [vmem:[#allocation2 + $0x6] sm:$0x1]
  %v81 = vperm.slane %v76, 0
  %v82 = vmul.f32 %v77, %v81
  %v83 = vmul.f32 %v78, %v81
  %v84 = vmul.f32 %v79, %v81
  %v85 = vmul.f32 %v80, %v81
  %v90 = vrot.slane %v83, 7
  %vm91 = vcmask 1041409
  %v92 = vsel %vm91, %v90, %v82
  %v93 = vrot.slane %v84, 6
  %vm94 = vcmask 1042434
  %v95 = vsel %vm94, %v93, %v92
  %v96 = vrot.slane %v85, 5
  %vm97 = vcmask 1043459
  %v98 = vsel %vm97, %v96, %v95
  %vm100 = vcmask 519168
  %101 = vst.msk [vmem:[#allocation5] sm:$0xf] %vm100, %v98
  %v102 = vld [vmem:[#allocation2 + $0x1] sm:$0x1]
  %v103 = vld [vmem:[#allocation2 + $0x3] sm:$0x1]
  %v104 = vld [vmem:[#allocation2 + $0x5] sm:$0x1]
  %v105 = vld [vmem:[#allocation2 + $0x7] sm:$0x1]
  %v106 = vmul.f32 %v102, %v81
  %v107 = vmul.f32 %v103, %v81
  %v108 = vmul.f32 %v104, %v81
  %v109 = vmul.f32 %v105, %v81
  %v114 = vrot.slane %v107, 7
  %v115 = vsel %vm91, %v114, %v106
  %v116 = vrot.slane %v108, 6
  %v117 = vsel %vm94, %v116, %v115
  %v118 = vrot.slane %v109, 5
  %v119 = vsel %vm97, %v118, %v117
  %120 = vrot.lane.b32.xlu0 %v119, 64
  %v121 = vpop.permute.xlu0 %120
  %vm123 = vcmask 1043968
  %124 = vst.msk [vmem:[#allocation5] sm:$0xf] %vm123, %v121
  %v125 = vld [vmem:[#allocation2] sm:$0x1]
  %v126 = vld [vmem:[#allocation2 + $0x2] sm:$0x1]
  %v127 = vld [vmem:[#allocation2 + $0x4] sm:$0x1]
  %v128 = vld [vmem:[#allocation2 + $0x6] sm:$0x1]
  %130 = vrot.lane.b32.xlu0 %v81, 8
  %v131 = vpop.permute.xlu0 %130
  %v133 = vmul.f32 %v125, %v131
  %v134 = vmul.f32 %v126, %v131
  %v135 = vmul.f32 %v127, %v131
  %v136 = vmul.f32 %v128, %v131
  %v141 = vrot.slane %v134, 7
  %v142 = vsel %vm91, %v141, %v133
  %v143 = vrot.slane %v135, 6
  %v144 = vsel %vm94, %v143, %v142
  %v145 = vrot.slane %v136, 5
  %v146 = vsel %vm97, %v145, %v144
  %147 = vrot.lane.b32.xlu0 %v146, 120
  %v148 = vpop.permute.xlu0 %147
  %150 = vst.msk [vmem:[#allocation5 + $0xc] sm:$0xf] %vm100, %v148
  %v151 = vld [vmem:[#allocation2 + $0x1] sm:$0x1]
  %v152 = vld [vmem:[#allocation2 + $0x3] sm:$0x1]
  %v153 = vld [vmem:[#allocation2 + $0x5] sm:$0x1]
  %v154 = vld [vmem:[#allocation2 + $0x7] sm:$0x1]
  %v155 = vmul.f32 %v151, %v131
  %v156 = vmul.f32 %v152, %v131
  %v157 = vmul.f32 %v153, %v131
  %v158 = vmul.f32 %v154, %v131
  %v163 = vrot.slane %v156, 7
  %v164 = vsel %vm91, %v163, %v155
  %v165 = vrot.slane %v157, 6
  %v166 = vsel %vm94, %v165, %v164
  %v167 = vrot.slane %v158, 5
  %v168 = vsel %vm97, %v167, %v166
  %169 = vrot.lane.b32.xlu0 %v168, 56
  %v170 = vpop.permute.xlu0 %169
  %172 = vst.msk [vmem:[#allocation5 + $0xc] sm:$0xf] %vm123, %v170
  %v173 = vld [vmem:[#allocation2] sm:$0x1]
  %v174 = vld [vmem:[#allocation2 + $0x2] sm:$0x1]
  %v175 = vld [vmem:[#allocation2 + $0x4] sm:$0x1]
  %v176 = vld [vmem:[#allocation2 + $0x6] sm:$0x1]
  %177 = vrot.lane.b32.xlu0 %v81, 16
  %v178 = vpop.permute.xlu0 %177
  %v180 = vmul.f32 %v173, %v178
  %v181 = vmul.f32 %v174, %v178
  %v182 = vmul.f32 %v175, %v178
  %v183 = vmul.f32 %v176, %v178
  %v188 = vrot.slane %v181, 7
  %v189 = vsel %vm91, %v188, %v180
  %v190 = vrot.slane %v182, 6
  %v191 = vsel %vm94, %v190, %v189
  %v192 = vrot.slane %v183, 5
  %v193 = vsel %vm97, %v192, %v191
  %194 = vrot.lane.b32.xlu0 %v193, 112
  %v195 = vpop.permute.xlu0 %194
  %197 = vst.msk [vmem:[#allocation5 + $0x18] sm:$0xf] %vm100, %v195
  %v198 = vld [vmem:[#allocation2 + $0x1] sm:$0x1]
  %v199 = vld [vmem:[#allocation2 + $0x3] sm:$0x1]
  %v200 = vld [vmem:[#allocation2 + $0x5] sm:$0x1]
  %v201 = vld [vmem:[#allocation2 + $0x7] sm:$0x1]
  %v202 = vmul.f32 %v198, %v178
  %v203 = vmul.f32 %v199, %v178
  %v204 = vmul.f32 %v200, %v178
  %v205 = vmul.f32 %v201, %v178
  %v210 = vrot.slane %v203, 7
  %v211 = vsel %vm91, %v210, %v202
  %v212 = vrot.slane %v204, 6
  %v213 = vsel %vm94, %v212, %v211
  %v214 = vrot.slane %v205, 5
  %v215 = vsel %vm97, %v214, %v213
  %216 = vrot.lane.b32.xlu0 %v215, 48
  %v217 = vpop.permute.xlu0 %216
  %219 = vst.msk [vmem:[#allocation5 + $0x18] sm:$0xf] %vm123, %v217
  %v220 = vld [vmem:[#allocation2] sm:$0x1]
  %v221 = vld [vmem:[#allocation2 + $0x2] sm:$0x1]
  %v222 = vld [vmem:[#allocation2 + $0x4] sm:$0x1]
  %v223 = vld [vmem:[#allocation2 + $0x6] sm:$0x1]
  %v228 = vrot.slane %v221, 7
  %v229 = vsel %vm91, %v228, %v220
  %v230 = vrot.slane %v222, 6
  %v231 = vsel %vm94, %v230, %v229
  %v232 = vrot.slane %v223, 5
  %v233 = vsel %vm97, %v232, %v231
  %234 = vrot.lane.b32.xlu0 %v233, 127
  %v235 = vpop.permute.xlu0 %234
  %237 = vst.msk [vmem:[#allocation5 + $0x4] sm:$0xf] %vm100, %v235
  %v238 = vld [vmem:[#allocation2 + $0x1] sm:$0x1]
  %v239 = vld [vmem:[#allocation2 + $0x3] sm:$0x1]
  %v240 = vld [vmem:[#allocation2 + $0x5] sm:$0x1]
  %v241 = vld [vmem:[#allocation2 + $0x7] sm:$0x1]
  %v246 = vrot.slane %v239, 7
  %v247 = vsel %vm91, %v246, %v238
  %v248 = vrot.slane %v240, 6
  %v249 = vsel %vm94, %v248, %v247
  %v250 = vrot.slane %v241, 5
  %v251 = vsel %vm97, %v250, %v249
  %252 = vrot.lane.b32.xlu0 %v251, 63
  %v253 = vpop.permute.xlu0 %252
  %255 = vst.msk [vmem:[#allocation5 + $0x4] sm:$0xf] %vm123, %v253
  %v256 = vld [vmem:[#allocation2] sm:$0x1]
  %v257 = vld [vmem:[#allocation2 + $0x2] sm:$0x1]
  %v258 = vld [vmem:[#allocation2 + $0x4] sm:$0x1]
  %v259 = vld [vmem:[#allocation2 + $0x6] sm:$0x1]
  %v264 = vrot.slane %v257, 7
  %v265 = vsel %vm91, %v264, %v256
  %v266 = vrot.slane %v258, 6
  %v267 = vsel %vm94, %v266, %v265
  %v268 = vrot.slane %v259, 5
  %v269 = vsel %vm97, %v268, %v267
  %270 = vrot.lane.b32.xlu0 %v269, 119
  %v271 = vpop.permute.xlu0 %270
  %273 = vst.msk [vmem:[#allocation5 + $0x10] sm:$0xf] %vm100, %v271
  %v274 = vld [vmem:[#allocation2 + $0x1] sm:$0x1]
  %v275 = vld [vmem:[#allocation2 + $0x3] sm:$0x1]
  %v276 = vld [vmem:[#allocation2 + $0x5] sm:$0x1]
  %v277 = vld [vmem:[#allocation2 + $0x7] sm:$0x1]
  %v282 = vrot.slane %v275, 7
  %v283 = vsel %vm91, %v282, %v274
  %v284 = vrot.slane %v276, 6
  %v285 = vsel %vm94, %v284, %v283
  %v286 = vrot.slane %v277, 5
  %v287 = vsel %vm97, %v286, %v285
  %288 = vrot.lane.b32.xlu0 %v287, 55
  %v289 = vpop.permute.xlu0 %288
  %291 = vst.msk [vmem:[#allocation5 + $0x10] sm:$0xf] %vm123, %v289
  %v292 = vld [vmem:[#allocation2] sm:$0x1]
  %v293 = vld [vmem:[#allocation2 + $0x2] sm:$0x1]
  %v294 = vld [vmem:[#allocation2 + $0x4] sm:$0x1]
  %v295 = vld [vmem:[#allocation2 + $0x6] sm:$0x1]
  %v300 = vrot.slane %v293, 7
  %v301 = vsel %vm91, %v300, %v292
  %v302 = vrot.slane %v294, 6
  %v303 = vsel %vm94, %v302, %v301
  %v304 = vrot.slane %v295, 5
  %v305 = vsel %vm97, %v304, %v303
  %306 = vrot.lane.b32.xlu0 %v305, 111
  %v307 = vpop.permute.xlu0 %306
  %309 = vst.msk [vmem:[#allocation5 + $0x1c] sm:$0xf] %vm100, %v307
  %v310 = vld [vmem:[#allocation2 + $0x1] sm:$0x1]
  %v311 = vld [vmem:[#allocation2 + $0x3] sm:$0x1]
  %v312 = vld [vmem:[#allocation2 + $0x5] sm:$0x1]
  %v313 = vld [vmem:[#allocation2 + $0x7] sm:$0x1]
  %v318 = vrot.slane %v311, 7
  %v319 = vsel %vm91, %v318, %v310
  %v320 = vrot.slane %v312, 6
  %v321 = vsel %vm94, %v320, %v319
  %v322 = vrot.slane %v313, 5
  %v323 = vsel %vm97, %v322, %v321
  %324 = vrot.lane.b32.xlu0 %v323, 47
  %v325 = vpop.permute.xlu0 %324
  %327 = vst.msk [vmem:[#allocation5 + $0x1c] sm:$0xf] %vm123, %v325
  %v328 = vld [vmem:[%s7 + $0x2] sm:$0x1]
  %v329 = vld [vmem:[#allocation2] sm:$0x1]
  %v330 = vld [vmem:[#allocation2 + $0x2] sm:$0x1]
  %v331 = vld [vmem:[#allocation2 + $0x4] sm:$0x1]
  %v332 = vld [vmem:[#allocation2 + $0x6] sm:$0x1]
  %v333 = vperm.slane %v328, 0
  %335 = vrot.lane.b32.xlu0 %v333, 2
  %v336 = vpop.permute.xlu0 %335
  %v338 = vmul.f32 %v329, %v336
  %v339 = vmul.f32 %v330, %v336
  %v340 = vmul.f32 %v331, %v336
  %v341 = vmul.f32 %v332, %v336
  %v346 = vrot.slane %v339, 7
  %v347 = vsel %vm91, %v346, %v338
  %v348 = vrot.slane %v340, 6
  %v349 = vsel %vm94, %v348, %v347
  %v350 = vrot.slane %v341, 5
  %v351 = vsel %vm97, %v350, %v349
  %352 = vrot.lane.b32.xlu0 %v351, 126
  %v353 = vpop.permute.xlu0 %352
  %355 = vst.msk [vmem:[#allocation5 + $0x8] sm:$0xf] %vm100, %v353
  %v356 = vld [vmem:[#allocation2 + $0x1] sm:$0x1]
  %v357 = vld [vmem:[#allocation2 + $0x3] sm:$0x1]
  %v358 = vld [vmem:[#allocation2 + $0x5] sm:$0x1]
  %v359 = vld [vmem:[#allocation2 + $0x7] sm:$0x1]
  %v360 = vmul.f32 %v356, %v336
  %v361 = vmul.f32 %v357, %v336
  %v362 = vmul.f32 %v358, %v336
  %v363 = vmul.f32 %v359, %v336
  %v368 = vrot.slane %v361, 7
  %v369 = vsel %vm91, %v368, %v360
  %v370 = vrot.slane %v362, 6
  %v371 = vsel %vm94, %v370, %v369
  %v372 = vrot.slane %v363, 5
  %v373 = vsel %vm97, %v372, %v371
  %374 = vrot.lane.b32.xlu0 %v373, 62
  %v375 = vpop.permute.xlu0 %374
  %377 = vst.msk [vmem:[#allocation5 + $0x8] sm:$0xf] %vm123, %v375
  %v378 = vld [vmem:[#allocation2] sm:$0x1]
  %v379 = vld [vmem:[#allocation2 + $0x2] sm:$0x1]
  %v380 = vld [vmem:[#allocation2 + $0x4] sm:$0x1]
  %v381 = vld [vmem:[#allocation2 + $0x6] sm:$0x1]
  %382 = vrot.lane.b32.xlu0 %v333, 10
  %v383 = vpop.permute.xlu0 %382
  %v385 = vmul.f32 %v378, %v383
  %v386 = vmul.f32 %v379, %v383
  %v387 = vmul.f32 %v380, %v383
  %v388 = vmul.f32 %v381, %v383
  %v393 = vrot.slane %v386, 7
  %v394 = vsel %vm91, %v393, %v385
  %v395 = vrot.slane %v387, 6
  %v396 = vsel %vm94, %v395, %v394
  %v397 = vrot.slane %v388, 5
  %v398 = vsel %vm97, %v397, %v396
  %399 = vrot.lane.b32.xlu0 %v398, 118
  %v400 = vpop.permute.xlu0 %399
  %402 = vst.msk [vmem:[#allocation5 + $0x14] sm:$0xf] %vm100, %v400
  %v403 = vld [vmem:[#allocation2 + $0x1] sm:$0x1]
  %v404 = vld [vmem:[#allocation2 + $0x3] sm:$0x1]
  %v405 = vld [vmem:[#allocation2 + $0x5] sm:$0x1]
  %v406 = vld [vmem:[#allocation2 + $0x7] sm:$0x1]
  %v407 = vmul.f32 %v403, %v383
  %v408 = vmul.f32 %v404, %v383
  %v409 = vmul.f32 %v405, %v383
  %v410 = vmul.f32 %v406, %v383
  %v415 = vrot.slane %v408, 7
  %v416 = vsel %vm91, %v415, %v407
  %v417 = vrot.slane %v409, 6
  %v418 = vsel %vm94, %v417, %v416
  %v419 = vrot.slane %v410, 5
  %v420 = vsel %vm97, %v419, %v418
  %421 = vrot.lane.b32.xlu0 %v420, 54
  %v422 = vpop.permute.xlu0 %421
  %424 = vst.msk [vmem:[#allocation5 + $0x14] sm:$0xf] %vm123, %v422
  %v425 = vld [vmem:[#allocation2] sm:$0x1]
  %v426 = vld [vmem:[#allocation2 + $0x2] sm:$0x1]
  %v427 = vld [vmem:[#allocation2 + $0x4] sm:$0x1]
  %v428 = vld [vmem:[#allocation2 + $0x6] sm:$0x1]
  %429 = vrot.lane.b32.xlu0 %v333, 18
  %v430 = vpop.permute.xlu0 %429
  %v432 = vmul.f32 %v425, %v430
  %v433 = vmul.f32 %v426, %v430
  %v434 = vmul.f32 %v427, %v430
  %v435 = vmul.f32 %v428, %v430
  %v440 = vrot.slane %v433, 7
  %v441 = vsel %vm91, %v440, %v432
  %v442 = vrot.slane %v434, 6
  %v443 = vsel %vm94, %v442, %v441
  %v444 = vrot.slane %v435, 5
  %v445 = vsel %vm97, %v444, %v443
  %446 = vrot.lane.b32.xlu0 %v445, 110
  %v447 = vpop.permute.xlu0 %446
  %449 = vst.msk [vmem:[#allocation5 + $0x20] sm:$0xf] %vm100, %v447
  %v450 = vld [vmem:[#allocation2 + $0x1] sm:$0x1]
  %v451 = vld [vmem:[#allocation2 + $0x3] sm:$0x1]
  %v452 = vld [vmem:[#allocation2 + $0x5] sm:$0x1]
  %v453 = vld [vmem:[#allocation2 + $0x7] sm:$0x1]
  %v454 = vmul.f32 %v450, %v430
  %v455 = vmul.f32 %v451, %v430
  %v456 = vmul.f32 %v452, %v430
  %v457 = vmul.f32 %v453, %v430
  %v462 = vrot.slane %v455, 7
  %v463 = vsel %vm91, %v462, %v454
  %v464 = vrot.slane %v456, 6
  %v465 = vsel %vm94, %v464, %v463
  %v466 = vrot.slane %v457, 5
  %v467 = vsel %vm97, %v466, %v465
  %468 = vrot.lane.b32.xlu0 %v467, 46
  %v469 = vpop.permute.xlu0 %468
  %471 = vst.msk [vmem:[#allocation5 + $0x20] sm:$0xf] %vm123, %v469
  %v472 = vld [vmem:[%s3] sm:$0x3]
  %v473 = vld [vmem:[#allocation5] sm:$0xff]
  %v474 = vld [vmem:[#allocation5 + $0x8] sm:$0xff]
  %v475 = vld [vmem:[#allocation5 + $0x10] sm:$0xff]
  %v476 = vld [vmem:[#allocation5 + $0x18] sm:$0xff]
  %v477 = vld [vmem:[#allocation5 + $0x20] sm:$0xf]
  %vm478 = vcmask 293888
  %v480 = vsel %vm478, %v472, 0
  %vm482 = vcmask 1043456
  %v484 = vsel %vm482, %v477, 0
  %486 = vmatpush.msra.mxu0 0.0
  %487 = vmatpush.msra.mxu0 0.0
  %488 = vmatpush.msra.mxu0 0.0
  %489 = vmatpush.msra.mxu0 0.0
  %490 = vmatpush.msra.mxu0 0.0
  %491 = vmatpush.msra.mxu0 0.0
  %492 = vmatpush.msra.mxu0 0.0
  %493 = vmatpush.msra.mxu0 0.0
  %494 = vmatpush.msra.mxu0 0.0
  %495 = vmatpush.msra.mxu0 0.0
  %496 = vmatpush.msra.mxu0 0.0
  %497 = vmatpush.msra.mxu0 %v484
  %498 = vmatpush.msra.mxu0 %v476
  %499 = vmatpush.msra.mxu0 %v475
  %500 = vmatpush.msra.mxu0 %v474
  %501 = vmatpush.msra.mxu0 %v473
  %502 = vmatmul.f32.gmra.mxu0 %v480
  %v503 = vpop.f32.mrf.mxu0
  %v504 = vadd.f32 0.0, %v503
  %505 = vdwg.mxu0
  %506 = vst [vmem:[%s12] sm:$0x3] %v504
  %507 = vst.msk [vmem:[#allocation3] sm:$0x3] %vm41, 0.0
  %508 = vst.msk [vmem:[#allocation3 + $0x2] sm:$0x3] %vm41, 0.0
  %509 = vst.msk [vmem:[#allocation3] sm:$0x3] %vm46, 0.0
  %510 = vst.msk [vmem:[#allocation3 + $0x2] sm:$0x3] %vm46, 0.0
  %v511 = vld [vmem:[%s1] sm:$0x3]
  %v512 = vld [vmem:[%s1 + $0x2] sm:$0x3]
  %515 = vrot.lane.b32.xlu0 %v511, 9
  %v516 = vpop.permute.xlu0 %515
  %517 = vrot.lane.b32.xlu0 %v512, 9
  %v518 = vpop.permute.xlu0 %517
  %521 = vst.msk [vmem:[#allocation3] sm:$0x3] %vm71, %v516
  %522 = vst.msk [vmem:[#allocation3 + $0x2] sm:$0x3] %vm71, %v518
  %v523 = vld [vmem:[%s8] sm:$0x1]
  %v524 = vld [vmem:[#allocation3] sm:$0x1]
  %v525 = vld [vmem:[#allocation3 + $0x2] sm:$0x1]
  %v526 = vperm.slane %v523, 0
  %v527 = vmul.f32 %v524, %v526
  %v528 = vmul.f32 %v525, %v526
  %v531 = vrot.slane %v528, 7
  %v532 = vsel %vm91, %v531, %v527
  %vm534 = vcmask 517120
  %535 = vst.msk [vmem:[#allocation6] sm:$0x3] %vm534, %v532
  %v536 = vld [vmem:[#allocation3 + $0x1] sm:$0x1]
  %v537 = vld [vmem:[#allocation3 + $0x3] sm:$0x1]
  %v538 = vmul.f32 %v536, %v526
  %v539 = vmul.f32 %v537, %v526
  %v542 = vrot.slane %v539, 7
  %v543 = vsel %vm91, %v542, %v538
  %544 = vrot.lane.b32.xlu0 %v543, 64
  %v545 = vpop.permute.xlu0 %544
  %vm547 = vcmask 1041920
  %548 = vst.msk [vmem:[#allocation6] sm:$0x3] %vm547, %v545
  %v549 = vld [vmem:[#allocation3] sm:$0x1]
  %v550 = vld [vmem:[#allocation3 + $0x2] sm:$0x1]
  %552 = vrot.lane.b32.xlu0 %v526, 8
  %v553 = vpop.permute.xlu0 %552
  %v555 = vmul.f32 %v549, %v553
  %v556 = vmul.f32 %v550, %v553
  %v559 = vrot.slane %v556, 7
  %v560 = vsel %vm91, %v559, %v555
  %561 = vrot.lane.b32.xlu0 %v560, 120
  %v562 = vpop.permute.xlu0 %561
  %564 = vst.msk [vmem:[#allocation6 + $0x6] sm:$0x3] %vm534, %v562
  %v565 = vld [vmem:[#allocation3 + $0x1] sm:$0x1]
  %v566 = vld [vmem:[#allocation3 + $0x3] sm:$0x1]
  %v567 = vmul.f32 %v565, %v553
  %v568 = vmul.f32 %v566, %v553
  %v571 = vrot.slane %v568, 7
  %v572 = vsel %vm91, %v571, %v567
  %573 = vrot.lane.b32.xlu0 %v572, 56
  %v574 = vpop.permute.xlu0 %573
  %576 = vst.msk [vmem:[#allocation6 + $0x6] sm:$0x3] %vm547, %v574
  %v577 = vld [vmem:[#allocation3] sm:$0x1]
  %v578 = vld [vmem:[#allocation3 + $0x2] sm:$0x1]
  %579 = vrot.lane.b32.xlu0 %v526, 16
  %v580 = vpop.permute.xlu0 %579
  %v582 = vmul.f32 %v577, %v580
  %v583 = vmul.f32 %v578, %v580
  %v586 = vrot.slane %v583, 7
  %v587 = vsel %vm91, %v586, %v582
  %588 = vrot.lane.b32.xlu0 %v587, 112
  %v589 = vpop.permute.xlu0 %588
  %591 = vst.msk [vmem:[#allocation6 + $0xc] sm:$0x3] %vm534, %v589
  %v592 = vld [vmem:[#allocation3 + $0x1] sm:$0x1]
  %v593 = vld [vmem:[#allocation3 + $0x3] sm:$0x1]
  %v594 = vmul.f32 %v592, %v580
  %v595 = vmul.f32 %v593, %v580
  %v598 = vrot.slane %v595, 7
  %v599 = vsel %vm91, %v598, %v594
  %600 = vrot.lane.b32.xlu0 %v599, 48
  %v601 = vpop.permute.xlu0 %600
  %603 = vst.msk [vmem:[#allocation6 + $0xc] sm:$0x3] %vm547, %v601
  %v604 = vld [vmem:[#allocation3] sm:$0x1]
  %v605 = vld [vmem:[#allocation3 + $0x2] sm:$0x1]
  %v608 = vrot.slane %v605, 7
  %v609 = vsel %vm91, %v608, %v604
  %610 = vrot.lane.b32.xlu0 %v609, 127
  %v611 = vpop.permute.xlu0 %610
  %613 = vst.msk [vmem:[#allocation6 + $0x2] sm:$0x3] %vm534, %v611
  %v614 = vld [vmem:[#allocation3 + $0x1] sm:$0x1]
  %v615 = vld [vmem:[#allocation3 + $0x3] sm:$0x1]
  %v618 = vrot.slane %v615, 7
  %v619 = vsel %vm91, %v618, %v614
  %620 = vrot.lane.b32.xlu0 %v619, 63
  %v621 = vpop.permute.xlu0 %620
  %623 = vst.msk [vmem:[#allocation6 + $0x2] sm:$0x3] %vm547, %v621
  %v624 = vld [vmem:[#allocation3] sm:$0x1]
  %v625 = vld [vmem:[#allocation3 + $0x2] sm:$0x1]
  %v628 = vrot.slane %v625, 7
  %v629 = vsel %vm91, %v628, %v624
  %630 = vrot.lane.b32.xlu0 %v629, 119
  %v631 = vpop.permute.xlu0 %630
  %633 = vst.msk [vmem:[#allocation6 + $0x8] sm:$0x3] %vm534, %v631
  %v634 = vld [vmem:[#allocation3 + $0x1] sm:$0x1]
  %v635 = vld [vmem:[#allocation3 + $0x3] sm:$0x1]
  %v638 = vrot.slane %v635, 7
  %v639 = vsel %vm91, %v638, %v634
  %640 = vrot.lane.b32.xlu0 %v639, 55
  %v641 = vpop.permute.xlu0 %640
  %643 = vst.msk [vmem:[#allocation6 + $0x8] sm:$0x3] %vm547, %v641
  %v644 = vld [vmem:[#allocation3] sm:$0x1]
  %v645 = vld [vmem:[#allocation3 + $0x2] sm:$0x1]
  %v648 = vrot.slane %v645, 7
  %v649 = vsel %vm91, %v648, %v644
  %650 = vrot.lane.b32.xlu0 %v649, 111
  %v651 = vpop.permute.xlu0 %650
  %653 = vst.msk [vmem:[#allocation6 + $0xe] sm:$0x3] %vm534, %v651
  %v654 = vld [vmem:[#allocation3 + $0x1] sm:$0x1]
  %v655 = vld [vmem:[#allocation3 + $0x3] sm:$0x1]
  %v658 = vrot.slane %v655, 7
  %v659 = vsel %vm91, %v658, %v654
  %660 = vrot.lane.b32.xlu0 %v659, 47
  %v661 = vpop.permute.xlu0 %660
  %663 = vst.msk [vmem:[#allocation6 + $0xe] sm:$0x3] %vm547, %v661
  %v664 = vld [vmem:[%s8 + $0x2] sm:$0x1]
  %v665 = vld [vmem:[#allocation3] sm:$0x1]
  %v666 = vld [vmem:[#allocation3 + $0x2] sm:$0x1]
  %v667 = vperm.slane %v664, 0
  %669 = vrot.lane.b32.xlu0 %v667, 2
  %v670 = vpop.permute.xlu0 %669
  %v672 = vmul.f32 %v665, %v670
  %v673 = vmul.f32 %v666, %v670
  %v676 = vrot.slane %v673, 7
  %v677 = vsel %vm91, %v676, %v672
  %678 = vrot.lane.b32.xlu0 %v677, 126
  %v679 = vpop.permute.xlu0 %678
  %681 = vst.msk [vmem:[#allocation6 + $0x4] sm:$0x3] %vm534, %v679
  %v682 = vld [vmem:[#allocation3 + $0x1] sm:$0x1]
  %v683 = vld [vmem:[#allocation3 + $0x3] sm:$0x1]
  %v684 = vmul.f32 %v682, %v670
  %v685 = vmul.f32 %v683, %v670
  %v688 = vrot.slane %v685, 7
  %v689 = vsel %vm91, %v688, %v684
  %690 = vrot.lane.b32.xlu0 %v689, 62
  %v691 = vpop.permute.xlu0 %690
  %693 = vst.msk [vmem:[#allocation6 + $0x4] sm:$0x3] %vm547, %v691
  %v694 = vld [vmem:[#allocation3] sm:$0x1]
  %v695 = vld [vmem:[#allocation3 + $0x2] sm:$0x1]
  %696 = vrot.lane.b32.xlu0 %v667, 10
  %v697 = vpop.permute.xlu0 %696
  %v699 = vmul.f32 %v694, %v697
  %v700 = vmul.f32 %v695, %v697
  %v703 = vrot.slane %v700, 7
  %v704 = vsel %vm91, %v703, %v699
  %705 = vrot.lane.b32.xlu0 %v704, 118
  %v706 = vpop.permute.xlu0 %705
  %708 = vst.msk [vmem:[#allocation6 + $0xa] sm:$0x3] %vm534, %v706
  %v709 = vld [vmem:[#allocation3 + $0x1] sm:$0x1]
  %v710 = vld [vmem:[#allocation3 + $0x3] sm:$0x1]
  %v711 = vmul.f32 %v709, %v697
  %v712 = vmul.f32 %v710, %v697
  %v715 = vrot.slane %v712, 7
  %v716 = vsel %vm91, %v715, %v711
  %717 = vrot.lane.b32.xlu0 %v716, 54
  %v718 = vpop.permute.xlu0 %717
  %720 = vst.msk [vmem:[#allocation6 + $0xa] sm:$0x3] %vm547, %v718
  %v721 = vld [vmem:[#allocation3] sm:$0x1]
  %v722 = vld [vmem:[#allocation3 + $0x2] sm:$0x1]
  %723 = vrot.lane.b32.xlu0 %v667, 18
  %v724 = vpop.permute.xlu0 %723
  %v726 = vmul.f32 %v721, %v724
  %v727 = vmul.f32 %v722, %v724
  %v730 = vrot.slane %v727, 7
  %v731 = vsel %vm91, %v730, %v726
  %732 = vrot.lane.b32.xlu0 %v731, 110
  %v733 = vpop.permute.xlu0 %732
  %735 = vst.msk [vmem:[#allocation6 + $0x10] sm:$0x3] %vm534, %v733
  %v736 = vld [vmem:[#allocation3 + $0x1] sm:$0x1]
  %v737 = vld [vmem:[#allocation3 + $0x3] sm:$0x1]
  %v738 = vmul.f32 %v736, %v724
  %v739 = vmul.f32 %v737, %v724
  %v742 = vrot.slane %v739, 7
  %v743 = vsel %vm91, %v742, %v738
  %744 = vrot.lane.b32.xlu0 %v743, 46
  %v745 = vpop.permute.xlu0 %744
  %747 = vst.msk [vmem:[#allocation6 + $0x10] sm:$0x3] %vm547, %v745
  %v748 = vld [vmem:[%s4] sm:$0x3]
  %v749 = vld [vmem:[#allocation6] sm:$0xff]
  %v750 = vld [vmem:[#allocation6 + $0x8] sm:$0xff]
  %v751 = vld [vmem:[#allocation6 + $0x10] sm:$0x3]
  %vm752 = vcmask 146432
  %v754 = vsel %vm752, %v748, 0
  %vm756 = vcmask 1041408
  %v758 = vsel %vm756, %v751, 0
  %760 = vmatpush.msra.mxu0 0.0
  %761 = vmatpush.msra.mxu0 0.0
  %762 = vmatpush.msra.mxu0 0.0
  %763 = vmatpush.msra.mxu0 0.0
  %764 = vmatpush.msra.mxu0 0.0
  %765 = vmatpush.msra.mxu0 0.0
  %766 = vmatpush.msra.mxu0 0.0
  %767 = vmatpush.msra.mxu0 0.0
  %768 = vmatpush.msra.mxu0 0.0
  %769 = vmatpush.msra.mxu0 0.0
  %770 = vmatpush.msra.mxu0 0.0
  %771 = vmatpush.msra.mxu0 0.0
  %772 = vmatpush.msra.mxu0 0.0
  %773 = vmatpush.msra.mxu0 %v758
  %774 = vmatpush.msra.mxu0 %v750
  %775 = vmatpush.msra.mxu0 %v749
  %776 = vmatmul.f32.gmra.mxu0 %v754
  %v777 = vpop.f32.mrf.mxu0
  %v778 = vadd.f32 0.0, %v777
  %779 = vdwg.mxu0
  %v780 = vld [vmem:[%s12] sm:$0x3]
  %v781 = vadd.f32 %v780, %v778
  %782 = vst [vmem:[%s12] sm:$0x3] %v781
  %vm783 = vcmask 33792
  %784 = vst.msk [vmem:[#allocation4] sm:$0x3] %vm783, 0.0
  %785 = vst.msk [vmem:[#allocation4 + $0x2] sm:$0x3] %vm783, 0.0
  %vm786 = vcmask 205992
  %787 = vst.msk [vmem:[#allocation4] sm:$0x3] %vm786, 0.0
  %788 = vst.msk [vmem:[#allocation4 + $0x2] sm:$0x3] %vm786, 0.0
  %v789 = vld [vmem:[%s2] sm:$0x3]
  %v790 = vld [vmem:[%s2 + $0x2] sm:$0x3]
  %793 = vrot.lane.b32.xlu0 %v789, 5
  %v794 = vpop.permute.xlu0 %793
  %795 = vrot.lane.b32.xlu0 %v790, 5
  %v796 = vpop.permute.xlu0 %795
  %vm799 = vcmask 164904
  %800 = vst.msk [vmem:[#allocation4] sm:$0x3] %vm799, %v794
  %801 = vst.msk [vmem:[#allocation4 + $0x2] sm:$0x3] %vm799, %v796
  %v802 = vld [vmem:[%s9] sm:$0x1]
  %v803 = vld [vmem:[#allocation4] sm:$0x1]
  %v804 = vld [vmem:[#allocation4 + $0x2] sm:$0x1]
  %v805 = vperm.slane %v802, 0
  %v806 = vmul.f32 %v803, %v805
  %v807 = vmul.f32 %v804, %v805
  %v810 = vrot.slane %v807, 7
  %v811 = vsel %vm91, %v810, %v806
  %vm813 = vcmask 123904
  %814 = vst.msk [vmem:[#allocation7] sm:$0x3] %vm813, %v811
  %v815 = vld [vmem:[#allocation4 + $0x1] sm:$0x1]
  %v816 = vld [vmem:[#allocation4 + $0x3] sm:$0x1]
  %v817 = vmul.f32 %v815, %v805
  %v818 = vmul.f32 %v816, %v805
  %v821 = vrot.slane %v818, 7
  %v822 = vsel %vm91, %v821, %v817
  %823 = vrot.lane.b32.xlu0 %v822, 16
  %v824 = vpop.permute.xlu0 %823
  %vm826 = vcmask 255104
  %827 = vst.msk [vmem:[#allocation7] sm:$0x3] %vm826, %v824
  %v828 = vld [vmem:[#allocation4] sm:$0x1]
  %v829 = vld [vmem:[#allocation4 + $0x2] sm:$0x1]
  %831 = vrot.lane.b32.xlu0 %v805, 4
  %v832 = vpop.permute.xlu0 %831
  %v834 = vmul.f32 %v828, %v832
  %v835 = vmul.f32 %v829, %v832
  %v838 = vrot.slane %v835, 7
  %v839 = vsel %vm91, %v838, %v834
  %840 = vrot.lane.b32.xlu0 %v839, 124
  %v841 = vpop.permute.xlu0 %840
  %843 = vst.msk [vmem:[#allocation7 + $0x6] sm:$0x3] %vm813, %v841
  %v844 = vld [vmem:[#allocation4 + $0x1] sm:$0x1]
  %v845 = vld [vmem:[#allocation4 + $0x3] sm:$0x1]
  %v846 = vmul.f32 %v844, %v832
  %v847 = vmul.f32 %v845, %v832
  %v850 = vrot.slane %v847, 7
  %v851 = vsel %vm91, %v850, %v846
  %852 = vrot.lane.b32.xlu0 %v851, 12
  %v853 = vpop.permute.xlu0 %852
  %855 = vst.msk [vmem:[#allocation7 + $0x6] sm:$0x3] %vm826, %v853
  %v856 = vld [vmem:[#allocation4] sm:$0x1]
  %v857 = vld [vmem:[#allocation4 + $0x2] sm:$0x1]
  %858 = vrot.lane.b32.xlu0 %v805, 8
  %v859 = vpop.permute.xlu0 %858
  %v861 = vmul.f32 %v856, %v859
  %v862 = vmul.f32 %v857, %v859
  %v865 = vrot.slane %v862, 7
  %v866 = vsel %vm91, %v865, %v861
  %867 = vrot.lane.b32.xlu0 %v866, 120
  %v868 = vpop.permute.xlu0 %867
  %870 = vst.msk [vmem:[#allocation7 + $0xc] sm:$0x3] %vm813, %v868
  %v871 = vld [vmem:[#allocation4 + $0x1] sm:$0x1]
  %v872 = vld [vmem:[#allocation4 + $0x3] sm:$0x1]
  %v873 = vmul.f32 %v871, %v859
  %v874 = vmul.f32 %v872, %v859
  %v877 = vrot.slane %v874, 7
  %v878 = vsel %vm91, %v877, %v873
  %879 = vrot.lane.b32.xlu0 %v878, 8
  %v880 = vpop.permute.xlu0 %879
  %882 = vst.msk [vmem:[#allocation7 + $0xc] sm:$0x3] %vm826, %v880
  %v883 = vld [vmem:[#allocation4] sm:$0x1]
  %v884 = vld [vmem:[#allocation4 + $0x2] sm:$0x1]
  %v887 = vrot.slane %v884, 7
  %v888 = vsel %vm91, %v887, %v883
  %889 = vrot.lane.b32.xlu0 %v888, 127
  %v890 = vpop.permute.xlu0 %889
  %892 = vst.msk [vmem:[#allocation7 + $0x2] sm:$0x3] %vm813, %v890
  %v893 = vld [vmem:[#allocation4 + $0x1] sm:$0x1]
  %v894 = vld [vmem:[#allocation4 + $0x3] sm:$0x1]
  %v897 = vrot.slane %v894, 7
  %v898 = vsel %vm91, %v897, %v893
  %899 = vrot.lane.b32.xlu0 %v898, 15
  %v900 = vpop.permute.xlu0 %899
  %902 = vst.msk [vmem:[#allocation7 + $0x2] sm:$0x3] %vm826, %v900
  %v903 = vld [vmem:[#allocation4] sm:$0x1]
  %v904 = vld [vmem:[#allocation4 + $0x2] sm:$0x1]
  %v907 = vrot.slane %v904, 7
  %v908 = vsel %vm91, %v907, %v903
  %909 = vrot.lane.b32.xlu0 %v908, 123
  %v910 = vpop.permute.xlu0 %909
  %912 = vst.msk [vmem:[#allocation7 + $0x8] sm:$0x3] %vm813, %v910
  %v913 = vld [vmem:[#allocation4 + $0x1] sm:$0x1]
  %v914 = vld [vmem:[#allocation4 + $0x3] sm:$0x1]
  %v917 = vrot.slane %v914, 7
  %v918 = vsel %vm91, %v917, %v913
  %919 = vrot.lane.b32.xlu0 %v918, 11
  %v920 = vpop.permute.xlu0 %919
  %922 = vst.msk [vmem:[#allocation7 + $0x8] sm:$0x3] %vm826, %v920
  %v923 = vld [vmem:[#allocation4] sm:$0x1]
  %v924 = vld [vmem:[#allocation4 + $0x2] sm:$0x1]
  %v927 = vrot.slane %v924, 7
  %v928 = vsel %vm91, %v927, %v923
  %929 = vrot.lane.b32.xlu0 %v928, 119
  %v930 = vpop.permute.xlu0 %929
  %932 = vst.msk [vmem:[#allocation7 + $0xe] sm:$0x3] %vm813, %v930
  %v933 = vld [vmem:[#allocation4 + $0x1] sm:$0x1]
  %v934 = vld [vmem:[#allocation4 + $0x3] sm:$0x1]
  %v937 = vrot.slane %v934, 7
  %v938 = vsel %vm91, %v937, %v933
  %939 = vrot.lane.b32.xlu0 %v938, 7
  %v940 = vpop.permute.xlu0 %939
  %942 = vst.msk [vmem:[#allocation7 + $0xe] sm:$0x3] %vm826, %v940
  %v943 = vld [vmem:[%s9 + $0x2] sm:$0x1]
  %v944 = vld [vmem:[#allocation4] sm:$0x1]
  %v945 = vld [vmem:[#allocation4 + $0x2] sm:$0x1]
  %v946 = vperm.slane %v943, 0
  %948 = vrot.lane.b32.xlu0 %v946, 2
  %v949 = vpop.permute.xlu0 %948
  %v951 = vmul.f32 %v944, %v949
  %v952 = vmul.f32 %v945, %v949
  %v955 = vrot.slane %v952, 7
  %v956 = vsel %vm91, %v955, %v951
  %957 = vrot.lane.b32.xlu0 %v956, 126
  %v958 = vpop.permute.xlu0 %957
  %960 = vst.msk [vmem:[#allocation7 + $0x4] sm:$0x3] %vm813, %v958
  %v961 = vld [vmem:[#allocation4 + $0x1] sm:$0x1]
  %v962 = vld [vmem:[#allocation4 + $0x3] sm:$0x1]
  %v963 = vmul.f32 %v961, %v949
  %v964 = vmul.f32 %v962, %v949
  %v967 = vrot.slane %v964, 7
  %v968 = vsel %vm91, %v967, %v963
  %969 = vrot.lane.b32.xlu0 %v968, 14
  %v970 = vpop.permute.xlu0 %969
  %972 = vst.msk [vmem:[#allocation7 + $0x4] sm:$0x3] %vm826, %v970
  %v973 = vld [vmem:[#allocation4] sm:$0x1]
  %v974 = vld [vmem:[#allocation4 + $0x2] sm:$0x1]
  %975 = vrot.lane.b32.xlu0 %v946, 6
  %v976 = vpop.permute.xlu0 %975
  %v978 = vmul.f32 %v973, %v976
  %v979 = vmul.f32 %v974, %v976
  %v982 = vrot.slane %v979, 7
  %v983 = vsel %vm91, %v982, %v978
  %984 = vrot.lane.b32.xlu0 %v983, 122
  %v985 = vpop.permute.xlu0 %984
  %987 = vst.msk [vmem:[#allocation7 + $0xa] sm:$0x3] %vm813, %v985
  %v988 = vld [vmem:[#allocation4 + $0x1] sm:$0x1]
  %v989 = vld [vmem:[#allocation4 + $0x3] sm:$0x1]
  %v990 = vmul.f32 %v988, %v976
  %v991 = vmul.f32 %v989, %v976
  %v994 = vrot.slane %v991, 7
  %v995 = vsel %vm91, %v994, %v990
  %996 = vrot.lane.b32.xlu0 %v995, 10
  %v997 = vpop.permute.xlu0 %996
  %999 = vst.msk [vmem:[#allocation7 + $0xa] sm:$0x3] %vm826, %v997
  %v1000 = vld [vmem:[#allocation4] sm:$0x1]
  %v1001 = vld [vmem:[#allocation4 + $0x2] sm:$0x1]
  %1002 = vrot.lane.b32.xlu0 %v946, 10
  %v1003 = vpop.permute.xlu0 %1002
  %v1005 = vmul.f32 %v1000, %v1003
  %v1006 = vmul.f32 %v1001, %v1003
  %v1009 = vrot.slane %v1006, 7
  %v1010 = vsel %vm91, %v1009, %v1005
  %1011 = vrot.lane.b32.xlu0 %v1010, 118
  %v1012 = vpop.permute.xlu0 %1011
  %1014 = vst.msk [vmem:[#allocation7 + $0x10] sm:$0x3] %vm813, %v1012
  %v1015 = vld [vmem:[#allocation4 + $0x1] sm:$0x1]
  %v1016 = vld [vmem:[#allocation4 + $0x3] sm:$0x1]
  %v1017 = vmul.f32 %v1015, %v1003
  %v1018 = vmul.f32 %v1016, %v1003
  %v1021 = vrot.slane %v1018, 7
  %v1022 = vsel %vm91, %v1021, %v1017
  %1023 = vrot.lane.b32.xlu0 %v1022, 6
  %v1024 = vpop.permute.xlu0 %1023
  %1026 = vst.msk [vmem:[#allocation7 + $0x10] sm:$0x3] %vm826, %v1024
  %v1027 = vld [vmem:[%s5] sm:$0x3]
  %v1028 = vld [vmem:[#allocation7] sm:$0xff]
  %v1029 = vld [vmem:[#allocation7 + $0x8] sm:$0xff]
  %v1030 = vld [vmem:[#allocation7 + $0x10] sm:$0x3]
  %v1032 = vsel %vm752, %v1027, 0
  %v1035 = vsel %vm756, %v1030, 0
  %1037 = vmatpush.msra.mxu0 0.0
  %1038 = vmatpush.msra.mxu0 0.0
  %1039 = vmatpush.msra.mxu0 0.0
  %1040 = vmatpush.msra.mxu0 0.0
  %1041 = vmatpush.msra.mxu0 0.0
  %1042 = vmatpush.msra.mxu0 0.0
  %1043 = vmatpush.msra.mxu0 0.0
  %1044 = vmatpush.msra.mxu0 0.0
  %1045 = vmatpush.msra.mxu0 0.0
  %1046 = vmatpush.msra.mxu0 0.0
  %1047 = vmatpush.msra.mxu0 0.0
  %1048 = vmatpush.msra.mxu0 0.0
  %1049 = vmatpush.msra.mxu0 0.0
  %1050 = vmatpush.msra.mxu0 %v1035
  %1051 = vmatpush.msra.mxu0 %v1029
  %1052 = vmatpush.msra.mxu0 %v1028
  %1053 = vmatmul.f32.gmra.mxu0 %v1032
  %v1054 = vpop.f32.mrf.mxu0
  %v1055 = vadd.f32 0.0, %v1054
  %1056 = vdwg.mxu0
  %v1057 = vld [vmem:[%s6] sm:$0xff]
  %v1058 = vld [vmem:[%s6 + $0x8] sm:$0xff]
  %vm1059 = vcmask 130048
  %v1061 = vsel %vm1059, %v1055, 0
  %1063 = vmatpush.msra.mxu0 0.0
  %1064 = vmatpush.msra.mxu0 0.0
  %1065 = vmatpush.msra.mxu0 0.0
  %1066 = vmatpush.msra.mxu0 0.0
  %1067 = vmatpush.msra.mxu0 0.0
  %1068 = vmatpush.msra.mxu0 0.0
  %1069 = vmatpush.msra.mxu0 0.0
  %1070 = vmatpush.msra.mxu0 0.0
  %1071 = vmatpush.msra.mxu0 0.0
  %1072 = vmatpush.msra.mxu0 0.0
  %1073 = vmatpush.msra.mxu0 0.0
  %1074 = vmatpush.msra.mxu0 0.0
  %1075 = vmatpush.msra.mxu0 0.0
  %1076 = vmatpush.msra.mxu0 0.0
  %1077 = vmatpush.msra.mxu0 %v1058
  %1078 = vmatpush.msra.mxu0 %v1057
  %1079 = vmatmul.f32.gmra.mxu0 %v1061
  %v1080 = vpop.f32.mrf.mxu0
  %v1081 = vadd.f32 0.0, %v1080
  %1082 = vdwg.mxu0
  %v1083 = vld [vmem:[%s12] sm:$0x3]
  %v1084 = vadd.f32 %v1083, %v1081
  %1085 = vst.msk [vmem:[%s12] sm:$0x3] %vm534, %v1084
  %1086 = vrot.lane.b32.xlu0 %v1055, 112
  %v1087 = vpop.permute.xlu0 %1086
  %v1088 = vsel %vm1059, %v1087, 0
  %1090 = vmatpush.msra.mxu0 0.0
  %1091 = vmatpush.msra.mxu0 0.0
  %1092 = vmatpush.msra.mxu0 0.0
  %1093 = vmatpush.msra.mxu0 0.0
  %1094 = vmatpush.msra.mxu0 0.0
  %1095 = vmatpush.msra.mxu0 0.0
  %1096 = vmatpush.msra.mxu0 0.0
  %1097 = vmatpush.msra.mxu0 0.0
  %1098 = vmatpush.msra.mxu0 0.0
  %1099 = vmatpush.msra.mxu0 0.0
  %1100 = vmatpush.msra.mxu0 0.0
  %1101 = vmatpush.msra.mxu0 0.0
  %1102 = vmatpush.msra.mxu0 0.0
  %1103 = vmatpush.msra.mxu0 0.0
  %1104 = vmatpush.msra.mxu0 %v1058
  %1105 = vmatpush.msra.mxu0 %v1057
  %1106 = vmatmul.f32.gmra.mxu0 %v1088
  %v1107 = vpop.f32.mrf.mxu0
  %v1108 = vadd.f32 0.0, %v1107
  %1109 = vdwg.mxu0
  %v1110 = vld [vmem:[%s12] sm:$0x3]
  %1112 = vrot.lane.b32.xlu0 %v1108, 64
  %v1113 = vpop.permute.xlu0 %1112
  %v1115 = vadd.f32 %v1110, %v1113
  %1116 = vst.msk [vmem:[%s12] sm:$0x3] %vm547, %v1115
  %v1117 = vld [vmem:[%s12] sm:$0x3]
  %v1118 = vsel %vm756, %v1117, 0.0
  %1119 = vadd.xlane.f32.xlu0 %v1118
  %v1120 = vpop.xlane.xlu0 %1119
  %v1121 = vmul.f32 %v1120, 0.0078125
  %v1122 = vmul.f32 %v1117, %v1117
  %v1123 = vsel %vm756, %v1122, 0.0
  %1124 = vadd.xlane.f32.xlu0 %v1123
  %v1125 = vpop.xlane.xlu0 %1124
  %v1126 = vmul.f32 %v1125, 0.0078125
  %v1127 = vmul.f32 %v1121, %v1121
  %v1128 = vsub.f32 %v1126, %v1127
  %v1129 = vld [vmem:[%s10] sm:$0x3]
  %v1130 = vadd.f32 %v1128, 1e-05
  %v1131 = vrsqrt.pop %v1130
  %v1132 = vmul.f32 %v1131, %v1130
  %v1133 = vmul.f32 %v1132, %v1131
  %v1134 = vmul.f32 0.5, %v1133
  %v1135 = vsub.f32 1.5, %v1134
  %v1136 = vmul.f32 %v1131, %v1135
  %vm1137 = vweird.f32 %v1130
  %vm1138 = vweird.f32 %v1131
  %vm1139 = vmor %vm1137, %vm1138
  %v1140 = vsel %vm1139, %v1131, %v1136
  %v1141 = vmul.f32 %v1129, %v1140
  %v1142 = vld [vmem:[%s11] sm:$0x3]
  %v1143 = vmul.f32 %v1121, %v1141
  %v1144 = vsub.f32 %v1142, %v1143
  %1146 = vset.pattern.permute.xlu0 0
  %1147 = vperm.xlu0 %1146, %v1141
  %v1148 = vpop.permute.xlu0 %1147
  %v1150 = vmul.f32 %v1117, %v1148
  %1152 = vset.pattern.permute.xlu0 0
  %1153 = vperm.xlu0 %1152, %v1144
  %v1154 = vpop.permute.xlu0 %1153
  %v1156 = vadd.f32 %v1150, %v1154
  %1157 = vst [vmem:[%s12] sm:$0x3] %v1156
  // Predicated region
  $region50: #{_lambda_.4} parent=0 // pred_check
    _
  $region51: #{_lambda_.4} parent=0 // pred_check_branch
    %1159 = sbr.rel (0) target = $region53
  $region52: #{_lambda_.4} parent=0 // pred_region
    _
  $region53: #{_lambda_.4} parent=0 // pred_fallthru
    _
  // Predicated region
  $region54: #{_lambda_.4} parent=0 // pred_check
    _
  $region55: #{_lambda_.4} parent=0 // pred_check_branch
    %1161 = sbr.rel (0) target = $region57
  $region56: #{_lambda_.4} parent=0 // pred_region
    _
  $region57: #{_lambda_.4} parent=0 // pred_fallthru
    _

// kernel: _lambda_.3
$region0: #{_lambda_.3}
  #allocation0 [shape = 'u32[]', space=smem, size = 0x4, offset = 0x4, fixed_abs, tag = 'smem constant byte address 0x4 - core index']
  #allocation1 [shape = 'u32[72,128]{1,0:T(1,128)}', space=vmem, size = 0x9000, scoped, tag = 'internal scratch']
  #allocation2 [shape = 'f32[4,2,290]{2,1,0:T(2,128)}', space=vmem, size = 0x3000, scoped, tag = 'scratch operand']
  #allocation3 [shape = 'f32[2,2,82]{2,1,0:T(2,128)}', space=vmem, size = 0x800, scoped, tag = 'scratch operand']
  #allocation4 [shape = 'f32[2,2,26]{2,1,0:T(2,128)}', space=vmem, size = 0x800, scoped, tag = 'scratch operand']
  #allocation5 [shape = 'f32[36,512]{1,0:T(8,128)}', space=vmem, size = 0x14000, scoped, tag = 'scratch operand']
  #allocation6 [shape = 'f32[18,128]{1,0:T(8,128)}', space=vmem, size = 0x3000, scoped, tag = 'scratch operand']
  #allocation7 [shape = 'f32[18,32]{1,0:T(8,128)}', space=vmem, size = 0x3000, scoped, tag = 'scratch operand']
  %s0 = inlined_call_operand.vmem [shape: f32[4,2,256], index: 0, kind: input, shape index: {}]
  %s1 = inlined_call_operand.vmem [shape: f32[2,2,64], index: 1, kind: input, shape index: {}]
  %s2 = inlined_call_operand.vmem [shape: f32[2,2,16], index: 2, kind: input, shape index: {}]
  %s3 = inlined_call_operand.vmem [shape: f32[4,36], index: 3, kind: input, shape index: {}]
  %s4 = inlined_call_operand.vmem [shape: f32[4,18], index: 4, kind: input, shape index: {}]
  %s5 = inlined_call_operand.vmem [shape: f32[4,18], index: 5, kind: input, shape index: {}]
  %s6 = inlined_call_operand.vmem [shape: f32[64,256], index: 6, kind: input, shape index: {}]
  %s7 = inlined_call_operand.vmem [shape: f32[16,256], index: 7, kind: input, shape index: {}]
  %s8 = inlined_call_operand.vmem [shape: f32[3,256], index: 8, kind: input, shape index: {}]
  %s9 = inlined_call_operand.vmem [shape: f32[3,64], index: 9, kind: input, shape index: {}]
  %s10 = inlined_call_operand.vmem [shape: f32[3,16], index: 10, kind: input, shape index: {}]
  %s11 = inlined_call_operand.vmem [shape: f32[4,1], index: 11, kind: input, shape index: {}]
  %s12 = inlined_call_operand.vmem [shape: f32[4,1], index: 12, kind: input, shape index: {}]
  %s13 = inlined_call_operand.vmem [shape: f32[4,512], index: 13, kind: output, shape index: {}]
  %s14 = sld [smem:[#allocation0]]
  $region62: #{_lambda_.3} parent=0
    _
  %s16 = ssub.s32 1, %s14
  %s17 = scalar_select 0, %s16, %s14
  // Predicated region
  $region2: #{_lambda_.3} parent=0 // pred_check
    _
  $region3: #{_lambda_.3} parent=0 // pred_check_branch
    %19 = sbr.rel (0) target = $region5
  $region4: #{_lambda_.3} parent=0 // pred_region
    _
  $region5: #{_lambda_.3} parent=0 // pred_fallthru
    _
  // Predicated region
  $region6: #{_lambda_.3} parent=0 // pred_check
    _
  $region7: #{_lambda_.3} parent=0 // pred_check_branch
    %21 = sbr.rel (0) target = $region9
  $region8: #{_lambda_.3} parent=0 // pred_region
    _
  $region9: #{_lambda_.3} parent=0 // pred_fallthru
    _
  // Predicated region
  $region10: #{_lambda_.3} parent=0 // pred_check
    _
  $region11: #{_lambda_.3} parent=0 // pred_check_branch
    %23 = sbr.rel (0) target = $region13
  $region12: #{_lambda_.3} parent=0 // pred_region
    _
  $region13: #{_lambda_.3} parent=0 // pred_fallthru
    _
  // Predicated region
  $region14: #{_lambda_.3} parent=0 // pred_check
    _
  $region15: #{_lambda_.3} parent=0 // pred_check_branch
    %25 = sbr.rel (0) target = $region17
  $region16: #{_lambda_.3} parent=0 // pred_region
    _
  $region17: #{_lambda_.3} parent=0 // pred_fallthru
    _
  // Predicated region
  $region18: #{_lambda_.3} parent=0 // pred_check
    _
  $region19: #{_lambda_.3} parent=0 // pred_check_branch
    %27 = sbr.rel (0) target = $region21
  $region20: #{_lambda_.3} parent=0 // pred_region
    _
  $region21: #{_lambda_.3} parent=0 // pred_fallthru
    _
  // Predicated region
  $region22: #{_lambda_.3} parent=0 // pred_check
    _
  $region23: #{_lambda_.3} parent=0 // pred_check_branch
    %29 = sbr.rel (0) target = $region25
  $region24: #{_lambda_.3} parent=0 // pred_region
    _
  $region25: #{_lambda_.3} parent=0 // pred_fallthru
    _
  // Predicated region
  $region26: #{_lambda_.3} parent=0 // pred_check
    _
  $region27: #{_lambda_.3} parent=0 // pred_check_branch
    %31 = sbr.rel (0) target = $region29
  $region28: #{_lambda_.3} parent=0 // pred_region
    _
  $region29: #{_lambda_.3} parent=0 // pred_fallthru
    _
  // Predicated region
  $region30: #{_lambda_.3} parent=0 // pred_check
    _
  $region31: #{_lambda_.3} parent=0 // pred_check_branch
    %33 = sbr.rel (0) target = $region33
  $region32: #{_lambda_.3} parent=0 // pred_region
    _
  $region33: #{_lambda_.3} parent=0 // pred_fallthru
    _
  // Predicated region
  $region34: #{_lambda_.3} parent=0 // pred_check
    _
  $region35: #{_lambda_.3} parent=0 // pred_check_branch
    %35 = sbr.rel (0) target = $region37
  $region36: #{_lambda_.3} parent=0 // pred_region
    _
  $region37: #{_lambda_.3} parent=0 // pred_fallthru
    _
  // Predicated region
  $region38: #{_lambda_.3} parent=0 // pred_check
    _
  $region39: #{_lambda_.3} parent=0 // pred_check_branch
    %37 = sbr.rel (0) target = $region41
  $region40: #{_lambda_.3} parent=0 // pred_region
    _
  $region41: #{_lambda_.3} parent=0 // pred_fallthru
    _
  // Predicated region
  $region42: #{_lambda_.3} parent=0 // pred_check
    _
  $region43: #{_lambda_.3} parent=0 // pred_check_branch
    %39 = sbr.rel (0) target = $region45
  $region44: #{_lambda_.3} parent=0 // pred_region
    _
  $region45: #{_lambda_.3} parent=0 // pred_fallthru
    _
  // Predicated region
  $region46: #{_lambda_.3} parent=0 // pred_check
    _
  $region47: #{_lambda_.3} parent=0 // pred_check_branch
    %41 = sbr.rel (0) target = $region49
  $region48: #{_lambda_.3} parent=0 // pred_region
    _
  $region49: #{_lambda_.3} parent=0 // pred_fallthru
    _
  // Predicated region
  $region50: #{_lambda_.3} parent=0 // pred_check
    _
  $region51: #{_lambda_.3} parent=0 // pred_check_branch
    %43 = sbr.rel (0) target = $region53
  $region52: #{_lambda_.3} parent=0 // pred_region
    _
  $region53: #{_lambda_.3} parent=0 // pred_fallthru
    _
  %vm44 = vcmask 132096
  %45 = vst.msk [vmem:[#allocation2] sm:$0x3] %vm44, 0.0
  %46 = vst.msk [vmem:[#allocation2 + $0x6] sm:$0x3] %vm44, 0.0
  %47 = vst.msk [vmem:[#allocation2 + $0xc] sm:$0x3] %vm44, 0.0
  %48 = vst.msk [vmem:[#allocation2 + $0x12] sm:$0x3] %vm44, 0.0
  %vm49 = vcmask 271496
  %50 = vst.msk [vmem:[#allocation2 + $0x4] sm:$0x3] %vm49, 0.0
  %51 = vst.msk [vmem:[#allocation2 + $0xa] sm:$0x3] %vm49, 0.0
  %52 = vst.msk [vmem:[#allocation2 + $0x10] sm:$0x3] %vm49, 0.0
  %53 = vst.msk [vmem:[#allocation2 + $0x16] sm:$0x3] %vm49, 0.0
  %v54 = vld [vmem:[%s0] sm:$0xf]
  %v55 = vld [vmem:[%s0 + $0x4] sm:$0xf]
  %v56 = vld [vmem:[%s0 + $0x8] sm:$0xf]
  %v57 = vld [vmem:[%s0 + $0xc] sm:$0xf]
  %62 = vrot.lane.b32.xlu0 %v54, 17
  %v63 = vpop.permute.xlu0 %62
  %64 = vrot.lane.b32.xlu0 %v55, 17
  %v65 = vpop.permute.xlu0 %64
  %66 = vrot.lane.b32.xlu0 %v56, 17
  %v67 = vpop.permute.xlu0 %66
  %68 = vrot.lane.b32.xlu0 %v57, 17
  %v69 = vpop.permute.xlu0 %68
  %v70 = vrot.slane %v63, 6
  %v71 = vrot.slane %v65, 6
  %v72 = vrot.slane %v67, 6
  %v73 = vrot.slane %v69, 6
  %vm74 = vcmask 138240
  %v75 = vsel %vm74, %v70, %v63
  %v76 = vsel %vm74, %v71, %v65
  %v77 = vsel %vm74, %v72, %v67
  %v78 = vsel %vm74, %v73, %v69
  %vm83 = vcmask 1041544
  %vm84 = vcmask 1043458
  %vm85 = vmor %vm84, %vm83
  %vm86 = vcmask 136196
  %vm87 = vmor %vm86, %vm85
  %88 = vst.msk [vmem:[#allocation2] sm:$0x3f] %vm87, %v75
  %89 = vst.msk [vmem:[#allocation2 + $0x6] sm:$0x3f] %vm87, %v76
  %90 = vst.msk [vmem:[#allocation2 + $0xc] sm:$0x3f] %vm87, %v77
  %91 = vst.msk [vmem:[#allocation2 + $0x12] sm:$0x3f] %vm87, %v78
  %v92 = vld [vmem:[%s8] ss:$4 sm:$0x3]
  %v93 = vld [vmem:[#allocation2] ss:$2 sm:$0x3]
  %s94 = scalar_lea.vmem [#allocation2], 6
  %v95 = vld [vmem:[%s94] ss:$2 sm:$0x3]
  %s96 = scalar_lea.vmem [#allocation2], 12
  %v97 = vld [vmem:[%s96] ss:$2 sm:$0x3]
  %s98 = scalar_lea.vmem [#allocation2], 18
  %v99 = vld [vmem:[%s98] ss:$2 sm:$0x3]
  %v101 = vperm.slane %v92, 0
  %v102 = vperm.slane %v92, 1
  %v103 = vrot.slane %v102, 7
  %vm104 = vcmask 1040384
  %v105 = vsel %vm104, %v101, %v103
  %vm106 = vcmask 1041409
  %v107 = vsel %vm106, %v101, %v103
  %v108 = vrot.slane %v107, 1
  %vm109 = vcmask 1042434
  %v110 = vsel %vm109, %v101, %v103
  %v111 = vrot.slane %v110, 2
  %vm112 = vcmask 1043459
  %v113 = vsel %vm112, %v101, %v103
  %v114 = vrot.slane %v113, 3
  %v119 = vmul.f32 %v93, %v105
  %v120 = vmul.f32 %v95, %v108
  %v121 = vmul.f32 %v97, %v111
  %v122 = vmul.f32 %v99, %v114
  %127 = vst [vmem:[#allocation1] ss:$9 sm:$0xff] %v119
  %s128 = scalar_lea.vmem [#allocation1], 1
  %129 = vst [vmem:[%s128] ss:$9 sm:$0xff] %v120
  %s130 = scalar_lea.vmem [#allocation1], 2
  %131 = vst [vmem:[%s130] ss:$9 sm:$0xff] %v121
  %s132 = scalar_lea.vmem [#allocation1], 3
  %133 = vst [vmem:[%s132] ss:$9 sm:$0xff] %v122
  %v134 = vld [vmem:[#allocation1] sm:$0xff]
  %v135 = vld [vmem:[#allocation1 + $0x9] sm:$0xff]
  %138 = vst [vmem:[#allocation5] sm:$0xf] %v134
  %139 = vst [vmem:[#allocation5 + $0x8] sm:$0xf] %v135
  %s140 = scalar_lea.vmem [#allocation2], 1
  %v141 = vld [vmem:[%s140] ss:$2 sm:$0x3]
  %s142 = scalar_lea.vmem [#allocation2], 7
  %v143 = vld [vmem:[%s142] ss:$2 sm:$0x3]
  %s144 = scalar_lea.vmem [#allocation2], 13
  %v145 = vld [vmem:[%s144] ss:$2 sm:$0x3]
  %s146 = scalar_lea.vmem [#allocation2], 19
  %v147 = vld [vmem:[%s146] ss:$2 sm:$0x3]
  %v148 = vmul.f32 %v141, %v105
  %v149 = vmul.f32 %v143, %v108
  %v150 = vmul.f32 %v145, %v111
  %v151 = vmul.f32 %v147, %v114
  %156 = vst [vmem:[#allocation1] ss:$9 sm:$0xff] %v148
  %s157 = scalar_lea.vmem [#allocation1], 1
  %158 = vst [vmem:[%s157] ss:$9 sm:$0xff] %v149
  %s159 = scalar_lea.vmem [#allocation1], 2
  %160 = vst [vmem:[%s159] ss:$9 sm:$0xff] %v150
  %s161 = scalar_lea.vmem [#allocation1], 3
  %162 = vst [vmem:[%s161] ss:$9 sm:$0xff] %v151
  %v163 = vld [vmem:[#allocation1] sm:$0xff]
  %v164 = vld [vmem:[#allocation1 + $0x9] sm:$0xff]
  %167 = vst [vmem:[#allocation5 + $0x10] sm:$0xf] %v163
  %168 = vst [vmem:[#allocation5 + $0x18] sm:$0xf] %v164
  %v169 = vld [vmem:[#allocation2] ss:$2 sm:$0x7]
  %v170 = vld [vmem:[%s94] ss:$2 sm:$0x7]
  %v171 = vld [vmem:[%s96] ss:$2 sm:$0x7]
  %v172 = vld [vmem:[%s98] ss:$2 sm:$0x7]
  %173 = vrot.lane.b32.xlu0 %v105, 16
  %v174 = vpop.permute.xlu0 %173
  %175 = vrot.lane.b32.xlu0 %v108, 16
  %v176 = vpop.permute.xlu0 %175
  %177 = vrot.lane.b32.xlu0 %v111, 16
  %v178 = vpop.permute.xlu0 %177
  %179 = vrot.lane.b32.xlu0 %v114, 16
  %v180 = vpop.permute.xlu0 %179
  %v181 = vrot.slane %v174, 7
  %v182 = vrot.slane %v176, 7
  %v183 = vrot.slane %v178, 7
  %v184 = vrot.slane %v180, 7
  %vm185 = vcmask 130048
  %v186 = vsel %vm185, %v181, %v174
  %v187 = vsel %vm185, %v182, %v176
  %v188 = vsel %vm185, %v183, %v178
  %v189 = vsel %vm185, %v184, %v180
  %v194 = vmul.f32 %v169, %v186
  %v195 = vmul.f32 %v170, %v187
  %v196 = vmul.f32 %v171, %v188
  %v197 = vmul.f32 %v172, %v189
  %s202 = scalar_lea.vmem [#allocation1], 4
  %203 = vst [vmem:[%s202] ss:$9 sm:$0xff] %v194
  %s204 = scalar_lea.vmem [#allocation1], 5
  %205 = vst [vmem:[%s204] ss:$9 sm:$0xff] %v195
  %s206 = scalar_lea.vmem [#allocation1], 6
  %207 = vst [vmem:[%s206] ss:$9 sm:$0xff] %v196
  %s208 = scalar_lea.vmem [#allocation1], 7
  %209 = vst [vmem:[%s208] ss:$9 sm:$0xff] %v197
  %v210 = vld [vmem:[#allocation1] sm:$0xff]
  %v211 = vld [vmem:[#allocation1 + $0x9] sm:$0xff]
  %v212 = vld [vmem:[#allocation1 + $0x12] sm:$0xff]
  %213 = vrot.lane.b32.xlu0 %v210, 112
  %v214 = vpop.permute.xlu0 %213
  %215 = vrot.lane.b32.xlu0 %v211, 112
  %v216 = vpop.permute.xlu0 %215
  %217 = vrot.lane.b32.xlu0 %v212, 112
  %v218 = vpop.permute.xlu0 %217
  %vm219 = vcmask 916480
  %v220 = vsel %vm219, %v214, %v216
  %v221 = vsel %vm219, %v216, %v218
  %224 = vst [vmem:[#allocation5 + $0x20] sm:$0xf0] %v220
  %225 = vst [vmem:[#allocation5 + $0x28] sm:$0xf0] %v221
  %v226 = vld [vmem:[%s140] ss:$2 sm:$0x7]
  %v227 = vld [vmem:[%s142] ss:$2 sm:$0x7]
  %v228 = vld [vmem:[%s144] ss:$2 sm:$0x7]
  %v229 = vld [vmem:[%s146] ss:$2 sm:$0x7]
  %v230 = vmul.f32 %v226, %v186
  %v231 = vmul.f32 %v227, %v187
  %v232 = vmul.f32 %v228, %v188
  %v233 = vmul.f32 %v229, %v189
  %s238 = scalar_lea.vmem [#allocation1], 4
  %239 = vst [vmem:[%s238] ss:$9 sm:$0xff] %v230
  %s240 = scalar_lea.vmem [#allocation1], 5
  %241 = vst [vmem:[%s240] ss:$9 sm:$0xff] %v231
  %s242 = scalar_lea.vmem [#allocation1], 6
  %243 = vst [vmem:[%s242] ss:$9 sm:$0xff] %v232
  %s244 = scalar_lea.vmem [#allocation1], 7
  %245 = vst [vmem:[%s244] ss:$9 sm:$0xff] %v233
  %v246 = vld [vmem:[#allocation1] sm:$0xff]
  %v247 = vld [vmem:[#allocation1 + $0x9] sm:$0xff]
  %v248 = vld [vmem:[#allocation1 + $0x12] sm:$0xff]
  %249 = vrot.lane.b32.xlu0 %v246, 112
  %v250 = vpop.permute.xlu0 %249
  %251 = vrot.lane.b32.xlu0 %v247, 112
  %v252 = vpop.permute.xlu0 %251
  %253 = vrot.lane.b32.xlu0 %v248, 112
  %v254 = vpop.permute.xlu0 %253
  %v255 = vsel %vm219, %v250, %v252
  %v256 = vsel %vm219, %v252, %v254
  %259 = vst [vmem:[#allocation5 + $0x30] sm:$0xf0] %v255
  %260 = vst [vmem:[#allocation5 + $0x38] sm:$0xf0] %v256
  %v261 = vld [vmem:[#allocation2] ss:$2 sm:$0x7]
  %v262 = vld [vmem:[%s94] ss:$2 sm:$0x7]
  %v263 = vld [vmem:[%s96] ss:$2 sm:$0x7]
  %v264 = vld [vmem:[%s98] ss:$2 sm:$0x7]
  %265 = vrot.lane.b32.xlu0 %v105, 32
  %v266 = vpop.permute.xlu0 %265
  %267 = vrot.lane.b32.xlu0 %v108, 32
  %v268 = vpop.permute.xlu0 %267
  %269 = vrot.lane.b32.xlu0 %v111, 32
  %v270 = vpop.permute.xlu0 %269
  %271 = vrot.lane.b32.xlu0 %v114, 32
  %v272 = vpop.permute.xlu0 %271
  %v273 = vrot.slane %v266, 7
  %v274 = vrot.slane %v268, 7
  %v275 = vrot.slane %v270, 7
  %v276 = vrot.slane %v272, 7
  %vm277 = vcmask 261120
  %v278 = vsel %vm277, %v273, %v266
  %v279 = vsel %vm277, %v274, %v268
  %v280 = vsel %vm277, %v275, %v270
  %v281 = vsel %vm277, %v276, %v272
  %v286 = vmul.f32 %v261, %v278
  %v287 = vmul.f32 %v262, %v279
  %v288 = vmul.f32 %v263, %v280
  %v289 = vmul.f32 %v264, %v281
  %294 = vst [vmem:[#allocation1] ss:$9 sm:$0xff] %v286
  %s295 = scalar_lea.vmem [#allocation1], 1
  %296 = vst [vmem:[%s295] ss:$9 sm:$0xff] %v287
  %s297 = scalar_lea.vmem [#allocation1], 2
  %298 = vst [vmem:[%s297] ss:$9 sm:$0xff] %v288
  %s299 = scalar_lea.vmem [#allocation1], 3
  %300 = vst [vmem:[%s299] ss:$9 sm:$0xff] %v289
  %v301 = vld [vmem:[#allocation1] sm:$0xff]
  %v302 = vld [vmem:[#allocation1 + $0x9] sm:$0xff]
  %v303 = vld [vmem:[#allocation1 + $0x12] sm:$0xff]
  %304 = vrot.lane.b32.xlu0 %v301, 96
  %v305 = vpop.permute.xlu0 %304
  %306 = vrot.lane.b32.xlu0 %v302, 96
  %v307 = vpop.permute.xlu0 %306
  %308 = vrot.lane.b32.xlu0 %v303, 96
  %v309 = vpop.permute.xlu0 %308
  %vm310 = vcmask 785408
  %v311 = vsel %vm310, %v305, %v307
  %v312 = vsel %vm310, %v307, %v309
  %315 = vst [vmem:[#allocation5 + $0x60] sm:$0xf] %v311
  %316 = vst [vmem:[#allocation5 + $0x68] sm:$0xf] %v312
  %v317 = vld [vmem:[%s140] ss:$2 sm:$0x7]
  %v318 = vld [vmem:[%s142] ss:$2 sm:$0x7]
  %v319 = vld [vmem:[%s144] ss:$2 sm:$0x7]
  %v320 = vld [vmem:[%s146] ss:$2 sm:$0x7]
  %v321 = vmul.f32 %v317, %v278
  %v322 = vmul.f32 %v318, %v279
  %v323 = vmul.f32 %v319, %v280
  %v324 = vmul.f32 %v320, %v281
  %329 = vst [vmem:[#allocation1] ss:$9 sm:$0xff] %v321
  %s330 = scalar_lea.vmem [#allocation1], 1
  %331 = vst [vmem:[%s330] ss:$9 sm:$0xff] %v322
  %s332 = scalar_lea.vmem [#allocation1], 2
  %333 = vst [vmem:[%s332] ss:$9 sm:$0xff] %v323
  %s334 = scalar_lea.vmem [#allocation1], 3
  %335 = vst [vmem:[%s334] ss:$9 sm:$0xff] %v324
  %v336 = vld [vmem:[#allocation1] sm:$0xff]
  %v337 = vld [vmem:[#allocation1 + $0x9] sm:$0xff]
  %v338 = vld [vmem:[#allocation1 + $0x12] sm:$0xff]
  %339 = vrot.lane.b32.xlu0 %v336, 96
  %v340 = vpop.permute.xlu0 %339
  %341 = vrot.lane.b32.xlu0 %v337, 96
  %v342 = vpop.permute.xlu0 %341
  %343 = vrot.lane.b32.xlu0 %v338, 96
  %v344 = vpop.permute.xlu0 %343
  %v345 = vsel %vm310, %v340, %v342
  %v346 = vsel %vm310, %v342, %v344
  %349 = vst [vmem:[#allocation5 + $0x70] sm:$0xf] %v345
  %350 = vst [vmem:[#allocation5 + $0x78] sm:$0xf] %v346
  %v351 = vld [vmem:[#allocation2] ss:$2 sm:$0x7]
  %v352 = vld [vmem:[%s94] ss:$2 sm:$0x7]
  %v353 = vld [vmem:[%s96] ss:$2 sm:$0x7]
  %v354 = vld [vmem:[%s98] ss:$2 sm:$0x7]
  %s359 = scalar_lea.vmem [#allocation1], 4
  %360 = vst [vmem:[%s359] ss:$9 sm:$0xff] %v351
  %s361 = scalar_lea.vmem [#allocation1], 5
  %362 = vst [vmem:[%s361] ss:$9 sm:$0xff] %v352
  %s363 = scalar_lea.vmem [#allocation1], 6
  %364 = vst [vmem:[%s363] ss:$9 sm:$0xff] %v353
  %s365 = scalar_lea.vmem [#allocation1], 7
  %366 = vst [vmem:[%s365] ss:$9 sm:$0xff] %v354
  %v367 = vld [vmem:[#allocation1] sm:$0xff]
  %v368 = vld [vmem:[#allocation1 + $0x9] sm:$0xff]
  %v369 = vld [vmem:[#allocation1 + $0x12] sm:$0xff]
  %370 = vrot.lane.b32.xlu0 %v367, 127
  %v371 = vpop.permute.xlu0 %370
  %372 = vrot.lane.b32.xlu0 %v368, 127
  %v373 = vpop.permute.xlu0 %372
  %374 = vrot.lane.b32.xlu0 %v369, 127
  %v375 = vpop.permute.xlu0 %374
  %vm376 = vcmask 1039360
  %v377 = vsel %vm376, %v371, %v373
  %v378 = vsel %vm376, %v373, %v375
  %381 = vst [vmem:[#allocation5] sm:$0xf0] %v377
  %382 = vst [vmem:[#allocation5 + $0x8] sm:$0xf0] %v378
  %v383 = vld [vmem:[%s140] ss:$2 sm:$0x7]
  %v384 = vld [vmem:[%s142] ss:$2 sm:$0x7]
  %v385 = vld [vmem:[%s144] ss:$2 sm:$0x7]
  %v386 = vld [vmem:[%s146] ss:$2 sm:$0x7]
  %s391 = scalar_lea.vmem [#allocation1], 4
  %392 = vst [vmem:[%s391] ss:$9 sm:$0xff] %v383
  %s393 = scalar_lea.vmem [#allocation1], 5
  %394 = vst [vmem:[%s393] ss:$9 sm:$0xff] %v384
  %s395 = scalar_lea.vmem [#allocation1], 6
  %396 = vst [vmem:[%s395] ss:$9 sm:$0xff] %v385
  %s397 = scalar_lea.vmem [#allocation1], 7
  %398 = vst [vmem:[%s397] ss:$9 sm:$0xff] %v386
  %v399 = vld [vmem:[#allocation1] sm:$0xff]
  %v400 = vld [vmem:[#allocation1 + $0x9] sm:$0xff]
  %v401 = vld [vmem:[#allocation1 + $0x12] sm:$0xff]
  %402 = vrot.lane.b32.xlu0 %v399, 127
  %v403 = vpop.permute.xlu0 %402
  %404 = vrot.lane.b32.xlu0 %v400, 127
  %v405 = vpop.permute.xlu0 %404
  %406 = vrot.lane.b32.xlu0 %v401, 127
  %v407 = vpop.permute.xlu0 %406
  %v408 = vsel %vm376, %v403, %v405
  %v409 = vsel %vm376, %v405, %v407
  %412 = vst [vmem:[#allocation5 + $0x10] sm:$0xf0] %v408
  %413 = vst [vmem:[#allocation5 + $0x18] sm:$0xf0] %v409
  %v414 = vld [vmem:[#allocation2] ss:$2 sm:$0x7]
  %v415 = vld [vmem:[%s94] ss:$2 sm:$0x7]
  %v416 = vld [vmem:[%s96] ss:$2 sm:$0x7]
  %v417 = vld [vmem:[%s98] ss:$2 sm:$0x7]
  %422 = vst [vmem:[#allocation1] ss:$9 sm:$0xff] %v414
  %s423 = scalar_lea.vmem [#allocation1], 1
  %424 = vst [vmem:[%s423] ss:$9 sm:$0xff] %v415
  %s425 = scalar_lea.vmem [#allocation1], 2
  %426 = vst [vmem:[%s425] ss:$9 sm:$0xff] %v416
  %s427 = scalar_lea.vmem [#allocation1], 3
  %428 = vst [vmem:[%s427] ss:$9 sm:$0xff] %v417
  %v429 = vld [vmem:[#allocation1] sm:$0xff]
  %v430 = vld [vmem:[#allocation1 + $0x9] sm:$0xff]
  %v431 = vld [vmem:[#allocation1 + $0x12] sm:$0xff]
  %432 = vrot.lane.b32.xlu0 %v429, 111
  %v433 = vpop.permute.xlu0 %432
  %434 = vrot.lane.b32.xlu0 %v430, 111
  %v435 = vpop.permute.xlu0 %434
  %436 = vrot.lane.b32.xlu0 %v431, 111
  %v437 = vpop.permute.xlu0 %436
  %vm438 = vcmask 908288
  %v439 = vsel %vm438, %v433, %v435
  %v440 = vsel %vm438, %v435, %v437
  %443 = vst [vmem:[#allocation5 + $0x40] sm:$0xf] %v439
  %444 = vst [vmem:[#allocation5 + $0x48] sm:$0xf] %v440
  %v445 = vld [vmem:[%s140] ss:$2 sm:$0x7]
  %v446 = vld [vmem:[%s142] ss:$2 sm:$0x7]
  %v447 = vld [vmem:[%s144] ss:$2 sm:$0x7]
  %v448 = vld [vmem:[%s146] ss:$2 sm:$0x7]
  %453 = vst [vmem:[#allocation1] ss:$9 sm:$0xff] %v445
  %s454 = scalar_lea.vmem [#allocation1], 1
  %455 = vst [vmem:[%s454] ss:$9 sm:$0xff] %v446
  %s456 = scalar_lea.vmem [#allocation1], 2
  %457 = vst [vmem:[%s456] ss:$9 sm:$0xff] %v447
  %s458 = scalar_lea.vmem [#allocation1], 3
  %459 = vst [vmem:[%s458] ss:$9 sm:$0xff] %v448
  %v460 = vld [vmem:[#allocation1] sm:$0xff]
  %v461 = vld [vmem:[#allocation1 + $0x9] sm:$0xff]
  %v462 = vld [vmem:[#allocation1 + $0x12] sm:$0xff]
  %463 = vrot.lane.b32.xlu0 %v460, 111
  %v464 = vpop.permute.xlu0 %463
  %465 = vrot.lane.b32.xlu0 %v461, 111
  %v466 = vpop.permute.xlu0 %465
  %467 = vrot.lane.b32.xlu0 %v462, 111
  %v468 = vpop.permute.xlu0 %467
  %v469 = vsel %vm438, %v464, %v466
  %v470 = vsel %vm438, %v466, %v468
  %473 = vst [vmem:[#allocation5 + $0x50] sm:$0xf] %v469
  %474 = vst [vmem:[#allocation5 + $0x58] sm:$0xf] %v470
  %v475 = vld [vmem:[#allocation2] ss:$2 sm:$0x7]
  %v476 = vld [vmem:[%s94] ss:$2 sm:$0x7]
  %v477 = vld [vmem:[%s96] ss:$2 sm:$0x7]
  %v478 = vld [vmem:[%s98] ss:$2 sm:$0x7]
  %s483 = scalar_lea.vmem [#allocation1], 4
  %484 = vst [vmem:[%s483] ss:$9 sm:$0xff] %v475
  %s485 = scalar_lea.vmem [#allocation1], 5
  %486 = vst [vmem:[%s485] ss:$9 sm:$0xff] %v476
  %s487 = scalar_lea.vmem [#allocation1], 6
  %488 = vst [vmem:[%s487] ss:$9 sm:$0xff] %v477
  %s489 = scalar_lea.vmem [#allocation1], 7
  %490 = vst [vmem:[%s489] ss:$9 sm:$0xff] %v478
  %v491 = vld [vmem:[#allocation1] sm:$0xff]
  %v492 = vld [vmem:[#allocation1 + $0x9] sm:$0xff]
  %v493 = vld [vmem:[#allocation1 + $0x12] sm:$0xff]
  %494 = vrot.lane.b32.xlu0 %v491, 95
  %v495 = vpop.permute.xlu0 %494
  %496 = vrot.lane.b32.xlu0 %v492, 95
  %v497 = vpop.permute.xlu0 %496
  %498 = vrot.lane.b32.xlu0 %v493, 95
  %v499 = vpop.permute.xlu0 %498
  %vm500 = vcmask 777216
  %v501 = vsel %vm500, %v495, %v497
  %v502 = vsel %vm500, %v497, %v499
  %505 = vst [vmem:[#allocation5 + $0x60] sm:$0xf0] %v501
  %506 = vst [vmem:[#allocation5 + $0x68] sm:$0xf0] %v502
  %v507 = vld [vmem:[%s140] ss:$2 sm:$0x7]
  %v508 = vld [vmem:[%s142] ss:$2 sm:$0x7]
  %v509 = vld [vmem:[%s144] ss:$2 sm:$0x7]
  %v510 = vld [vmem:[%s146] ss:$2 sm:$0x7]
  %s515 = scalar_lea.vmem [#allocation1], 4
  %516 = vst [vmem:[%s515] ss:$9 sm:$0xff] %v507
  %s517 = scalar_lea.vmem [#allocation1], 5
  %518 = vst [vmem:[%s517] ss:$9 sm:$0xff] %v508
  %s519 = scalar_lea.vmem [#allocation1], 6
  %520 = vst [vmem:[%s519] ss:$9 sm:$0xff] %v509
  %s521 = scalar_lea.vmem [#allocation1], 7
  %522 = vst [vmem:[%s521] ss:$9 sm:$0xff] %v510
  %v523 = vld [vmem:[#allocation1] sm:$0xff]
  %v524 = vld [vmem:[#allocation1 + $0x9] sm:$0xff]
  %v525 = vld [vmem:[#allocation1 + $0x12] sm:$0xff]
  %526 = vrot.lane.b32.xlu0 %v523, 95
  %v527 = vpop.permute.xlu0 %526
  %528 = vrot.lane.b32.xlu0 %v524, 95
  %v529 = vpop.permute.xlu0 %528
  %530 = vrot.lane.b32.xlu0 %v525, 95
  %v531 = vpop.permute.xlu0 %530
  %v532 = vsel %vm500, %v527, %v529
  %v533 = vsel %vm500, %v529, %v531
  %536 = vst [vmem:[#allocation5 + $0x70] sm:$0xf0] %v532
  %537 = vst [vmem:[#allocation5 + $0x78] sm:$0xf0] %v533
  %s538 = scalar_lea.vmem %s8, 2
  %v539 = vld [vmem:[%s538] ss:$4 sm:$0x3]
  %v540 = vld [vmem:[#allocation2] ss:$2 sm:$0x7]
  %v541 = vld [vmem:[%s94] ss:$2 sm:$0x7]
  %v542 = vld [vmem:[%s96] ss:$2 sm:$0x7]
  %v543 = vld [vmem:[%s98] ss:$2 sm:$0x7]
  %v545 = vperm.slane %v539, 0
  %v546 = vperm.slane %v539, 1
  %v547 = vrot.slane %v546, 7
  %v548 = vsel %vm104, %v545, %v547
  %v549 = vsel %vm106, %v545, %v547
  %v550 = vrot.slane %v549, 1
  %v551 = vsel %vm109, %v545, %v547
  %v552 = vrot.slane %v551, 2
  %v553 = vsel %vm112, %v545, %v547
  %v554 = vrot.slane %v553, 3
  %555 = vrot.lane.b32.xlu0 %v548, 2
  %v556 = vpop.permute.xlu0 %555
  %557 = vrot.lane.b32.xlu0 %v550, 2
  %v558 = vpop.permute.xlu0 %557
  %559 = vrot.lane.b32.xlu0 %v552, 2
  %v560 = vpop.permute.xlu0 %559
  %561 = vrot.lane.b32.xlu0 %v554, 2
  %v562 = vpop.permute.xlu0 %561
  %v563 = vrot.slane %v556, 7
  %v564 = vrot.slane %v558, 7
  %v565 = vrot.slane %v560, 7
  %v566 = vrot.slane %v562, 7
  %vm567 = vcmask 15360
  %v568 = vsel %vm567, %v563, %v556
  %v569 = vsel %vm567, %v564, %v558
  %v570 = vsel %vm567, %v565, %v560
  %v571 = vsel %vm567, %v566, %v562
  %v576 = vmul.f32 %v540, %v568
  %v577 = vmul.f32 %v541, %v569
  %v578 = vmul.f32 %v542, %v570
  %v579 = vmul.f32 %v543, %v571
  %584 = vst [vmem:[#allocation1] ss:$9 sm:$0xff] %v576
  %s585 = scalar_lea.vmem [#allocation1], 1
  %586 = vst [vmem:[%s585] ss:$9 sm:$0xff] %v577
  %s587 = scalar_lea.vmem [#allocation1], 2
  %588 = vst [vmem:[%s587] ss:$9 sm:$0xff] %v578
  %s589 = scalar_lea.vmem [#allocation1], 3
  %590 = vst [vmem:[%s589] ss:$9 sm:$0xff] %v579
  %v591 = vld [vmem:[#allocation1] sm:$0xff]
  %v592 = vld [vmem:[#allocation1 + $0x9] sm:$0xff]
  %v593 = vld [vmem:[#allocation1 + $0x12] sm:$0xff]
  %594 = vrot.lane.b32.xlu0 %v591, 126
  %v595 = vpop.permute.xlu0 %594
  %596 = vrot.lane.b32.xlu0 %v592, 126
  %v597 = vpop.permute.xlu0 %596
  %598 = vrot.lane.b32.xlu0 %v593, 126
  %v599 = vpop.permute.xlu0 %598
  %vm600 = vcmask 1031168
  %v601 = vsel %vm600, %v595, %v597
  %v602 = vsel %vm600, %v597, %v599
  %605 = vst [vmem:[#allocation5 + $0x20] sm:$0xf] %v601
  %606 = vst [vmem:[#allocation5 + $0x28] sm:$0xf] %v602
  %v607 = vld [vmem:[%s140] ss:$2 sm:$0x7]
  %v608 = vld [vmem:[%s142] ss:$2 sm:$0x7]
  %v609 = vld [vmem:[%s144] ss:$2 sm:$0x7]
  %v610 = vld [vmem:[%s146] ss:$2 sm:$0x7]
  %v611 = vmul.f32 %v607, %v568
  %v612 = vmul.f32 %v608, %v569
  %v613 = vmul.f32 %v609, %v570
  %v614 = vmul.f32 %v610, %v571
  %619 = vst [vmem:[#allocation1] ss:$9 sm:$0xff] %v611
  %s620 = scalar_lea.vmem [#allocation1], 1
  %621 = vst [vmem:[%s620] ss:$9 sm:$0xff] %v612
  %s622 = scalar_lea.vmem [#allocation1], 2
  %623 = vst [vmem:[%s622] ss:$9 sm:$0xff] %v613
  %s624 = scalar_lea.vmem [#allocation1], 3
  %625 = vst [vmem:[%s624] ss:$9 sm:$0xff] %v614
  %v626 = vld [vmem:[#allocation1] sm:$0xff]
  %v627 = vld [vmem:[#allocation1 + $0x9] sm:$0xff]
  %v628 = vld [vmem:[#allocation1 + $0x12] sm:$0xff]
  %629 = vrot.lane.b32.xlu0 %v626, 126
  %v630 = vpop.permute.xlu0 %629
  %631 = vrot.lane.b32.xlu0 %v627, 126
  %v632 = vpop.permute.xlu0 %631
  %633 = vrot.lane.b32.xlu0 %v628, 126
  %v634 = vpop.permute.xlu0 %633
  %v635 = vsel %vm600, %v630, %v632
  %v636 = vsel %vm600, %v632, %v634
  %639 = vst [vmem:[#allocation5 + $0x30] sm:$0xf] %v635
  %640 = vst [vmem:[#allocation5 + $0x38] sm:$0xf] %v636
  %v641 = vld [vmem:[#allocation2] ss:$2 sm:$0x7]
  %v642 = vld [vmem:[%s94] ss:$2 sm:$0x7]
  %v643 = vld [vmem:[%s96] ss:$2 sm:$0x7]
  %v644 = vld [vmem:[%s98] ss:$2 sm:$0x7]
  %645 = vrot.lane.b32.xlu0 %v548, 18
  %v646 = vpop.permute.xlu0 %645
  %647 = vrot.lane.b32.xlu0 %v550, 18
  %v648 = vpop.permute.xlu0 %647
  %649 = vrot.lane.b32.xlu0 %v552, 18
  %v650 = vpop.permute.xlu0 %649
  %651 = vrot.lane.b32.xlu0 %v554, 18
  %v652 = vpop.permute.xlu0 %651
  %v653 = vrot.slane %v646, 7
  %v654 = vrot.slane %v648, 7
  %v655 = vrot.slane %v650, 7
  %v656 = vrot.slane %v652, 7
  %vm657 = vcmask 146432
  %v658 = vsel %vm657, %v653, %v646
  %v659 = vsel %vm657, %v654, %v648
  %v660 = vsel %vm657, %v655, %v650
  %v661 = vsel %vm657, %v656, %v652
  %v666 = vmul.f32 %v641, %v658
  %v667 = vmul.f32 %v642, %v659
  %v668 = vmul.f32 %v643, %v660
  %v669 = vmul.f32 %v644, %v661
  %s674 = scalar_lea.vmem [#allocation1], 4
  %675 = vst [vmem:[%s674] ss:$9 sm:$0xff] %v666
  %s676 = scalar_lea.vmem [#allocation1], 5
  %677 = vst [vmem:[%s676] ss:$9 sm:$0xff] %v667
  %s678 = scalar_lea.vmem [#allocation1], 6
  %679 = vst [vmem:[%s678] ss:$9 sm:$0xff] %v668
  %s680 = scalar_lea.vmem [#allocation1], 7
  %681 = vst [vmem:[%s680] ss:$9 sm:$0xff] %v669
  %v682 = vld [vmem:[#allocation1] sm:$0xff]
  %v683 = vld [vmem:[#allocation1 + $0x9] sm:$0xff]
  %v684 = vld [vmem:[#allocation1 + $0x12] sm:$0xff]
  %685 = vrot.lane.b32.xlu0 %v682, 110
  %v686 = vpop.permute.xlu0 %685
  %687 = vrot.lane.b32.xlu0 %v683, 110
  %v688 = vpop.permute.xlu0 %687
  %689 = vrot.lane.b32.xlu0 %v684, 110
  %v690 = vpop.permute.xlu0 %689
  %vm691 = vcmask 900096
  %v692 = vsel %vm691, %v686, %v688
  %v693 = vsel %vm691, %v688, %v690
  %696 = vst [vmem:[#allocation5 + $0x40] sm:$0xf0] %v692
  %697 = vst [vmem:[#allocation5 + $0x48] sm:$0xf0] %v693
  %v698 = vld [vmem:[%s140] ss:$2 sm:$0x7]
  %v699 = vld [vmem:[%s142] ss:$2 sm:$0x7]
  %v700 = vld [vmem:[%s144] ss:$2 sm:$0x7]
  %v701 = vld [vmem:[%s146] ss:$2 sm:$0x7]
  %v702 = vmul.f32 %v698, %v658
  %v703 = vmul.f32 %v699, %v659
  %v704 = vmul.f32 %v700, %v660
  %v705 = vmul.f32 %v701, %v661
  %s710 = scalar_lea.vmem [#allocation1], 4
  %711 = vst [vmem:[%s710] ss:$9 sm:$0xff] %v702
  %s712 = scalar_lea.vmem [#allocation1], 5
  %713 = vst [vmem:[%s712] ss:$9 sm:$0xff] %v703
  %s714 = scalar_lea.vmem [#allocation1], 6
  %715 = vst [vmem:[%s714] ss:$9 sm:$0xff] %v704
  %s716 = scalar_lea.vmem [#allocation1], 7
  %717 = vst [vmem:[%s716] ss:$9 sm:$0xff] %v705
  %v718 = vld [vmem:[#allocation1] sm:$0xff]
  %v719 = vld [vmem:[#allocation1 + $0x9] sm:$0xff]
  %v720 = vld [vmem:[#allocation1 + $0x12] sm:$0xff]
  %721 = vrot.lane.b32.xlu0 %v718, 110
  %v722 = vpop.permute.xlu0 %721
  %723 = vrot.lane.b32.xlu0 %v719, 110
  %v724 = vpop.permute.xlu0 %723
  %725 = vrot.lane.b32.xlu0 %v720, 110
  %v726 = vpop.permute.xlu0 %725
  %v727 = vsel %vm691, %v722, %v724
  %v728 = vsel %vm691, %v724, %v726
  %731 = vst [vmem:[#allocation5 + $0x50] sm:$0xf0] %v727
  %732 = vst [vmem:[#allocation5 + $0x58] sm:$0xf0] %v728
  %v733 = vld [vmem:[#allocation2] ss:$2 sm:$0x7]
  %v734 = vld [vmem:[%s94] ss:$2 sm:$0x7]
  %v735 = vld [vmem:[%s96] ss:$2 sm:$0x7]
  %v736 = vld [vmem:[%s98] ss:$2 sm:$0x7]
  %737 = vrot.lane.b32.xlu0 %v548, 34
  %v738 = vpop.permute.xlu0 %737
  %739 = vrot.lane.b32.xlu0 %v550, 34
  %v740 = vpop.permute.xlu0 %739
  %741 = vrot.lane.b32.xlu0 %v552, 34
  %v742 = vpop.permute.xlu0 %741
  %743 = vrot.lane.b32.xlu0 %v554, 34
  %v744 = vpop.permute.xlu0 %743
  %v745 = vrot.slane %v738, 7
  %v746 = vrot.slane %v740, 7
  %v747 = vrot.slane %v742, 7
  %v748 = vrot.slane %v744, 7
  %vm749 = vcmask 277504
  %v750 = vsel %vm749, %v745, %v738
  %v751 = vsel %vm749, %v746, %v740
  %v752 = vsel %vm749, %v747, %v742
  %v753 = vsel %vm749, %v748, %v744
  %v758 = vmul.f32 %v733, %v750
  %v759 = vmul.f32 %v734, %v751
  %v760 = vmul.f32 %v735, %v752
  %v761 = vmul.f32 %v736, %v753
  %766 = vst [vmem:[#allocation1] ss:$9 sm:$0xff] %v758
  %s767 = scalar_lea.vmem [#allocation1], 1
  %768 = vst [vmem:[%s767] ss:$9 sm:$0xff] %v759
  %s769 = scalar_lea.vmem [#allocation1], 2
  %770 = vst [vmem:[%s769] ss:$9 sm:$0xff] %v760
  %s771 = scalar_lea.vmem [#allocation1], 3
  %772 = vst [vmem:[%s771] ss:$9 sm:$0xff] %v761
  %v773 = vld [vmem:[#allocation1] sm:$0xff]
  %v774 = vld [vmem:[#allocation1 + $0x9] sm:$0xff]
  %v775 = vld [vmem:[#allocation1 + $0x12] sm:$0xff]
  %776 = vrot.lane.b32.xlu0 %v773, 94
  %v777 = vpop.permute.xlu0 %776
  %778 = vrot.lane.b32.xlu0 %v774, 94
  %v779 = vpop.permute.xlu0 %778
  %780 = vrot.lane.b32.xlu0 %v775, 94
  %v781 = vpop.permute.xlu0 %780
  %vm782 = vcmask 769024
  %v783 = vsel %vm782, %v777, %v779
  %v784 = vsel %vm782, %v779, %v781
  %787 = vst [vmem:[#allocation5 + $0x80] sm:$0xf] %v783
  %788 = vst [vmem:[#allocation5 + $0x88] sm:$0xf] %v784
  %v789 = vld [vmem:[%s140] ss:$2 sm:$0x7]
  %v790 = vld [vmem:[%s142] ss:$2 sm:$0x7]
  %v791 = vld [vmem:[%s144] ss:$2 sm:$0x7]
  %v792 = vld [vmem:[%s146] ss:$2 sm:$0x7]
  %v793 = vmul.f32 %v789, %v750
  %v794 = vmul.f32 %v790, %v751
  %v795 = vmul.f32 %v791, %v752
  %v796 = vmul.f32 %v792, %v753
  %801 = vst [vmem:[#allocation1] ss:$9 sm:$0xff] %v793
  %s802 = scalar_lea.vmem [#allocation1], 1
  %803 = vst [vmem:[%s802] ss:$9 sm:$0xff] %v794
  %s804 = scalar_lea.vmem [#allocation1], 2
  %805 = vst [vmem:[%s804] ss:$9 sm:$0xff] %v795
  %s806 = scalar_lea.vmem [#allocation1], 3
  %807 = vst [vmem:[%s806] ss:$9 sm:$0xff] %v796
  %v808 = vld [vmem:[#allocation1] sm:$0xff]
  %v809 = vld [vmem:[#allocation1 + $0x9] sm:$0xff]
  %v810 = vld [vmem:[#allocation1 + $0x12] sm:$0xff]
  %811 = vrot.lane.b32.xlu0 %v808, 94
  %v812 = vpop.permute.xlu0 %811
  %813 = vrot.lane.b32.xlu0 %v809, 94
  %v814 = vpop.permute.xlu0 %813
  %815 = vrot.lane.b32.xlu0 %v810, 94
  %v816 = vpop.permute.xlu0 %815
  %v817 = vsel %vm782, %v812, %v814
  %v818 = vsel %vm782, %v814, %v816
  %821 = vst [vmem:[#allocation5 + $0x90] sm:$0xf] %v817
  %822 = vst [vmem:[#allocation5 + $0x98] sm:$0xf] %v818
  %v823 = vld [vmem:[%s3] sm:$0xf]
  %v824 = vld [vmem:[#allocation5] sm:$0xff]
  %v825 = vld [vmem:[#allocation5 + $0x8] sm:$0xff]
  %v826 = vld [vmem:[#allocation5 + $0x10] sm:$0xff]
  %v827 = vld [vmem:[#allocation5 + $0x18] sm:$0xff]
  %v828 = vld [vmem:[#allocation5 + $0x20] sm:$0xff]
  %v829 = vld [vmem:[#allocation5 + $0x28] sm:$0xff]
  %v830 = vld [vmem:[#allocation5 + $0x30] sm:$0xff]
  %v831 = vld [vmem:[#allocation5 + $0x38] sm:$0xff]
  %v832 = vld [vmem:[#allocation5 + $0x40] sm:$0xff]
  %v833 = vld [vmem:[#allocation5 + $0x48] sm:$0xff]
  %v834 = vld [vmem:[#allocation5 + $0x50] sm:$0xff]
  %v835 = vld [vmem:[#allocation5 + $0x58] sm:$0xff]
  %v836 = vld [vmem:[#allocation5 + $0x60] sm:$0xff]
  %v837 = vld [vmem:[#allocation5 + $0x68] sm:$0xff]
  %v838 = vld [vmem:[#allocation5 + $0x70] sm:$0xff]
  %v839 = vld [vmem:[#allocation5 + $0x78] sm:$0xff]
  %v840 = vld [vmem:[#allocation5 + $0x80] sm:$0xf]
  %v841 = vld [vmem:[#allocation5 + $0x88] sm:$0xf]
  %v842 = vld [vmem:[#allocation5 + $0x90] sm:$0xf]
  %v843 = vld [vmem:[#allocation5 + $0x98] sm:$0xf]
  %vm844 = vcmask 293888
  %v846 = vsel %vm844, %v823, 0
  %vm848 = vcmask 1043456
  %v850 = vsel %vm848, %v840, 0
  %v853 = vsel %vm848, %v841, 0
  %v856 = vsel %vm848, %v842, 0
  %v859 = vsel %vm848, %v843, 0
  %861 = vmatpush.msra.mxu0 0.0
  %862 = vmatpush.msra.mxu0 0.0
  %863 = vmatpush.msra.mxu0 0.0
  %864 = vmatpush.msra.mxu0 0.0
  %865 = vmatpush.msra.mxu0 0.0
  %866 = vmatpush.msra.mxu0 0.0
  %867 = vmatpush.msra.mxu0 0.0
  %868 = vmatpush.msra.mxu0 0.0
  %869 = vmatpush.msra.mxu0 0.0
  %870 = vmatpush.msra.mxu0 0.0
  %871 = vmatpush.msra.mxu0 0.0
  %872 = vmatpush.msra.mxu0 %v850
  %873 = vmatpush.msra.mxu0 %v836
  %874 = vmatpush.msra.mxu0 %v832
  %875 = vmatpush.msra.mxu0 %v828
  %876 = vmatpush.msra.mxu0 %v824
  %877 = vmatmul.f32.gmra.mxu0 %v846
  %v878 = vpop.f32.mrf.mxu0
  %v879 = vadd.f32 0.0, %v878
  %880 = vdwg.mxu0
  %881 = vmatpush.msra.mxu0 0.0
  %882 = vmatpush.msra.mxu0 0.0
  %883 = vmatpush.msra.mxu0 0.0
  %884 = vmatpush.msra.mxu0 0.0
  %885 = vmatpush.msra.mxu0 0.0
  %886 = vmatpush.msra.mxu0 0.0
  %887 = vmatpush.msra.mxu0 0.0
  %888 = vmatpush.msra.mxu0 0.0
  %889 = vmatpush.msra.mxu0 0.0
  %890 = vmatpush.msra.mxu0 0.0
  %891 = vmatpush.msra.mxu0 0.0
  %892 = vmatpush.msra.mxu0 %v853
  %893 = vmatpush.msra.mxu0 %v837
  %894 = vmatpush.msra.mxu0 %v833
  %895 = vmatpush.msra.mxu0 %v829
  %896 = vmatpush.msra.mxu0 %v825
  %897 = vmatmul.f32.gmra.mxu0 %v846
  %v898 = vpop.f32.mrf.mxu0
  %v899 = vadd.f32 0.0, %v898
  %900 = vdwg.mxu0
  %901 = vmatpush.msra.mxu0 0.0
  %902 = vmatpush.msra.mxu0 0.0
  %903 = vmatpush.msra.mxu0 0.0
  %904 = vmatpush.msra.mxu0 0.0
  %905 = vmatpush.msra.mxu0 0.0
  %906 = vmatpush.msra.mxu0 0.0
  %907 = vmatpush.msra.mxu0 0.0
  %908 = vmatpush.msra.mxu0 0.0
  %909 = vmatpush.msra.mxu0 0.0
  %910 = vmatpush.msra.mxu0 0.0
  %911 = vmatpush.msra.mxu0 0.0
  %912 = vmatpush.msra.mxu0 %v856
  %913 = vmatpush.msra.mxu0 %v838
  %914 = vmatpush.msra.mxu0 %v834
  %915 = vmatpush.msra.mxu0 %v830
  %916 = vmatpush.msra.mxu0 %v826
  %917 = vmatmul.f32.gmra.mxu0 %v846
  %v918 = vpop.f32.mrf.mxu0
  %v919 = vadd.f32 0.0, %v918
  %920 = vdwg.mxu0
  %921 = vmatpush.msra.mxu0 0.0
  %922 = vmatpush.msra.mxu0 0.0
  %923 = vmatpush.msra.mxu0 0.0
  %924 = vmatpush.msra.mxu0 0.0
  %925 = vmatpush.msra.mxu0 0.0
  %926 = vmatpush.msra.mxu0 0.0
  %927 = vmatpush.msra.mxu0 0.0
  %928 = vmatpush.msra.mxu0 0.0
  %929 = vmatpush.msra.mxu0 0.0
  %930 = vmatpush.msra.mxu0 0.0
  %931 = vmatpush.msra.mxu0 0.0
  %932 = vmatpush.msra.mxu0 %v859
  %933 = vmatpush.msra.mxu0 %v839
  %934 = vmatpush.msra.mxu0 %v835
  %935 = vmatpush.msra.mxu0 %v831
  %936 = vmatpush.msra.mxu0 %v827
  %937 = vmatmul.f32.gmra.mxu0 %v846
  %v938 = vpop.f32.mrf.mxu0
  %v939 = vadd.f32 0.0, %v938
  %940 = vdwg.mxu0
  %v945 = vrot.slane %v899, 4
  %v946 = vrot.slane %v939, 4
  %v947 = vsel %vm848, %v879, %v945
  %v948 = vsel %vm848, %v919, %v946
  %951 = vst [vmem:[%s13] sm:$0xff] %v947
  %952 = vst [vmem:[%s13 + $0x8] sm:$0xff] %v948
  %vm953 = vcmask 66560
  %954 = vst.msk [vmem:[#allocation3] sm:$0x3] %vm953, 0.0
  %955 = vst.msk [vmem:[#allocation3 + $0x2] sm:$0x3] %vm953, 0.0
  %vm956 = vcmask 665160
  %957 = vst.msk [vmem:[#allocation3] sm:$0x3] %vm956, 0.0
  %958 = vst.msk [vmem:[#allocation3 + $0x2] sm:$0x3] %vm956, 0.0
  %v959 = vld [vmem:[%s1] sm:$0x3]
  %v960 = vld [vmem:[%s1 + $0x2] sm:$0x3]
  %963 = vrot.lane.b32.xlu0 %v959, 9
  %v964 = vpop.permute.xlu0 %963
  %965 = vrot.lane.b32.xlu0 %v960, 9
  %v966 = vpop.permute.xlu0 %965
  %vm969 = vcmask 590920
  %970 = vst.msk [vmem:[#allocation3] sm:$0x3] %vm969, %v964
  %971 = vst.msk [vmem:[#allocation3 + $0x2] sm:$0x3] %vm969, %v966
  %v972 = vld [vmem:[%s9] sm:$0x1]
  %v973 = vld [vmem:[#allocation3] sm:$0x1]
  %v974 = vld [vmem:[#allocation3 + $0x2] sm:$0x1]
  %v975 = vperm.slane %v972, 0
  %v976 = vmul.f32 %v973, %v975
  %v977 = vmul.f32 %v974, %v975
  %v980 = vrot.slane %v977, 7
  %v981 = vsel %vm106, %v980, %v976
  %vm983 = vcmask 517120
  %984 = vst.msk [vmem:[#allocation6] sm:$0x3] %vm983, %v981
  %v985 = vld [vmem:[#allocation3 + $0x1] sm:$0x1]
  %v986 = vld [vmem:[#allocation3 + $0x3] sm:$0x1]
  %v987 = vmul.f32 %v985, %v975
  %v988 = vmul.f32 %v986, %v975
  %v991 = vrot.slane %v988, 7
  %v992 = vsel %vm106, %v991, %v987
  %993 = vrot.lane.b32.xlu0 %v992, 64
  %v994 = vpop.permute.xlu0 %993
  %vm996 = vcmask 1041920
  %997 = vst.msk [vmem:[#allocation6] sm:$0x3] %vm996, %v994
  %v998 = vld [vmem:[#allocation3] sm:$0x1]
  %v999 = vld [vmem:[#allocation3 + $0x2] sm:$0x1]
  %1001 = vrot.lane.b32.xlu0 %v975, 8
  %v1002 = vpop.permute.xlu0 %1001
  %v1004 = vmul.f32 %v998, %v1002
  %v1005 = vmul.f32 %v999, %v1002
  %v1008 = vrot.slane %v1005, 7
  %v1009 = vsel %vm106, %v1008, %v1004
  %1010 = vrot.lane.b32.xlu0 %v1009, 120
  %v1011 = vpop.permute.xlu0 %1010
  %1013 = vst.msk [vmem:[#allocation6 + $0x6] sm:$0x3] %vm983, %v1011
  %v1014 = vld [vmem:[#allocation3 + $0x1] sm:$0x1]
  %v1015 = vld [vmem:[#allocation3 + $0x3] sm:$0x1]
  %v1016 = vmul.f32 %v1014, %v1002
  %v1017 = vmul.f32 %v1015, %v1002
  %v1020 = vrot.slane %v1017, 7
  %v1021 = vsel %vm106, %v1020, %v1016
  %1022 = vrot.lane.b32.xlu0 %v1021, 56
  %v1023 = vpop.permute.xlu0 %1022
  %1025 = vst.msk [vmem:[#allocation6 + $0x6] sm:$0x3] %vm996, %v1023
  %v1026 = vld [vmem:[#allocation3] sm:$0x1]
  %v1027 = vld [vmem:[#allocation3 + $0x2] sm:$0x1]
  %1028 = vrot.lane.b32.xlu0 %v975, 16
  %v1029 = vpop.permute.xlu0 %1028
  %v1031 = vmul.f32 %v1026, %v1029
  %v1032 = vmul.f32 %v1027, %v1029
  %v1035 = vrot.slane %v1032, 7
  %v1036 = vsel %vm106, %v1035, %v1031
  %1037 = vrot.lane.b32.xlu0 %v1036, 112
  %v1038 = vpop.permute.xlu0 %1037
  %1040 = vst.msk [vmem:[#allocation6 + $0xc] sm:$0x3] %vm983, %v1038
  %v1041 = vld [vmem:[#allocation3 + $0x1] sm:$0x1]
  %v1042 = vld [vmem:[#allocation3 + $0x3] sm:$0x1]
  %v1043 = vmul.f32 %v1041, %v1029
  %v1044 = vmul.f32 %v1042, %v1029
  %v1047 = vrot.slane %v1044, 7
  %v1048 = vsel %vm106, %v1047, %v1043
  %1049 = vrot.lane.b32.xlu0 %v1048, 48
  %v1050 = vpop.permute.xlu0 %1049
  %1052 = vst.msk [vmem:[#allocation6 + $0xc] sm:$0x3] %vm996, %v1050
  %v1053 = vld [vmem:[#allocation3] sm:$0x1]
  %v1054 = vld [vmem:[#allocation3 + $0x2] sm:$0x1]
  %v1057 = vrot.slane %v1054, 7
  %v1058 = vsel %vm106, %v1057, %v1053
  %1059 = vrot.lane.b32.xlu0 %v1058, 127
  %v1060 = vpop.permute.xlu0 %1059
  %1062 = vst.msk [vmem:[#allocation6 + $0x2] sm:$0x3] %vm983, %v1060
  %v1063 = vld [vmem:[#allocation3 + $0x1] sm:$0x1]
  %v1064 = vld [vmem:[#allocation3 + $0x3] sm:$0x1]
  %v1067 = vrot.slane %v1064, 7
  %v1068 = vsel %vm106, %v1067, %v1063
  %1069 = vrot.lane.b32.xlu0 %v1068, 63
  %v1070 = vpop.permute.xlu0 %1069
  %1072 = vst.msk [vmem:[#allocation6 + $0x2] sm:$0x3] %vm996, %v1070
  %v1073 = vld [vmem:[#allocation3] sm:$0x1]
  %v1074 = vld [vmem:[#allocation3 + $0x2] sm:$0x1]
  %v1077 = vrot.slane %v1074, 7
  %v1078 = vsel %vm106, %v1077, %v1073
  %1079 = vrot.lane.b32.xlu0 %v1078, 119
  %v1080 = vpop.permute.xlu0 %1079
  %1082 = vst.msk [vmem:[#allocation6 + $0x8] sm:$0x3] %vm983, %v1080
  %v1083 = vld [vmem:[#allocation3 + $0x1] sm:$0x1]
  %v1084 = vld [vmem:[#allocation3 + $0x3] sm:$0x1]
  %v1087 = vrot.slane %v1084, 7
  %v1088 = vsel %vm106, %v1087, %v1083
  %1089 = vrot.lane.b32.xlu0 %v1088, 55
  %v1090 = vpop.permute.xlu0 %1089
  %1092 = vst.msk [vmem:[#allocation6 + $0x8] sm:$0x3] %vm996, %v1090
  %v1093 = vld [vmem:[#allocation3] sm:$0x1]
  %v1094 = vld [vmem:[#allocation3 + $0x2] sm:$0x1]
  %v1097 = vrot.slane %v1094, 7
  %v1098 = vsel %vm106, %v1097, %v1093
  %1099 = vrot.lane.b32.xlu0 %v1098, 111
  %v1100 = vpop.permute.xlu0 %1099
  %1102 = vst.msk [vmem:[#allocation6 + $0xe] sm:$0x3] %vm983, %v1100
  %v1103 = vld [vmem:[#allocation3 + $0x1] sm:$0x1]
  %v1104 = vld [vmem:[#allocation3 + $0x3] sm:$0x1]
  %v1107 = vrot.slane %v1104, 7
  %v1108 = vsel %vm106, %v1107, %v1103
  %1109 = vrot.lane.b32.xlu0 %v1108, 47
  %v1110 = vpop.permute.xlu0 %1109
  %1112 = vst.msk [vmem:[#allocation6 + $0xe] sm:$0x3] %vm996, %v1110
  %v1113 = vld [vmem:[%s9 + $0x2] sm:$0x1]
  %v1114 = vld [vmem:[#allocation3] sm:$0x1]
  %v1115 = vld [vmem:[#allocation3 + $0x2] sm:$0x1]
  %v1116 = vperm.slane %v1113, 0
  %1118 = vrot.lane.b32.xlu0 %v1116, 2
  %v1119 = vpop.permute.xlu0 %1118
  %v1121 = vmul.f32 %v1114, %v1119
  %v1122 = vmul.f32 %v1115, %v1119
  %v1125 = vrot.slane %v1122, 7
  %v1126 = vsel %vm106, %v1125, %v1121
  %1127 = vrot.lane.b32.xlu0 %v1126, 126
  %v1128 = vpop.permute.xlu0 %1127
  %1130 = vst.msk [vmem:[#allocation6 + $0x4] sm:$0x3] %vm983, %v1128
  %v1131 = vld [vmem:[#allocation3 + $0x1] sm:$0x1]
  %v1132 = vld [vmem:[#allocation3 + $0x3] sm:$0x1]
  %v1133 = vmul.f32 %v1131, %v1119
  %v1134 = vmul.f32 %v1132, %v1119
  %v1137 = vrot.slane %v1134, 7
  %v1138 = vsel %vm106, %v1137, %v1133
  %1139 = vrot.lane.b32.xlu0 %v1138, 62
  %v1140 = vpop.permute.xlu0 %1139
  %1142 = vst.msk [vmem:[#allocation6 + $0x4] sm:$0x3] %vm996, %v1140
  %v1143 = vld [vmem:[#allocation3] sm:$0x1]
  %v1144 = vld [vmem:[#allocation3 + $0x2] sm:$0x1]
  %1145 = vrot.lane.b32.xlu0 %v1116, 10
  %v1146 = vpop.permute.xlu0 %1145
  %v1148 = vmul.f32 %v1143, %v1146
  %v1149 = vmul.f32 %v1144, %v1146
  %v1152 = vrot.slane %v1149, 7
  %v1153 = vsel %vm106, %v1152, %v1148
  %1154 = vrot.lane.b32.xlu0 %v1153, 118
  %v1155 = vpop.permute.xlu0 %1154
  %1157 = vst.msk [vmem:[#allocation6 + $0xa] sm:$0x3] %vm983, %v1155
  %v1158 = vld [vmem:[#allocation3 + $0x1] sm:$0x1]
  %v1159 = vld [vmem:[#allocation3 + $0x3] sm:$0x1]
  %v1160 = vmul.f32 %v1158, %v1146
  %v1161 = vmul.f32 %v1159, %v1146
  %v1164 = vrot.slane %v1161, 7
  %v1165 = vsel %vm106, %v1164, %v1160
  %1166 = vrot.lane.b32.xlu0 %v1165, 54
  %v1167 = vpop.permute.xlu0 %1166
  %1169 = vst.msk [vmem:[#allocation6 + $0xa] sm:$0x3] %vm996, %v1167
  %v1170 = vld [vmem:[#allocation3] sm:$0x1]
  %v1171 = vld [vmem:[#allocation3 + $0x2] sm:$0x1]
  %1172 = vrot.lane.b32.xlu0 %v1116, 18
  %v1173 = vpop.permute.xlu0 %1172
  %v1175 = vmul.f32 %v1170, %v1173
  %v1176 = vmul.f32 %v1171, %v1173
  %v1179 = vrot.slane %v1176, 7
  %v1180 = vsel %vm106, %v1179, %v1175
  %1181 = vrot.lane.b32.xlu0 %v1180, 110
  %v1182 = vpop.permute.xlu0 %1181
  %1184 = vst.msk [vmem:[#allocation6 + $0x10] sm:$0x3] %vm983, %v1182
  %v1185 = vld [vmem:[#allocation3 + $0x1] sm:$0x1]
  %v1186 = vld [vmem:[#allocation3 + $0x3] sm:$0x1]
  %v1187 = vmul.f32 %v1185, %v1173
  %v1188 = vmul.f32 %v1186, %v1173
  %v1191 = vrot.slane %v1188, 7
  %v1192 = vsel %vm106, %v1191, %v1187
  %1193 = vrot.lane.b32.xlu0 %v1192, 46
  %v1194 = vpop.permute.xlu0 %1193
  %1196 = vst.msk [vmem:[#allocation6 + $0x10] sm:$0x3] %vm996, %v1194
  %v1197 = vld [vmem:[%s4] sm:$0xf]
  %v1198 = vld [vmem:[#allocation6] sm:$0xff]
  %v1199 = vld [vmem:[#allocation6 + $0x8] sm:$0xff]
  %v1200 = vld [vmem:[#allocation6 + $0x10] sm:$0x3]
  %v1202 = vsel %vm657, %v1197, 0
  %vm1204 = vcmask 1041408
  %v1206 = vsel %vm1204, %v1200, 0
  %1208 = vmatpush.msra.mxu0 0.0
  %1209 = vmatpush.msra.mxu0 0.0
  %1210 = vmatpush.msra.mxu0 0.0
  %1211 = vmatpush.msra.mxu0 0.0
  %1212 = vmatpush.msra.mxu0 0.0
  %1213 = vmatpush.msra.mxu0 0.0
  %1214 = vmatpush.msra.mxu0 0.0
  %1215 = vmatpush.msra.mxu0 0.0
  %1216 = vmatpush.msra.mxu0 0.0
  %1217 = vmatpush.msra.mxu0 0.0
  %1218 = vmatpush.msra.mxu0 0.0
  %1219 = vmatpush.msra.mxu0 0.0
  %1220 = vmatpush.msra.mxu0 0.0
  %1221 = vmatpush.msra.mxu0 %v1206
  %1222 = vmatpush.msra.mxu0 %v1199
  %1223 = vmatpush.msra.mxu0 %v1198
  %1224 = vmatmul.f32.gmra.mxu0 %v1202
  %v1225 = vpop.f32.mrf.mxu0
  %v1226 = vadd.f32 0.0, %v1225
  %1227 = vdwg.mxu0
  %v1228 = vld [vmem:[%s6] sm:$0xff]
  %v1229 = vld [vmem:[%s6 + $0x8] sm:$0xff]
  %v1230 = vld [vmem:[%s6 + $0x10] sm:$0xff]
  %v1231 = vld [vmem:[%s6 + $0x18] sm:$0xff]
  %v1232 = vld [vmem:[%s6 + $0x20] sm:$0xff]
  %v1233 = vld [vmem:[%s6 + $0x28] sm:$0xff]
  %v1234 = vld [vmem:[%s6 + $0x30] sm:$0xff]
  %v1235 = vld [vmem:[%s6 + $0x38] sm:$0xff]
  %v1236 = vld [vmem:[%s6 + $0x40] sm:$0xff]
  %v1237 = vld [vmem:[%s6 + $0x48] sm:$0xff]
  %v1238 = vld [vmem:[%s6 + $0x50] sm:$0xff]
  %v1239 = vld [vmem:[%s6 + $0x58] sm:$0xff]
  %v1240 = vld [vmem:[%s6 + $0x60] sm:$0xff]
  %v1241 = vld [vmem:[%s6 + $0x68] sm:$0xff]
  %v1242 = vld [vmem:[%s6 + $0x70] sm:$0xff]
  %v1243 = vld [vmem:[%s6 + $0x78] sm:$0xff]
  %vm1244 = vcmask 523264
  %v1246 = vsel %vm1244, %v1226, 0
  %1248 = vmatpush.msra.mxu0 0.0
  %1249 = vmatpush.msra.mxu0 0.0
  %1250 = vmatpush.msra.mxu0 0.0
  %1251 = vmatpush.msra.mxu0 0.0
  %1252 = vmatpush.msra.mxu0 0.0
  %1253 = vmatpush.msra.mxu0 0.0
  %1254 = vmatpush.msra.mxu0 0.0
  %1255 = vmatpush.msra.mxu0 0.0
  %1256 = vmatpush.msra.mxu0 %v1242
  %1257 = vmatpush.msra.mxu0 %v1240
  %1258 = vmatpush.msra.mxu0 %v1238
  %1259 = vmatpush.msra.mxu0 %v1236
  %1260 = vmatpush.msra.mxu0 %v1234
  %1261 = vmatpush.msra.mxu0 %v1232
  %1262 = vmatpush.msra.mxu0 %v1230
  %1263 = vmatpush.msra.mxu0 %v1228
  %1264 = vmatmul.f32.gmra.mxu0 %v1246
  %v1265 = vpop.f32.mrf.mxu0
  %v1266 = vadd.f32 0.0, %v1265
  %1267 = vdwg.mxu0
  %1268 = vmatpush.msra.mxu0 0.0
  %1269 = vmatpush.msra.mxu0 0.0
  %1270 = vmatpush.msra.mxu0 0.0
  %1271 = vmatpush.msra.mxu0 0.0
  %1272 = vmatpush.msra.mxu0 0.0
  %1273 = vmatpush.msra.mxu0 0.0
  %1274 = vmatpush.msra.mxu0 0.0
  %1275 = vmatpush.msra.mxu0 0.0
  %1276 = vmatpush.msra.mxu0 %v1243
  %1277 = vmatpush.msra.mxu0 %v1241
  %1278 = vmatpush.msra.mxu0 %v1239
  %1279 = vmatpush.msra.mxu0 %v1237
  %1280 = vmatpush.msra.mxu0 %v1235
  %1281 = vmatpush.msra.mxu0 %v1233
  %1282 = vmatpush.msra.mxu0 %v1231
  %1283 = vmatpush.msra.mxu0 %v1229
  %1284 = vmatmul.f32.gmra.mxu0 %v1246
  %v1285 = vpop.f32.mrf.mxu0
  %v1286 = vadd.f32 0.0, %v1285
  %1287 = vdwg.mxu0
  %v1288 = vld [vmem:[%s13] sm:$0xff]
  %v1291 = vrot.slane %v1286, 4
  %v1292 = vsel %vm848, %v1266, %v1291
  %v1294 = vadd.f32 %v1288, %v1292
  %1295 = vst [vmem:[%s13] sm:$0xff] %v1294
  %1296 = vrot.lane.b32.xlu0 %v1226, 64
  %v1297 = vpop.permute.xlu0 %1296
  %v1298 = vsel %vm1244, %v1297, 0
  %1300 = vmatpush.msra.mxu0 0.0
  %1301 = vmatpush.msra.mxu0 0.0
  %1302 = vmatpush.msra.mxu0 0.0
  %1303 = vmatpush.msra.mxu0 0.0
  %1304 = vmatpush.msra.mxu0 0.0
  %1305 = vmatpush.msra.mxu0 0.0
  %1306 = vmatpush.msra.mxu0 0.0
  %1307 = vmatpush.msra.mxu0 0.0
  %1308 = vmatpush.msra.mxu0 %v1242
  %1309 = vmatpush.msra.mxu0 %v1240
  %1310 = vmatpush.msra.mxu0 %v1238
  %1311 = vmatpush.msra.mxu0 %v1236
  %1312 = vmatpush.msra.mxu0 %v1234
  %1313 = vmatpush.msra.mxu0 %v1232
  %1314 = vmatpush.msra.mxu0 %v1230
  %1315 = vmatpush.msra.mxu0 %v1228
  %1316 = vmatmul.f32.gmra.mxu0 %v1298
  %v1317 = vpop.f32.mrf.mxu0
  %v1318 = vadd.f32 0.0, %v1317
  %1319 = vdwg.mxu0
  %1320 = vmatpush.msra.mxu0 0.0
  %1321 = vmatpush.msra.mxu0 0.0
  %1322 = vmatpush.msra.mxu0 0.0
  %1323 = vmatpush.msra.mxu0 0.0
  %1324 = vmatpush.msra.mxu0 0.0
  %1325 = vmatpush.msra.mxu0 0.0
  %1326 = vmatpush.msra.mxu0 0.0
  %1327 = vmatpush.msra.mxu0 0.0
  %1328 = vmatpush.msra.mxu0 %v1243
  %1329 = vmatpush.msra.mxu0 %v1241
  %1330 = vmatpush.msra.mxu0 %v1239
  %1331 = vmatpush.msra.mxu0 %v1237
  %1332 = vmatpush.msra.mxu0 %v1235
  %1333 = vmatpush.msra.mxu0 %v1233
  %1334 = vmatpush.msra.mxu0 %v1231
  %1335 = vmatpush.msra.mxu0 %v1229
  %1336 = vmatmul.f32.gmra.mxu0 %v1298
  %v1337 = vpop.f32.mrf.mxu0
  %v1338 = vadd.f32 0.0, %v1337
  %1339 = vdwg.mxu0
  %v1340 = vld [vmem:[%s13 + $0x8] sm:$0xff]
  %v1343 = vrot.slane %v1338, 4
  %v1344 = vsel %vm848, %v1318, %v1343
  %v1346 = vadd.f32 %v1340, %v1344
  %1347 = vst [vmem:[%s13 + $0x8] sm:$0xff] %v1346
  %vm1348 = vcmask 33792
  %1349 = vst.msk [vmem:[#allocation4] sm:$0x3] %vm1348, 0.0
  %1350 = vst.msk [vmem:[#allocation4 + $0x2] sm:$0x3] %vm1348, 0.0
  %vm1351 = vcmask 205992
  %1352 = vst.msk [vmem:[#allocation4] sm:$0x3] %vm1351, 0.0
  %1353 = vst.msk [vmem:[#allocation4 + $0x2] sm:$0x3] %vm1351, 0.0
  %v1354 = vld [vmem:[%s2] sm:$0x3]
  %v1355 = vld [vmem:[%s2 + $0x2] sm:$0x3]
  %1358 = vrot.lane.b32.xlu0 %v1354, 5
  %v1359 = vpop.permute.xlu0 %1358
  %1360 = vrot.lane.b32.xlu0 %v1355, 5
  %v1361 = vpop.permute.xlu0 %1360
  %vm1364 = vcmask 164904
  %1365 = vst.msk [vmem:[#allocation4] sm:$0x3] %vm1364, %v1359
  %1366 = vst.msk [vmem:[#allocation4 + $0x2] sm:$0x3] %vm1364, %v1361
  %v1367 = vld [vmem:[%s10] sm:$0x1]
  %v1368 = vld [vmem:[#allocation4] sm:$0x1]
  %v1369 = vld [vmem:[#allocation4 + $0x2] sm:$0x1]
  %v1370 = vperm.slane %v1367, 0
  %v1371 = vmul.f32 %v1368, %v1370
  %v1372 = vmul.f32 %v1369, %v1370
  %v1375 = vrot.slane %v1372, 7
  %v1376 = vsel %vm106, %v1375, %v1371
  %vm1378 = vcmask 123904
  %1379 = vst.msk [vmem:[#allocation7] sm:$0x3] %vm1378, %v1376
  %v1380 = vld [vmem:[#allocation4 + $0x1] sm:$0x1]
  %v1381 = vld [vmem:[#allocation4 + $0x3] sm:$0x1]
  %v1382 = vmul.f32 %v1380, %v1370
  %v1383 = vmul.f32 %v1381, %v1370
  %v1386 = vrot.slane %v1383, 7
  %v1387 = vsel %vm106, %v1386, %v1382
  %1388 = vrot.lane.b32.xlu0 %v1387, 16
  %v1389 = vpop.permute.xlu0 %1388
  %vm1391 = vcmask 255104
  %1392 = vst.msk [vmem:[#allocation7] sm:$0x3] %vm1391, %v1389
  %v1393 = vld [vmem:[#allocation4] sm:$0x1]
  %v1394 = vld [vmem:[#allocation4 + $0x2] sm:$0x1]
  %1396 = vrot.lane.b32.xlu0 %v1370, 4
  %v1397 = vpop.permute.xlu0 %1396
  %v1399 = vmul.f32 %v1393, %v1397
  %v1400 = vmul.f32 %v1394, %v1397
  %v1403 = vrot.slane %v1400, 7
  %v1404 = vsel %vm106, %v1403, %v1399
  %1405 = vrot.lane.b32.xlu0 %v1404, 124
  %v1406 = vpop.permute.xlu0 %1405
  %1408 = vst.msk [vmem:[#allocation7 + $0x6] sm:$0x3] %vm1378, %v1406
  %v1409 = vld [vmem:[#allocation4 + $0x1] sm:$0x1]
  %v1410 = vld [vmem:[#allocation4 + $0x3] sm:$0x1]
  %v1411 = vmul.f32 %v1409, %v1397
  %v1412 = vmul.f32 %v1410, %v1397
  %v1415 = vrot.slane %v1412, 7
  %v1416 = vsel %vm106, %v1415, %v1411
  %1417 = vrot.lane.b32.xlu0 %v1416, 12
  %v1418 = vpop.permute.xlu0 %1417
  %1420 = vst.msk [vmem:[#allocation7 + $0x6] sm:$0x3] %vm1391, %v1418
  %v1421 = vld [vmem:[#allocation4] sm:$0x1]
  %v1422 = vld [vmem:[#allocation4 + $0x2] sm:$0x1]
  %1423 = vrot.lane.b32.xlu0 %v1370, 8
  %v1424 = vpop.permute.xlu0 %1423
  %v1426 = vmul.f32 %v1421, %v1424
  %v1427 = vmul.f32 %v1422, %v1424
  %v1430 = vrot.slane %v1427, 7
  %v1431 = vsel %vm106, %v1430, %v1426
  %1432 = vrot.lane.b32.xlu0 %v1431, 120
  %v1433 = vpop.permute.xlu0 %1432
  %1435 = vst.msk [vmem:[#allocation7 + $0xc] sm:$0x3] %vm1378, %v1433
  %v1436 = vld [vmem:[#allocation4 + $0x1] sm:$0x1]
  %v1437 = vld [vmem:[#allocation4 + $0x3] sm:$0x1]
  %v1438 = vmul.f32 %v1436, %v1424
  %v1439 = vmul.f32 %v1437, %v1424
  %v1442 = vrot.slane %v1439, 7
  %v1443 = vsel %vm106, %v1442, %v1438
  %1444 = vrot.lane.b32.xlu0 %v1443, 8
  %v1445 = vpop.permute.xlu0 %1444
  %1447 = vst.msk [vmem:[#allocation7 + $0xc] sm:$0x3] %vm1391, %v1445
  %v1448 = vld [vmem:[#allocation4] sm:$0x1]
  %v1449 = vld [vmem:[#allocation4 + $0x2] sm:$0x1]
  %v1452 = vrot.slane %v1449, 7
  %v1453 = vsel %vm106, %v1452, %v1448
  %1454 = vrot.lane.b32.xlu0 %v1453, 127
  %v1455 = vpop.permute.xlu0 %1454
  %1457 = vst.msk [vmem:[#allocation7 + $0x2] sm:$0x3] %vm1378, %v1455
  %v1458 = vld [vmem:[#allocation4 + $0x1] sm:$0x1]
  %v1459 = vld [vmem:[#allocation4 + $0x3] sm:$0x1]
  %v1462 = vrot.slane %v1459, 7
  %v1463 = vsel %vm106, %v1462, %v1458
  %1464 = vrot.lane.b32.xlu0 %v1463, 15
  %v1465 = vpop.permute.xlu0 %1464
  %1467 = vst.msk [vmem:[#allocation7 + $0x2] sm:$0x3] %vm1391, %v1465
  %v1468 = vld [vmem:[#allocation4] sm:$0x1]
  %v1469 = vld [vmem:[#allocation4 + $0x2] sm:$0x1]
  %v1472 = vrot.slane %v1469, 7
  %v1473 = vsel %vm106, %v1472, %v1468
  %1474 = vrot.lane.b32.xlu0 %v1473, 123
  %v1475 = vpop.permute.xlu0 %1474
  %1477 = vst.msk [vmem:[#allocation7 + $0x8] sm:$0x3] %vm1378, %v1475
  %v1478 = vld [vmem:[#allocation4 + $0x1] sm:$0x1]
  %v1479 = vld [vmem:[#allocation4 + $0x3] sm:$0x1]
  %v1482 = vrot.slane %v1479, 7
  %v1483 = vsel %vm106, %v1482, %v1478
  %1484 = vrot.lane.b32.xlu0 %v1483, 11
  %v1485 = vpop.permute.xlu0 %1484
  %1487 = vst.msk [vmem:[#allocation7 + $0x8] sm:$0x3] %vm1391, %v1485
  %v1488 = vld [vmem:[#allocation4] sm:$0x1]
  %v1489 = vld [vmem:[#allocation4 + $0x2] sm:$0x1]
  %v1492 = vrot.slane %v1489, 7
  %v1493 = vsel %vm106, %v1492, %v1488
  %1494 = vrot.lane.b32.xlu0 %v1493, 119
  %v1495 = vpop.permute.xlu0 %1494
  %1497 = vst.msk [vmem:[#allocation7 + $0xe] sm:$0x3] %vm1378, %v1495
  %v1498 = vld [vmem:[#allocation4 + $0x1] sm:$0x1]
  %v1499 = vld [vmem:[#allocation4 + $0x3] sm:$0x1]
  %v1502 = vrot.slane %v1499, 7
  %v1503 = vsel %vm106, %v1502, %v1498
  %1504 = vrot.lane.b32.xlu0 %v1503, 7
  %v1505 = vpop.permute.xlu0 %1504
  %1507 = vst.msk [vmem:[#allocation7 + $0xe] sm:$0x3] %vm1391, %v1505
  %v1508 = vld [vmem:[%s10 + $0x2] sm:$0x1]
  %v1509 = vld [vmem:[#allocation4] sm:$0x1]
  %v1510 = vld [vmem:[#allocation4 + $0x2] sm:$0x1]
  %v1511 = vperm.slane %v1508, 0
  %1513 = vrot.lane.b32.xlu0 %v1511, 2
  %v1514 = vpop.permute.xlu0 %1513
  %v1516 = vmul.f32 %v1509, %v1514
  %v1517 = vmul.f32 %v1510, %v1514
  %v1520 = vrot.slane %v1517, 7
  %v1521 = vsel %vm106, %v1520, %v1516
  %1522 = vrot.lane.b32.xlu0 %v1521, 126
  %v1523 = vpop.permute.xlu0 %1522
  %1525 = vst.msk [vmem:[#allocation7 + $0x4] sm:$0x3] %vm1378, %v1523
  %v1526 = vld [vmem:[#allocation4 + $0x1] sm:$0x1]
  %v1527 = vld [vmem:[#allocation4 + $0x3] sm:$0x1]
  %v1528 = vmul.f32 %v1526, %v1514
  %v1529 = vmul.f32 %v1527, %v1514
  %v1532 = vrot.slane %v1529, 7
  %v1533 = vsel %vm106, %v1532, %v1528
  %1534 = vrot.lane.b32.xlu0 %v1533, 14
  %v1535 = vpop.permute.xlu0 %1534
  %1537 = vst.msk [vmem:[#allocation7 + $0x4] sm:$0x3] %vm1391, %v1535
  %v1538 = vld [vmem:[#allocation4] sm:$0x1]
  %v1539 = vld [vmem:[#allocation4 + $0x2] sm:$0x1]
  %1540 = vrot.lane.b32.xlu0 %v1511, 6
  %v1541 = vpop.permute.xlu0 %1540
  %v1543 = vmul.f32 %v1538, %v1541
  %v1544 = vmul.f32 %v1539, %v1541
  %v1547 = vrot.slane %v1544, 7
  %v1548 = vsel %vm106, %v1547, %v1543
  %1549 = vrot.lane.b32.xlu0 %v1548, 122
  %v1550 = vpop.permute.xlu0 %1549
  %1552 = vst.msk [vmem:[#allocation7 + $0xa] sm:$0x3] %vm1378, %v1550
  %v1553 = vld [vmem:[#allocation4 + $0x1] sm:$0x1]
  %v1554 = vld [vmem:[#allocation4 + $0x3] sm:$0x1]
  %v1555 = vmul.f32 %v1553, %v1541
  %v1556 = vmul.f32 %v1554, %v1541
  %v1559 = vrot.slane %v1556, 7
  %v1560 = vsel %vm106, %v1559, %v1555
  %1561 = vrot.lane.b32.xlu0 %v1560, 10
  %v1562 = vpop.permute.xlu0 %1561
  %1564 = vst.msk [vmem:[#allocation7 + $0xa] sm:$0x3] %vm1391, %v1562
  %v1565 = vld [vmem:[#allocation4] sm:$0x1]
  %v1566 = vld [vmem:[#allocation4 + $0x2] sm:$0x1]
  %1567 = vrot.lane.b32.xlu0 %v1511, 10
  %v1568 = vpop.permute.xlu0 %1567
  %v1570 = vmul.f32 %v1565, %v1568
  %v1571 = vmul.f32 %v1566, %v1568
  %v1574 = vrot.slane %v1571, 7
  %v1575 = vsel %vm106, %v1574, %v1570
  %1576 = vrot.lane.b32.xlu0 %v1575, 118
  %v1577 = vpop.permute.xlu0 %1576
  %1579 = vst.msk [vmem:[#allocation7 + $0x10] sm:$0x3] %vm1378, %v1577
  %v1580 = vld [vmem:[#allocation4 + $0x1] sm:$0x1]
  %v1581 = vld [vmem:[#allocation4 + $0x3] sm:$0x1]
  %v1582 = vmul.f32 %v1580, %v1568
  %v1583 = vmul.f32 %v1581, %v1568
  %v1586 = vrot.slane %v1583, 7
  %v1587 = vsel %vm106, %v1586, %v1582
  %1588 = vrot.lane.b32.xlu0 %v1587, 6
  %v1589 = vpop.permute.xlu0 %1588
  %1591 = vst.msk [vmem:[#allocation7 + $0x10] sm:$0x3] %vm1391, %v1589
  %v1592 = vld [vmem:[%s5] sm:$0xf]
  %v1593 = vld [vmem:[#allocation7] sm:$0xff]
  %v1594 = vld [vmem:[#allocation7 + $0x8] sm:$0xff]
  %v1595 = vld [vmem:[#allocation7 + $0x10] sm:$0x3]
  %v1597 = vsel %vm657, %v1592, 0
  %v1600 = vsel %vm1204, %v1595, 0
  %1602 = vmatpush.msra.mxu0 0.0
  %1603 = vmatpush.msra.mxu0 0.0
  %1604 = vmatpush.msra.mxu0 0.0
  %1605 = vmatpush.msra.mxu0 0.0
  %1606 = vmatpush.msra.mxu0 0.0
  %1607 = vmatpush.msra.mxu0 0.0
  %1608 = vmatpush.msra.mxu0 0.0
  %1609 = vmatpush.msra.mxu0 0.0
  %1610 = vmatpush.msra.mxu0 0.0
  %1611 = vmatpush.msra.mxu0 0.0
  %1612 = vmatpush.msra.mxu0 0.0
  %1613 = vmatpush.msra.mxu0 0.0
  %1614 = vmatpush.msra.mxu0 0.0
  %1615 = vmatpush.msra.mxu0 %v1600
  %1616 = vmatpush.msra.mxu0 %v1594
  %1617 = vmatpush.msra.mxu0 %v1593
  %1618 = vmatmul.f32.gmra.mxu0 %v1597
  %v1619 = vpop.f32.mrf.mxu0
  %v1620 = vadd.f32 0.0, %v1619
  %1621 = vdwg.mxu0
  %v1622 = vld [vmem:[%s7] sm:$0xff]
  %v1623 = vld [vmem:[%s7 + $0x8] sm:$0xff]
  %v1624 = vld [vmem:[%s7 + $0x10] sm:$0xff]
  %v1625 = vld [vmem:[%s7 + $0x18] sm:$0xff]
  %v1627 = vsel %vm185, %v1620, 0
  %1629 = vmatpush.msra.mxu0 0.0
  %1630 = vmatpush.msra.mxu0 0.0
  %1631 = vmatpush.msra.mxu0 0.0
  %1632 = vmatpush.msra.mxu0 0.0
  %1633 = vmatpush.msra.mxu0 0.0
  %1634 = vmatpush.msra.mxu0 0.0
  %1635 = vmatpush.msra.mxu0 0.0
  %1636 = vmatpush.msra.mxu0 0.0
  %1637 = vmatpush.msra.mxu0 0.0
  %1638 = vmatpush.msra.mxu0 0.0
  %1639 = vmatpush.msra.mxu0 0.0
  %1640 = vmatpush.msra.mxu0 0.0
  %1641 = vmatpush.msra.mxu0 0.0
  %1642 = vmatpush.msra.mxu0 0.0
  %1643 = vmatpush.msra.mxu0 %v1624
  %1644 = vmatpush.msra.mxu0 %v1622
  %1645 = vmatmul.f32.gmra.mxu0 %v1627
  %v1646 = vpop.f32.mrf.mxu0
  %v1647 = vadd.f32 0.0, %v1646
  %1648 = vdwg.mxu0
  %1649 = vmatpush.msra.mxu0 0.0
  %1650 = vmatpush.msra.mxu0 0.0
  %1651 = vmatpush.msra.mxu0 0.0
  %1652 = vmatpush.msra.mxu0 0.0
  %1653 = vmatpush.msra.mxu0 0.0
  %1654 = vmatpush.msra.mxu0 0.0
  %1655 = vmatpush.msra.mxu0 0.0
  %1656 = vmatpush.msra.mxu0 0.0
  %1657 = vmatpush.msra.mxu0 0.0
  %1658 = vmatpush.msra.mxu0 0.0
  %1659 = vmatpush.msra.mxu0 0.0
  %1660 = vmatpush.msra.mxu0 0.0
  %1661 = vmatpush.msra.mxu0 0.0
  %1662 = vmatpush.msra.mxu0 0.0
  %1663 = vmatpush.msra.mxu0 %v1625
  %1664 = vmatpush.msra.mxu0 %v1623
  %1665 = vmatmul.f32.gmra.mxu0 %v1627
  %v1666 = vpop.f32.mrf.mxu0
  %v1667 = vadd.f32 0.0, %v1666
  %1668 = vdwg.mxu0
  %v1669 = vld [vmem:[%s13] sm:$0xff]
  %v1672 = vrot.slane %v1667, 4
  %v1673 = vsel %vm848, %v1647, %v1672
  %v1675 = vadd.f32 %v1669, %v1673
  %1676 = vst [vmem:[%s13] sm:$0xff] %v1675
  %1677 = vrot.lane.b32.xlu0 %v1620, 112
  %v1678 = vpop.permute.xlu0 %1677
  %v1679 = vsel %vm185, %v1678, 0
  %1681 = vmatpush.msra.mxu0 0.0
  %1682 = vmatpush.msra.mxu0 0.0
  %1683 = vmatpush.msra.mxu0 0.0
  %1684 = vmatpush.msra.mxu0 0.0
  %1685 = vmatpush.msra.mxu0 0.0
  %1686 = vmatpush.msra.mxu0 0.0
  %1687 = vmatpush.msra.mxu0 0.0
  %1688 = vmatpush.msra.mxu0 0.0
  %1689 = vmatpush.msra.mxu0 0.0
  %1690 = vmatpush.msra.mxu0 0.0
  %1691 = vmatpush.msra.mxu0 0.0
  %1692 = vmatpush.msra.mxu0 0.0
  %1693 = vmatpush.msra.mxu0 0.0
  %1694 = vmatpush.msra.mxu0 0.0
  %1695 = vmatpush.msra.mxu0 %v1624
  %1696 = vmatpush.msra.mxu0 %v1622
  %1697 = vmatmul.f32.gmra.mxu0 %v1679
  %v1698 = vpop.f32.mrf.mxu0
  %v1699 = vadd.f32 0.0, %v1698
  %1700 = vdwg.mxu0
  %1701 = vmatpush.msra.mxu0 0.0
  %1702 = vmatpush.msra.mxu0 0.0
  %1703 = vmatpush.msra.mxu0 0.0
  %1704 = vmatpush.msra.mxu0 0.0
  %1705 = vmatpush.msra.mxu0 0.0
  %1706 = vmatpush.msra.mxu0 0.0
  %1707 = vmatpush.msra.mxu0 0.0
  %1708 = vmatpush.msra.mxu0 0.0
  %1709 = vmatpush.msra.mxu0 0.0
  %1710 = vmatpush.msra.mxu0 0.0
  %1711 = vmatpush.msra.mxu0 0.0
  %1712 = vmatpush.msra.mxu0 0.0
  %1713 = vmatpush.msra.mxu0 0.0
  %1714 = vmatpush.msra.mxu0 0.0
  %1715 = vmatpush.msra.mxu0 %v1625
  %1716 = vmatpush.msra.mxu0 %v1623
  %1717 = vmatmul.f32.gmra.mxu0 %v1679
  %v1718 = vpop.f32.mrf.mxu0
  %v1719 = vadd.f32 0.0, %v1718
  %1720 = vdwg.mxu0
  %v1721 = vld [vmem:[%s13 + $0x8] sm:$0xff]
  %v1724 = vrot.slane %v1719, 4
  %v1725 = vsel %vm848, %v1699, %v1724
  %v1727 = vadd.f32 %v1721, %v1725
  %1728 = vst [vmem:[%s13 + $0x8] sm:$0xff] %v1727
  %v1729 = vld [vmem:[%s13] sm:$0xff]
  %v1730 = vld [vmem:[%s13 + $0x8] sm:$0xff]
  %1733 = vst [vmem:[#allocation1] ss:$2 sm:$0xff] %v1729
  %s1734 = scalar_lea.vmem [#allocation1], 16
  %1735 = vst [vmem:[%s1734] ss:$2 sm:$0xff] %v1730
  %v1736 = vld.sshfl [vmem:[#allocation1] sm:$0xff pattern:$0x75316420]
  %v1737 = vld.sshfl [vmem:[#allocation1 + $0x8] sm:$0xff pattern:$0x75316420]
  %v1738 = vld.sshfl [vmem:[#allocation1 + $0x10] sm:$0xff pattern:$0x75316420]
  %v1739 = vld.sshfl [vmem:[#allocation1 + $0x18] sm:$0xff pattern:$0x75316420]
  %v1744 = vsel %vm848, %v1736, 0.0
  %v1745 = vsel %vm848, %v1737, 0.0
  %v1746 = vadd.f32 %v1744, %v1745
  %v1747 = vsel %vm848, %v1738, 0.0
  %v1748 = vadd.f32 %v1746, %v1747
  %v1749 = vsel %vm848, %v1739, 0.0
  %v1750 = vadd.f32 %v1748, %v1749
  %1751 = vadd.xlane.f32.xlu0 %v1750
  %v1752 = vpop.xlane.xlu0 %1751
  %v1753 = vmul.f32 %v1752, 0.001953125
  %v1754 = vmul.f32 %v1729, %v1729
  %v1755 = vmul.f32 %v1730, %v1730
  %1758 = vst [vmem:[#allocation1] ss:$2 sm:$0xff] %v1754
  %s1759 = scalar_lea.vmem [#allocation1], 16
  %1760 = vst [vmem:[%s1759] ss:$2 sm:$0xff] %v1755
  %v1761 = vld.sshfl [vmem:[#allocation1] sm:$0xff pattern:$0x75316420]
  %v1762 = vld.sshfl [vmem:[#allocation1 + $0x8] sm:$0xff pattern:$0x75316420]
  %v1763 = vld.sshfl [vmem:[#allocation1 + $0x10] sm:$0xff pattern:$0x75316420]
  %v1764 = vld.sshfl [vmem:[#allocation1 + $0x18] sm:$0xff pattern:$0x75316420]
  %v1769 = vsel %vm848, %v1761, 0.0
  %v1770 = vsel %vm848, %v1762, 0.0
  %v1771 = vadd.f32 %v1769, %v1770
  %v1772 = vsel %vm848, %v1763, 0.0
  %v1773 = vadd.f32 %v1771, %v1772
  %v1774 = vsel %vm848, %v1764, 0.0
  %v1775 = vadd.f32 %v1773, %v1774
  %1776 = vadd.xlane.f32.xlu0 %v1775
  %v1777 = vpop.xlane.xlu0 %1776
  %v1778 = vmul.f32 %v1777, 0.001953125
  %v1779 = vmul.f32 %v1753, %v1753
  %v1780 = vsub.f32 %v1778, %v1779
  %v1781 = vld [vmem:[%s11] sm:$0xf]
  %v1782 = vadd.f32 %v1780, 1e-05
  %v1783 = vrsqrt.pop %v1782
  %v1784 = vmul.f32 %v1783, %v1782
  %v1785 = vmul.f32 %v1784, %v1783
  %v1786 = vmul.f32 0.5, %v1785
  %v1787 = vsub.f32 1.5, %v1786
  %v1788 = vmul.f32 %v1783, %v1787
  %vm1789 = vweird.f32 %v1782
  %vm1790 = vweird.f32 %v1783
  %vm1791 = vmor %vm1789, %vm1790
  %v1792 = vsel %vm1791, %v1783, %v1788
  %v1793 = vmul.f32 %v1781, %v1792
  %v1794 = vld [vmem:[%s12] sm:$0xf]
  %v1795 = vmul.f32 %v1753, %v1793
  %v1796 = vsub.f32 %v1794, %v1795
  %1798 = vset.pattern.permute.xlu0 0
  %1799 = vperm.xlu0 %1798, %v1793
  %v1800 = vpop.permute.xlu0 %1799
  %v1802 = vunpack.c.l.s4 839922192
  %v1803 = vunpack.c.0.s8 %v1802
  %v1804 = vperm.slane %v1800, %v1803
  %v1806 = vmul.f32 %v1729, %v1804
  %v1807 = vmul.f32 %v1730, %v1804
  %1809 = vset.pattern.permute.xlu0 0
  %1810 = vperm.xlu0 %1809, %v1796
  %v1811 = vpop.permute.xlu0 %1810
  %v1813 = vunpack.c.l.s4 839922192
  %v1814 = vunpack.c.0.s8 %v1813
  %v1815 = vperm.slane %v1811, %v1814
  %v1817 = vadd.f32 %v1806, %v1815
  %v1818 = vadd.f32 %v1807, %v1815
  %1819 = vst [vmem:[%s13] sm:$0xff] %v1817
  %1820 = vst [vmem:[%s13 + $0x8] sm:$0xff] %v1818
  // Predicated region
  $region54: #{_lambda_.3} parent=0 // pred_check
    _
  $region55: #{_lambda_.3} parent=0 // pred_check_branch
    %1822 = sbr.rel (0) target = $region57
  $region56: #{_lambda_.3} parent=0 // pred_region
    _
  $region57: #{_lambda_.3} parent=0 // pred_fallthru
    _
  // Predicated region
  $region58: #{_lambda_.3} parent=0 // pred_check
    _
  $region59: #{_lambda_.3} parent=0 // pred_check_branch
    %1824 = sbr.rel (0) target = $region61
  $region60: #{_lambda_.3} parent=0 // pred_region
    _
  $region61: #{_lambda_.3} parent=0 // pred_fallthru
    _

// kernel: _lambda_.5
$region0: #{_lambda_.5}
  #allocation0 [shape = 'u32[]', space=smem, size = 0x4, offset = 0x4, fixed_abs, tag = 'smem constant byte address 0x4 - core index']
  #allocation1 [shape = 'u32[72,128]{1,0:T(1,128)}', space=vmem, size = 0x9000, scoped, tag = 'internal scratch']
  #allocation2 [shape = 'f32[4,2,26]{2,1,0:T(2,128)}', space=vmem, size = 0x1000, scoped, tag = 'scratch operand']
  #allocation3 [shape = 'f32[2,2,26]{2,1,0:T(2,128)}', space=vmem, size = 0x800, scoped, tag = 'scratch operand']
  #allocation4 [shape = 'f32[2,2,26]{2,1,0:T(2,128)}', space=vmem, size = 0x800, scoped, tag = 'scratch operand']
  #allocation5 [shape = 'f32[36,32]{1,0:T(8,128)}', space=vmem, size = 0x5000, scoped, tag = 'scratch operand']
  #allocation6 [shape = 'f32[18,32]{1,0:T(8,128)}', space=vmem, size = 0x3000, scoped, tag = 'scratch operand']
  #allocation7 [shape = 'f32[18,32]{1,0:T(8,128)}', space=vmem, size = 0x3000, scoped, tag = 'scratch operand']
  %s0 = inlined_call_operand.vmem [shape: f32[4,2,16], index: 0, kind: input, shape index: {}]
  %s1 = inlined_call_operand.vmem [shape: f32[2,2,16], index: 1, kind: input, shape index: {}]
  %s2 = inlined_call_operand.vmem [shape: f32[2,2,16], index: 2, kind: input, shape index: {}]
  %s3 = inlined_call_operand.vmem [shape: f32[2,36], index: 3, kind: input, shape index: {}]
  %s4 = inlined_call_operand.vmem [shape: f32[2,18], index: 4, kind: input, shape index: {}]
  %s5 = inlined_call_operand.vmem [shape: f32[2,18], index: 5, kind: input, shape index: {}]
  %s6 = inlined_call_operand.vmem [shape: f32[3,16], index: 6, kind: input, shape index: {}, may-alias: {6,7,8}]
  %s7 = inlined_call_operand.vmem [shape: f32[3,16], index: 7, kind: input, shape index: {}, may-alias: {6,7,8}]
  %s8 = inlined_call_operand.vmem [shape: f32[3,16], index: 8, kind: input, shape index: {}, may-alias: {6,7,8}]
  %s9 = inlined_call_operand.vmem [shape: f32[2,1], index: 9, kind: input, shape index: {}]
  %s10 = inlined_call_operand.vmem [shape: f32[2,1], index: 10, kind: input, shape index: {}]
  %s11 = inlined_call_operand.vmem [shape: f32[2,32], index: 11, kind: output, shape index: {}]
  %s12 = sld [smem:[#allocation0]]
  $region54: #{_lambda_.5} parent=0
    _
  %s14 = ssub.s32 1, %s12
  %s15 = scalar_select 0, %s14, %s12
  // Predicated region
  $region2: #{_lambda_.5} parent=0 // pred_check
    _
  $region3: #{_lambda_.5} parent=0 // pred_check_branch
    %17 = sbr.rel (0) target = $region5
  $region4: #{_lambda_.5} parent=0 // pred_region
    _
  $region5: #{_lambda_.5} parent=0 // pred_fallthru
    _
  // Predicated region
  $region6: #{_lambda_.5} parent=0 // pred_check
    _
  $region7: #{_lambda_.5} parent=0 // pred_check_branch
    %19 = sbr.rel (0) target = $region9
  $region8: #{_lambda_.5} parent=0 // pred_region
    _
  $region9: #{_lambda_.5} parent=0 // pred_fallthru
    _
  // Predicated region
  $region10: #{_lambda_.5} parent=0 // pred_check
    _
  $region11: #{_lambda_.5} parent=0 // pred_check_branch
    %21 = sbr.rel (0) target = $region13
  $region12: #{_lambda_.5} parent=0 // pred_region
    _
  $region13: #{_lambda_.5} parent=0 // pred_fallthru
    _
  // Predicated region
  $region14: #{_lambda_.5} parent=0 // pred_check
    _
  $region15: #{_lambda_.5} parent=0 // pred_check_branch
    %23 = sbr.rel (0) target = $region17
  $region16: #{_lambda_.5} parent=0 // pred_region
    _
  $region17: #{_lambda_.5} parent=0 // pred_fallthru
    _
  // Predicated region
  $region18: #{_lambda_.5} parent=0 // pred_check
    _
  $region19: #{_lambda_.5} parent=0 // pred_check_branch
    %25 = sbr.rel (0) target = $region21
  $region20: #{_lambda_.5} parent=0 // pred_region
    _
  $region21: #{_lambda_.5} parent=0 // pred_fallthru
    _
  // Predicated region
  $region22: #{_lambda_.5} parent=0 // pred_check
    _
  $region23: #{_lambda_.5} parent=0 // pred_check_branch
    %27 = sbr.rel (0) target = $region25
  $region24: #{_lambda_.5} parent=0 // pred_region
    _
  $region25: #{_lambda_.5} parent=0 // pred_fallthru
    _
  // Predicated region
  $region26: #{_lambda_.5} parent=0 // pred_check
    _
  $region27: #{_lambda_.5} parent=0 // pred_check_branch
    %29 = sbr.rel (0) target = $region29
  $region28: #{_lambda_.5} parent=0 // pred_region
    _
  $region29: #{_lambda_.5} parent=0 // pred_fallthru
    _
  // Predicated region
  $region30: #{_lambda_.5} parent=0 // pred_check
    _
  $region31: #{_lambda_.5} parent=0 // pred_check_branch
    %31 = sbr.rel (0) target = $region33
  $region32: #{_lambda_.5} parent=0 // pred_region
    _
  $region33: #{_lambda_.5} parent=0 // pred_fallthru
    _
  // Predicated region
  $region34: #{_lambda_.5} parent=0 // pred_check
    _
  $region35: #{_lambda_.5} parent=0 // pred_check_branch
    %33 = sbr.rel (0) target = $region37
  $region36: #{_lambda_.5} parent=0 // pred_region
    _
  $region37: #{_lambda_.5} parent=0 // pred_fallthru
    _
  // Predicated region
  $region38: #{_lambda_.5} parent=0 // pred_check
    _
  $region39: #{_lambda_.5} parent=0 // pred_check_branch
    %35 = sbr.rel (0) target = $region41
  $region40: #{_lambda_.5} parent=0 // pred_region
    _
  $region41: #{_lambda_.5} parent=0 // pred_fallthru
    _
  // Predicated region
  $region42: #{_lambda_.5} parent=0 // pred_check
    _
  $region43: #{_lambda_.5} parent=0 // pred_check_branch
    %37 = sbr.rel (0) target = $region45
  $region44: #{_lambda_.5} parent=0 // pred_region
    _
  $region45: #{_lambda_.5} parent=0 // pred_fallthru
    _
  %vm38 = vcmask 33792
  %39 = vst.msk [vmem:[#allocation2] sm:$0x3] %vm38, 0.0
  %40 = vst.msk [vmem:[#allocation2 + $0x2] sm:$0x3] %vm38, 0.0
  %41 = vst.msk [vmem:[#allocation2 + $0x4] sm:$0x3] %vm38, 0.0
  %42 = vst.msk [vmem:[#allocation2 + $0x6] sm:$0x3] %vm38, 0.0
  %vm43 = vcmask 205992
  %44 = vst.msk [vmem:[#allocation2] sm:$0x3] %vm43, 0.0
  %45 = vst.msk [vmem:[#allocation2 + $0x2] sm:$0x3] %vm43, 0.0
  %46 = vst.msk [vmem:[#allocation2 + $0x4] sm:$0x3] %vm43, 0.0
  %47 = vst.msk [vmem:[#allocation2 + $0x6] sm:$0x3] %vm43, 0.0
  %v48 = vld [vmem:[%s0] sm:$0x3]
  %v49 = vld [vmem:[%s0 + $0x2] sm:$0x3]
  %v50 = vld [vmem:[%s0 + $0x4] sm:$0x3]
  %v51 = vld [vmem:[%s0 + $0x6] sm:$0x3]
  %56 = vrot.lane.b32.xlu0 %v48, 5
  %v57 = vpop.permute.xlu0 %56
  %58 = vrot.lane.b32.xlu0 %v49, 5
  %v59 = vpop.permute.xlu0 %58
  %60 = vrot.lane.b32.xlu0 %v50, 5
  %v61 = vpop.permute.xlu0 %60
  %62 = vrot.lane.b32.xlu0 %v51, 5
  %v63 = vpop.permute.xlu0 %62
  %vm68 = vcmask 164904
  %69 = vst.msk [vmem:[#allocation2] sm:$0x3] %vm68, %v57
  %70 = vst.msk [vmem:[#allocation2 + $0x2] sm:$0x3] %vm68, %v59
  %71 = vst.msk [vmem:[#allocation2 + $0x4] sm:$0x3] %vm68, %v61
  %72 = vst.msk [vmem:[#allocation2 + $0x6] sm:$0x3] %vm68, %v63
  %v73 = vld [vmem:[%s6] sm:$0x1]
  %v74 = vld [vmem:[#allocation2] sm:$0x1]
  %v75 = vld [vmem:[#allocation2 + $0x2] sm:$0x1]
  %v76 = vld [vmem:[#allocation2 + $0x4] sm:$0x1]
  %v77 = vld [vmem:[#allocation2 + $0x6] sm:$0x1]
  %v78 = vperm.slane %v73, 0
  %v79 = vmul.f32 %v74, %v78
  %v80 = vmul.f32 %v75, %v78
  %v81 = vmul.f32 %v76, %v78
  %v82 = vmul.f32 %v77, %v78
  %v87 = vrot.slane %v80, 7
  %vm88 = vcmask 1041409
  %v89 = vsel %vm88, %v87, %v79
  %v90 = vrot.slane %v81, 6
  %vm91 = vcmask 1042434
  %v92 = vsel %vm91, %v90, %v89
  %v93 = vrot.slane %v82, 5
  %vm94 = vcmask 1043459
  %v95 = vsel %vm94, %v93, %v92
  %vm97 = vcmask 125952
  %98 = vst.msk [vmem:[#allocation5] sm:$0xf] %vm97, %v95
  %v99 = vld [vmem:[#allocation2 + $0x1] sm:$0x1]
  %v100 = vld [vmem:[#allocation2 + $0x3] sm:$0x1]
  %v101 = vld [vmem:[#allocation2 + $0x5] sm:$0x1]
  %v102 = vld [vmem:[#allocation2 + $0x7] sm:$0x1]
  %v103 = vmul.f32 %v99, %v78
  %v104 = vmul.f32 %v100, %v78
  %v105 = vmul.f32 %v101, %v78
  %v106 = vmul.f32 %v102, %v78
  %v111 = vrot.slane %v104, 7
  %v112 = vsel %vm88, %v111, %v103
  %v113 = vrot.slane %v105, 6
  %v114 = vsel %vm91, %v113, %v112
  %v115 = vrot.slane %v106, 5
  %v116 = vsel %vm94, %v115, %v114
  %117 = vrot.lane.b32.xlu0 %v116, 16
  %v118 = vpop.permute.xlu0 %117
  %vm120 = vcmask 257152
  %121 = vst.msk [vmem:[#allocation5] sm:$0xf] %vm120, %v118
  %v122 = vld [vmem:[#allocation2] sm:$0x1]
  %v123 = vld [vmem:[#allocation2 + $0x2] sm:$0x1]
  %v124 = vld [vmem:[#allocation2 + $0x4] sm:$0x1]
  %v125 = vld [vmem:[#allocation2 + $0x6] sm:$0x1]
  %127 = vrot.lane.b32.xlu0 %v78, 4
  %v128 = vpop.permute.xlu0 %127
  %v130 = vmul.f32 %v122, %v128
  %v131 = vmul.f32 %v123, %v128
  %v132 = vmul.f32 %v124, %v128
  %v133 = vmul.f32 %v125, %v128
  %v138 = vrot.slane %v131, 7
  %v139 = vsel %vm88, %v138, %v130
  %v140 = vrot.slane %v132, 6
  %v141 = vsel %vm91, %v140, %v139
  %v142 = vrot.slane %v133, 5
  %v143 = vsel %vm94, %v142, %v141
  %144 = vrot.lane.b32.xlu0 %v143, 124
  %v145 = vpop.permute.xlu0 %144
  %147 = vst.msk [vmem:[#allocation5 + $0xc] sm:$0xf] %vm97, %v145
  %v148 = vld [vmem:[#allocation2 + $0x1] sm:$0x1]
  %v149 = vld [vmem:[#allocation2 + $0x3] sm:$0x1]
  %v150 = vld [vmem:[#allocation2 + $0x5] sm:$0x1]
  %v151 = vld [vmem:[#allocation2 + $0x7] sm:$0x1]
  %v152 = vmul.f32 %v148, %v128
  %v153 = vmul.f32 %v149, %v128
  %v154 = vmul.f32 %v150, %v128
  %v155 = vmul.f32 %v151, %v128
  %v160 = vrot.slane %v153, 7
  %v161 = vsel %vm88, %v160, %v152
  %v162 = vrot.slane %v154, 6
  %v163 = vsel %vm91, %v162, %v161
  %v164 = vrot.slane %v155, 5
  %v165 = vsel %vm94, %v164, %v163
  %166 = vrot.lane.b32.xlu0 %v165, 12
  %v167 = vpop.permute.xlu0 %166
  %169 = vst.msk [vmem:[#allocation5 + $0xc] sm:$0xf] %vm120, %v167
  %v170 = vld [vmem:[#allocation2] sm:$0x1]
  %v171 = vld [vmem:[#allocation2 + $0x2] sm:$0x1]
  %v172 = vld [vmem:[#allocation2 + $0x4] sm:$0x1]
  %v173 = vld [vmem:[#allocation2 + $0x6] sm:$0x1]
  %174 = vrot.lane.b32.xlu0 %v78, 8
  %v175 = vpop.permute.xlu0 %174
  %v177 = vmul.f32 %v170, %v175
  %v178 = vmul.f32 %v171, %v175
  %v179 = vmul.f32 %v172, %v175
  %v180 = vmul.f32 %v173, %v175
  %v185 = vrot.slane %v178, 7
  %v186 = vsel %vm88, %v185, %v177
  %v187 = vrot.slane %v179, 6
  %v188 = vsel %vm91, %v187, %v186
  %v189 = vrot.slane %v180, 5
  %v190 = vsel %vm94, %v189, %v188
  %191 = vrot.lane.b32.xlu0 %v190, 120
  %v192 = vpop.permute.xlu0 %191
  %194 = vst.msk [vmem:[#allocation5 + $0x18] sm:$0xf] %vm97, %v192
  %v195 = vld [vmem:[#allocation2 + $0x1] sm:$0x1]
  %v196 = vld [vmem:[#allocation2 + $0x3] sm:$0x1]
  %v197 = vld [vmem:[#allocation2 + $0x5] sm:$0x1]
  %v198 = vld [vmem:[#allocation2 + $0x7] sm:$0x1]
  %v199 = vmul.f32 %v195, %v175
  %v200 = vmul.f32 %v196, %v175
  %v201 = vmul.f32 %v197, %v175
  %v202 = vmul.f32 %v198, %v175
  %v207 = vrot.slane %v200, 7
  %v208 = vsel %vm88, %v207, %v199
  %v209 = vrot.slane %v201, 6
  %v210 = vsel %vm91, %v209, %v208
  %v211 = vrot.slane %v202, 5
  %v212 = vsel %vm94, %v211, %v210
  %213 = vrot.lane.b32.xlu0 %v212, 8
  %v214 = vpop.permute.xlu0 %213
  %216 = vst.msk [vmem:[#allocation5 + $0x18] sm:$0xf] %vm120, %v214
  %v217 = vld [vmem:[#allocation2] sm:$0x1]
  %v218 = vld [vmem:[#allocation2 + $0x2] sm:$0x1]
  %v219 = vld [vmem:[#allocation2 + $0x4] sm:$0x1]
  %v220 = vld [vmem:[#allocation2 + $0x6] sm:$0x1]
  %v225 = vrot.slane %v218, 7
  %v226 = vsel %vm88, %v225, %v217
  %v227 = vrot.slane %v219, 6
  %v228 = vsel %vm91, %v227, %v226
  %v229 = vrot.slane %v220, 5
  %v230 = vsel %vm94, %v229, %v228
  %231 = vrot.lane.b32.xlu0 %v230, 127
  %v232 = vpop.permute.xlu0 %231
  %234 = vst.msk [vmem:[#allocation5 + $0x4] sm:$0xf] %vm97, %v232
  %v235 = vld [vmem:[#allocation2 + $0x1] sm:$0x1]
  %v236 = vld [vmem:[#allocation2 + $0x3] sm:$0x1]
  %v237 = vld [vmem:[#allocation2 + $0x5] sm:$0x1]
  %v238 = vld [vmem:[#allocation2 + $0x7] sm:$0x1]
  %v243 = vrot.slane %v236, 7
  %v244 = vsel %vm88, %v243, %v235
  %v245 = vrot.slane %v237, 6
  %v246 = vsel %vm91, %v245, %v244
  %v247 = vrot.slane %v238, 5
  %v248 = vsel %vm94, %v247, %v246
  %249 = vrot.lane.b32.xlu0 %v248, 15
  %v250 = vpop.permute.xlu0 %249
  %252 = vst.msk [vmem:[#allocation5 + $0x4] sm:$0xf] %vm120, %v250
  %v253 = vld [vmem:[#allocation2] sm:$0x1]
  %v254 = vld [vmem:[#allocation2 + $0x2] sm:$0x1]
  %v255 = vld [vmem:[#allocation2 + $0x4] sm:$0x1]
  %v256 = vld [vmem:[#allocation2 + $0x6] sm:$0x1]
  %v261 = vrot.slane %v254, 7
  %v262 = vsel %vm88, %v261, %v253
  %v263 = vrot.slane %v255, 6
  %v264 = vsel %vm91, %v263, %v262
  %v265 = vrot.slane %v256, 5
  %v266 = vsel %vm94, %v265, %v264
  %267 = vrot.lane.b32.xlu0 %v266, 123
  %v268 = vpop.permute.xlu0 %267
  %270 = vst.msk [vmem:[#allocation5 + $0x10] sm:$0xf] %vm97, %v268
  %v271 = vld [vmem:[#allocation2 + $0x1] sm:$0x1]
  %v272 = vld [vmem:[#allocation2 + $0x3] sm:$0x1]
  %v273 = vld [vmem:[#allocation2 + $0x5] sm:$0x1]
  %v274 = vld [vmem:[#allocation2 + $0x7] sm:$0x1]
  %v279 = vrot.slane %v272, 7
  %v280 = vsel %vm88, %v279, %v271
  %v281 = vrot.slane %v273, 6
  %v282 = vsel %vm91, %v281, %v280
  %v283 = vrot.slane %v274, 5
  %v284 = vsel %vm94, %v283, %v282
  %285 = vrot.lane.b32.xlu0 %v284, 11
  %v286 = vpop.permute.xlu0 %285
  %288 = vst.msk [vmem:[#allocation5 + $0x10] sm:$0xf] %vm120, %v286
  %v289 = vld [vmem:[#allocation2] sm:$0x1]
  %v290 = vld [vmem:[#allocation2 + $0x2] sm:$0x1]
  %v291 = vld [vmem:[#allocation2 + $0x4] sm:$0x1]
  %v292 = vld [vmem:[#allocation2 + $0x6] sm:$0x1]
  %v297 = vrot.slane %v290, 7
  %v298 = vsel %vm88, %v297, %v289
  %v299 = vrot.slane %v291, 6
  %v300 = vsel %vm91, %v299, %v298
  %v301 = vrot.slane %v292, 5
  %v302 = vsel %vm94, %v301, %v300
  %303 = vrot.lane.b32.xlu0 %v302, 119
  %v304 = vpop.permute.xlu0 %303
  %306 = vst.msk [vmem:[#allocation5 + $0x1c] sm:$0xf] %vm97, %v304
  %v307 = vld [vmem:[#allocation2 + $0x1] sm:$0x1]
  %v308 = vld [vmem:[#allocation2 + $0x3] sm:$0x1]
  %v309 = vld [vmem:[#allocation2 + $0x5] sm:$0x1]
  %v310 = vld [vmem:[#allocation2 + $0x7] sm:$0x1]
  %v315 = vrot.slane %v308, 7
  %v316 = vsel %vm88, %v315, %v307
  %v317 = vrot.slane %v309, 6
  %v318 = vsel %vm91, %v317, %v316
  %v319 = vrot.slane %v310, 5
  %v320 = vsel %vm94, %v319, %v318
  %321 = vrot.lane.b32.xlu0 %v320, 7
  %v322 = vpop.permute.xlu0 %321
  %324 = vst.msk [vmem:[#allocation5 + $0x1c] sm:$0xf] %vm120, %v322
  %v325 = vld [vmem:[%s6 + $0x2] sm:$0x1]
  %v326 = vld [vmem:[#allocation2] sm:$0x1]
  %v327 = vld [vmem:[#allocation2 + $0x2] sm:$0x1]
  %v328 = vld [vmem:[#allocation2 + $0x4] sm:$0x1]
  %v329 = vld [vmem:[#allocation2 + $0x6] sm:$0x1]
  %v330 = vperm.slane %v325, 0
  %332 = vrot.lane.b32.xlu0 %v330, 2
  %v333 = vpop.permute.xlu0 %332
  %v335 = vmul.f32 %v326, %v333
  %v336 = vmul.f32 %v327, %v333
  %v337 = vmul.f32 %v328, %v333
  %v338 = vmul.f32 %v329, %v333
  %v343 = vrot.slane %v336, 7
  %v344 = vsel %vm88, %v343, %v335
  %v345 = vrot.slane %v337, 6
  %v346 = vsel %vm91, %v345, %v344
  %v347 = vrot.slane %v338, 5
  %v348 = vsel %vm94, %v347, %v346
  %349 = vrot.lane.b32.xlu0 %v348, 126
  %v350 = vpop.permute.xlu0 %349
  %352 = vst.msk [vmem:[#allocation5 + $0x8] sm:$0xf] %vm97, %v350
  %v353 = vld [vmem:[#allocation2 + $0x1] sm:$0x1]
  %v354 = vld [vmem:[#allocation2 + $0x3] sm:$0x1]
  %v355 = vld [vmem:[#allocation2 + $0x5] sm:$0x1]
  %v356 = vld [vmem:[#allocation2 + $0x7] sm:$0x1]
  %v357 = vmul.f32 %v353, %v333
  %v358 = vmul.f32 %v354, %v333
  %v359 = vmul.f32 %v355, %v333
  %v360 = vmul.f32 %v356, %v333
  %v365 = vrot.slane %v358, 7
  %v366 = vsel %vm88, %v365, %v357
  %v367 = vrot.slane %v359, 6
  %v368 = vsel %vm91, %v367, %v366
  %v369 = vrot.slane %v360, 5
  %v370 = vsel %vm94, %v369, %v368
  %371 = vrot.lane.b32.xlu0 %v370, 14
  %v372 = vpop.permute.xlu0 %371
  %374 = vst.msk [vmem:[#allocation5 + $0x8] sm:$0xf] %vm120, %v372
  %v375 = vld [vmem:[#allocation2] sm:$0x1]
  %v376 = vld [vmem:[#allocation2 + $0x2] sm:$0x1]
  %v377 = vld [vmem:[#allocation2 + $0x4] sm:$0x1]
  %v378 = vld [vmem:[#allocation2 + $0x6] sm:$0x1]
  %379 = vrot.lane.b32.xlu0 %v330, 6
  %v380 = vpop.permute.xlu0 %379
  %v382 = vmul.f32 %v375, %v380
  %v383 = vmul.f32 %v376, %v380
  %v384 = vmul.f32 %v377, %v380
  %v385 = vmul.f32 %v378, %v380
  %v390 = vrot.slane %v383, 7
  %v391 = vsel %vm88, %v390, %v382
  %v392 = vrot.slane %v384, 6
  %v393 = vsel %vm91, %v392, %v391
  %v394 = vrot.slane %v385, 5
  %v395 = vsel %vm94, %v394, %v393
  %396 = vrot.lane.b32.xlu0 %v395, 122
  %v397 = vpop.permute.xlu0 %396
  %399 = vst.msk [vmem:[#allocation5 + $0x14] sm:$0xf] %vm97, %v397
  %v400 = vld [vmem:[#allocation2 + $0x1] sm:$0x1]
  %v401 = vld [vmem:[#allocation2 + $0x3] sm:$0x1]
  %v402 = vld [vmem:[#allocation2 + $0x5] sm:$0x1]
  %v403 = vld [vmem:[#allocation2 + $0x7] sm:$0x1]
  %v404 = vmul.f32 %v400, %v380
  %v405 = vmul.f32 %v401, %v380
  %v406 = vmul.f32 %v402, %v380
  %v407 = vmul.f32 %v403, %v380
  %v412 = vrot.slane %v405, 7
  %v413 = vsel %vm88, %v412, %v404
  %v414 = vrot.slane %v406, 6
  %v415 = vsel %vm91, %v414, %v413
  %v416 = vrot.slane %v407, 5
  %v417 = vsel %vm94, %v416, %v415
  %418 = vrot.lane.b32.xlu0 %v417, 10
  %v419 = vpop.permute.xlu0 %418
  %421 = vst.msk [vmem:[#allocation5 + $0x14] sm:$0xf] %vm120, %v419
  %v422 = vld [vmem:[#allocation2] sm:$0x1]
  %v423 = vld [vmem:[#allocation2 + $0x2] sm:$0x1]
  %v424 = vld [vmem:[#allocation2 + $0x4] sm:$0x1]
  %v425 = vld [vmem:[#allocation2 + $0x6] sm:$0x1]
  %426 = vrot.lane.b32.xlu0 %v330, 10
  %v427 = vpop.permute.xlu0 %426
  %v429 = vmul.f32 %v422, %v427
  %v430 = vmul.f32 %v423, %v427
  %v431 = vmul.f32 %v424, %v427
  %v432 = vmul.f32 %v425, %v427
  %v437 = vrot.slane %v430, 7
  %v438 = vsel %vm88, %v437, %v429
  %v439 = vrot.slane %v431, 6
  %v440 = vsel %vm91, %v439, %v438
  %v441 = vrot.slane %v432, 5
  %v442 = vsel %vm94, %v441, %v440
  %443 = vrot.lane.b32.xlu0 %v442, 118
  %v444 = vpop.permute.xlu0 %443
  %446 = vst.msk [vmem:[#allocation5 + $0x20] sm:$0xf] %vm97, %v444
  %v447 = vld [vmem:[#allocation2 + $0x1] sm:$0x1]
  %v448 = vld [vmem:[#allocation2 + $0x3] sm:$0x1]
  %v449 = vld [vmem:[#allocation2 + $0x5] sm:$0x1]
  %v450 = vld [vmem:[#allocation2 + $0x7] sm:$0x1]
  %v451 = vmul.f32 %v447, %v427
  %v452 = vmul.f32 %v448, %v427
  %v453 = vmul.f32 %v449, %v427
  %v454 = vmul.f32 %v450, %v427
  %v459 = vrot.slane %v452, 7
  %v460 = vsel %vm88, %v459, %v451
  %v461 = vrot.slane %v453, 6
  %v462 = vsel %vm91, %v461, %v460
  %v463 = vrot.slane %v454, 5
  %v464 = vsel %vm94, %v463, %v462
  %465 = vrot.lane.b32.xlu0 %v464, 6
  %v466 = vpop.permute.xlu0 %465
  %468 = vst.msk [vmem:[#allocation5 + $0x20] sm:$0xf] %vm120, %v466
  %v469 = vld [vmem:[%s3] sm:$0x3]
  %v470 = vld [vmem:[#allocation5] sm:$0xff]
  %v471 = vld [vmem:[#allocation5 + $0x8] sm:$0xff]
  %v472 = vld [vmem:[#allocation5 + $0x10] sm:$0xff]
  %v473 = vld [vmem:[#allocation5 + $0x18] sm:$0xff]
  %v474 = vld [vmem:[#allocation5 + $0x20] sm:$0xf]
  %vm475 = vcmask 293888
  %v477 = vsel %vm475, %v469, 0
  %vm479 = vcmask 1043456
  %v481 = vsel %vm479, %v474, 0
  %483 = vmatpush.msra.mxu0 0.0
  %484 = vmatpush.msra.mxu0 0.0
  %485 = vmatpush.msra.mxu0 0.0
  %486 = vmatpush.msra.mxu0 0.0
  %487 = vmatpush.msra.mxu0 0.0
  %488 = vmatpush.msra.mxu0 0.0
  %489 = vmatpush.msra.mxu0 0.0
  %490 = vmatpush.msra.mxu0 0.0
  %491 = vmatpush.msra.mxu0 0.0
  %492 = vmatpush.msra.mxu0 0.0
  %493 = vmatpush.msra.mxu0 0.0
  %494 = vmatpush.msra.mxu0 %v481
  %495 = vmatpush.msra.mxu0 %v473
  %496 = vmatpush.msra.mxu0 %v472
  %497 = vmatpush.msra.mxu0 %v471
  %498 = vmatpush.msra.mxu0 %v470
  %499 = vmatmul.f32.gmra.mxu0 %v477
  %v500 = vpop.f32.mrf.mxu0
  %v501 = vadd.f32 0.0, %v500
  %502 = vdwg.mxu0
  %vm503 = vcmask 254976
  %504 = vst.msk [vmem:[%s11] sm:$0x3] %vm503, %v501
  %505 = vst.msk [vmem:[#allocation3] sm:$0x3] %vm38, 0.0
  %506 = vst.msk [vmem:[#allocation3 + $0x2] sm:$0x3] %vm38, 0.0
  %507 = vst.msk [vmem:[#allocation3] sm:$0x3] %vm43, 0.0
  %508 = vst.msk [vmem:[#allocation3 + $0x2] sm:$0x3] %vm43, 0.0
  %v509 = vld [vmem:[%s1] sm:$0x3]
  %v510 = vld [vmem:[%s1 + $0x2] sm:$0x3]
  %513 = vrot.lane.b32.xlu0 %v509, 5
  %v514 = vpop.permute.xlu0 %513
  %515 = vrot.lane.b32.xlu0 %v510, 5
  %v516 = vpop.permute.xlu0 %515
  %519 = vst.msk [vmem:[#allocation3] sm:$0x3] %vm68, %v514
  %520 = vst.msk [vmem:[#allocation3 + $0x2] sm:$0x3] %vm68, %v516
  %v521 = vld [vmem:[%s7] sm:$0x1]
  %v522 = vld [vmem:[#allocation3] sm:$0x1]
  %v523 = vld [vmem:[#allocation3 + $0x2] sm:$0x1]
  %v524 = vperm.slane %v521, 0
  %v525 = vmul.f32 %v522, %v524
  %v526 = vmul.f32 %v523, %v524
  %v529 = vrot.slane %v526, 7
  %v530 = vsel %vm88, %v529, %v525
  %vm532 = vcmask 123904
  %533 = vst.msk [vmem:[#allocation6] sm:$0x3] %vm532, %v530
  %v534 = vld [vmem:[#allocation3 + $0x1] sm:$0x1]
  %v535 = vld [vmem:[#allocation3 + $0x3] sm:$0x1]
  %v536 = vmul.f32 %v534, %v524
  %v537 = vmul.f32 %v535, %v524
  %v540 = vrot.slane %v537, 7
  %v541 = vsel %vm88, %v540, %v536
  %542 = vrot.lane.b32.xlu0 %v541, 16
  %v543 = vpop.permute.xlu0 %542
  %vm545 = vcmask 255104
  %546 = vst.msk [vmem:[#allocation6] sm:$0x3] %vm545, %v543
  %v547 = vld [vmem:[#allocation3] sm:$0x1]
  %v548 = vld [vmem:[#allocation3 + $0x2] sm:$0x1]
  %550 = vrot.lane.b32.xlu0 %v524, 4
  %v551 = vpop.permute.xlu0 %550
  %v553 = vmul.f32 %v547, %v551
  %v554 = vmul.f32 %v548, %v551
  %v557 = vrot.slane %v554, 7
  %v558 = vsel %vm88, %v557, %v553
  %559 = vrot.lane.b32.xlu0 %v558, 124
  %v560 = vpop.permute.xlu0 %559
  %562 = vst.msk [vmem:[#allocation6 + $0x6] sm:$0x3] %vm532, %v560
  %v563 = vld [vmem:[#allocation3 + $0x1] sm:$0x1]
  %v564 = vld [vmem:[#allocation3 + $0x3] sm:$0x1]
  %v565 = vmul.f32 %v563, %v551
  %v566 = vmul.f32 %v564, %v551
  %v569 = vrot.slane %v566, 7
  %v570 = vsel %vm88, %v569, %v565
  %571 = vrot.lane.b32.xlu0 %v570, 12
  %v572 = vpop.permute.xlu0 %571
  %574 = vst.msk [vmem:[#allocation6 + $0x6] sm:$0x3] %vm545, %v572
  %v575 = vld [vmem:[#allocation3] sm:$0x1]
  %v576 = vld [vmem:[#allocation3 + $0x2] sm:$0x1]
  %577 = vrot.lane.b32.xlu0 %v524, 8
  %v578 = vpop.permute.xlu0 %577
  %v580 = vmul.f32 %v575, %v578
  %v581 = vmul.f32 %v576, %v578
  %v584 = vrot.slane %v581, 7
  %v585 = vsel %vm88, %v584, %v580
  %586 = vrot.lane.b32.xlu0 %v585, 120
  %v587 = vpop.permute.xlu0 %586
  %589 = vst.msk [vmem:[#allocation6 + $0xc] sm:$0x3] %vm532, %v587
  %v590 = vld [vmem:[#allocation3 + $0x1] sm:$0x1]
  %v591 = vld [vmem:[#allocation3 + $0x3] sm:$0x1]
  %v592 = vmul.f32 %v590, %v578
  %v593 = vmul.f32 %v591, %v578
  %v596 = vrot.slane %v593, 7
  %v597 = vsel %vm88, %v596, %v592
  %598 = vrot.lane.b32.xlu0 %v597, 8
  %v599 = vpop.permute.xlu0 %598
  %601 = vst.msk [vmem:[#allocation6 + $0xc] sm:$0x3] %vm545, %v599
  %v602 = vld [vmem:[#allocation3] sm:$0x1]
  %v603 = vld [vmem:[#allocation3 + $0x2] sm:$0x1]
  %v606 = vrot.slane %v603, 7
  %v607 = vsel %vm88, %v606, %v602
  %608 = vrot.lane.b32.xlu0 %v607, 127
  %v609 = vpop.permute.xlu0 %608
  %611 = vst.msk [vmem:[#allocation6 + $0x2] sm:$0x3] %vm532, %v609
  %v612 = vld [vmem:[#allocation3 + $0x1] sm:$0x1]
  %v613 = vld [vmem:[#allocation3 + $0x3] sm:$0x1]
  %v616 = vrot.slane %v613, 7
  %v617 = vsel %vm88, %v616, %v612
  %618 = vrot.lane.b32.xlu0 %v617, 15
  %v619 = vpop.permute.xlu0 %618
  %621 = vst.msk [vmem:[#allocation6 + $0x2] sm:$0x3] %vm545, %v619
  %v622 = vld [vmem:[#allocation3] sm:$0x1]
  %v623 = vld [vmem:[#allocation3 + $0x2] sm:$0x1]
  %v626 = vrot.slane %v623, 7
  %v627 = vsel %vm88, %v626, %v622
  %628 = vrot.lane.b32.xlu0 %v627, 123
  %v629 = vpop.permute.xlu0 %628
  %631 = vst.msk [vmem:[#allocation6 + $0x8] sm:$0x3] %vm532, %v629
  %v632 = vld [vmem:[#allocation3 + $0x1] sm:$0x1]
  %v633 = vld [vmem:[#allocation3 + $0x3] sm:$0x1]
  %v636 = vrot.slane %v633, 7
  %v637 = vsel %vm88, %v636, %v632
  %638 = vrot.lane.b32.xlu0 %v637, 11
  %v639 = vpop.permute.xlu0 %638
  %641 = vst.msk [vmem:[#allocation6 + $0x8] sm:$0x3] %vm545, %v639
  %v642 = vld [vmem:[#allocation3] sm:$0x1]
  %v643 = vld [vmem:[#allocation3 + $0x2] sm:$0x1]
  %v646 = vrot.slane %v643, 7
  %v647 = vsel %vm88, %v646, %v642
  %648 = vrot.lane.b32.xlu0 %v647, 119
  %v649 = vpop.permute.xlu0 %648
  %651 = vst.msk [vmem:[#allocation6 + $0xe] sm:$0x3] %vm532, %v649
  %v652 = vld [vmem:[#allocation3 + $0x1] sm:$0x1]
  %v653 = vld [vmem:[#allocation3 + $0x3] sm:$0x1]
  %v656 = vrot.slane %v653, 7
  %v657 = vsel %vm88, %v656, %v652
  %658 = vrot.lane.b32.xlu0 %v657, 7
  %v659 = vpop.permute.xlu0 %658
  %661 = vst.msk [vmem:[#allocation6 + $0xe] sm:$0x3] %vm545, %v659
  %v662 = vld [vmem:[%s7 + $0x2] sm:$0x1]
  %v663 = vld [vmem:[#allocation3] sm:$0x1]
  %v664 = vld [vmem:[#allocation3 + $0x2] sm:$0x1]
  %v665 = vperm.slane %v662, 0
  %667 = vrot.lane.b32.xlu0 %v665, 2
  %v668 = vpop.permute.xlu0 %667
  %v670 = vmul.f32 %v663, %v668
  %v671 = vmul.f32 %v664, %v668
  %v674 = vrot.slane %v671, 7
  %v675 = vsel %vm88, %v674, %v670
  %676 = vrot.lane.b32.xlu0 %v675, 126
  %v677 = vpop.permute.xlu0 %676
  %679 = vst.msk [vmem:[#allocation6 + $0x4] sm:$0x3] %vm532, %v677
  %v680 = vld [vmem:[#allocation3 + $0x1] sm:$0x1]
  %v681 = vld [vmem:[#allocation3 + $0x3] sm:$0x1]
  %v682 = vmul.f32 %v680, %v668
  %v683 = vmul.f32 %v681, %v668
  %v686 = vrot.slane %v683, 7
  %v687 = vsel %vm88, %v686, %v682
  %688 = vrot.lane.b32.xlu0 %v687, 14
  %v689 = vpop.permute.xlu0 %688
  %691 = vst.msk [vmem:[#allocation6 + $0x4] sm:$0x3] %vm545, %v689
  %v692 = vld [vmem:[#allocation3] sm:$0x1]
  %v693 = vld [vmem:[#allocation3 + $0x2] sm:$0x1]
  %694 = vrot.lane.b32.xlu0 %v665, 6
  %v695 = vpop.permute.xlu0 %694
  %v697 = vmul.f32 %v692, %v695
  %v698 = vmul.f32 %v693, %v695
  %v701 = vrot.slane %v698, 7
  %v702 = vsel %vm88, %v701, %v697
  %703 = vrot.lane.b32.xlu0 %v702, 122
  %v704 = vpop.permute.xlu0 %703
  %706 = vst.msk [vmem:[#allocation6 + $0xa] sm:$0x3] %vm532, %v704
  %v707 = vld [vmem:[#allocation3 + $0x1] sm:$0x1]
  %v708 = vld [vmem:[#allocation3 + $0x3] sm:$0x1]
  %v709 = vmul.f32 %v707, %v695
  %v710 = vmul.f32 %v708, %v695
  %v713 = vrot.slane %v710, 7
  %v714 = vsel %vm88, %v713, %v709
  %715 = vrot.lane.b32.xlu0 %v714, 10
  %v716 = vpop.permute.xlu0 %715
  %718 = vst.msk [vmem:[#allocation6 + $0xa] sm:$0x3] %vm545, %v716
  %v719 = vld [vmem:[#allocation3] sm:$0x1]
  %v720 = vld [vmem:[#allocation3 + $0x2] sm:$0x1]
  %721 = vrot.lane.b32.xlu0 %v665, 10
  %v722 = vpop.permute.xlu0 %721
  %v724 = vmul.f32 %v719, %v722
  %v725 = vmul.f32 %v720, %v722
  %v728 = vrot.slane %v725, 7
  %v729 = vsel %vm88, %v728, %v724
  %730 = vrot.lane.b32.xlu0 %v729, 118
  %v731 = vpop.permute.xlu0 %730
  %733 = vst.msk [vmem:[#allocation6 + $0x10] sm:$0x3] %vm532, %v731
  %v734 = vld [vmem:[#allocation3 + $0x1] sm:$0x1]
  %v735 = vld [vmem:[#allocation3 + $0x3] sm:$0x1]
  %v736 = vmul.f32 %v734, %v722
  %v737 = vmul.f32 %v735, %v722
  %v740 = vrot.slane %v737, 7
  %v741 = vsel %vm88, %v740, %v736
  %742 = vrot.lane.b32.xlu0 %v741, 6
  %v743 = vpop.permute.xlu0 %742
  %745 = vst.msk [vmem:[#allocation6 + $0x10] sm:$0x3] %vm545, %v743
  %v746 = vld [vmem:[%s4] sm:$0x3]
  %v747 = vld [vmem:[#allocation6] sm:$0xff]
  %v748 = vld [vmem:[#allocation6 + $0x8] sm:$0xff]
  %v749 = vld [vmem:[#allocation6 + $0x10] sm:$0x3]
  %vm750 = vcmask 146432
  %v752 = vsel %vm750, %v746, 0
  %vm754 = vcmask 1041408
  %v756 = vsel %vm754, %v749, 0
  %758 = vmatpush.msra.mxu0 0.0
  %759 = vmatpush.msra.mxu0 0.0
  %760 = vmatpush.msra.mxu0 0.0
  %761 = vmatpush.msra.mxu0 0.0
  %762 = vmatpush.msra.mxu0 0.0
  %763 = vmatpush.msra.mxu0 0.0
  %764 = vmatpush.msra.mxu0 0.0
  %765 = vmatpush.msra.mxu0 0.0
  %766 = vmatpush.msra.mxu0 0.0
  %767 = vmatpush.msra.mxu0 0.0
  %768 = vmatpush.msra.mxu0 0.0
  %769 = vmatpush.msra.mxu0 0.0
  %770 = vmatpush.msra.mxu0 0.0
  %771 = vmatpush.msra.mxu0 %v756
  %772 = vmatpush.msra.mxu0 %v748
  %773 = vmatpush.msra.mxu0 %v747
  %774 = vmatmul.f32.gmra.mxu0 %v752
  %v775 = vpop.f32.mrf.mxu0
  %v776 = vadd.f32 0.0, %v775
  %777 = vdwg.mxu0
  %v778 = vld [vmem:[%s11] sm:$0x3]
  %v779 = vadd.f32 %v778, %v776
  %780 = vst.msk [vmem:[%s11] sm:$0x3] %vm503, %v779
  %781 = vst.msk [vmem:[#allocation4] sm:$0x3] %vm38, 0.0
  %782 = vst.msk [vmem:[#allocation4 + $0x2] sm:$0x3] %vm38, 0.0
  %783 = vst.msk [vmem:[#allocation4] sm:$0x3] %vm43, 0.0
  %784 = vst.msk [vmem:[#allocation4 + $0x2] sm:$0x3] %vm43, 0.0
  %v785 = vld [vmem:[%s2] sm:$0x3]
  %v786 = vld [vmem:[%s2 + $0x2] sm:$0x3]
  %789 = vrot.lane.b32.xlu0 %v785, 5
  %v790 = vpop.permute.xlu0 %789
  %791 = vrot.lane.b32.xlu0 %v786, 5
  %v792 = vpop.permute.xlu0 %791
  %795 = vst.msk [vmem:[#allocation4] sm:$0x3] %vm68, %v790
  %796 = vst.msk [vmem:[#allocation4 + $0x2] sm:$0x3] %vm68, %v792
  %v797 = vld [vmem:[%s8] sm:$0x1]
  %v798 = vld [vmem:[#allocation4] sm:$0x1]
  %v799 = vld [vmem:[#allocation4 + $0x2] sm:$0x1]
  %v800 = vperm.slane %v797, 0
  %v801 = vmul.f32 %v798, %v800
  %v802 = vmul.f32 %v799, %v800
  %v805 = vrot.slane %v802, 7
  %v806 = vsel %vm88, %v805, %v801
  %808 = vst.msk [vmem:[#allocation7] sm:$0x3] %vm532, %v806
  %v809 = vld [vmem:[#allocation4 + $0x1] sm:$0x1]
  %v810 = vld [vmem:[#allocation4 + $0x3] sm:$0x1]
  %v811 = vmul.f32 %v809, %v800
  %v812 = vmul.f32 %v810, %v800
  %v815 = vrot.slane %v812, 7
  %v816 = vsel %vm88, %v815, %v811
  %817 = vrot.lane.b32.xlu0 %v816, 16
  %v818 = vpop.permute.xlu0 %817
  %820 = vst.msk [vmem:[#allocation7] sm:$0x3] %vm545, %v818
  %v821 = vld [vmem:[#allocation4] sm:$0x1]
  %v822 = vld [vmem:[#allocation4 + $0x2] sm:$0x1]
  %824 = vrot.lane.b32.xlu0 %v800, 4
  %v825 = vpop.permute.xlu0 %824
  %v827 = vmul.f32 %v821, %v825
  %v828 = vmul.f32 %v822, %v825
  %v831 = vrot.slane %v828, 7
  %v832 = vsel %vm88, %v831, %v827
  %833 = vrot.lane.b32.xlu0 %v832, 124
  %v834 = vpop.permute.xlu0 %833
  %836 = vst.msk [vmem:[#allocation7 + $0x6] sm:$0x3] %vm532, %v834
  %v837 = vld [vmem:[#allocation4 + $0x1] sm:$0x1]
  %v838 = vld [vmem:[#allocation4 + $0x3] sm:$0x1]
  %v839 = vmul.f32 %v837, %v825
  %v840 = vmul.f32 %v838, %v825
  %v843 = vrot.slane %v840, 7
  %v844 = vsel %vm88, %v843, %v839
  %845 = vrot.lane.b32.xlu0 %v844, 12
  %v846 = vpop.permute.xlu0 %845
  %848 = vst.msk [vmem:[#allocation7 + $0x6] sm:$0x3] %vm545, %v846
  %v849 = vld [vmem:[#allocation4] sm:$0x1]
  %v850 = vld [vmem:[#allocation4 + $0x2] sm:$0x1]
  %851 = vrot.lane.b32.xlu0 %v800, 8
  %v852 = vpop.permute.xlu0 %851
  %v854 = vmul.f32 %v849, %v852
  %v855 = vmul.f32 %v850, %v852
  %v858 = vrot.slane %v855, 7
  %v859 = vsel %vm88, %v858, %v854
  %860 = vrot.lane.b32.xlu0 %v859, 120
  %v861 = vpop.permute.xlu0 %860
  %863 = vst.msk [vmem:[#allocation7 + $0xc] sm:$0x3] %vm532, %v861
  %v864 = vld [vmem:[#allocation4 + $0x1] sm:$0x1]
  %v865 = vld [vmem:[#allocation4 + $0x3] sm:$0x1]
  %v866 = vmul.f32 %v864, %v852
  %v867 = vmul.f32 %v865, %v852
  %v870 = vrot.slane %v867, 7
  %v871 = vsel %vm88, %v870, %v866
  %872 = vrot.lane.b32.xlu0 %v871, 8
  %v873 = vpop.permute.xlu0 %872
  %875 = vst.msk [vmem:[#allocation7 + $0xc] sm:$0x3] %vm545, %v873
  %v876 = vld [vmem:[#allocation4] sm:$0x1]
  %v877 = vld [vmem:[#allocation4 + $0x2] sm:$0x1]
  %v880 = vrot.slane %v877, 7
  %v881 = vsel %vm88, %v880, %v876
  %882 = vrot.lane.b32.xlu0 %v881, 127
  %v883 = vpop.permute.xlu0 %882
  %885 = vst.msk [vmem:[#allocation7 + $0x2] sm:$0x3] %vm532, %v883
  %v886 = vld [vmem:[#allocation4 + $0x1] sm:$0x1]
  %v887 = vld [vmem:[#allocation4 + $0x3] sm:$0x1]
  %v890 = vrot.slane %v887, 7
  %v891 = vsel %vm88, %v890, %v886
  %892 = vrot.lane.b32.xlu0 %v891, 15
  %v893 = vpop.permute.xlu0 %892
  %895 = vst.msk [vmem:[#allocation7 + $0x2] sm:$0x3] %vm545, %v893
  %v896 = vld [vmem:[#allocation4] sm:$0x1]
  %v897 = vld [vmem:[#allocation4 + $0x2] sm:$0x1]
  %v900 = vrot.slane %v897, 7
  %v901 = vsel %vm88, %v900, %v896
  %902 = vrot.lane.b32.xlu0 %v901, 123
  %v903 = vpop.permute.xlu0 %902
  %905 = vst.msk [vmem:[#allocation7 + $0x8] sm:$0x3] %vm532, %v903
  %v906 = vld [vmem:[#allocation4 + $0x1] sm:$0x1]
  %v907 = vld [vmem:[#allocation4 + $0x3] sm:$0x1]
  %v910 = vrot.slane %v907, 7
  %v911 = vsel %vm88, %v910, %v906
  %912 = vrot.lane.b32.xlu0 %v911, 11
  %v913 = vpop.permute.xlu0 %912
  %915 = vst.msk [vmem:[#allocation7 + $0x8] sm:$0x3] %vm545, %v913
  %v916 = vld [vmem:[#allocation4] sm:$0x1]
  %v917 = vld [vmem:[#allocation4 + $0x2] sm:$0x1]
  %v920 = vrot.slane %v917, 7
  %v921 = vsel %vm88, %v920, %v916
  %922 = vrot.lane.b32.xlu0 %v921, 119
  %v923 = vpop.permute.xlu0 %922
  %925 = vst.msk [vmem:[#allocation7 + $0xe] sm:$0x3] %vm532, %v923
  %v926 = vld [vmem:[#allocation4 + $0x1] sm:$0x1]
  %v927 = vld [vmem:[#allocation4 + $0x3] sm:$0x1]
  %v930 = vrot.slane %v927, 7
  %v931 = vsel %vm88, %v930, %v926
  %932 = vrot.lane.b32.xlu0 %v931, 7
  %v933 = vpop.permute.xlu0 %932
  %935 = vst.msk [vmem:[#allocation7 + $0xe] sm:$0x3] %vm545, %v933
  %v936 = vld [vmem:[%s8 + $0x2] sm:$0x1]
  %v937 = vld [vmem:[#allocation4] sm:$0x1]
  %v938 = vld [vmem:[#allocation4 + $0x2] sm:$0x1]
  %v939 = vperm.slane %v936, 0
  %941 = vrot.lane.b32.xlu0 %v939, 2
  %v942 = vpop.permute.xlu0 %941
  %v944 = vmul.f32 %v937, %v942
  %v945 = vmul.f32 %v938, %v942
  %v948 = vrot.slane %v945, 7
  %v949 = vsel %vm88, %v948, %v944
  %950 = vrot.lane.b32.xlu0 %v949, 126
  %v951 = vpop.permute.xlu0 %950
  %953 = vst.msk [vmem:[#allocation7 + $0x4] sm:$0x3] %vm532, %v951
  %v954 = vld [vmem:[#allocation4 + $0x1] sm:$0x1]
  %v955 = vld [vmem:[#allocation4 + $0x3] sm:$0x1]
  %v956 = vmul.f32 %v954, %v942
  %v957 = vmul.f32 %v955, %v942
  %v960 = vrot.slane %v957, 7
  %v961 = vsel %vm88, %v960, %v956
  %962 = vrot.lane.b32.xlu0 %v961, 14
  %v963 = vpop.permute.xlu0 %962
  %965 = vst.msk [vmem:[#allocation7 + $0x4] sm:$0x3] %vm545, %v963
  %v966 = vld [vmem:[#allocation4] sm:$0x1]
  %v967 = vld [vmem:[#allocation4 + $0x2] sm:$0x1]
  %968 = vrot.lane.b32.xlu0 %v939, 6
  %v969 = vpop.permute.xlu0 %968
  %v971 = vmul.f32 %v966, %v969
  %v972 = vmul.f32 %v967, %v969
  %v975 = vrot.slane %v972, 7
  %v976 = vsel %vm88, %v975, %v971
  %977 = vrot.lane.b32.xlu0 %v976, 122
  %v978 = vpop.permute.xlu0 %977
  %980 = vst.msk [vmem:[#allocation7 + $0xa] sm:$0x3] %vm532, %v978
  %v981 = vld [vmem:[#allocation4 + $0x1] sm:$0x1]
  %v982 = vld [vmem:[#allocation4 + $0x3] sm:$0x1]
  %v983 = vmul.f32 %v981, %v969
  %v984 = vmul.f32 %v982, %v969
  %v987 = vrot.slane %v984, 7
  %v988 = vsel %vm88, %v987, %v983
  %989 = vrot.lane.b32.xlu0 %v988, 10
  %v990 = vpop.permute.xlu0 %989
  %992 = vst.msk [vmem:[#allocation7 + $0xa] sm:$0x3] %vm545, %v990
  %v993 = vld [vmem:[#allocation4] sm:$0x1]
  %v994 = vld [vmem:[#allocation4 + $0x2] sm:$0x1]
  %995 = vrot.lane.b32.xlu0 %v939, 10
  %v996 = vpop.permute.xlu0 %995
  %v998 = vmul.f32 %v993, %v996
  %v999 = vmul.f32 %v994, %v996
  %v1002 = vrot.slane %v999, 7
  %v1003 = vsel %vm88, %v1002, %v998
  %1004 = vrot.lane.b32.xlu0 %v1003, 118
  %v1005 = vpop.permute.xlu0 %1004
  %1007 = vst.msk [vmem:[#allocation7 + $0x10] sm:$0x3] %vm532, %v1005
  %v1008 = vld [vmem:[#allocation4 + $0x1] sm:$0x1]
  %v1009 = vld [vmem:[#allocation4 + $0x3] sm:$0x1]
  %v1010 = vmul.f32 %v1008, %v996
  %v1011 = vmul.f32 %v1009, %v996
  %v1014 = vrot.slane %v1011, 7
  %v1015 = vsel %vm88, %v1014, %v1010
  %1016 = vrot.lane.b32.xlu0 %v1015, 6
  %v1017 = vpop.permute.xlu0 %1016
  %1019 = vst.msk [vmem:[#allocation7 + $0x10] sm:$0x3] %vm545, %v1017
  %v1020 = vld [vmem:[%s5] sm:$0x3]
  %v1021 = vld [vmem:[#allocation7] sm:$0xff]
  %v1022 = vld [vmem:[#allocation7 + $0x8] sm:$0xff]
  %v1023 = vld [vmem:[#allocation7 + $0x10] sm:$0x3]
  %v1025 = vsel %vm750, %v1020, 0
  %v1028 = vsel %vm754, %v1023, 0
  %1030 = vmatpush.msra.mxu0 0.0
  %1031 = vmatpush.msra.mxu0 0.0
  %1032 = vmatpush.msra.mxu0 0.0
  %1033 = vmatpush.msra.mxu0 0.0
  %1034 = vmatpush.msra.mxu0 0.0
  %1035 = vmatpush.msra.mxu0 0.0
  %1036 = vmatpush.msra.mxu0 0.0
  %1037 = vmatpush.msra.mxu0 0.0
  %1038 = vmatpush.msra.mxu0 0.0
  %1039 = vmatpush.msra.mxu0 0.0
  %1040 = vmatpush.msra.mxu0 0.0
  %1041 = vmatpush.msra.mxu0 0.0
  %1042 = vmatpush.msra.mxu0 0.0
  %1043 = vmatpush.msra.mxu0 %v1028
  %1044 = vmatpush.msra.mxu0 %v1022
  %1045 = vmatpush.msra.mxu0 %v1021
  %1046 = vmatmul.f32.gmra.mxu0 %v1025
  %v1047 = vpop.f32.mrf.mxu0
  %v1048 = vadd.f32 0.0, %v1047
  %1049 = vdwg.mxu0
  %v1050 = vld [vmem:[%s11] sm:$0x3]
  %v1051 = vadd.f32 %v1050, %v1048
  %1052 = vst.msk [vmem:[%s11] sm:$0x3] %vm503, %v1051
  %v1053 = vld [vmem:[%s11] sm:$0x3]
  %v1054 = vsel %vm503, %v1053, 0.0
  %1055 = vadd.xlane.f32.xlu0 %v1054
  %v1056 = vpop.xlane.xlu0 %1055
  %v1057 = vmul.f32 %v1056, 0.03125
  %v1058 = vmul.f32 %v1053, %v1053
  %v1059 = vsel %vm503, %v1058, 0.0
  %1060 = vadd.xlane.f32.xlu0 %v1059
  %v1061 = vpop.xlane.xlu0 %1060
  %v1062 = vmul.f32 %v1061, 0.03125
  %v1063 = vmul.f32 %v1057, %v1057
  %v1064 = vsub.f32 %v1062, %v1063
  %v1065 = vld [vmem:[%s9] sm:$0x3]
  %v1066 = vadd.f32 %v1064, 1e-05
  %v1067 = vrsqrt.pop %v1066
  %v1068 = vmul.f32 %v1067, %v1066
  %v1069 = vmul.f32 %v1068, %v1067
  %v1070 = vmul.f32 0.5, %v1069
  %v1071 = vsub.f32 1.5, %v1070
  %v1072 = vmul.f32 %v1067, %v1071
  %vm1073 = vweird.f32 %v1066
  %vm1074 = vweird.f32 %v1067
  %vm1075 = vmor %vm1073, %vm1074
  %v1076 = vsel %vm1075, %v1067, %v1072
  %v1077 = vmul.f32 %v1065, %v1076
  %v1078 = vld [vmem:[%s10] sm:$0x3]
  %v1079 = vmul.f32 %v1057, %v1077
  %v1080 = vsub.f32 %v1078, %v1079
  %1082 = vset.pattern.permute.xlu0 0
  %1083 = vperm.xlu0 %1082, %v1077
  %v1084 = vpop.permute.xlu0 %1083
  %v1086 = vmul.f32 %v1053, %v1084
  %1088 = vset.pattern.permute.xlu0 0
  %1089 = vperm.xlu0 %1088, %v1080
  %v1090 = vpop.permute.xlu0 %1089
  %v1092 = vadd.f32 %v1086, %v1090
  %1093 = vst.msk [vmem:[%s11] sm:$0x3] %vm503, %v1092
  // Predicated region
  $region46: #{_lambda_.5} parent=0 // pred_check
    _
  $region47: #{_lambda_.5} parent=0 // pred_check_branch
    %1095 = sbr.rel (0) target = $region49
  $region48: #{_lambda_.5} parent=0 // pred_region
    _
  $region49: #{_lambda_.5} parent=0 // pred_fallthru
    _
  // Predicated region
  $region50: #{_lambda_.5} parent=0 // pred_check
    _
  $region51: #{_lambda_.5} parent=0 // pred_check_branch
    %1097 = sbr.rel (0) target = $region53
  $region52: #{_lambda_.5} parent=0 // pred_region
    _
  $region53: #{_lambda_.5} parent=0 // pred_fallthru
    _

</llo_original>
